<compile_context>
chip_gen: v6e
topology: v6e:2x2x1
jax: 0.10.0
libtpu: 0.0.40
codegen_flags: <defaults>
</compile_context>

<pallas_src>
import functools
import math

import jax
import jax.numpy as jnp
from jax.experimental import pallas as pl
from jax.experimental.pallas import tpu as pltpu

LN_EPS = 1e-5                      # torch.nn.LayerNorm default
DTYPE = jnp.bfloat16               # storage / MXU-operand dtype (f32 accumulation inside)
MLP_HIDDEN_CHUNK = 1024            # lane-chunk width for the MLP hidden dimension
# 48 MiB scoped VMEM: ample for this demo, leaves headroom on v7x (64 MiB physical);
# can be raised toward 64-100 MiB on v5e/v6e (128 MiB physical) for large-row configs.
VMEM_LIMIT_BYTES = 48 * 1024 * 1024
_INV_SQRT2 = 1.0 / math.sqrt(2.0)


# ------------------------------ in-kernel helpers ------------------------------ #

def _f32(a):
    return a.astype(jnp.float32)


def _layer_norm_f32(x, g, b):
    # x: (R, C) f32, g/b: (1, C) f32.  Biased variance -> matches torch.nn.LayerNorm.
    mean = jnp.mean(x, axis=-1, keepdims=True)
    xc = x - mean
    var = jnp.mean(xc * xc, axis=-1, keepdims=True)
    return xc * jax.lax.rsqrt(var + LN_EPS) * g + b


def _erf_f32(x):
    # Abramowitz & Stegun 7.1.26 (|err| < 1.5e-7): exp/mul/select only, so it lowers on
    # every TPU generation; numerically equivalent to exact erf at f32/bf16 precision.
    sign = jnp.where(x >= 0.0, 1.0, -1.0)
    a = jnp.abs(x)
    t = 1.0 / (1.0 + 0.3275911 * a)
    poly = ((((1.061405429 * t - 1.453152027) * t + 1.421413741) * t
             - 0.284496736) * t + 0.254829592) * t
    return sign * (1.0 - poly * jnp.exp(-a * a))


def _gelu_f32(x):
    # exact erf-GELU (torch.nn.GELU default)
    return 0.5 * x * (1.0 + _erf_f32(x * _INV_SQRT2))


def _mm(a_f32, w):
    # f32 activations cast to the weight dtype (bf16) for the MXU, f32 accumulation.
    return jnp.dot(a_f32.astype(w.dtype), w, preferred_element_type=jnp.float32)


def _mha_proj_f32(q, k, v, wo, *, batch, n_q, n_kv, num_heads, scale, cd):
    """softmax(q k^T * scale) v followed by the output projection.

    q: (batch*n_q, C) f32, k/v: (batch*n_kv, C) f32, wo: (C, C).  Heads are unrolled
    with static lane slices + plain 2-D dots (no (n, h, hd) reshapes, no 'hnm'
    relayouts).  The output projection is folded per head, which avoids a
    lane-unaligned concatenation of head contexts; the over-heads sum is identical to
    concat-then-project.  Softmax math stays f32 with an exact reciprocal.
    """
    width = q.shape[-1]
    hd = width // num_heads
    per_batch = []
    for b in range(batch):
        qb = q[b * n_q:(b + 1) * n_q, :]
        kb = k[b * n_kv:(b + 1) * n_kv, :]
        vb = v[b * n_kv:(b + 1) * n_kv, :]
        out_b = None
        for h in range(num_heads):
            c0, c1 = h * hd, (h + 1) * hd
            qh = qb[:, c0:c1].astype(cd)              # (n_q, hd)
            kh = kb[:, c0:c1].astype(cd)              # (n_kv, hd)
            vh = vb[:, c0:c1].astype(cd)              # (n_kv, hd)
            s = jax.lax.dot_general(                  # q @ k^T without materializing k^T
                qh, kh, (((1,), (1,)), ((), ())),
                preferred_element_type=jnp.float32) * scale
            s = s - jnp.max(s, axis=-1, keepdims=True)
            p = jnp.exp(s)
            p = p / jnp.sum(p, axis=-1, keepdims=True)   # exact (parity with torch)
            ctx = jnp.dot(p.astype(cd), vh, preferred_element_type=jnp.float32)
            contrib = jnp.dot(ctx.astype(cd), wo[c0:c1, :],
                              preferred_element_type=jnp.float32)   # (n_q, C)
            out_b = contrib if out_b is None else out_b + contrib
        per_batch.append(out_b)
    # concat over batch is along sublanes in 8-row-aligned pieces (cheap / safe).
    return jnp.concatenate(per_batch, axis=0)            # (batch*n_q, C)


# ------------------------------ the fused kernel ------------------------------ #

def _context_decoder_kernel(
    # batch-flattened input streams
    text_ref, vis_ref,
    # memory_proj: LN -> Linear -> LN
    mln1_w, mln1_b, mfc_w, mfc_b, mln2_w, mln2_b,
    # text_proj: LN -> Linear
    tln_w, tln_b, tfc_w, tfc_b,
    # out_proj: LN -> Linear
    oln_w, oln_b, ofc_w, ofc_b,
    # per-layer stacks (leading dim = layer, selected by the grid index)
    n1_w, n1_b, sa_wqkv, sa_wo, sa_bo,
    n2_w, n2_b, ca_wq, ca_wkv, ca_wo, ca_bo,
    n3_w, n3_b, fc1_w, fc1_b, fc2_w, fc2_b,
    # output
    out_ref,
    # VMEM-resident state (persists across the layer grid)
    x_scr, mem_scr,
    *, num_heads, batch, n_text, n_mem, scale,
):
    layer = pl.program_id(0)
    width = x_scr.shape[-1]
    cd = sa_wqkv.dtype            # matmul-operand dtype (bf16 by default)

    # ---- one-time input projections (layer 0): results stay resident in VMEM ----
    @pl.when(layer == 0)
    def _project_inputs():
        vis = _f32(vis_ref[...])
        m = _layer_norm_f32(vis, _f32(mln1_w[...]), _f32(mln1_b[...]))
        m = _mm(m, mfc_w[...]) + _f32(mfc_b[...])
        mem_scr[...] = _layer_norm_f32(m, _f32(mln2_w[...]), _f32(mln2_b[...]))

        txt = _f32(text_ref[...])
        t = _layer_norm_f32(txt, _f32(tln_w[...]), _f32(tln_b[...]))
        x_scr[...] = _mm(t, tfc_w[...]) + _f32(tfc_b[...])

    x = x_scr[...]                # (B*N, C) f32 residual stream
    mem = mem_scr[...]            # (B*M, C) f32 projected memory

    # ---- self-attention: x = x + proj(MHA(LN1(x))) ----
    xn = _layer_norm_f32(x, _f32(n1_w[0]), _f32(n1_b[0]))
    qkv = _mm(xn, sa_wqkv[0])                                   # (B*N, 3C), no qkv bias
    x = x + _mha_proj_f32(
        qkv[:, :width], qkv[:, width:2 * width], qkv[:, 2 * width:], sa_wo[0],
        batch=batch, n_q=n_text, n_kv=n_text,
        num_heads=num_heads, scale=scale, cd=cd) + _f32(sa_bo[0])

    # ---- cross-attention: x = x + proj(MHA(LN2(x), mem, mem)) ----
    xn = _layer_norm_f32(x, _f32(n2_w[0]), _f32(n2_b[0]))
    q = _mm(xn, ca_wq[0])                                       # (B*N, C)
    kv = _mm(mem, ca_wkv[0])                                    # (B*M, 2C)
    x = x + _mha_proj_f32(
        q, kv[:, :width], kv[:, width:], ca_wo[0],
        batch=batch, n_q=n_text, n_kv=n_mem,
        num_heads=num_heads, scale=scale, cd=cd) + _f32(ca_bo[0])

    # ---- MLP: x = x + fc2(GELU(fc1(LN3(x)))), hidden lane-chunked in VMEM ----
    xn = _layer_norm_f32(x, _f32(n3_w[0]), _f32(n3_b[0]))
    xn_cd = xn.astype(cd)
    hidden = fc1_w.shape[-1]
    chunk = hidden if hidden <= MLP_HIDDEN_CHUNK else MLP_HIDDEN_CHUNK
    y = jnp.zeros_like(x)
    for c0 in range(0, hidden, chunk):
        c1 = min(c0 + chunk, hidden)
        h = jnp.dot(xn_cd, fc1_w[0, :, c0:c1], preferred_element_type=jnp.float32)
        h = _gelu_f32(h + _f32(fc1_b[0, :, c0:c1]))
        y = y + jnp.dot(h.astype(cd), fc2_w[0, c0:c1, :],
                        preferred_element_type=jnp.float32)
    x = x + y + _f32(fc2_b[0])

    x_scr[...] = x

    # ---- output projection (last layer only).  The constant-index output block is
    # written back to HBM exactly once at the end of the grid. ----
    @pl.when(layer == pl.num_programs(0) - 1)
    def _project_out():
        yn = _layer_norm_f32(x, _f32(oln_w[...]), _f32(oln_b[...]))
        out = _mm(yn, ofc_w[...]) + _f32(ofc_b[...])
        out_ref[...] = out.astype(out_ref.dtype)


# ------------------------------ BlockSpec helpers ------------------------------ #

def _const_spec(shape):
    """Full-array block whose index never changes across the layer grid."""
    index_map = lambda l, n=len(shape): (0,) * n
    if hasattr(pl, "Buffered"):
        try:
            # Single-buffer constant blocks so weights / input streams are not
            # duplicated in VMEM (review item: critical on v7x's 64 MiB VMEM at
            # realistic widths; free at demo size).
            return pl.BlockSpec(shape, index_map, pipeline_mode=pl.Buffered(1))
        except TypeError:   # older jax without BlockSpec.pipeline_mode
            pass
    return pl.BlockSpec(shape, index_map)


def _layer_spec(shape):
    """Per-layer stacked weights: layer l+1's block prefetches while l computes."""
    index_map = lambda l, n=len(shape) - 1: (l,) + (0,) * n
    return pl.BlockSpec((1,) + tuple(shape[1:]), index_map)


# ------------------------------ module forward ------------------------------ #

def context_decoder_forward(text, visual, params, num_heads):
    """text: (B, N, visual_dim), visual: (B, M, visual_dim) -> (B, N, visual_dim)."""
    B, n_text, v_dim = text.shape
    _, n_mem, _ = visual.shape
    width = params["text_proj_fc"]["w"].shape[1]
    lay = params["layers"]
    num_layers = lay["sa_wqkv"].shape[0]
    scale = (width // num_heads) ** (-0.5)

    text2 = text.reshape(B * n_text, v_dim)
    vis2 = visual.reshape(B * n_mem, v_dim)

    const_args = (
        text2, vis2,
        params["memory_proj_ln1"]["w"], params["memory_proj_ln1"]["b"],
        params["memory_proj_fc"]["w"], params["memory_proj_fc"]["b"],
        params["memory_proj_ln2"]["w"], params["memory_proj_ln2"]["b"],
        params["text_proj_ln"]["w"], params["text_proj_ln"]["b"],
        params["text_proj_fc"]["w"], params["text_proj_fc"]["b"],
        params["out_proj_ln"]["w"], params["out_proj_ln"]["b"],
        params["out_proj_fc"]["w"], params["out_proj_fc"]["b"],
    )
    layer_args = (
        lay["n1_w"], lay["n1_b"], lay["sa_wqkv"], lay["sa_wo"], lay["sa_bo"],
        lay["n2_w"], lay["n2_b"], lay["ca_wq"], lay["ca_wkv"], lay["ca_wo"], lay["ca_bo"],
        lay["n3_w"], lay["n3_b"], lay["fc1_w"], lay["fc1_b"], lay["fc2_w"], lay["fc2_b"],
    )
    in_specs = ([_const_spec(a.shape) for a in const_args]
                + [_layer_spec(a.shape) for a in layer_args])

    kernel = functools.partial(
        _context_decoder_kernel,
        num_heads=num_heads, batch=B, n_text=n_text, n_mem=n_mem, scale=scale)

    out2 = pl.pallas_call(
        kernel,
        out_shape=jax.ShapeDtypeStruct((B * n_text, v_dim), text.dtype),
        grid=(num_layers,),
        in_specs=in_specs,
        out_specs=pl.BlockSpec((B * n_text, v_dim), lambda l: (0, 0)),
        scratch_shapes=[
            pltpu.VMEM((B * n_text, width), jnp.float32),   # residual stream x
            pltpu.VMEM((B * n_mem, width), jnp.float32),    # projected memory
        ],
        compiler_params=pltpu.CompilerParams(
            # The layer axis is a sequential dependency -> "arbitrary".  For realistic
            # batch/sequence sizes a leading "parallel" row-tile axis should be added
            # so both v7x TensorCores get work; at B*N=16 rows it only adds overhead.
            dimension_semantics=("arbitrary",),
            vmem_limit_bytes=VMEM_LIMIT_BYTES,
        ),
    )(*const_args, *layer_args)
    return out2.reshape(B, n_text, v_dim)


# ------------------------- deterministic param init ------------------------- #

def init_params(key, width, layers, visual_dim, dtype=DTYPE):
    """Mirrors ContextDecoder._init_weights: trunc_normal(0.02) weights, zero biases,
    LayerNorm gamma=1 / beta=0.  Per-layer tensors are stacked on a leading layer axis
    so the fused kernel can stream them with the layer grid."""
    W, Dv, L = width, visual_dim, layers
    ks = jax.random.split(key, 10)

    def tn(k, shape):
        return (0.02 * jax.random.truncated_normal(k, -2.0, 2.0, shape, jnp.float32)
                ).astype(dtype)

    ones = lambda *s: jnp.ones(s, dtype)
    zeros = lambda *s: jnp.zeros(s, dtype)

    return {
        "memory_proj_ln1": {"w": ones(1, Dv), "b": zeros(1, Dv)},
        "memory_proj_fc": {"w": tn(ks[0], (Dv, W)), "b": zeros(1, W)},
        "memory_proj_ln2": {"w": ones(1, W), "b": zeros(1, W)},
        "text_proj_ln": {"w": ones(1, Dv), "b": zeros(1, Dv)},
        "text_proj_fc": {"w": tn(ks[1], (Dv, W)), "b": zeros(1, W)},
        "out_proj_ln": {"w": ones(1, W), "b": zeros(1, W)},
        "out_proj_fc": {"w": tn(ks[2], (W, Dv)), "b": zeros(1, Dv)},
        "layers": {
            "n1_w": ones(L, 1, W), "n1_b": zeros(L, 1, W),
            "sa_wqkv": tn(ks[3], (L, W, 3 * W)),              # qkv_bias=False
            "sa_wo": tn(ks[4], (L, W, W)), "sa_bo": zeros(L, 1, W),
            "n2_w": ones(L, 1, W), "n2_b": zeros(L, 1, W),
            "ca_wq": tn(ks[5], (L, W, W)),
            "ca_wkv": tn(ks[6], (L, W, 2 * W)),               # qkv_bias=False
            "ca_wo": tn(ks[7], (L, W, W)), "ca_bo": zeros(L, 1, W),
            "n3_w": ones(L, 1, W), "n3_b": zeros(L, 1, W),
            "fc1_w": tn(ks[8], (L, W, 4 * W)), "fc1_b": zeros(L, 1, 4 * W),
            "fc2_w": tn(ks[9], (L, 4 * W, W)), "fc2_b": zeros(L, 1, W),
        },
    }


# ----------------------------------- main ----------------------------------- #

if __name__ == "__main__":
    B, N_text, N_vis = 2, 8, 16
    visual_dim, width, heads, n_layers = 256, 128, 4, 2

    key = jax.random.PRNGKey(0)
    kp, kt, kv = jax.random.split(key, 3)
    params = init_params(kp, width, n_layers, visual_dim)
    text = jax.random.normal(kt, (B, N_text, visual_dim), jnp.float32).astype(DTYPE)
    visual = jax.random.normal(kv, (B, N_vis, visual_dim), jnp.float32).astype(DTYPE)

    fwd = jax.jit(context_decoder_forward, static_argnums=(3,))
    out = jax.block_until_ready(fwd(text, visual, params, heads))

    assert out.shape == (B, N_text, visual_dim), out.shape
    assert bool(jnp.all(jnp.isfinite(out.astype(jnp.float32))))
    print("KERNEL_OK")
</pallas_src>

<mosaic_0001>
module attributes {stable_mosaic.version = 11 : i64} {
  func.func @_context_decoder_kernel(%arg0: i32, %arg1: memref<16x256xbf16, #tpu.memory_space<vmem>>, %arg2: memref<32x256xbf16, #tpu.memory_space<vmem>>, %arg3: memref<1x256xbf16, #tpu.memory_space<vmem>>, %arg4: memref<1x256xbf16, #tpu.memory_space<vmem>>, %arg5: memref<256x128xbf16, #tpu.memory_space<vmem>>, %arg6: memref<1x128xbf16, #tpu.memory_space<vmem>>, %arg7: memref<1x128xbf16, #tpu.memory_space<vmem>>, %arg8: memref<1x128xbf16, #tpu.memory_space<vmem>>, %arg9: memref<1x256xbf16, #tpu.memory_space<vmem>>, %arg10: memref<1x256xbf16, #tpu.memory_space<vmem>>, %arg11: memref<256x128xbf16, #tpu.memory_space<vmem>>, %arg12: memref<1x128xbf16, #tpu.memory_space<vmem>>, %arg13: memref<1x128xbf16, #tpu.memory_space<vmem>>, %arg14: memref<1x128xbf16, #tpu.memory_space<vmem>>, %arg15: memref<128x256xbf16, #tpu.memory_space<vmem>>, %arg16: memref<1x256xbf16, #tpu.memory_space<vmem>>, %arg17: memref<1x1x128xbf16, #tpu.memory_space<vmem>>, %arg18: memref<1x1x128xbf16, #tpu.memory_space<vmem>>, %arg19: memref<1x128x384xbf16, #tpu.memory_space<vmem>>, %arg20: memref<1x128x128xbf16, #tpu.memory_space<vmem>>, %arg21: memref<1x1x128xbf16, #tpu.memory_space<vmem>>, %arg22: memref<1x1x128xbf16, #tpu.memory_space<vmem>>, %arg23: memref<1x1x128xbf16, #tpu.memory_space<vmem>>, %arg24: memref<1x128x128xbf16, #tpu.memory_space<vmem>>, %arg25: memref<1x128x256xbf16, #tpu.memory_space<vmem>>, %arg26: memref<1x128x128xbf16, #tpu.memory_space<vmem>>, %arg27: memref<1x1x128xbf16, #tpu.memory_space<vmem>>, %arg28: memref<1x1x128xbf16, #tpu.memory_space<vmem>>, %arg29: memref<1x1x128xbf16, #tpu.memory_space<vmem>>, %arg30: memref<1x128x512xbf16, #tpu.memory_space<vmem>>, %arg31: memref<1x1x512xbf16, #tpu.memory_space<vmem>>, %arg32: memref<1x512x128xbf16, #tpu.memory_space<vmem>>, %arg33: memref<1x1x128xbf16, #tpu.memory_space<vmem>>, %arg34: memref<16x256xbf16, #tpu.memory_space<vmem>>, %arg35: memref<16x128xf32, #tpu.memory_space<vmem>>, %arg36: memref<32x128xf32, #tpu.memory_space<vmem>>) attributes {dimension_semantics = [#tpu.dimension_semantics<arbitrary>], iteration_bounds = array<i64: 2>, scalar_prefetch = 0 : i64, scratch_operands = 2 : i64, tpu.core_type = #tpu.core_type<tc>, window_params = [{pipeline_mode = #tpu.pipeline_mode<synchronous>, transform_indices = @transform_0, window_bounds = array<i64: 16, 256>}, {pipeline_mode = #tpu.pipeline_mode<synchronous>, transform_indices = @transform_1, window_bounds = array<i64: 32, 256>}, {pipeline_mode = #tpu.pipeline_mode<synchronous>, transform_indices = @transform_2, window_bounds = array<i64: 1, 256>}, {pipeline_mode = #tpu.pipeline_mode<synchronous>, transform_indices = @transform_3, window_bounds = array<i64: 1, 256>}, {pipeline_mode = #tpu.pipeline_mode<synchronous>, transform_indices = @transform_4, window_bounds = array<i64: 256, 128>}, {pipeline_mode = #tpu.pipeline_mode<synchronous>, transform_indices = @transform_5, window_bounds = array<i64: 1, 128>}, {pipeline_mode = #tpu.pipeline_mode<synchronous>, transform_indices = @transform_6, window_bounds = array<i64: 1, 128>}, {pipeline_mode = #tpu.pipeline_mode<synchronous>, transform_indices = @transform_7, window_bounds = array<i64: 1, 128>}, {pipeline_mode = #tpu.pipeline_mode<synchronous>, transform_indices = @transform_8, window_bounds = array<i64: 1, 256>}, {pipeline_mode = #tpu.pipeline_mode<synchronous>, transform_indices = @transform_9, window_bounds = array<i64: 1, 256>}, {pipeline_mode = #tpu.pipeline_mode<synchronous>, transform_indices = @transform_10, window_bounds = array<i64: 256, 128>}, {pipeline_mode = #tpu.pipeline_mode<synchronous>, transform_indices = @transform_11, window_bounds = array<i64: 1, 128>}, {pipeline_mode = #tpu.pipeline_mode<synchronous>, transform_indices = @transform_12, window_bounds = array<i64: 1, 128>}, {pipeline_mode = #tpu.pipeline_mode<synchronous>, transform_indices = @transform_13, window_bounds = array<i64: 1, 128>}, {pipeline_mode = #tpu.pipeline_mode<synchronous>, transform_indices = @transform_14, window_bounds = array<i64: 128, 256>}, {pipeline_mode = #tpu.pipeline_mode<synchronous>, transform_indices = @transform_15, window_bounds = array<i64: 1, 256>}, {transform_indices = @transform_16, window_bounds = array<i64: 1, 1, 128>}, {transform_indices = @transform_17, window_bounds = array<i64: 1, 1, 128>}, {transform_indices = @transform_18, window_bounds = array<i64: 1, 128, 384>}, {transform_indices = @transform_19, window_bounds = array<i64: 1, 128, 128>}, {transform_indices = @transform_20, window_bounds = array<i64: 1, 1, 128>}, {transform_indices = @transform_21, window_bounds = array<i64: 1, 1, 128>}, {transform_indices = @transform_22, window_bounds = array<i64: 1, 1, 128>}, {transform_indices = @transform_23, window_bounds = array<i64: 1, 128, 128>}, {transform_indices = @transform_24, window_bounds = array<i64: 1, 128, 256>}, {transform_indices = @transform_25, window_bounds = array<i64: 1, 128, 128>}, {transform_indices = @transform_26, window_bounds = array<i64: 1, 1, 128>}, {transform_indices = @transform_27, window_bounds = array<i64: 1, 1, 128>}, {transform_indices = @transform_28, window_bounds = array<i64: 1, 1, 128>}, {transform_indices = @transform_29, window_bounds = array<i64: 1, 128, 512>}, {transform_indices = @transform_30, window_bounds = array<i64: 1, 1, 512>}, {transform_indices = @transform_31, window_bounds = array<i64: 1, 512, 128>}, {transform_indices = @transform_32, window_bounds = array<i64: 1, 1, 128>}, {pipeline_mode = #tpu.pipeline_mode<synchronous>, transform_indices = @transform_33, window_bounds = array<i64: 16, 256>}]} {
    %c0_i32 = arith.constant 0 : i32
    %0 = arith.cmpi eq, %arg0, %c0_i32 : i32
    %1 = arith.extui %0 : i1 to i32
    %c0_i32_0 = arith.constant 0 : i32
    %2 = arith.cmpi ne, %1, %c0_i32_0 : i32
    scf.if %2 {
      %c0_190 = arith.constant 0 : index
      %c0_191 = arith.constant 0 : index
      %576 = vector.load %arg2[%c0_190, %c0_191] : memref<32x256xbf16, #tpu.memory_space<vmem>>, vector<32x256xbf16>
      %577 = arith.extf %576 : vector<32x256xbf16> to vector<32x256xf32>
      %c0_192 = arith.constant 0 : index
      %c0_193 = arith.constant 0 : index
      %578 = vector.load %arg3[%c0_192, %c0_193] : memref<1x256xbf16, #tpu.memory_space<vmem>>, vector<1x256xbf16>
      %579 = arith.extf %578 : vector<1x256xbf16> to vector<1x256xf32>
      %c0_194 = arith.constant 0 : index
      %c0_195 = arith.constant 0 : index
      %580 = vector.load %arg4[%c0_194, %c0_195] : memref<1x256xbf16, #tpu.memory_space<vmem>>, vector<1x256xbf16>
      %581 = arith.extf %580 : vector<1x256xbf16> to vector<1x256xf32>
      %cst_196 = arith.constant dense<0.000000e+00> : vector<32xf32>
      %582 = vector.multi_reduction <add>, %577, %cst_196 [1] : vector<32x256xf32> to vector<32xf32>
      %583 = vector.shape_cast %582 : vector<32xf32> to vector<32x1xf32>
      %cst_197 = arith.constant 2.560000e+02 : f32
      %584 = vector.broadcast %cst_197 : f32 to vector<32x1xf32>
      %585 = arith.divf %583, %584 : vector<32x1xf32>
      %586 = vector.broadcast %585 : vector<32x1xf32> to vector<32x256xf32>
      %587 = arith.subf %577, %586 : vector<32x256xf32>
      %588 = arith.mulf %587, %587 : vector<32x256xf32>
      %cst_198 = arith.constant dense<0.000000e+00> : vector<32xf32>
      %589 = vector.multi_reduction <add>, %588, %cst_198 [1] : vector<32x256xf32> to vector<32xf32>
      %590 = vector.shape_cast %589 : vector<32xf32> to vector<32x1xf32>
      %cst_199 = arith.constant 2.560000e+02 : f32
      %591 = vector.broadcast %cst_199 : f32 to vector<32x1xf32>
      %592 = arith.divf %590, %591 : vector<32x1xf32>
      %cst_200 = arith.constant 9.99999974E-6 : f32
      %593 = vector.broadcast %cst_200 : f32 to vector<32x1xf32>
      %594 = arith.addf %592, %593 : vector<32x1xf32>
      %595 = math.rsqrt %594 : vector<32x1xf32>
      %596 = vector.broadcast %595 : vector<32x1xf32> to vector<32x256xf32>
      %597 = arith.mulf %587, %596 : vector<32x256xf32>
      %598 = vector.broadcast %579 : vector<1x256xf32> to vector<32x256xf32>
      %599 = arith.mulf %597, %598 : vector<32x256xf32>
      %600 = vector.broadcast %581 : vector<1x256xf32> to vector<32x256xf32>
      %601 = arith.addf %599, %600 : vector<32x256xf32>
      %c0_201 = arith.constant 0 : index
      %c0_202 = arith.constant 0 : index
      %602 = vector.load %arg5[%c0_201, %c0_202] : memref<256x128xbf16, #tpu.memory_space<vmem>>, vector<256x128xbf16>
      %603 = arith.truncf %601 : vector<32x256xf32> to vector<32x256xbf16>
      %cst_203 = arith.constant dense<0.000000e+00> : vector<32x128xf32>
      %604 = tpu.matmul %603, %602, %cst_203 {dimension_numbers = #tpu.dot_dimension_numbers<[1], [0], [0], [1], [0, 0, 1, 1], [], []>} : vector<32x256xbf16>, vector<256x128xbf16>, vector<32x128xf32> -> vector<32x128xf32>
      %c0_204 = arith.constant 0 : index
      %c0_205 = arith.constant 0 : index
      %605 = vector.load %arg6[%c0_204, %c0_205] : memref<1x128xbf16, #tpu.memory_space<vmem>>, vector<1x128xbf16>
      %606 = arith.extf %605 : vector<1x128xbf16> to vector<1x128xf32>
      %607 = vector.broadcast %606 : vector<1x128xf32> to vector<32x128xf32>
      %608 = arith.addf %604, %607 : vector<32x128xf32>
      %c0_206 = arith.constant 0 : index
      %c0_207 = arith.constant 0 : index
      %609 = vector.load %arg7[%c0_206, %c0_207] : memref<1x128xbf16, #tpu.memory_space<vmem>>, vector<1x128xbf16>
      %610 = arith.extf %609 : vector<1x128xbf16> to vector<1x128xf32>
      %c0_208 = arith.constant 0 : index
      %c0_209 = arith.constant 0 : index
      %611 = vector.load %arg8[%c0_208, %c0_209] : memref<1x128xbf16, #tpu.memory_space<vmem>>, vector<1x128xbf16>
      %612 = arith.extf %611 : vector<1x128xbf16> to vector<1x128xf32>
      %cst_210 = arith.constant dense<0.000000e+00> : vector<32xf32>
      %613 = vector.multi_reduction <add>, %608, %cst_210 [1] : vector<32x128xf32> to vector<32xf32>
      %614 = vector.shape_cast %613 : vector<32xf32> to vector<32x1xf32>
      %cst_211 = arith.constant 1.280000e+02 : f32
      %615 = vector.broadcast %cst_211 : f32 to vector<32x1xf32>
      %616 = arith.divf %614, %615 : vector<32x1xf32>
      %617 = vector.broadcast %616 : vector<32x1xf32> to vector<32x128xf32>
      %618 = arith.subf %608, %617 : vector<32x128xf32>
      %619 = arith.mulf %618, %618 : vector<32x128xf32>
      %cst_212 = arith.constant dense<0.000000e+00> : vector<32xf32>
      %620 = vector.multi_reduction <add>, %619, %cst_212 [1] : vector<32x128xf32> to vector<32xf32>
      %621 = vector.shape_cast %620 : vector<32xf32> to vector<32x1xf32>
      %cst_213 = arith.constant 1.280000e+02 : f32
      %622 = vector.broadcast %cst_213 : f32 to vector<32x1xf32>
      %623 = arith.divf %621, %622 : vector<32x1xf32>
      %cst_214 = arith.constant 9.99999974E-6 : f32
      %624 = vector.broadcast %cst_214 : f32 to vector<32x1xf32>
      %625 = arith.addf %623, %624 : vector<32x1xf32>
      %626 = math.rsqrt %625 : vector<32x1xf32>
      %627 = vector.broadcast %626 : vector<32x1xf32> to vector<32x128xf32>
      %628 = arith.mulf %618, %627 : vector<32x128xf32>
      %629 = vector.broadcast %610 : vector<1x128xf32> to vector<32x128xf32>
      %630 = arith.mulf %628, %629 : vector<32x128xf32>
      %631 = vector.broadcast %612 : vector<1x128xf32> to vector<32x128xf32>
      %632 = arith.addf %630, %631 : vector<32x128xf32>
      %c0_215 = arith.constant 0 : index
      %c0_216 = arith.constant 0 : index
      %633 = vector.load %arg36[%c0_215, %c0_216] : memref<32x128xf32, #tpu.memory_space<vmem>>, vector<32x128xf32>
      tpu.vector_store %arg36[%c0_215, %c0_216], %632 {strides = array<i32>} : memref<32x128xf32, #tpu.memory_space<vmem>>, vector<32x128xf32>,
      %c0_217 = arith.constant 0 : index
      %c0_218 = arith.constant 0 : index
      %634 = vector.load %arg1[%c0_217, %c0_218] : memref<16x256xbf16, #tpu.memory_space<vmem>>, vector<16x256xbf16>
      %635 = arith.extf %634 : vector<16x256xbf16> to vector<16x256xf32>
      %c0_219 = arith.constant 0 : index
      %c0_220 = arith.constant 0 : index
      %636 = vector.load %arg9[%c0_219, %c0_220] : memref<1x256xbf16, #tpu.memory_space<vmem>>, vector<1x256xbf16>
      %637 = arith.extf %636 : vector<1x256xbf16> to vector<1x256xf32>
      %c0_221 = arith.constant 0 : index
      %c0_222 = arith.constant 0 : index
      %638 = vector.load %arg10[%c0_221, %c0_222] : memref<1x256xbf16, #tpu.memory_space<vmem>>, vector<1x256xbf16>
      %639 = arith.extf %638 : vector<1x256xbf16> to vector<1x256xf32>
      %cst_223 = arith.constant dense<0.000000e+00> : vector<16xf32>
      %640 = vector.multi_reduction <add>, %635, %cst_223 [1] : vector<16x256xf32> to vector<16xf32>
      %641 = vector.shape_cast %640 : vector<16xf32> to vector<16x1xf32>
      %cst_224 = arith.constant 2.560000e+02 : f32
      %642 = vector.broadcast %cst_224 : f32 to vector<16x1xf32>
      %643 = arith.divf %641, %642 : vector<16x1xf32>
      %644 = vector.broadcast %643 : vector<16x1xf32> to vector<16x256xf32>
      %645 = arith.subf %635, %644 : vector<16x256xf32>
      %646 = arith.mulf %645, %645 : vector<16x256xf32>
      %cst_225 = arith.constant dense<0.000000e+00> : vector<16xf32>
      %647 = vector.multi_reduction <add>, %646, %cst_225 [1] : vector<16x256xf32> to vector<16xf32>
      %648 = vector.shape_cast %647 : vector<16xf32> to vector<16x1xf32>
      %cst_226 = arith.constant 2.560000e+02 : f32
      %649 = vector.broadcast %cst_226 : f32 to vector<16x1xf32>
      %650 = arith.divf %648, %649 : vector<16x1xf32>
      %cst_227 = arith.constant 9.99999974E-6 : f32
      %651 = vector.broadcast %cst_227 : f32 to vector<16x1xf32>
      %652 = arith.addf %650, %651 : vector<16x1xf32>
      %653 = math.rsqrt %652 : vector<16x1xf32>
      %654 = vector.broadcast %653 : vector<16x1xf32> to vector<16x256xf32>
      %655 = arith.mulf %645, %654 : vector<16x256xf32>
      %656 = vector.broadcast %637 : vector<1x256xf32> to vector<16x256xf32>
      %657 = arith.mulf %655, %656 : vector<16x256xf32>
      %658 = vector.broadcast %639 : vector<1x256xf32> to vector<16x256xf32>
      %659 = arith.addf %657, %658 : vector<16x256xf32>
      %c0_228 = arith.constant 0 : index
      %c0_229 = arith.constant 0 : index
      %660 = vector.load %arg11[%c0_228, %c0_229] : memref<256x128xbf16, #tpu.memory_space<vmem>>, vector<256x128xbf16>
      %661 = arith.truncf %659 : vector<16x256xf32> to vector<16x256xbf16>
      %cst_230 = arith.constant dense<0.000000e+00> : vector<16x128xf32>
      %662 = tpu.matmul %661, %660, %cst_230 {dimension_numbers = #tpu.dot_dimension_numbers<[1], [0], [0], [1], [0, 0, 1, 1], [], []>} : vector<16x256xbf16>, vector<256x128xbf16>, vector<16x128xf32> -> vector<16x128xf32>
      %c0_231 = arith.constant 0 : index
      %c0_232 = arith.constant 0 : index
      %663 = vector.load %arg12[%c0_231, %c0_232] : memref<1x128xbf16, #tpu.memory_space<vmem>>, vector<1x128xbf16>
      %664 = arith.extf %663 : vector<1x128xbf16> to vector<1x128xf32>
      %665 = vector.broadcast %664 : vector<1x128xf32> to vector<16x128xf32>
      %666 = arith.addf %662, %665 : vector<16x128xf32>
      %c0_233 = arith.constant 0 : index
      %c0_234 = arith.constant 0 : index
      %667 = vector.load %arg35[%c0_233, %c0_234] : memref<16x128xf32, #tpu.memory_space<vmem>>, vector<16x128xf32>
      tpu.vector_store %arg35[%c0_233, %c0_234], %666 {strides = array<i32>} : memref<16x128xf32, #tpu.memory_space<vmem>>, vector<16x128xf32>,
    } else {
    }
    %c0 = arith.constant 0 : index
    %c0_1 = arith.constant 0 : index
    %3 = vector.load %arg35[%c0, %c0_1] : memref<16x128xf32, #tpu.memory_space<vmem>>, vector<16x128xf32>
    %c0_2 = arith.constant 0 : index
    %c0_3 = arith.constant 0 : index
    %4 = vector.load %arg36[%c0_2, %c0_3] : memref<32x128xf32, #tpu.memory_space<vmem>>, vector<32x128xf32>
    %c0_4 = arith.constant 0 : index
    %c0_5 = arith.constant 0 : index
    %c0_6 = arith.constant 0 : index
    %5 = vector.load %arg17[%c0_4, %c0_5, %c0_6] : memref<1x1x128xbf16, #tpu.memory_space<vmem>>, vector<1x1x128xbf16>
    %6 = vector.shape_cast %5 : vector<1x1x128xbf16> to vector<1x128xbf16>
    %7 = arith.extf %6 : vector<1x128xbf16> to vector<1x128xf32>
    %c0_7 = arith.constant 0 : index
    %c0_8 = arith.constant 0 : index
    %c0_9 = arith.constant 0 : index
    %8 = vector.load %arg18[%c0_7, %c0_8, %c0_9] : memref<1x1x128xbf16, #tpu.memory_space<vmem>>, vector<1x1x128xbf16>
    %9 = vector.shape_cast %8 : vector<1x1x128xbf16> to vector<1x128xbf16>
    %10 = arith.extf %9 : vector<1x128xbf16> to vector<1x128xf32>
    %cst = arith.constant dense<0.000000e+00> : vector<16xf32>
    %11 = vector.multi_reduction <add>, %3, %cst [1] : vector<16x128xf32> to vector<16xf32>
    %12 = vector.shape_cast %11 : vector<16xf32> to vector<16x1xf32>
    %cst_10 = arith.constant 1.280000e+02 : f32
    %13 = vector.broadcast %cst_10 : f32 to vector<16x1xf32>
    %14 = arith.divf %12, %13 : vector<16x1xf32>
    %15 = vector.broadcast %14 : vector<16x1xf32> to vector<16x128xf32>
    %16 = arith.subf %3, %15 : vector<16x128xf32>
    %17 = arith.mulf %16, %16 : vector<16x128xf32>
    %cst_11 = arith.constant dense<0.000000e+00> : vector<16xf32>
    %18 = vector.multi_reduction <add>, %17, %cst_11 [1] : vector<16x128xf32> to vector<16xf32>
    %19 = vector.shape_cast %18 : vector<16xf32> to vector<16x1xf32>
    %cst_12 = arith.constant 1.280000e+02 : f32
    %20 = vector.broadcast %cst_12 : f32 to vector<16x1xf32>
    %21 = arith.divf %19, %20 : vector<16x1xf32>
    %cst_13 = arith.constant 9.99999974E-6 : f32
    %22 = vector.broadcast %cst_13 : f32 to vector<16x1xf32>
    %23 = arith.addf %21, %22 : vector<16x1xf32>
    %24 = math.rsqrt %23 : vector<16x1xf32>
    %25 = vector.broadcast %24 : vector<16x1xf32> to vector<16x128xf32>
    %26 = arith.mulf %16, %25 : vector<16x128xf32>
    %27 = vector.broadcast %7 : vector<1x128xf32> to vector<16x128xf32>
    %28 = arith.mulf %26, %27 : vector<16x128xf32>
    %29 = vector.broadcast %10 : vector<1x128xf32> to vector<16x128xf32>
    %30 = arith.addf %28, %29 : vector<16x128xf32>
    %c0_14 = arith.constant 0 : index
    %c0_15 = arith.constant 0 : index
    %c0_16 = arith.constant 0 : index
    %31 = vector.load %arg19[%c0_14, %c0_15, %c0_16] : memref<1x128x384xbf16, #tpu.memory_space<vmem>>, vector<1x128x384xbf16>
    %32 = vector.shape_cast %31 : vector<1x128x384xbf16> to vector<128x384xbf16>
    %33 = arith.truncf %30 : vector<16x128xf32> to vector<16x128xbf16>
    %cst_17 = arith.constant dense<0.000000e+00> : vector<16x384xf32>
    %34 = tpu.matmul %33, %32, %cst_17 {dimension_numbers = #tpu.dot_dimension_numbers<[1], [0], [0], [1], [0, 0, 1, 1], [], []>} : vector<16x128xbf16>, vector<128x384xbf16>, vector<16x384xf32> -> vector<16x384xf32>
    %35 = vector.extract_strided_slice %34 {offsets = [0, 0], sizes = [16, 128], strides = [1, 1]} : vector<16x384xf32> to vector<16x128xf32>
    %36 = vector.extract_strided_slice %34 {offsets = [0, 128], sizes = [16, 128], strides = [1, 1]} : vector<16x384xf32> to vector<16x128xf32>
    %37 = vector.extract_strided_slice %34 {offsets = [0, 256], sizes = [16, 128], strides = [1, 1]} : vector<16x384xf32> to vector<16x128xf32>
    %c0_18 = arith.constant 0 : index
    %c0_19 = arith.constant 0 : index
    %c0_20 = arith.constant 0 : index
    %38 = vector.load %arg20[%c0_18, %c0_19, %c0_20] : memref<1x128x128xbf16, #tpu.memory_space<vmem>>, vector<1x128x128xbf16>
    %39 = vector.shape_cast %38 : vector<1x128x128xbf16> to vector<128x128xbf16>
    %40 = vector.extract_strided_slice %35 {offsets = [0, 0], sizes = [8, 128], strides = [1, 1]} : vector<16x128xf32> to vector<8x128xf32>
    %41 = vector.extract_strided_slice %36 {offsets = [0, 0], sizes = [8, 128], strides = [1, 1]} : vector<16x128xf32> to vector<8x128xf32>
    %42 = vector.extract_strided_slice %37 {offsets = [0, 0], sizes = [8, 128], strides = [1, 1]} : vector<16x128xf32> to vector<8x128xf32>
    %43 = vector.extract_strided_slice %40 {offsets = [0, 0], sizes = [8, 32], strides = [1, 1]} : vector<8x128xf32> to vector<8x32xf32>
    %44 = arith.truncf %43 : vector<8x32xf32> to vector<8x32xbf16>
    %45 = vector.extract_strided_slice %41 {offsets = [0, 0], sizes = [8, 32], strides = [1, 1]} : vector<8x128xf32> to vector<8x32xf32>
    %46 = arith.truncf %45 : vector<8x32xf32> to vector<8x32xbf16>
    %47 = vector.extract_strided_slice %42 {offsets = [0, 0], sizes = [8, 32], strides = [1, 1]} : vector<8x128xf32> to vector<8x32xf32>
    %48 = arith.truncf %47 : vector<8x32xf32> to vector<8x32xbf16>
    %cst_21 = arith.constant dense<0.000000e+00> : vector<8x8xf32>
    %49 = tpu.matmul %44, %46, %cst_21 {dimension_numbers = #tpu.dot_dimension_numbers<[1], [1], [0], [0], [0, 0, 1, 0], [], []>} : vector<8x32xbf16>, vector<8x32xbf16>, vector<8x8xf32> -> vector<8x8xf32>
    %cst_22 = arith.constant 0.176776692 : f32
    %50 = vector.broadcast %cst_22 : f32 to vector<8x8xf32>
    %51 = arith.mulf %49, %50 : vector<8x8xf32>
    %cst_23 = arith.constant dense<0xFF800000> : vector<8xf32>
    %52 = vector.multi_reduction <maximumf>, %51, %cst_23 [1] : vector<8x8xf32> to vector<8xf32>
    %53 = vector.shape_cast %52 : vector<8xf32> to vector<8x1xf32>
    %54 = vector.broadcast %53 : vector<8x1xf32> to vector<8x8xf32>
    %55 = arith.subf %51, %54 : vector<8x8xf32>
    %56 = math.exp %55 : vector<8x8xf32>
    %cst_24 = arith.constant dense<0.000000e+00> : vector<8xf32>
    %57 = vector.multi_reduction <add>, %56, %cst_24 [1] : vector<8x8xf32> to vector<8xf32>
    %58 = vector.shape_cast %57 : vector<8xf32> to vector<8x1xf32>
    %59 = vector.broadcast %58 : vector<8x1xf32> to vector<8x8xf32>
    %60 = arith.divf %56, %59 : vector<8x8xf32>
    %61 = arith.truncf %60 : vector<8x8xf32> to vector<8x8xbf16>
    %cst_25 = arith.constant dense<0.000000e+00> : vector<8x32xf32>
    %62 = tpu.matmul %61, %48, %cst_25 {dimension_numbers = #tpu.dot_dimension_numbers<[1], [0], [0], [1], [0, 0, 1, 1], [], []>} : vector<8x8xbf16>, vector<8x32xbf16>, vector<8x32xf32> -> vector<8x32xf32>
    %63 = arith.truncf %62 : vector<8x32xf32> to vector<8x32xbf16>
    %64 = vector.extract_strided_slice %39 {offsets = [0, 0], sizes = [32, 128], strides = [1, 1]} : vector<128x128xbf16> to vector<32x128xbf16>
    %cst_26 = arith.constant dense<0.000000e+00> : vector<8x128xf32>
    %65 = tpu.matmul %63, %64, %cst_26 {dimension_numbers = #tpu.dot_dimension_numbers<[1], [0], [0], [1], [0, 0, 1, 1], [], []>} : vector<8x32xbf16>, vector<32x128xbf16>, vector<8x128xf32> -> vector<8x128xf32>
    %66 = vector.extract_strided_slice %40 {offsets = [0, 32], sizes = [8, 32], strides = [1, 1]} : vector<8x128xf32> to vector<8x32xf32>
    %67 = arith.truncf %66 : vector<8x32xf32> to vector<8x32xbf16>
    %68 = vector.extract_strided_slice %41 {offsets = [0, 32], sizes = [8, 32], strides = [1, 1]} : vector<8x128xf32> to vector<8x32xf32>
    %69 = arith.truncf %68 : vector<8x32xf32> to vector<8x32xbf16>
    %70 = vector.extract_strided_slice %42 {offsets = [0, 32], sizes = [8, 32], strides = [1, 1]} : vector<8x128xf32> to vector<8x32xf32>
    %71 = arith.truncf %70 : vector<8x32xf32> to vector<8x32xbf16>
    %cst_27 = arith.constant dense<0.000000e+00> : vector<8x8xf32>
    %72 = tpu.matmul %67, %69, %cst_27 {dimension_numbers = #tpu.dot_dimension_numbers<[1], [1], [0], [0], [0, 0, 1, 0], [], []>} : vector<8x32xbf16>, vector<8x32xbf16>, vector<8x8xf32> -> vector<8x8xf32>
    %cst_28 = arith.constant 0.176776692 : f32
    %73 = vector.broadcast %cst_28 : f32 to vector<8x8xf32>
    %74 = arith.mulf %72, %73 : vector<8x8xf32>
    %cst_29 = arith.constant dense<0xFF800000> : vector<8xf32>
    %75 = vector.multi_reduction <maximumf>, %74, %cst_29 [1] : vector<8x8xf32> to vector<8xf32>
    %76 = vector.shape_cast %75 : vector<8xf32> to vector<8x1xf32>
    %77 = vector.broadcast %76 : vector<8x1xf32> to vector<8x8xf32>
    %78 = arith.subf %74, %77 : vector<8x8xf32>
    %79 = math.exp %78 : vector<8x8xf32>
    %cst_30 = arith.constant dense<0.000000e+00> : vector<8xf32>
    %80 = vector.multi_reduction <add>, %79, %cst_30 [1] : vector<8x8xf32> to vector<8xf32>
    %81 = vector.shape_cast %80 : vector<8xf32> to vector<8x1xf32>
    %82 = vector.broadcast %81 : vector<8x1xf32> to vector<8x8xf32>
    %83 = arith.divf %79, %82 : vector<8x8xf32>
    %84 = arith.truncf %83 : vector<8x8xf32> to vector<8x8xbf16>
    %cst_31 = arith.constant dense<0.000000e+00> : vector<8x32xf32>
    %85 = tpu.matmul %84, %71, %cst_31 {dimension_numbers = #tpu.dot_dimension_numbers<[1], [0], [0], [1], [0, 0, 1, 1], [], []>} : vector<8x8xbf16>, vector<8x32xbf16>, vector<8x32xf32> -> vector<8x32xf32>
    %86 = arith.truncf %85 : vector<8x32xf32> to vector<8x32xbf16>
    %87 = vector.extract_strided_slice %39 {offsets = [32, 0], sizes = [32, 128], strides = [1, 1]} : vector<128x128xbf16> to vector<32x128xbf16>
    %cst_32 = arith.constant dense<0.000000e+00> : vector<8x128xf32>
    %88 = tpu.matmul %86, %87, %cst_32 {dimension_numbers = #tpu.dot_dimension_numbers<[1], [0], [0], [1], [0, 0, 1, 1], [], []>} : vector<8x32xbf16>, vector<32x128xbf16>, vector<8x128xf32> -> vector<8x128xf32>
    %89 = arith.addf %65, %88 : vector<8x128xf32>
    %90 = vector.extract_strided_slice %40 {offsets = [0, 64], sizes = [8, 32], strides = [1, 1]} : vector<8x128xf32> to vector<8x32xf32>
    %91 = arith.truncf %90 : vector<8x32xf32> to vector<8x32xbf16>
    %92 = vector.extract_strided_slice %41 {offsets = [0, 64], sizes = [8, 32], strides = [1, 1]} : vector<8x128xf32> to vector<8x32xf32>
    %93 = arith.truncf %92 : vector<8x32xf32> to vector<8x32xbf16>
    %94 = vector.extract_strided_slice %42 {offsets = [0, 64], sizes = [8, 32], strides = [1, 1]} : vector<8x128xf32> to vector<8x32xf32>
    %95 = arith.truncf %94 : vector<8x32xf32> to vector<8x32xbf16>
    %cst_33 = arith.constant dense<0.000000e+00> : vector<8x8xf32>
    %96 = tpu.matmul %91, %93, %cst_33 {dimension_numbers = #tpu.dot_dimension_numbers<[1], [1], [0], [0], [0, 0, 1, 0], [], []>} : vector<8x32xbf16>, vector<8x32xbf16>, vector<8x8xf32> -> vector<8x8xf32>
    %cst_34 = arith.constant 0.176776692 : f32
    %97 = vector.broadcast %cst_34 : f32 to vector<8x8xf32>
    %98 = arith.mulf %96, %97 : vector<8x8xf32>
    %cst_35 = arith.constant dense<0xFF800000> : vector<8xf32>
    %99 = vector.multi_reduction <maximumf>, %98, %cst_35 [1] : vector<8x8xf32> to vector<8xf32>
    %100 = vector.shape_cast %99 : vector<8xf32> to vector<8x1xf32>
    %101 = vector.broadcast %100 : vector<8x1xf32> to vector<8x8xf32>
    %102 = arith.subf %98, %101 : vector<8x8xf32>
    %103 = math.exp %102 : vector<8x8xf32>
    %cst_36 = arith.constant dense<0.000000e+00> : vector<8xf32>
    %104 = vector.multi_reduction <add>, %103, %cst_36 [1] : vector<8x8xf32> to vector<8xf32>
    %105 = vector.shape_cast %104 : vector<8xf32> to vector<8x1xf32>
    %106 = vector.broadcast %105 : vector<8x1xf32> to vector<8x8xf32>
    %107 = arith.divf %103, %106 : vector<8x8xf32>
    %108 = arith.truncf %107 : vector<8x8xf32> to vector<8x8xbf16>
    %cst_37 = arith.constant dense<0.000000e+00> : vector<8x32xf32>
    %109 = tpu.matmul %108, %95, %cst_37 {dimension_numbers = #tpu.dot_dimension_numbers<[1], [0], [0], [1], [0, 0, 1, 1], [], []>} : vector<8x8xbf16>, vector<8x32xbf16>, vector<8x32xf32> -> vector<8x32xf32>
    %110 = arith.truncf %109 : vector<8x32xf32> to vector<8x32xbf16>
    %111 = vector.extract_strided_slice %39 {offsets = [64, 0], sizes = [32, 128], strides = [1, 1]} : vector<128x128xbf16> to vector<32x128xbf16>
    %cst_38 = arith.constant dense<0.000000e+00> : vector<8x128xf32>
    %112 = tpu.matmul %110, %111, %cst_38 {dimension_numbers = #tpu.dot_dimension_numbers<[1], [0], [0], [1], [0, 0, 1, 1], [], []>} : vector<8x32xbf16>, vector<32x128xbf16>, vector<8x128xf32> -> vector<8x128xf32>
    %113 = arith.addf %89, %112 : vector<8x128xf32>
    %114 = vector.extract_strided_slice %40 {offsets = [0, 96], sizes = [8, 32], strides = [1, 1]} : vector<8x128xf32> to vector<8x32xf32>
    %115 = arith.truncf %114 : vector<8x32xf32> to vector<8x32xbf16>
    %116 = vector.extract_strided_slice %41 {offsets = [0, 96], sizes = [8, 32], strides = [1, 1]} : vector<8x128xf32> to vector<8x32xf32>
    %117 = arith.truncf %116 : vector<8x32xf32> to vector<8x32xbf16>
    %118 = vector.extract_strided_slice %42 {offsets = [0, 96], sizes = [8, 32], strides = [1, 1]} : vector<8x128xf32> to vector<8x32xf32>
    %119 = arith.truncf %118 : vector<8x32xf32> to vector<8x32xbf16>
    %cst_39 = arith.constant dense<0.000000e+00> : vector<8x8xf32>
    %120 = tpu.matmul %115, %117, %cst_39 {dimension_numbers = #tpu.dot_dimension_numbers<[1], [1], [0], [0], [0, 0, 1, 0], [], []>} : vector<8x32xbf16>, vector<8x32xbf16>, vector<8x8xf32> -> vector<8x8xf32>
    %cst_40 = arith.constant 0.176776692 : f32
    %121 = vector.broadcast %cst_40 : f32 to vector<8x8xf32>
    %122 = arith.mulf %120, %121 : vector<8x8xf32>
    %cst_41 = arith.constant dense<0xFF800000> : vector<8xf32>
    %123 = vector.multi_reduction <maximumf>, %122, %cst_41 [1] : vector<8x8xf32> to vector<8xf32>
    %124 = vector.shape_cast %123 : vector<8xf32> to vector<8x1xf32>
    %125 = vector.broadcast %124 : vector<8x1xf32> to vector<8x8xf32>
    %126 = arith.subf %122, %125 : vector<8x8xf32>
    %127 = math.exp %126 : vector<8x8xf32>
    %cst_42 = arith.constant dense<0.000000e+00> : vector<8xf32>
    %128 = vector.multi_reduction <add>, %127, %cst_42 [1] : vector<8x8xf32> to vector<8xf32>
    %129 = vector.shape_cast %128 : vector<8xf32> to vector<8x1xf32>
    %130 = vector.broadcast %129 : vector<8x1xf32> to vector<8x8xf32>
    %131 = arith.divf %127, %130 : vector<8x8xf32>
    %132 = arith.truncf %131 : vector<8x8xf32> to vector<8x8xbf16>
    %cst_43 = arith.constant dense<0.000000e+00> : vector<8x32xf32>
    %133 = tpu.matmul %132, %119, %cst_43 {dimension_numbers = #tpu.dot_dimension_numbers<[1], [0], [0], [1], [0, 0, 1, 1], [], []>} : vector<8x8xbf16>, vector<8x32xbf16>, vector<8x32xf32> -> vector<8x32xf32>
    %134 = arith.truncf %133 : vector<8x32xf32> to vector<8x32xbf16>
    %135 = vector.extract_strided_slice %39 {offsets = [96, 0], sizes = [32, 128], strides = [1, 1]} : vector<128x128xbf16> to vector<32x128xbf16>
    %cst_44 = arith.constant dense<0.000000e+00> : vector<8x128xf32>
    %136 = tpu.matmul %134, %135, %cst_44 {dimension_numbers = #tpu.dot_dimension_numbers<[1], [0], [0], [1], [0, 0, 1, 1], [], []>} : vector<8x32xbf16>, vector<32x128xbf16>, vector<8x128xf32> -> vector<8x128xf32>
    %137 = arith.addf %113, %136 : vector<8x128xf32>
    %138 = vector.extract_strided_slice %35 {offsets = [8, 0], sizes = [8, 128], strides = [1, 1]} : vector<16x128xf32> to vector<8x128xf32>
    %139 = vector.extract_strided_slice %36 {offsets = [8, 0], sizes = [8, 128], strides = [1, 1]} : vector<16x128xf32> to vector<8x128xf32>
    %140 = vector.extract_strided_slice %37 {offsets = [8, 0], sizes = [8, 128], strides = [1, 1]} : vector<16x128xf32> to vector<8x128xf32>
    %141 = vector.extract_strided_slice %138 {offsets = [0, 0], sizes = [8, 32], strides = [1, 1]} : vector<8x128xf32> to vector<8x32xf32>
    %142 = arith.truncf %141 : vector<8x32xf32> to vector<8x32xbf16>
    %143 = vector.extract_strided_slice %139 {offsets = [0, 0], sizes = [8, 32], strides = [1, 1]} : vector<8x128xf32> to vector<8x32xf32>
    %144 = arith.truncf %143 : vector<8x32xf32> to vector<8x32xbf16>
    %145 = vector.extract_strided_slice %140 {offsets = [0, 0], sizes = [8, 32], strides = [1, 1]} : vector<8x128xf32> to vector<8x32xf32>
    %146 = arith.truncf %145 : vector<8x32xf32> to vector<8x32xbf16>
    %cst_45 = arith.constant dense<0.000000e+00> : vector<8x8xf32>
    %147 = tpu.matmul %142, %144, %cst_45 {dimension_numbers = #tpu.dot_dimension_numbers<[1], [1], [0], [0], [0, 0, 1, 0], [], []>} : vector<8x32xbf16>, vector<8x32xbf16>, vector<8x8xf32> -> vector<8x8xf32>
    %cst_46 = arith.constant 0.176776692 : f32
    %148 = vector.broadcast %cst_46 : f32 to vector<8x8xf32>
    %149 = arith.mulf %147, %148 : vector<8x8xf32>
    %cst_47 = arith.constant dense<0xFF800000> : vector<8xf32>
    %150 = vector.multi_reduction <maximumf>, %149, %cst_47 [1] : vector<8x8xf32> to vector<8xf32>
    %151 = vector.shape_cast %150 : vector<8xf32> to vector<8x1xf32>
    %152 = vector.broadcast %151 : vector<8x1xf32> to vector<8x8xf32>
    %153 = arith.subf %149, %152 : vector<8x8xf32>
    %154 = math.exp %153 : vector<8x8xf32>
    %cst_48 = arith.constant dense<0.000000e+00> : vector<8xf32>
    %155 = vector.multi_reduction <add>, %154, %cst_48 [1] : vector<8x8xf32> to vector<8xf32>
    %156 = vector.shape_cast %155 : vector<8xf32> to vector<8x1xf32>
    %157 = vector.broadcast %156 : vector<8x1xf32> to vector<8x8xf32>
    %158 = arith.divf %154, %157 : vector<8x8xf32>
    %159 = arith.truncf %158 : vector<8x8xf32> to vector<8x8xbf16>
    %cst_49 = arith.constant dense<0.000000e+00> : vector<8x32xf32>
    %160 = tpu.matmul %159, %146, %cst_49 {dimension_numbers = #tpu.dot_dimension_numbers<[1], [0], [0], [1], [0, 0, 1, 1], [], []>} : vector<8x8xbf16>, vector<8x32xbf16>, vector<8x32xf32> -> vector<8x32xf32>
    %161 = arith.truncf %160 : vector<8x32xf32> to vector<8x32xbf16>
    %162 = vector.extract_strided_slice %39 {offsets = [0, 0], sizes = [32, 128], strides = [1, 1]} : vector<128x128xbf16> to vector<32x128xbf16>
    %cst_50 = arith.constant dense<0.000000e+00> : vector<8x128xf32>
    %163 = tpu.matmul %161, %162, %cst_50 {dimension_numbers = #tpu.dot_dimension_numbers<[1], [0], [0], [1], [0, 0, 1, 1], [], []>} : vector<8x32xbf16>, vector<32x128xbf16>, vector<8x128xf32> -> vector<8x128xf32>
    %164 = vector.extract_strided_slice %138 {offsets = [0, 32], sizes = [8, 32], strides = [1, 1]} : vector<8x128xf32> to vector<8x32xf32>
    %165 = arith.truncf %164 : vector<8x32xf32> to vector<8x32xbf16>
    %166 = vector.extract_strided_slice %139 {offsets = [0, 32], sizes = [8, 32], strides = [1, 1]} : vector<8x128xf32> to vector<8x32xf32>
    %167 = arith.truncf %166 : vector<8x32xf32> to vector<8x32xbf16>
    %168 = vector.extract_strided_slice %140 {offsets = [0, 32], sizes = [8, 32], strides = [1, 1]} : vector<8x128xf32> to vector<8x32xf32>
    %169 = arith.truncf %168 : vector<8x32xf32> to vector<8x32xbf16>
    %cst_51 = arith.constant dense<0.000000e+00> : vector<8x8xf32>
    %170 = tpu.matmul %165, %167, %cst_51 {dimension_numbers = #tpu.dot_dimension_numbers<[1], [1], [0], [0], [0, 0, 1, 0], [], []>} : vector<8x32xbf16>, vector<8x32xbf16>, vector<8x8xf32> -> vector<8x8xf32>
    %cst_52 = arith.constant 0.176776692 : f32
    %171 = vector.broadcast %cst_52 : f32 to vector<8x8xf32>
    %172 = arith.mulf %170, %171 : vector<8x8xf32>
    %cst_53 = arith.constant dense<0xFF800000> : vector<8xf32>
    %173 = vector.multi_reduction <maximumf>, %172, %cst_53 [1] : vector<8x8xf32> to vector<8xf32>
    %174 = vector.shape_cast %173 : vector<8xf32> to vector<8x1xf32>
    %175 = vector.broadcast %174 : vector<8x1xf32> to vector<8x8xf32>
    %176 = arith.subf %172, %175 : vector<8x8xf32>
    %177 = math.exp %176 : vector<8x8xf32>
    %cst_54 = arith.constant dense<0.000000e+00> : vector<8xf32>
    %178 = vector.multi_reduction <add>, %177, %cst_54 [1] : vector<8x8xf32> to vector<8xf32>
    %179 = vector.shape_cast %178 : vector<8xf32> to vector<8x1xf32>
    %180 = vector.broadcast %179 : vector<8x1xf32> to vector<8x8xf32>
    %181 = arith.divf %177, %180 : vector<8x8xf32>
    %182 = arith.truncf %181 : vector<8x8xf32> to vector<8x8xbf16>
    %cst_55 = arith.constant dense<0.000000e+00> : vector<8x32xf32>
    %183 = tpu.matmul %182, %169, %cst_55 {dimension_numbers = #tpu.dot_dimension_numbers<[1], [0], [0], [1], [0, 0, 1, 1], [], []>} : vector<8x8xbf16>, vector<8x32xbf16>, vector<8x32xf32> -> vector<8x32xf32>
    %184 = arith.truncf %183 : vector<8x32xf32> to vector<8x32xbf16>
    %185 = vector.extract_strided_slice %39 {offsets = [32, 0], sizes = [32, 128], strides = [1, 1]} : vector<128x128xbf16> to vector<32x128xbf16>
    %cst_56 = arith.constant dense<0.000000e+00> : vector<8x128xf32>
    %186 = tpu.matmul %184, %185, %cst_56 {dimension_numbers = #tpu.dot_dimension_numbers<[1], [0], [0], [1], [0, 0, 1, 1], [], []>} : vector<8x32xbf16>, vector<32x128xbf16>, vector<8x128xf32> -> vector<8x128xf32>
    %187 = arith.addf %163, %186 : vector<8x128xf32>
    %188 = vector.extract_strided_slice %138 {offsets = [0, 64], sizes = [8, 32], strides = [1, 1]} : vector<8x128xf32> to vector<8x32xf32>
    %189 = arith.truncf %188 : vector<8x32xf32> to vector<8x32xbf16>
    %190 = vector.extract_strided_slice %139 {offsets = [0, 64], sizes = [8, 32], strides = [1, 1]} : vector<8x128xf32> to vector<8x32xf32>
    %191 = arith.truncf %190 : vector<8x32xf32> to vector<8x32xbf16>
    %192 = vector.extract_strided_slice %140 {offsets = [0, 64], sizes = [8, 32], strides = [1, 1]} : vector<8x128xf32> to vector<8x32xf32>
    %193 = arith.truncf %192 : vector<8x32xf32> to vector<8x32xbf16>
    %cst_57 = arith.constant dense<0.000000e+00> : vector<8x8xf32>
    %194 = tpu.matmul %189, %191, %cst_57 {dimension_numbers = #tpu.dot_dimension_numbers<[1], [1], [0], [0], [0, 0, 1, 0], [], []>} : vector<8x32xbf16>, vector<8x32xbf16>, vector<8x8xf32> -> vector<8x8xf32>
    %cst_58 = arith.constant 0.176776692 : f32
    %195 = vector.broadcast %cst_58 : f32 to vector<8x8xf32>
    %196 = arith.mulf %194, %195 : vector<8x8xf32>
    %cst_59 = arith.constant dense<0xFF800000> : vector<8xf32>
    %197 = vector.multi_reduction <maximumf>, %196, %cst_59 [1] : vector<8x8xf32> to vector<8xf32>
    %198 = vector.shape_cast %197 : vector<8xf32> to vector<8x1xf32>
    %199 = vector.broadcast %198 : vector<8x1xf32> to vector<8x8xf32>
    %200 = arith.subf %196, %199 : vector<8x8xf32>
    %201 = math.exp %200 : vector<8x8xf32>
    %cst_60 = arith.constant dense<0.000000e+00> : vector<8xf32>
    %202 = vector.multi_reduction <add>, %201, %cst_60 [1] : vector<8x8xf32> to vector<8xf32>
    %203 = vector.shape_cast %202 : vector<8xf32> to vector<8x1xf32>
    %204 = vector.broadcast %203 : vector<8x1xf32> to vector<8x8xf32>
    %205 = arith.divf %201, %204 : vector<8x8xf32>
    %206 = arith.truncf %205 : vector<8x8xf32> to vector<8x8xbf16>
    %cst_61 = arith.constant dense<0.000000e+00> : vector<8x32xf32>
    %207 = tpu.matmul %206, %193, %cst_61 {dimension_numbers = #tpu.dot_dimension_numbers<[1], [0], [0], [1], [0, 0, 1, 1], [], []>} : vector<8x8xbf16>, vector<8x32xbf16>, vector<8x32xf32> -> vector<8x32xf32>
    %208 = arith.truncf %207 : vector<8x32xf32> to vector<8x32xbf16>
    %209 = vector.extract_strided_slice %39 {offsets = [64, 0], sizes = [32, 128], strides = [1, 1]} : vector<128x128xbf16> to vector<32x128xbf16>
    %cst_62 = arith.constant dense<0.000000e+00> : vector<8x128xf32>
    %210 = tpu.matmul %208, %209, %cst_62 {dimension_numbers = #tpu.dot_dimension_numbers<[1], [0], [0], [1], [0, 0, 1, 1], [], []>} : vector<8x32xbf16>, vector<32x128xbf16>, vector<8x128xf32> -> vector<8x128xf32>
    %211 = arith.addf %187, %210 : vector<8x128xf32>
    %212 = vector.extract_strided_slice %138 {offsets = [0, 96], sizes = [8, 32], strides = [1, 1]} : vector<8x128xf32> to vector<8x32xf32>
    %213 = arith.truncf %212 : vector<8x32xf32> to vector<8x32xbf16>
    %214 = vector.extract_strided_slice %139 {offsets = [0, 96], sizes = [8, 32], strides = [1, 1]} : vector<8x128xf32> to vector<8x32xf32>
    %215 = arith.truncf %214 : vector<8x32xf32> to vector<8x32xbf16>
    %216 = vector.extract_strided_slice %140 {offsets = [0, 96], sizes = [8, 32], strides = [1, 1]} : vector<8x128xf32> to vector<8x32xf32>
    %217 = arith.truncf %216 : vector<8x32xf32> to vector<8x32xbf16>
    %cst_63 = arith.constant dense<0.000000e+00> : vector<8x8xf32>
    %218 = tpu.matmul %213, %215, %cst_63 {dimension_numbers = #tpu.dot_dimension_numbers<[1], [1], [0], [0], [0, 0, 1, 0], [], []>} : vector<8x32xbf16>, vector<8x32xbf16>, vector<8x8xf32> -> vector<8x8xf32>
    %cst_64 = arith.constant 0.176776692 : f32
    %219 = vector.broadcast %cst_64 : f32 to vector<8x8xf32>
    %220 = arith.mulf %218, %219 : vector<8x8xf32>
    %cst_65 = arith.constant dense<0xFF800000> : vector<8xf32>
    %221 = vector.multi_reduction <maximumf>, %220, %cst_65 [1] : vector<8x8xf32> to vector<8xf32>
    %222 = vector.shape_cast %221 : vector<8xf32> to vector<8x1xf32>
    %223 = vector.broadcast %222 : vector<8x1xf32> to vector<8x8xf32>
    %224 = arith.subf %220, %223 : vector<8x8xf32>
    %225 = math.exp %224 : vector<8x8xf32>
    %cst_66 = arith.constant dense<0.000000e+00> : vector<8xf32>
    %226 = vector.multi_reduction <add>, %225, %cst_66 [1] : vector<8x8xf32> to vector<8xf32>
    %227 = vector.shape_cast %226 : vector<8xf32> to vector<8x1xf32>
    %228 = vector.broadcast %227 : vector<8x1xf32> to vector<8x8xf32>
    %229 = arith.divf %225, %228 : vector<8x8xf32>
    %230 = arith.truncf %229 : vector<8x8xf32> to vector<8x8xbf16>
    %cst_67 = arith.constant dense<0.000000e+00> : vector<8x32xf32>
    %231 = tpu.matmul %230, %217, %cst_67 {dimension_numbers = #tpu.dot_dimension_numbers<[1], [0], [0], [1], [0, 0, 1, 1], [], []>} : vector<8x8xbf16>, vector<8x32xbf16>, vector<8x32xf32> -> vector<8x32xf32>
    %232 = arith.truncf %231 : vector<8x32xf32> to vector<8x32xbf16>
    %233 = vector.extract_strided_slice %39 {offsets = [96, 0], sizes = [32, 128], strides = [1, 1]} : vector<128x128xbf16> to vector<32x128xbf16>
    %cst_68 = arith.constant dense<0.000000e+00> : vector<8x128xf32>
    %234 = tpu.matmul %232, %233, %cst_68 {dimension_numbers = #tpu.dot_dimension_numbers<[1], [0], [0], [1], [0, 0, 1, 1], [], []>} : vector<8x32xbf16>, vector<32x128xbf16>, vector<8x128xf32> -> vector<8x128xf32>
    %235 = arith.addf %211, %234 : vector<8x128xf32>
    %236 = tpu.concatenate %137, %235 in 0 : vector<8x128xf32>, vector<8x128xf32> -> vector<16x128xf32>
    %237 = arith.addf %3, %236 : vector<16x128xf32>
    %c0_69 = arith.constant 0 : index
    %c0_70 = arith.constant 0 : index
    %c0_71 = arith.constant 0 : index
    %238 = vector.load %arg21[%c0_69, %c0_70, %c0_71] : memref<1x1x128xbf16, #tpu.memory_space<vmem>>, vector<1x1x128xbf16>
    %239 = vector.shape_cast %238 : vector<1x1x128xbf16> to vector<1x128xbf16>
    %240 = arith.extf %239 : vector<1x128xbf16> to vector<1x128xf32>
    %241 = vector.broadcast %240 : vector<1x128xf32> to vector<16x128xf32>
    %242 = arith.addf %237, %241 : vector<16x128xf32>
    %c0_72 = arith.constant 0 : index
    %c0_73 = arith.constant 0 : index
    %c0_74 = arith.constant 0 : index
    %243 = vector.load %arg22[%c0_72, %c0_73, %c0_74] : memref<1x1x128xbf16, #tpu.memory_space<vmem>>, vector<1x1x128xbf16>
    %244 = vector.shape_cast %243 : vector<1x1x128xbf16> to vector<1x128xbf16>
    %245 = arith.extf %244 : vector<1x128xbf16> to vector<1x128xf32>
    %c0_75 = arith.constant 0 : index
    %c0_76 = arith.constant 0 : index
    %c0_77 = arith.constant 0 : index
    %246 = vector.load %arg23[%c0_75, %c0_76, %c0_77] : memref<1x1x128xbf16, #tpu.memory_space<vmem>>, vector<1x1x128xbf16>
    %247 = vector.shape_cast %246 : vector<1x1x128xbf16> to vector<1x128xbf16>
    %248 = arith.extf %247 : vector<1x128xbf16> to vector<1x128xf32>
    %cst_78 = arith.constant dense<0.000000e+00> : vector<16xf32>
    %249 = vector.multi_reduction <add>, %242, %cst_78 [1] : vector<16x128xf32> to vector<16xf32>
    %250 = vector.shape_cast %249 : vector<16xf32> to vector<16x1xf32>
    %cst_79 = arith.constant 1.280000e+02 : f32
    %251 = vector.broadcast %cst_79 : f32 to vector<16x1xf32>
    %252 = arith.divf %250, %251 : vector<16x1xf32>
    %253 = vector.broadcast %252 : vector<16x1xf32> to vector<16x128xf32>
    %254 = arith.subf %242, %253 : vector<16x128xf32>
    %255 = arith.mulf %254, %254 : vector<16x128xf32>
    %cst_80 = arith.constant dense<0.000000e+00> : vector<16xf32>
    %256 = vector.multi_reduction <add>, %255, %cst_80 [1] : vector<16x128xf32> to vector<16xf32>
    %257 = vector.shape_cast %256 : vector<16xf32> to vector<16x1xf32>
    %cst_81 = arith.constant 1.280000e+02 : f32
    %258 = vector.broadcast %cst_81 : f32 to vector<16x1xf32>
    %259 = arith.divf %257, %258 : vector<16x1xf32>
    %cst_82 = arith.constant 9.99999974E-6 : f32
    %260 = vector.broadcast %cst_82 : f32 to vector<16x1xf32>
    %261 = arith.addf %259, %260 : vector<16x1xf32>
    %262 = math.rsqrt %261 : vector<16x1xf32>
    %263 = vector.broadcast %262 : vector<16x1xf32> to vector<16x128xf32>
    %264 = arith.mulf %254, %263 : vector<16x128xf32>
    %265 = vector.broadcast %245 : vector<1x128xf32> to vector<16x128xf32>
    %266 = arith.mulf %264, %265 : vector<16x128xf32>
    %267 = vector.broadcast %248 : vector<1x128xf32> to vector<16x128xf32>
    %268 = arith.addf %266, %267 : vector<16x128xf32>
    %c0_83 = arith.constant 0 : index
    %c0_84 = arith.constant 0 : index
    %c0_85 = arith.constant 0 : index
    %269 = vector.load %arg24[%c0_83, %c0_84, %c0_85] : memref<1x128x128xbf16, #tpu.memory_space<vmem>>, vector<1x128x128xbf16>
    %270 = vector.shape_cast %269 : vector<1x128x128xbf16> to vector<128x128xbf16>
    %271 = arith.truncf %268 : vector<16x128xf32> to vector<16x128xbf16>
    %cst_86 = arith.constant dense<0.000000e+00> : vector<16x128xf32>
    %272 = tpu.matmul %271, %270, %cst_86 {dimension_numbers = #tpu.dot_dimension_numbers<[1], [0], [0], [1], [0, 0, 1, 1], [], []>} : vector<16x128xbf16>, vector<128x128xbf16>, vector<16x128xf32> -> vector<16x128xf32>
    %c0_87 = arith.constant 0 : index
    %c0_88 = arith.constant 0 : index
    %c0_89 = arith.constant 0 : index
    %273 = vector.load %arg25[%c0_87, %c0_88, %c0_89] : memref<1x128x256xbf16, #tpu.memory_space<vmem>>, vector<1x128x256xbf16>
    %274 = vector.shape_cast %273 : vector<1x128x256xbf16> to vector<128x256xbf16>
    %275 = arith.truncf %4 : vector<32x128xf32> to vector<32x128xbf16>
    %cst_90 = arith.constant dense<0.000000e+00> : vector<32x256xf32>
    %276 = tpu.matmul %275, %274, %cst_90 {dimension_numbers = #tpu.dot_dimension_numbers<[1], [0], [0], [1], [0, 0, 1, 1], [], []>} : vector<32x128xbf16>, vector<128x256xbf16>, vector<32x256xf32> -> vector<32x256xf32>
    %277 = vector.extract_strided_slice %276 {offsets = [0, 0], sizes = [32, 128], strides = [1, 1]} : vector<32x256xf32> to vector<32x128xf32>
    %278 = vector.extract_strided_slice %276 {offsets = [0, 128], sizes = [32, 128], strides = [1, 1]} : vector<32x256xf32> to vector<32x128xf32>
    %c0_91 = arith.constant 0 : index
    %c0_92 = arith.constant 0 : index
    %c0_93 = arith.constant 0 : index
    %279 = vector.load %arg26[%c0_91, %c0_92, %c0_93] : memref<1x128x128xbf16, #tpu.memory_space<vmem>>, vector<1x128x128xbf16>
    %280 = vector.shape_cast %279 : vector<1x128x128xbf16> to vector<128x128xbf16>
    %281 = vector.extract_strided_slice %272 {offsets = [0, 0], sizes = [8, 128], strides = [1, 1]} : vector<16x128xf32> to vector<8x128xf32>
    %282 = vector.extract_strided_slice %277 {offsets = [0, 0], sizes = [16, 128], strides = [1, 1]} : vector<32x128xf32> to vector<16x128xf32>
    %283 = vector.extract_strided_slice %278 {offsets = [0, 0], sizes = [16, 128], strides = [1, 1]} : vector<32x128xf32> to vector<16x128xf32>
    %284 = vector.extract_strided_slice %281 {offsets = [0, 0], sizes = [8, 32], strides = [1, 1]} : vector<8x128xf32> to vector<8x32xf32>
    %285 = arith.truncf %284 : vector<8x32xf32> to vector<8x32xbf16>
    %286 = vector.extract_strided_slice %282 {offsets = [0, 0], sizes = [16, 32], strides = [1, 1]} : vector<16x128xf32> to vector<16x32xf32>
    %287 = arith.truncf %286 : vector<16x32xf32> to vector<16x32xbf16>
    %288 = vector.extract_strided_slice %283 {offsets = [0, 0], sizes = [16, 32], strides = [1, 1]} : vector<16x128xf32> to vector<16x32xf32>
    %289 = arith.truncf %288 : vector<16x32xf32> to vector<16x32xbf16>
    %cst_94 = arith.constant dense<0.000000e+00> : vector<8x16xf32>
    %290 = tpu.matmul %285, %287, %cst_94 {dimension_numbers = #tpu.dot_dimension_numbers<[1], [1], [0], [0], [0, 0, 1, 0], [], []>} : vector<8x32xbf16>, vector<16x32xbf16>, vector<8x16xf32> -> vector<8x16xf32>
    %cst_95 = arith.constant 0.176776692 : f32
    %291 = vector.broadcast %cst_95 : f32 to vector<8x16xf32>
    %292 = arith.mulf %290, %291 : vector<8x16xf32>
    %cst_96 = arith.constant dense<0xFF800000> : vector<8xf32>
    %293 = vector.multi_reduction <maximumf>, %292, %cst_96 [1] : vector<8x16xf32> to vector<8xf32>
    %294 = vector.shape_cast %293 : vector<8xf32> to vector<8x1xf32>
    %295 = vector.broadcast %294 : vector<8x1xf32> to vector<8x16xf32>
    %296 = arith.subf %292, %295 : vector<8x16xf32>
    %297 = math.exp %296 : vector<8x16xf32>
    %cst_97 = arith.constant dense<0.000000e+00> : vector<8xf32>
    %298 = vector.multi_reduction <add>, %297, %cst_97 [1] : vector<8x16xf32> to vector<8xf32>
    %299 = vector.shape_cast %298 : vector<8xf32> to vector<8x1xf32>
    %300 = vector.broadcast %299 : vector<8x1xf32> to vector<8x16xf32>
    %301 = arith.divf %297, %300 : vector<8x16xf32>
    %302 = arith.truncf %301 : vector<8x16xf32> to vector<8x16xbf16>
    %cst_98 = arith.constant dense<0.000000e+00> : vector<8x32xf32>
    %303 = tpu.matmul %302, %289, %cst_98 {dimension_numbers = #tpu.dot_dimension_numbers<[1], [0], [0], [1], [0, 0, 1, 1], [], []>} : vector<8x16xbf16>, vector<16x32xbf16>, vector<8x32xf32> -> vector<8x32xf32>
    %304 = arith.truncf %303 : vector<8x32xf32> to vector<8x32xbf16>
    %305 = vector.extract_strided_slice %280 {offsets = [0, 0], sizes = [32, 128], strides = [1, 1]} : vector<128x128xbf16> to vector<32x128xbf16>
    %cst_99 = arith.constant dense<0.000000e+00> : vector<8x128xf32>
    %306 = tpu.matmul %304, %305, %cst_99 {dimension_numbers = #tpu.dot_dimension_numbers<[1], [0], [0], [1], [0, 0, 1, 1], [], []>} : vector<8x32xbf16>, vector<32x128xbf16>, vector<8x128xf32> -> vector<8x128xf32>
    %307 = vector.extract_strided_slice %281 {offsets = [0, 32], sizes = [8, 32], strides = [1, 1]} : vector<8x128xf32> to vector<8x32xf32>
    %308 = arith.truncf %307 : vector<8x32xf32> to vector<8x32xbf16>
    %309 = vector.extract_strided_slice %282 {offsets = [0, 32], sizes = [16, 32], strides = [1, 1]} : vector<16x128xf32> to vector<16x32xf32>
    %310 = arith.truncf %309 : vector<16x32xf32> to vector<16x32xbf16>
    %311 = vector.extract_strided_slice %283 {offsets = [0, 32], sizes = [16, 32], strides = [1, 1]} : vector<16x128xf32> to vector<16x32xf32>
    %312 = arith.truncf %311 : vector<16x32xf32> to vector<16x32xbf16>
    %cst_100 = arith.constant dense<0.000000e+00> : vector<8x16xf32>
    %313 = tpu.matmul %308, %310, %cst_100 {dimension_numbers = #tpu.dot_dimension_numbers<[1], [1], [0], [0], [0, 0, 1, 0], [], []>} : vector<8x32xbf16>, vector<16x32xbf16>, vector<8x16xf32> -> vector<8x16xf32>
    %cst_101 = arith.constant 0.176776692 : f32
    %314 = vector.broadcast %cst_101 : f32 to vector<8x16xf32>
    %315 = arith.mulf %313, %314 : vector<8x16xf32>
    %cst_102 = arith.constant dense<0xFF800000> : vector<8xf32>
    %316 = vector.multi_reduction <maximumf>, %315, %cst_102 [1] : vector<8x16xf32> to vector<8xf32>
    %317 = vector.shape_cast %316 : vector<8xf32> to vector<8x1xf32>
    %318 = vector.broadcast %317 : vector<8x1xf32> to vector<8x16xf32>
    %319 = arith.subf %315, %318 : vector<8x16xf32>
    %320 = math.exp %319 : vector<8x16xf32>
    %cst_103 = arith.constant dense<0.000000e+00> : vector<8xf32>
    %321 = vector.multi_reduction <add>, %320, %cst_103 [1] : vector<8x16xf32> to vector<8xf32>
    %322 = vector.shape_cast %321 : vector<8xf32> to vector<8x1xf32>
    %323 = vector.broadcast %322 : vector<8x1xf32> to vector<8x16xf32>
    %324 = arith.divf %320, %323 : vector<8x16xf32>
    %325 = arith.truncf %324 : vector<8x16xf32> to vector<8x16xbf16>
    %cst_104 = arith.constant dense<0.000000e+00> : vector<8x32xf32>
    %326 = tpu.matmul %325, %312, %cst_104 {dimension_numbers = #tpu.dot_dimension_numbers<[1], [0], [0], [1], [0, 0, 1, 1], [], []>} : vector<8x16xbf16>, vector<16x32xbf16>, vector<8x32xf32> -> vector<8x32xf32>
    %327 = arith.truncf %326 : vector<8x32xf32> to vector<8x32xbf16>
    %328 = vector.extract_strided_slice %280 {offsets = [32, 0], sizes = [32, 128], strides = [1, 1]} : vector<128x128xbf16> to vector<32x128xbf16>
    %cst_105 = arith.constant dense<0.000000e+00> : vector<8x128xf32>
    %329 = tpu.matmul %327, %328, %cst_105 {dimension_numbers = #tpu.dot_dimension_numbers<[1], [0], [0], [1], [0, 0, 1, 1], [], []>} : vector<8x32xbf16>, vector<32x128xbf16>, vector<8x128xf32> -> vector<8x128xf32>
    %330 = arith.addf %306, %329 : vector<8x128xf32>
    %331 = vector.extract_strided_slice %281 {offsets = [0, 64], sizes = [8, 32], strides = [1, 1]} : vector<8x128xf32> to vector<8x32xf32>
    %332 = arith.truncf %331 : vector<8x32xf32> to vector<8x32xbf16>
    %333 = vector.extract_strided_slice %282 {offsets = [0, 64], sizes = [16, 32], strides = [1, 1]} : vector<16x128xf32> to vector<16x32xf32>
    %334 = arith.truncf %333 : vector<16x32xf32> to vector<16x32xbf16>
    %335 = vector.extract_strided_slice %283 {offsets = [0, 64], sizes = [16, 32], strides = [1, 1]} : vector<16x128xf32> to vector<16x32xf32>
    %336 = arith.truncf %335 : vector<16x32xf32> to vector<16x32xbf16>
    %cst_106 = arith.constant dense<0.000000e+00> : vector<8x16xf32>
    %337 = tpu.matmul %332, %334, %cst_106 {dimension_numbers = #tpu.dot_dimension_numbers<[1], [1], [0], [0], [0, 0, 1, 0], [], []>} : vector<8x32xbf16>, vector<16x32xbf16>, vector<8x16xf32> -> vector<8x16xf32>
    %cst_107 = arith.constant 0.176776692 : f32
    %338 = vector.broadcast %cst_107 : f32 to vector<8x16xf32>
    %339 = arith.mulf %337, %338 : vector<8x16xf32>
    %cst_108 = arith.constant dense<0xFF800000> : vector<8xf32>
    %340 = vector.multi_reduction <maximumf>, %339, %cst_108 [1] : vector<8x16xf32> to vector<8xf32>
    %341 = vector.shape_cast %340 : vector<8xf32> to vector<8x1xf32>
    %342 = vector.broadcast %341 : vector<8x1xf32> to vector<8x16xf32>
    %343 = arith.subf %339, %342 : vector<8x16xf32>
    %344 = math.exp %343 : vector<8x16xf32>
    %cst_109 = arith.constant dense<0.000000e+00> : vector<8xf32>
    %345 = vector.multi_reduction <add>, %344, %cst_109 [1] : vector<8x16xf32> to vector<8xf32>
    %346 = vector.shape_cast %345 : vector<8xf32> to vector<8x1xf32>
    %347 = vector.broadcast %346 : vector<8x1xf32> to vector<8x16xf32>
    %348 = arith.divf %344, %347 : vector<8x16xf32>
    %349 = arith.truncf %348 : vector<8x16xf32> to vector<8x16xbf16>
    %cst_110 = arith.constant dense<0.000000e+00> : vector<8x32xf32>
    %350 = tpu.matmul %349, %336, %cst_110 {dimension_numbers = #tpu.dot_dimension_numbers<[1], [0], [0], [1], [0, 0, 1, 1], [], []>} : vector<8x16xbf16>, vector<16x32xbf16>, vector<8x32xf32> -> vector<8x32xf32>
    %351 = arith.truncf %350 : vector<8x32xf32> to vector<8x32xbf16>
    %352 = vector.extract_strided_slice %280 {offsets = [64, 0], sizes = [32, 128], strides = [1, 1]} : vector<128x128xbf16> to vector<32x128xbf16>
    %cst_111 = arith.constant dense<0.000000e+00> : vector<8x128xf32>
    %353 = tpu.matmul %351, %352, %cst_111 {dimension_numbers = #tpu.dot_dimension_numbers<[1], [0], [0], [1], [0, 0, 1, 1], [], []>} : vector<8x32xbf16>, vector<32x128xbf16>, vector<8x128xf32> -> vector<8x128xf32>
    %354 = arith.addf %330, %353 : vector<8x128xf32>
    %355 = vector.extract_strided_slice %281 {offsets = [0, 96], sizes = [8, 32], strides = [1, 1]} : vector<8x128xf32> to vector<8x32xf32>
    %356 = arith.truncf %355 : vector<8x32xf32> to vector<8x32xbf16>
    %357 = vector.extract_strided_slice %282 {offsets = [0, 96], sizes = [16, 32], strides = [1, 1]} : vector<16x128xf32> to vector<16x32xf32>
    %358 = arith.truncf %357 : vector<16x32xf32> to vector<16x32xbf16>
    %359 = vector.extract_strided_slice %283 {offsets = [0, 96], sizes = [16, 32], strides = [1, 1]} : vector<16x128xf32> to vector<16x32xf32>
    %360 = arith.truncf %359 : vector<16x32xf32> to vector<16x32xbf16>
    %cst_112 = arith.constant dense<0.000000e+00> : vector<8x16xf32>
    %361 = tpu.matmul %356, %358, %cst_112 {dimension_numbers = #tpu.dot_dimension_numbers<[1], [1], [0], [0], [0, 0, 1, 0], [], []>} : vector<8x32xbf16>, vector<16x32xbf16>, vector<8x16xf32> -> vector<8x16xf32>
    %cst_113 = arith.constant 0.176776692 : f32
    %362 = vector.broadcast %cst_113 : f32 to vector<8x16xf32>
    %363 = arith.mulf %361, %362 : vector<8x16xf32>
    %cst_114 = arith.constant dense<0xFF800000> : vector<8xf32>
    %364 = vector.multi_reduction <maximumf>, %363, %cst_114 [1] : vector<8x16xf32> to vector<8xf32>
    %365 = vector.shape_cast %364 : vector<8xf32> to vector<8x1xf32>
    %366 = vector.broadcast %365 : vector<8x1xf32> to vector<8x16xf32>
    %367 = arith.subf %363, %366 : vector<8x16xf32>
    %368 = math.exp %367 : vector<8x16xf32>
    %cst_115 = arith.constant dense<0.000000e+00> : vector<8xf32>
    %369 = vector.multi_reduction <add>, %368, %cst_115 [1] : vector<8x16xf32> to vector<8xf32>
    %370 = vector.shape_cast %369 : vector<8xf32> to vector<8x1xf32>
    %371 = vector.broadcast %370 : vector<8x1xf32> to vector<8x16xf32>
    %372 = arith.divf %368, %371 : vector<8x16xf32>
    %373 = arith.truncf %372 : vector<8x16xf32> to vector<8x16xbf16>
    %cst_116 = arith.constant dense<0.000000e+00> : vector<8x32xf32>
    %374 = tpu.matmul %373, %360, %cst_116 {dimension_numbers = #tpu.dot_dimension_numbers<[1], [0], [0], [1], [0, 0, 1, 1], [], []>} : vector<8x16xbf16>, vector<16x32xbf16>, vector<8x32xf32> -> vector<8x32xf32>
    %375 = arith.truncf %374 : vector<8x32xf32> to vector<8x32xbf16>
    %376 = vector.extract_strided_slice %280 {offsets = [96, 0], sizes = [32, 128], strides = [1, 1]} : vector<128x128xbf16> to vector<32x128xbf16>
    %cst_117 = arith.constant dense<0.000000e+00> : vector<8x128xf32>
    %377 = tpu.matmul %375, %376, %cst_117 {dimension_numbers = #tpu.dot_dimension_numbers<[1], [0], [0], [1], [0, 0, 1, 1], [], []>} : vector<8x32xbf16>, vector<32x128xbf16>, vector<8x128xf32> -> vector<8x128xf32>
    %378 = arith.addf %354, %377 : vector<8x128xf32>
    %379 = vector.extract_strided_slice %272 {offsets = [8, 0], sizes = [8, 128], strides = [1, 1]} : vector<16x128xf32> to vector<8x128xf32>
    %380 = vector.extract_strided_slice %277 {offsets = [16, 0], sizes = [16, 128], strides = [1, 1]} : vector<32x128xf32> to vector<16x128xf32>
    %381 = vector.extract_strided_slice %278 {offsets = [16, 0], sizes = [16, 128], strides = [1, 1]} : vector<32x128xf32> to vector<16x128xf32>
    %382 = vector.extract_strided_slice %379 {offsets = [0, 0], sizes = [8, 32], strides = [1, 1]} : vector<8x128xf32> to vector<8x32xf32>
    %383 = arith.truncf %382 : vector<8x32xf32> to vector<8x32xbf16>
    %384 = vector.extract_strided_slice %380 {offsets = [0, 0], sizes = [16, 32], strides = [1, 1]} : vector<16x128xf32> to vector<16x32xf32>
    %385 = arith.truncf %384 : vector<16x32xf32> to vector<16x32xbf16>
    %386 = vector.extract_strided_slice %381 {offsets = [0, 0], sizes = [16, 32], strides = [1, 1]} : vector<16x128xf32> to vector<16x32xf32>
    %387 = arith.truncf %386 : vector<16x32xf32> to vector<16x32xbf16>
    %cst_118 = arith.constant dense<0.000000e+00> : vector<8x16xf32>
    %388 = tpu.matmul %383, %385, %cst_118 {dimension_numbers = #tpu.dot_dimension_numbers<[1], [1], [0], [0], [0, 0, 1, 0], [], []>} : vector<8x32xbf16>, vector<16x32xbf16>, vector<8x16xf32> -> vector<8x16xf32>
    %cst_119 = arith.constant 0.176776692 : f32
    %389 = vector.broadcast %cst_119 : f32 to vector<8x16xf32>
    %390 = arith.mulf %388, %389 : vector<8x16xf32>
    %cst_120 = arith.constant dense<0xFF800000> : vector<8xf32>
    %391 = vector.multi_reduction <maximumf>, %390, %cst_120 [1] : vector<8x16xf32> to vector<8xf32>
    %392 = vector.shape_cast %391 : vector<8xf32> to vector<8x1xf32>
    %393 = vector.broadcast %392 : vector<8x1xf32> to vector<8x16xf32>
    %394 = arith.subf %390, %393 : vector<8x16xf32>
    %395 = math.exp %394 : vector<8x16xf32>
    %cst_121 = arith.constant dense<0.000000e+00> : vector<8xf32>
    %396 = vector.multi_reduction <add>, %395, %cst_121 [1] : vector<8x16xf32> to vector<8xf32>
    %397 = vector.shape_cast %396 : vector<8xf32> to vector<8x1xf32>
    %398 = vector.broadcast %397 : vector<8x1xf32> to vector<8x16xf32>
    %399 = arith.divf %395, %398 : vector<8x16xf32>
    %400 = arith.truncf %399 : vector<8x16xf32> to vector<8x16xbf16>
    %cst_122 = arith.constant dense<0.000000e+00> : vector<8x32xf32>
    %401 = tpu.matmul %400, %387, %cst_122 {dimension_numbers = #tpu.dot_dimension_numbers<[1], [0], [0], [1], [0, 0, 1, 1], [], []>} : vector<8x16xbf16>, vector<16x32xbf16>, vector<8x32xf32> -> vector<8x32xf32>
    %402 = arith.truncf %401 : vector<8x32xf32> to vector<8x32xbf16>
    %403 = vector.extract_strided_slice %280 {offsets = [0, 0], sizes = [32, 128], strides = [1, 1]} : vector<128x128xbf16> to vector<32x128xbf16>
    %cst_123 = arith.constant dense<0.000000e+00> : vector<8x128xf32>
    %404 = tpu.matmul %402, %403, %cst_123 {dimension_numbers = #tpu.dot_dimension_numbers<[1], [0], [0], [1], [0, 0, 1, 1], [], []>} : vector<8x32xbf16>, vector<32x128xbf16>, vector<8x128xf32> -> vector<8x128xf32>
    %405 = vector.extract_strided_slice %379 {offsets = [0, 32], sizes = [8, 32], strides = [1, 1]} : vector<8x128xf32> to vector<8x32xf32>
    %406 = arith.truncf %405 : vector<8x32xf32> to vector<8x32xbf16>
    %407 = vector.extract_strided_slice %380 {offsets = [0, 32], sizes = [16, 32], strides = [1, 1]} : vector<16x128xf32> to vector<16x32xf32>
    %408 = arith.truncf %407 : vector<16x32xf32> to vector<16x32xbf16>
    %409 = vector.extract_strided_slice %381 {offsets = [0, 32], sizes = [16, 32], strides = [1, 1]} : vector<16x128xf32> to vector<16x32xf32>
    %410 = arith.truncf %409 : vector<16x32xf32> to vector<16x32xbf16>
    %cst_124 = arith.constant dense<0.000000e+00> : vector<8x16xf32>
    %411 = tpu.matmul %406, %408, %cst_124 {dimension_numbers = #tpu.dot_dimension_numbers<[1], [1], [0], [0], [0, 0, 1, 0], [], []>} : vector<8x32xbf16>, vector<16x32xbf16>, vector<8x16xf32> -> vector<8x16xf32>
    %cst_125 = arith.constant 0.176776692 : f32
    %412 = vector.broadcast %cst_125 : f32 to vector<8x16xf32>
    %413 = arith.mulf %411, %412 : vector<8x16xf32>
    %cst_126 = arith.constant dense<0xFF800000> : vector<8xf32>
    %414 = vector.multi_reduction <maximumf>, %413, %cst_126 [1] : vector<8x16xf32> to vector<8xf32>
    %415 = vector.shape_cast %414 : vector<8xf32> to vector<8x1xf32>
    %416 = vector.broadcast %415 : vector<8x1xf32> to vector<8x16xf32>
    %417 = arith.subf %413, %416 : vector<8x16xf32>
    %418 = math.exp %417 : vector<8x16xf32>
    %cst_127 = arith.constant dense<0.000000e+00> : vector<8xf32>
    %419 = vector.multi_reduction <add>, %418, %cst_127 [1] : vector<8x16xf32> to vector<8xf32>
    %420 = vector.shape_cast %419 : vector<8xf32> to vector<8x1xf32>
    %421 = vector.broadcast %420 : vector<8x1xf32> to vector<8x16xf32>
    %422 = arith.divf %418, %421 : vector<8x16xf32>
    %423 = arith.truncf %422 : vector<8x16xf32> to vector<8x16xbf16>
    %cst_128 = arith.constant dense<0.000000e+00> : vector<8x32xf32>
    %424 = tpu.matmul %423, %410, %cst_128 {dimension_numbers = #tpu.dot_dimension_numbers<[1], [0], [0], [1], [0, 0, 1, 1], [], []>} : vector<8x16xbf16>, vector<16x32xbf16>, vector<8x32xf32> -> vector<8x32xf32>
    %425 = arith.truncf %424 : vector<8x32xf32> to vector<8x32xbf16>
    %426 = vector.extract_strided_slice %280 {offsets = [32, 0], sizes = [32, 128], strides = [1, 1]} : vector<128x128xbf16> to vector<32x128xbf16>
    %cst_129 = arith.constant dense<0.000000e+00> : vector<8x128xf32>
    %427 = tpu.matmul %425, %426, %cst_129 {dimension_numbers = #tpu.dot_dimension_numbers<[1], [0], [0], [1], [0, 0, 1, 1], [], []>} : vector<8x32xbf16>, vector<32x128xbf16>, vector<8x128xf32> -> vector<8x128xf32>
    %428 = arith.addf %404, %427 : vector<8x128xf32>
    %429 = vector.extract_strided_slice %379 {offsets = [0, 64], sizes = [8, 32], strides = [1, 1]} : vector<8x128xf32> to vector<8x32xf32>
    %430 = arith.truncf %429 : vector<8x32xf32> to vector<8x32xbf16>
    %431 = vector.extract_strided_slice %380 {offsets = [0, 64], sizes = [16, 32], strides = [1, 1]} : vector<16x128xf32> to vector<16x32xf32>
    %432 = arith.truncf %431 : vector<16x32xf32> to vector<16x32xbf16>
    %433 = vector.extract_strided_slice %381 {offsets = [0, 64], sizes = [16, 32], strides = [1, 1]} : vector<16x128xf32> to vector<16x32xf32>
    %434 = arith.truncf %433 : vector<16x32xf32> to vector<16x32xbf16>
    %cst_130 = arith.constant dense<0.000000e+00> : vector<8x16xf32>
    %435 = tpu.matmul %430, %432, %cst_130 {dimension_numbers = #tpu.dot_dimension_numbers<[1], [1], [0], [0], [0, 0, 1, 0], [], []>} : vector<8x32xbf16>, vector<16x32xbf16>, vector<8x16xf32> -> vector<8x16xf32>
    %cst_131 = arith.constant 0.176776692 : f32
    %436 = vector.broadcast %cst_131 : f32 to vector<8x16xf32>
    %437 = arith.mulf %435, %436 : vector<8x16xf32>
    %cst_132 = arith.constant dense<0xFF800000> : vector<8xf32>
    %438 = vector.multi_reduction <maximumf>, %437, %cst_132 [1] : vector<8x16xf32> to vector<8xf32>
    %439 = vector.shape_cast %438 : vector<8xf32> to vector<8x1xf32>
    %440 = vector.broadcast %439 : vector<8x1xf32> to vector<8x16xf32>
    %441 = arith.subf %437, %440 : vector<8x16xf32>
    %442 = math.exp %441 : vector<8x16xf32>
    %cst_133 = arith.constant dense<0.000000e+00> : vector<8xf32>
    %443 = vector.multi_reduction <add>, %442, %cst_133 [1] : vector<8x16xf32> to vector<8xf32>
    %444 = vector.shape_cast %443 : vector<8xf32> to vector<8x1xf32>
    %445 = vector.broadcast %444 : vector<8x1xf32> to vector<8x16xf32>
    %446 = arith.divf %442, %445 : vector<8x16xf32>
    %447 = arith.truncf %446 : vector<8x16xf32> to vector<8x16xbf16>
    %cst_134 = arith.constant dense<0.000000e+00> : vector<8x32xf32>
    %448 = tpu.matmul %447, %434, %cst_134 {dimension_numbers = #tpu.dot_dimension_numbers<[1], [0], [0], [1], [0, 0, 1, 1], [], []>} : vector<8x16xbf16>, vector<16x32xbf16>, vector<8x32xf32> -> vector<8x32xf32>
    %449 = arith.truncf %448 : vector<8x32xf32> to vector<8x32xbf16>
    %450 = vector.extract_strided_slice %280 {offsets = [64, 0], sizes = [32, 128], strides = [1, 1]} : vector<128x128xbf16> to vector<32x128xbf16>
    %cst_135 = arith.constant dense<0.000000e+00> : vector<8x128xf32>
    %451 = tpu.matmul %449, %450, %cst_135 {dimension_numbers = #tpu.dot_dimension_numbers<[1], [0], [0], [1], [0, 0, 1, 1], [], []>} : vector<8x32xbf16>, vector<32x128xbf16>, vector<8x128xf32> -> vector<8x128xf32>
    %452 = arith.addf %428, %451 : vector<8x128xf32>
    %453 = vector.extract_strided_slice %379 {offsets = [0, 96], sizes = [8, 32], strides = [1, 1]} : vector<8x128xf32> to vector<8x32xf32>
    %454 = arith.truncf %453 : vector<8x32xf32> to vector<8x32xbf16>
    %455 = vector.extract_strided_slice %380 {offsets = [0, 96], sizes = [16, 32], strides = [1, 1]} : vector<16x128xf32> to vector<16x32xf32>
    %456 = arith.truncf %455 : vector<16x32xf32> to vector<16x32xbf16>
    %457 = vector.extract_strided_slice %381 {offsets = [0, 96], sizes = [16, 32], strides = [1, 1]} : vector<16x128xf32> to vector<16x32xf32>
    %458 = arith.truncf %457 : vector<16x32xf32> to vector<16x32xbf16>
    %cst_136 = arith.constant dense<0.000000e+00> : vector<8x16xf32>
    %459 = tpu.matmul %454, %456, %cst_136 {dimension_numbers = #tpu.dot_dimension_numbers<[1], [1], [0], [0], [0, 0, 1, 0], [], []>} : vector<8x32xbf16>, vector<16x32xbf16>, vector<8x16xf32> -> vector<8x16xf32>
    %cst_137 = arith.constant 0.176776692 : f32
    %460 = vector.broadcast %cst_137 : f32 to vector<8x16xf32>
    %461 = arith.mulf %459, %460 : vector<8x16xf32>
    %cst_138 = arith.constant dense<0xFF800000> : vector<8xf32>
    %462 = vector.multi_reduction <maximumf>, %461, %cst_138 [1] : vector<8x16xf32> to vector<8xf32>
    %463 = vector.shape_cast %462 : vector<8xf32> to vector<8x1xf32>
    %464 = vector.broadcast %463 : vector<8x1xf32> to vector<8x16xf32>
    %465 = arith.subf %461, %464 : vector<8x16xf32>
    %466 = math.exp %465 : vector<8x16xf32>
    %cst_139 = arith.constant dense<0.000000e+00> : vector<8xf32>
    %467 = vector.multi_reduction <add>, %466, %cst_139 [1] : vector<8x16xf32> to vector<8xf32>
    %468 = vector.shape_cast %467 : vector<8xf32> to vector<8x1xf32>
    %469 = vector.broadcast %468 : vector<8x1xf32> to vector<8x16xf32>
    %470 = arith.divf %466, %469 : vector<8x16xf32>
    %471 = arith.truncf %470 : vector<8x16xf32> to vector<8x16xbf16>
    %cst_140 = arith.constant dense<0.000000e+00> : vector<8x32xf32>
    %472 = tpu.matmul %471, %458, %cst_140 {dimension_numbers = #tpu.dot_dimension_numbers<[1], [0], [0], [1], [0, 0, 1, 1], [], []>} : vector<8x16xbf16>, vector<16x32xbf16>, vector<8x32xf32> -> vector<8x32xf32>
    %473 = arith.truncf %472 : vector<8x32xf32> to vector<8x32xbf16>
    %474 = vector.extract_strided_slice %280 {offsets = [96, 0], sizes = [32, 128], strides = [1, 1]} : vector<128x128xbf16> to vector<32x128xbf16>
    %cst_141 = arith.constant dense<0.000000e+00> : vector<8x128xf32>
    %475 = tpu.matmul %473, %474, %cst_141 {dimension_numbers = #tpu.dot_dimension_numbers<[1], [0], [0], [1], [0, 0, 1, 1], [], []>} : vector<8x32xbf16>, vector<32x128xbf16>, vector<8x128xf32> -> vector<8x128xf32>
    %476 = arith.addf %452, %475 : vector<8x128xf32>
    %477 = tpu.concatenate %378, %476 in 0 : vector<8x128xf32>, vector<8x128xf32> -> vector<16x128xf32>
    %478 = arith.addf %242, %477 : vector<16x128xf32>
    %c0_142 = arith.constant 0 : index
    %c0_143 = arith.constant 0 : index
    %c0_144 = arith.constant 0 : index
    %479 = vector.load %arg27[%c0_142, %c0_143, %c0_144] : memref<1x1x128xbf16, #tpu.memory_space<vmem>>, vector<1x1x128xbf16>
    %480 = vector.shape_cast %479 : vector<1x1x128xbf16> to vector<1x128xbf16>
    %481 = arith.extf %480 : vector<1x128xbf16> to vector<1x128xf32>
    %482 = vector.broadcast %481 : vector<1x128xf32> to vector<16x128xf32>
    %483 = arith.addf %478, %482 : vector<16x128xf32>
    %c0_145 = arith.constant 0 : index
    %c0_146 = arith.constant 0 : index
    %c0_147 = arith.constant 0 : index
    %484 = vector.load %arg28[%c0_145, %c0_146, %c0_147] : memref<1x1x128xbf16, #tpu.memory_space<vmem>>, vector<1x1x128xbf16>
    %485 = vector.shape_cast %484 : vector<1x1x128xbf16> to vector<1x128xbf16>
    %486 = arith.extf %485 : vector<1x128xbf16> to vector<1x128xf32>
    %c0_148 = arith.constant 0 : index
    %c0_149 = arith.constant 0 : index
    %c0_150 = arith.constant 0 : index
    %487 = vector.load %arg29[%c0_148, %c0_149, %c0_150] : memref<1x1x128xbf16, #tpu.memory_space<vmem>>, vector<1x1x128xbf16>
    %488 = vector.shape_cast %487 : vector<1x1x128xbf16> to vector<1x128xbf16>
    %489 = arith.extf %488 : vector<1x128xbf16> to vector<1x128xf32>
    %cst_151 = arith.constant dense<0.000000e+00> : vector<16xf32>
    %490 = vector.multi_reduction <add>, %483, %cst_151 [1] : vector<16x128xf32> to vector<16xf32>
    %491 = vector.shape_cast %490 : vector<16xf32> to vector<16x1xf32>
    %cst_152 = arith.constant 1.280000e+02 : f32
    %492 = vector.broadcast %cst_152 : f32 to vector<16x1xf32>
    %493 = arith.divf %491, %492 : vector<16x1xf32>
    %494 = vector.broadcast %493 : vector<16x1xf32> to vector<16x128xf32>
    %495 = arith.subf %483, %494 : vector<16x128xf32>
    %496 = arith.mulf %495, %495 : vector<16x128xf32>
    %cst_153 = arith.constant dense<0.000000e+00> : vector<16xf32>
    %497 = vector.multi_reduction <add>, %496, %cst_153 [1] : vector<16x128xf32> to vector<16xf32>
    %498 = vector.shape_cast %497 : vector<16xf32> to vector<16x1xf32>
    %cst_154 = arith.constant 1.280000e+02 : f32
    %499 = vector.broadcast %cst_154 : f32 to vector<16x1xf32>
    %500 = arith.divf %498, %499 : vector<16x1xf32>
    %cst_155 = arith.constant 9.99999974E-6 : f32
    %501 = vector.broadcast %cst_155 : f32 to vector<16x1xf32>
    %502 = arith.addf %500, %501 : vector<16x1xf32>
    %503 = math.rsqrt %502 : vector<16x1xf32>
    %504 = vector.broadcast %503 : vector<16x1xf32> to vector<16x128xf32>
    %505 = arith.mulf %495, %504 : vector<16x128xf32>
    %506 = vector.broadcast %486 : vector<1x128xf32> to vector<16x128xf32>
    %507 = arith.mulf %505, %506 : vector<16x128xf32>
    %508 = vector.broadcast %489 : vector<1x128xf32> to vector<16x128xf32>
    %509 = arith.addf %507, %508 : vector<16x128xf32>
    %510 = arith.truncf %509 : vector<16x128xf32> to vector<16x128xbf16>
    %cst_156 = arith.constant 0.000000e+00 : f32
    %511 = vector.broadcast %cst_156 : f32 to vector<16x128xf32>
    %c0_157 = arith.constant 0 : index
    %c0_158 = arith.constant 0 : index
    %c0_159 = arith.constant 0 : index
    %512 = vector.load %arg30[%c0_157, %c0_158, %c0_159] : memref<1x128x512xbf16, #tpu.memory_space<vmem>>, vector<1x128x512xbf16>
    %513 = vector.shape_cast %512 : vector<1x128x512xbf16> to vector<128x512xbf16>
    %cst_160 = arith.constant dense<0.000000e+00> : vector<16x512xf32>
    %514 = tpu.matmul %510, %513, %cst_160 {dimension_numbers = #tpu.dot_dimension_numbers<[1], [0], [0], [1], [0, 0, 1, 1], [], []>} : vector<16x128xbf16>, vector<128x512xbf16>, vector<16x512xf32> -> vector<16x512xf32>
    %c0_161 = arith.constant 0 : index
    %c0_162 = arith.constant 0 : index
    %c0_163 = arith.constant 0 : index
    %515 = vector.load %arg31[%c0_161, %c0_162, %c0_163] : memref<1x1x512xbf16, #tpu.memory_space<vmem>>, vector<1x1x512xbf16>
    %516 = vector.shape_cast %515 : vector<1x1x512xbf16> to vector<1x512xbf16>
    %517 = arith.extf %516 : vector<1x512xbf16> to vector<1x512xf32>
    %518 = vector.broadcast %517 : vector<1x512xf32> to vector<16x512xf32>
    %519 = arith.addf %514, %518 : vector<16x512xf32>
    %cst_164 = arith.constant 5.000000e-01 : f32
    %520 = vector.broadcast %cst_164 : f32 to vector<16x512xf32>
    %521 = arith.mulf %520, %519 : vector<16x512xf32>
    %cst_165 = arith.constant 0.707106769 : f32
    %522 = vector.broadcast %cst_165 : f32 to vector<16x512xf32>
    %523 = arith.mulf %519, %522 : vector<16x512xf32>
    %cst_166 = arith.constant 0.000000e+00 : f32
    %524 = vector.broadcast %cst_166 : f32 to vector<16x512xf32>
    %525 = arith.cmpf oge, %523, %524 : vector<16x512xf32>
    %cst_167 = arith.constant 1.000000e+00 : f32
    %cst_168 = arith.constant -1.000000e+00 : f32
    %526 = vector.broadcast %cst_167 : f32 to vector<16x512xf32>
    %527 = vector.broadcast %cst_168 : f32 to vector<16x512xf32>
    %528 = arith.select %525, %526, %527 : vector<16x512xi1>, vector<16x512xf32>
    %529 = math.absf %523 : vector<16x512xf32>
    %cst_169 = arith.constant 0.327591091 : f32
    %530 = vector.broadcast %cst_169 : f32 to vector<16x512xf32>
    %531 = arith.mulf %530, %529 : vector<16x512xf32>
    %cst_170 = arith.constant 1.000000e+00 : f32
    %532 = vector.broadcast %cst_170 : f32 to vector<16x512xf32>
    %533 = arith.addf %532, %531 : vector<16x512xf32>
    %cst_171 = arith.constant 1.000000e+00 : f32
    %534 = vector.broadcast %cst_171 : f32 to vector<16x512xf32>
    %535 = arith.divf %534, %533 : vector<16x512xf32>
    %cst_172 = arith.constant 1.06140542 : f32
    %536 = vector.broadcast %cst_172 : f32 to vector<16x512xf32>
    %537 = arith.mulf %536, %535 : vector<16x512xf32>
    %cst_173 = arith.constant 1.45315206 : f32
    %538 = vector.broadcast %cst_173 : f32 to vector<16x512xf32>
    %539 = arith.subf %537, %538 : vector<16x512xf32>
    %540 = arith.mulf %539, %535 : vector<16x512xf32>
    %cst_174 = arith.constant 1.42141378 : f32
    %541 = vector.broadcast %cst_174 : f32 to vector<16x512xf32>
    %542 = arith.addf %540, %541 : vector<16x512xf32>
    %543 = arith.mulf %542, %535 : vector<16x512xf32>
    %cst_175 = arith.constant 0.284496725 : f32
    %544 = vector.broadcast %cst_175 : f32 to vector<16x512xf32>
    %545 = arith.subf %543, %544 : vector<16x512xf32>
    %546 = arith.mulf %545, %535 : vector<16x512xf32>
    %cst_176 = arith.constant 0.254829586 : f32
    %547 = vector.broadcast %cst_176 : f32 to vector<16x512xf32>
    %548 = arith.addf %546, %547 : vector<16x512xf32>
    %549 = arith.mulf %548, %535 : vector<16x512xf32>
    %cst_177 = arith.constant 0.000000e+00 : f32
    %550 = vector.broadcast %cst_177 : f32 to vector<16x512xf32>
    %551 = arith.subf %550, %529 : vector<16x512xf32>
    %552 = arith.mulf %551, %529 : vector<16x512xf32>
    %553 = math.exp %552 : vector<16x512xf32>
    %554 = arith.mulf %549, %553 : vector<16x512xf32>
    %cst_178 = arith.constant 1.000000e+00 : f32
    %555 = vector.broadcast %cst_178 : f32 to vector<16x512xf32>
    %556 = arith.subf %555, %554 : vector<16x512xf32>
    %557 = arith.mulf %528, %556 : vector<16x512xf32>
    %cst_179 = arith.constant 1.000000e+00 : f32
    %558 = vector.broadcast %cst_179 : f32 to vector<16x512xf32>
    %559 = arith.addf %558, %557 : vector<16x512xf32>
    %560 = arith.mulf %521, %559 : vector<16x512xf32>
    %561 = arith.truncf %560 : vector<16x512xf32> to vector<16x512xbf16>
    %c0_180 = arith.constant 0 : index
    %c0_181 = arith.constant 0 : index
    %c0_182 = arith.constant 0 : index
    %562 = vector.load %arg32[%c0_180, %c0_181, %c0_182] : memref<1x512x128xbf16, #tpu.memory_space<vmem>>, vector<1x512x128xbf16>
    %563 = vector.shape_cast %562 : vector<1x512x128xbf16> to vector<512x128xbf16>
    %cst_183 = arith.constant dense<0.000000e+00> : vector<16x128xf32>
    %564 = tpu.matmul %561, %563, %cst_183 {dimension_numbers = #tpu.dot_dimension_numbers<[1], [0], [0], [1], [0, 0, 1, 1], [], []>} : vector<16x512xbf16>, vector<512x128xbf16>, vector<16x128xf32> -> vector<16x128xf32>
    %565 = arith.addf %511, %564 : vector<16x128xf32>
    %566 = arith.addf %483, %565 : vector<16x128xf32>
    %c0_184 = arith.constant 0 : index
    %c0_185 = arith.constant 0 : index
    %c0_186 = arith.constant 0 : index
    %567 = vector.load %arg33[%c0_184, %c0_185, %c0_186] : memref<1x1x128xbf16, #tpu.memory_space<vmem>>, vector<1x1x128xbf16>
    %568 = vector.shape_cast %567 : vector<1x1x128xbf16> to vector<1x128xbf16>
    %569 = arith.extf %568 : vector<1x128xbf16> to vector<1x128xf32>
    %570 = vector.broadcast %569 : vector<1x128xf32> to vector<16x128xf32>
    %571 = arith.addf %566, %570 : vector<16x128xf32>
    %c0_187 = arith.constant 0 : index
    %c0_188 = arith.constant 0 : index
    %572 = vector.load %arg35[%c0_187, %c0_188] : memref<16x128xf32, #tpu.memory_space<vmem>>, vector<16x128xf32>
    tpu.vector_store %arg35[%c0_187, %c0_188], %571 {strides = array<i32>} : memref<16x128xf32, #tpu.memory_space<vmem>>, vector<16x128xf32>,
    %c1_i32 = arith.constant 1 : i32
    %573 = arith.cmpi eq, %arg0, %c1_i32 : i32
    %574 = arith.extui %573 : i1 to i32
    %c0_i32_189 = arith.constant 0 : i32
    %575 = arith.cmpi ne, %574, %c0_i32_189 : i32
    scf.if %575 {
      %c0_190 = arith.constant 0 : index
      %c0_191 = arith.constant 0 : index
      %576 = vector.load %arg13[%c0_190, %c0_191] : memref<1x128xbf16, #tpu.memory_space<vmem>>, vector<1x128xbf16>
      %577 = arith.extf %576 : vector<1x128xbf16> to vector<1x128xf32>
      %c0_192 = arith.constant 0 : index
      %c0_193 = arith.constant 0 : index
      %578 = vector.load %arg14[%c0_192, %c0_193] : memref<1x128xbf16, #tpu.memory_space<vmem>>, vector<1x128xbf16>
      %579 = arith.extf %578 : vector<1x128xbf16> to vector<1x128xf32>
      %cst_194 = arith.constant dense<0.000000e+00> : vector<16xf32>
      %580 = vector.multi_reduction <add>, %571, %cst_194 [1] : vector<16x128xf32> to vector<16xf32>
      %581 = vector.shape_cast %580 : vector<16xf32> to vector<16x1xf32>
      %cst_195 = arith.constant 1.280000e+02 : f32
      %582 = vector.broadcast %cst_195 : f32 to vector<16x1xf32>
      %583 = arith.divf %581, %582 : vector<16x1xf32>
      %584 = vector.broadcast %583 : vector<16x1xf32> to vector<16x128xf32>
      %585 = arith.subf %571, %584 : vector<16x128xf32>
      %586 = arith.mulf %585, %585 : vector<16x128xf32>
      %cst_196 = arith.constant dense<0.000000e+00> : vector<16xf32>
      %587 = vector.multi_reduction <add>, %586, %cst_196 [1] : vector<16x128xf32> to vector<16xf32>
      %588 = vector.shape_cast %587 : vector<16xf32> to vector<16x1xf32>
      %cst_197 = arith.constant 1.280000e+02 : f32
      %589 = vector.broadcast %cst_197 : f32 to vector<16x1xf32>
      %590 = arith.divf %588, %589 : vector<16x1xf32>
      %cst_198 = arith.constant 9.99999974E-6 : f32
      %591 = vector.broadcast %cst_198 : f32 to vector<16x1xf32>
      %592 = arith.addf %590, %591 : vector<16x1xf32>
      %593 = math.rsqrt %592 : vector<16x1xf32>
      %594 = vector.broadcast %593 : vector<16x1xf32> to vector<16x128xf32>
      %595 = arith.mulf %585, %594 : vector<16x128xf32>
      %596 = vector.broadcast %577 : vector<1x128xf32> to vector<16x128xf32>
      %597 = arith.mulf %595, %596 : vector<16x128xf32>
      %598 = vector.broadcast %579 : vector<1x128xf32> to vector<16x128xf32>
      %599 = arith.addf %597, %598 : vector<16x128xf32>
      %c0_199 = arith.constant 0 : index
      %c0_200 = arith.constant 0 : index
      %600 = vector.load %arg15[%c0_199, %c0_200] : memref<128x256xbf16, #tpu.memory_space<vmem>>, vector<128x256xbf16>
      %601 = arith.truncf %599 : vector<16x128xf32> to vector<16x128xbf16>
      %cst_201 = arith.constant dense<0.000000e+00> : vector<16x256xf32>
      %602 = tpu.matmul %601, %600, %cst_201 {dimension_numbers = #tpu.dot_dimension_numbers<[1], [0], [0], [1], [0, 0, 1, 1], [], []>} : vector<16x128xbf16>, vector<128x256xbf16>, vector<16x256xf32> -> vector<16x256xf32>
      %c0_202 = arith.constant 0 : index
      %c0_203 = arith.constant 0 : index
      %603 = vector.load %arg16[%c0_202, %c0_203] : memref<1x256xbf16, #tpu.memory_space<vmem>>, vector<1x256xbf16>
      %604 = arith.extf %603 : vector<1x256xbf16> to vector<1x256xf32>
      %605 = vector.broadcast %604 : vector<1x256xf32> to vector<16x256xf32>
      %606 = arith.addf %602, %605 : vector<16x256xf32>
      %607 = arith.truncf %606 : vector<16x256xf32> to vector<16x256xbf16>
      %c0_204 = arith.constant 0 : index
      %c0_205 = arith.constant 0 : index
      %608 = vector.load %arg34[%c0_204, %c0_205] : memref<16x256xbf16, #tpu.memory_space<vmem>>, vector<16x256xbf16>
      tpu.vector_store %arg34[%c0_204, %c0_205], %607 {strides = array<i32>} : memref<16x256xbf16, #tpu.memory_space<vmem>>, vector<16x256xbf16>,
    } else {
    }
    return
  }
  func.func @transform_0(%arg0: i32) -> (i32, i32) {
    %c0_i32 = arith.constant 0 : i32
    %c0_i32_0 = arith.constant 0 : i32
    %c0_i32_1 = arith.constant 0 : i32
    return %c0_i32, %c0_i32_0 : i32, i32
  }
  func.func @transform_1(%arg0: i32) -> (i32, i32) {
    %c0_i32 = arith.constant 0 : i32
    %c0_i32_0 = arith.constant 0 : i32
    %c0_i32_1 = arith.constant 0 : i32
    return %c0_i32, %c0_i32_0 : i32, i32
  }
  func.func @transform_2(%arg0: i32) -> (i32, i32) {
    %c0_i32 = arith.constant 0 : i32
    %c0_i32_0 = arith.constant 0 : i32
    %c0_i32_1 = arith.constant 0 : i32
    return %c0_i32, %c0_i32_0 : i32, i32
  }
  func.func @transform_3(%arg0: i32) -> (i32, i32) {
    %c0_i32 = arith.constant 0 : i32
    %c0_i32_0 = arith.constant 0 : i32
    %c0_i32_1 = arith.constant 0 : i32
    return %c0_i32, %c0_i32_0 : i32, i32
  }
  func.func @transform_4(%arg0: i32) -> (i32, i32) {
    %c0_i32 = arith.constant 0 : i32
    %c0_i32_0 = arith.constant 0 : i32
    %c0_i32_1 = arith.constant 0 : i32
    return %c0_i32, %c0_i32_0 : i32, i32
  }
  func.func @transform_5(%arg0: i32) -> (i32, i32) {
    %c0_i32 = arith.constant 0 : i32
    %c0_i32_0 = arith.constant 0 : i32
    %c0_i32_1 = arith.constant 0 : i32
    return %c0_i32, %c0_i32_0 : i32, i32
  }
  func.func @transform_6(%arg0: i32) -> (i32, i32) {
    %c0_i32 = arith.constant 0 : i32
    %c0_i32_0 = arith.constant 0 : i32
    %c0_i32_1 = arith.constant 0 : i32
    return %c0_i32, %c0_i32_0 : i32, i32
  }
  func.func @transform_7(%arg0: i32) -> (i32, i32) {
    %c0_i32 = arith.constant 0 : i32
    %c0_i32_0 = arith.constant 0 : i32
    %c0_i32_1 = arith.constant 0 : i32
    return %c0_i32, %c0_i32_0 : i32, i32
  }
  func.func @transform_8(%arg0: i32) -> (i32, i32) {
    %c0_i32 = arith.constant 0 : i32
    %c0_i32_0 = arith.constant 0 : i32
    %c0_i32_1 = arith.constant 0 : i32
    return %c0_i32, %c0_i32_0 : i32, i32
  }
  func.func @transform_9(%arg0: i32) -> (i32, i32) {
    %c0_i32 = arith.constant 0 : i32
    %c0_i32_0 = arith.constant 0 : i32
    %c0_i32_1 = arith.constant 0 : i32
    return %c0_i32, %c0_i32_0 : i32, i32
  }
  func.func @transform_10(%arg0: i32) -> (i32, i32) {
    %c0_i32 = arith.constant 0 : i32
    %c0_i32_0 = arith.constant 0 : i32
    %c0_i32_1 = arith.constant 0 : i32
    return %c0_i32, %c0_i32_0 : i32, i32
  }
  func.func @transform_11(%arg0: i32) -> (i32, i32) {
    %c0_i32 = arith.constant 0 : i32
    %c0_i32_0 = arith.constant 0 : i32
    %c0_i32_1 = arith.constant 0 : i32
    return %c0_i32, %c0_i32_0 : i32, i32
  }
  func.func @transform_12(%arg0: i32) -> (i32, i32) {
    %c0_i32 = arith.constant 0 : i32
    %c0_i32_0 = arith.constant 0 : i32
    %c0_i32_1 = arith.constant 0 : i32
    return %c0_i32, %c0_i32_0 : i32, i32
  }
  func.func @transform_13(%arg0: i32) -> (i32, i32) {
    %c0_i32 = arith.constant 0 : i32
    %c0_i32_0 = arith.constant 0 : i32
    %c0_i32_1 = arith.constant 0 : i32
    return %c0_i32, %c0_i32_0 : i32, i32
  }
  func.func @transform_14(%arg0: i32) -> (i32, i32) {
    %c0_i32 = arith.constant 0 : i32
    %c0_i32_0 = arith.constant 0 : i32
    %c0_i32_1 = arith.constant 0 : i32
    return %c0_i32, %c0_i32_0 : i32, i32
  }
  func.func @transform_15(%arg0: i32) -> (i32, i32) {
    %c0_i32 = arith.constant 0 : i32
    %c0_i32_0 = arith.constant 0 : i32
    %c0_i32_1 = arith.constant 0 : i32
    return %c0_i32, %c0_i32_0 : i32, i32
  }
  func.func @transform_16(%arg0: i32) -> (i32, i32, i32) {
    %c0_i32 = arith.constant 0 : i32
    %c0_i32_0 = arith.constant 0 : i32
    %c0_i32_1 = arith.constant 0 : i32
    return %arg0, %c0_i32, %c0_i32_0 : i32, i32, i32
  }
  func.func @transform_17(%arg0: i32) -> (i32, i32, i32) {
    %c0_i32 = arith.constant 0 : i32
    %c0_i32_0 = arith.constant 0 : i32
    %c0_i32_1 = arith.constant 0 : i32
    return %arg0, %c0_i32, %c0_i32_0 : i32, i32, i32
  }
  func.func @transform_18(%arg0: i32) -> (i32, i32, i32) {
    %c0_i32 = arith.constant 0 : i32
    %c0_i32_0 = arith.constant 0 : i32
    %c0_i32_1 = arith.constant 0 : i32
    return %arg0, %c0_i32, %c0_i32_0 : i32, i32, i32
  }
  func.func @transform_19(%arg0: i32) -> (i32, i32, i32) {
    %c0_i32 = arith.constant 0 : i32
    %c0_i32_0 = arith.constant 0 : i32
    %c0_i32_1 = arith.constant 0 : i32
    return %arg0, %c0_i32, %c0_i32_0 : i32, i32, i32
  }
  func.func @transform_20(%arg0: i32) -> (i32, i32, i32) {
    %c0_i32 = arith.constant 0 : i32
    %c0_i32_0 = arith.constant 0 : i32
    %c0_i32_1 = arith.constant 0 : i32
    return %arg0, %c0_i32, %c0_i32_0 : i32, i32, i32
  }
  func.func @transform_21(%arg0: i32) -> (i32, i32, i32) {
    %c0_i32 = arith.constant 0 : i32
    %c0_i32_0 = arith.constant 0 : i32
    %c0_i32_1 = arith.constant 0 : i32
    return %arg0, %c0_i32, %c0_i32_0 : i32, i32, i32
  }
  func.func @transform_22(%arg0: i32) -> (i32, i32, i32) {
    %c0_i32 = arith.constant 0 : i32
    %c0_i32_0 = arith.constant 0 : i32
    %c0_i32_1 = arith.constant 0 : i32
    return %arg0, %c0_i32, %c0_i32_0 : i32, i32, i32
  }
  func.func @transform_23(%arg0: i32) -> (i32, i32, i32) {
    %c0_i32 = arith.constant 0 : i32
    %c0_i32_0 = arith.constant 0 : i32
    %c0_i32_1 = arith.constant 0 : i32
    return %arg0, %c0_i32, %c0_i32_0 : i32, i32, i32
  }
  func.func @transform_24(%arg0: i32) -> (i32, i32, i32) {
    %c0_i32 = arith.constant 0 : i32
    %c0_i32_0 = arith.constant 0 : i32
    %c0_i32_1 = arith.constant 0 : i32
    return %arg0, %c0_i32, %c0_i32_0 : i32, i32, i32
  }
  func.func @transform_25(%arg0: i32) -> (i32, i32, i32) {
    %c0_i32 = arith.constant 0 : i32
    %c0_i32_0 = arith.constant 0 : i32
    %c0_i32_1 = arith.constant 0 : i32
    return %arg0, %c0_i32, %c0_i32_0 : i32, i32, i32
  }
  func.func @transform_26(%arg0: i32) -> (i32, i32, i32) {
    %c0_i32 = arith.constant 0 : i32
    %c0_i32_0 = arith.constant 0 : i32
    %c0_i32_1 = arith.constant 0 : i32
    return %arg0, %c0_i32, %c0_i32_0 : i32, i32, i32
  }
  func.func @transform_27(%arg0: i32) -> (i32, i32, i32) {
    %c0_i32 = arith.constant 0 : i32
    %c0_i32_0 = arith.constant 0 : i32
    %c0_i32_1 = arith.constant 0 : i32
    return %arg0, %c0_i32, %c0_i32_0 : i32, i32, i32
  }
  func.func @transform_28(%arg0: i32) -> (i32, i32, i32) {
    %c0_i32 = arith.constant 0 : i32
    %c0_i32_0 = arith.constant 0 : i32
    %c0_i32_1 = arith.constant 0 : i32
    return %arg0, %c0_i32, %c0_i32_0 : i32, i32, i32
  }
  func.func @transform_29(%arg0: i32) -> (i32, i32, i32) {
    %c0_i32 = arith.constant 0 : i32
    %c0_i32_0 = arith.constant 0 : i32
    %c0_i32_1 = arith.constant 0 : i32
    return %arg0, %c0_i32, %c0_i32_0 : i32, i32, i32
  }
  func.func @transform_30(%arg0: i32) -> (i32, i32, i32) {
    %c0_i32 = arith.constant 0 : i32
    %c0_i32_0 = arith.constant 0 : i32
    %c0_i32_1 = arith.constant 0 : i32
    return %arg0, %c0_i32, %c0_i32_0 : i32, i32, i32
  }
  func.func @transform_31(%arg0: i32) -> (i32, i32, i32) {
    %c0_i32 = arith.constant 0 : i32
    %c0_i32_0 = arith.constant 0 : i32
    %c0_i32_1 = arith.constant 0 : i32
    return %arg0, %c0_i32, %c0_i32_0 : i32, i32, i32
  }
  func.func @transform_32(%arg0: i32) -> (i32, i32, i32) {
    %c0_i32 = arith.constant 0 : i32
    %c0_i32_0 = arith.constant 0 : i32
    %c0_i32_1 = arith.constant 0 : i32
    return %arg0, %c0_i32, %c0_i32_0 : i32, i32, i32
  }
  func.func @transform_33(%arg0: i32) -> (i32, i32) {
    %c0_i32 = arith.constant 0 : i32
    %c0_i32_0 = arith.constant 0 : i32
    %c0_i32_1 = arith.constant 0 : i32
    return %c0_i32, %c0_i32_0 : i32, i32
  }
}

</mosaic_0001>

<llo_original>
// kernel: context_decoder_forward.1
$region0: #{context_decoder_forward.1}
  #allocation0 [shape = 'u32[]', space=smem, size = 0x4, offset = 0x4, fixed_abs, tag = 'smem constant byte address 0x4 - core index']
  #allocation1 [shape = 'u32[144,128]{1,0:T(1,128)}', space=vmem, size = 0x12000, scoped, tag = 'internal scratch']
  #allocation2 [shape = 'f32[16,128]{1,0:T(8,128)}', space=vmem, size = 0x2000, scoped, tag = 'scratch operand']
  #allocation3 [shape = 'f32[32,128]{1,0:T(8,128)}', space=vmem, size = 0x4000, scoped, tag = 'scratch operand']
  %s0 = inlined_call_operand.smem [shape: u32[34], index: -1, kind: input, shape index: {}]
  %s1 = sld [smem:[%s0]]
  %s2 = scalar_lea.smem %s0, 1
  %s3 = sld [smem:[%s2]]
  %s4 = scalar_lea.smem %s0, 2
  %s5 = sld [smem:[%s4]]
  %s6 = scalar_lea.smem %s0, 3
  %s7 = sld [smem:[%s6]]
  %s8 = scalar_lea.smem %s0, 4
  %s9 = sld [smem:[%s8]]
  %s10 = scalar_lea.smem %s0, 5
  %s11 = sld [smem:[%s10]]
  %s12 = scalar_lea.smem %s0, 6
  %s13 = sld [smem:[%s12]]
  %s14 = scalar_lea.smem %s0, 7
  %s15 = sld [smem:[%s14]]
  %s16 = scalar_lea.smem %s0, 8
  %s17 = sld [smem:[%s16]]
  %s18 = scalar_lea.smem %s0, 9
  %s19 = sld [smem:[%s18]]
  %s20 = scalar_lea.smem %s0, 10
  %s21 = sld [smem:[%s20]]
  %s22 = scalar_lea.smem %s0, 11
  %s23 = sld [smem:[%s22]]
  %s24 = scalar_lea.smem %s0, 12
  %s25 = sld [smem:[%s24]]
  %s26 = scalar_lea.smem %s0, 13
  %s27 = sld [smem:[%s26]]
  %s28 = scalar_lea.smem %s0, 14
  %s29 = sld [smem:[%s28]]
  %s30 = scalar_lea.smem %s0, 15
  %s31 = sld [smem:[%s30]]
  %s32 = scalar_lea.smem %s0, 16
  %s33 = sld [smem:[%s32]]
  %s34 = scalar_lea.smem %s0, 17
  %s35 = sld [smem:[%s34]]
  %s36 = scalar_lea.smem %s0, 18
  %s37 = sld [smem:[%s36]]
  %s38 = scalar_lea.smem %s0, 19
  %s39 = sld [smem:[%s38]]
  %s40 = scalar_lea.smem %s0, 20
  %s41 = sld [smem:[%s40]]
  %s42 = scalar_lea.smem %s0, 21
  %s43 = sld [smem:[%s42]]
  %s44 = scalar_lea.smem %s0, 22
  %s45 = sld [smem:[%s44]]
  %s46 = scalar_lea.smem %s0, 23
  %s47 = sld [smem:[%s46]]
  %s48 = scalar_lea.smem %s0, 24
  %s49 = sld [smem:[%s48]]
  %s50 = scalar_lea.smem %s0, 25
  %s51 = sld [smem:[%s50]]
  %s52 = scalar_lea.smem %s0, 26
  %s53 = sld [smem:[%s52]]
  %s54 = scalar_lea.smem %s0, 27
  %s55 = sld [smem:[%s54]]
  %s56 = scalar_lea.smem %s0, 28
  %s57 = sld [smem:[%s56]]
  %s58 = scalar_lea.smem %s0, 29
  %s59 = sld [smem:[%s58]]
  %s60 = scalar_lea.smem %s0, 30
  %s61 = sld [smem:[%s60]]
  %s62 = scalar_lea.smem %s0, 31
  %s63 = sld [smem:[%s62]]
  %s64 = scalar_lea.smem %s0, 32
  %s65 = sld [smem:[%s64]]
  %s66 = scalar_lea.smem %s0, 33
  %s67 = sld [smem:[%s66]]
  %s68 = sld [smem:[#allocation0]]
  $region217: #{context_decoder_forward.1} parent=0
    _
  %s70 = ssub.s32 1, %s68
  %s71 = scalar_select 0, %s70, %s68
  $region1: #{context_decoder_forward.1} parent=0
    #allocation4 [shape = 'u8[8192]{0}', space=vmem, size = 0x2000, scoped, tag = 'input window, operand 0, single buffered']
    #allocation5 [shape = 's32[2]{0}', space=sflag, size = 0x8, scoped, tag = 'scoped memory for context_decoder_forward.1']
    #allocation6 [shape = 's32[2]{0}', space=sflag, size = 0x8, scoped, tag = 'scoped memory for context_decoder_forward.1']
    #allocation7 [shape = 'u8[65536]{0}', space=vmem, size = 0x10000, scoped, tag = 'input window, operand 4, single buffered']
    #allocation8 [shape = 's32[1]{0}', space=sflag, size = 0x4, scoped, tag = 'scoped memory for context_decoder_forward.1']
    #allocation9 [shape = 'u8[65536]{0}', space=vmem, size = 0x10000, scoped, tag = 'input window, operand 10, single buffered']
    #allocation10 [shape = 'u8[65536]{0}', space=vmem, size = 0x10000, scoped, tag = 'input window, operand 14, single buffered']
    #allocation11 [shape = 's32[1]{0}', space=sflag, size = 0x4, scoped, tag = 'scoped memory for context_decoder_forward.1']
    #allocation12 [shape = 'u8[196608]{0}', space=vmem, size = 0x30000, scoped, tag = 'input window, operand 18']
    #allocation13 [shape = 'u8[65536]{0}', space=vmem, size = 0x10000, scoped, tag = 'input window, operand 19']
    #allocation14 [shape = 'u8[65536]{0}', space=vmem, size = 0x10000, scoped, tag = 'input window, operand 23']
    #allocation15 [shape = 'u8[131072]{0}', space=vmem, size = 0x20000, scoped, tag = 'input window, operand 24']
    #allocation16 [shape = 'u8[65536]{0}', space=vmem, size = 0x10000, scoped, tag = 'input window, operand 25']
    #allocation17 [shape = 'u8[262144]{0}', space=vmem, size = 0x40000, scoped, tag = 'input window, operand 29']
    #allocation18 [shape = 'u8[262144]{0}', space=vmem, size = 0x40000, scoped, tag = 'input window, operand 31']
    #allocation19 [shape = 'u8[8192]{0}', space=vmem, size = 0x2000, scoped, tag = 'output window, operand 0, single buffered']
    %72 = vsyncpa [#allocation5], 0
    %73 = vsyncpa [#allocation8], 0
    %74 = vsyncpa [#allocation11], 0
    %75 = vsyncpa [#allocation6], 0
    loop: start=0, step=1, limit=4
    $region2: #{context_decoder_forward.1} parent=1 // loop_pre_header
      _
    $region3: #{context_decoder_forward.1} parent=1 // loop_header
      %s77 = sphi 0, %s81
      %p78 = scmp.ge.s32.totalorder %s77, 4
      %s85 = sphi 0, %s85
      %s87 = sphi 0, %s85
      %s88 = sphi 0, %s87
      %s102 = sphi 0, %s88
      %s106 = sphi 0, %s106
      %s108 = sphi 0, %s106
      %s109 = sphi 0, %s108
      %s123 = sphi 0, %s109
      %s127 = sphi 0, %s127
      %s129 = sphi 0, %s127
      %s130 = sphi 0, %s129
      %s144 = sphi 0, %s130
      %s148 = sphi 0, %s148
      %s150 = sphi 0, %s148
      %s151 = sphi 0, %s150
      %s165 = sphi 0, %s151
      %s169 = sphi 0, %s169
      %s171 = sphi 0, %s169
      %s172 = sphi 0, %s171
      %s186 = sphi 0, %s172
      %s190 = sphi 0, %s190
      %s192 = sphi 0, %s190
      %s193 = sphi 0, %s192
      %s207 = sphi 0, %s193
      %s211 = sphi 0, %s211
      %s213 = sphi 0, %s211
      %s214 = sphi 0, %s213
      %s228 = sphi 0, %s214
      %s232 = sphi 0, %s232
      %s234 = sphi 0, %s232
      %s235 = sphi 0, %s234
      %s249 = sphi 0, %s235
      %s253 = sphi 0, %s253
      %s255 = sphi 0, %s253
      %s256 = sphi 0, %s255
      %s270 = sphi 0, %s256
      %s274 = sphi 0, %s274
      %s276 = sphi 0, %s274
      %s277 = sphi 0, %s276
      %s291 = sphi 0, %s277
      %s295 = sphi 0, %s295
      %s297 = sphi 0, %s295
      %s298 = sphi 0, %s297
      %s312 = sphi 0, %s298
      %s316 = sphi 0, %s316
      %s318 = sphi 0, %s316
      %s319 = sphi 0, %s318
      %s333 = sphi 0, %s319
      %s337 = sphi 0, %s337
      %s339 = sphi 0, %s337
      %s340 = sphi 0, %s339
      %s354 = sphi 0, %s340
      %s358 = sphi 0, %s358
      %s360 = sphi 0, %s358
      %s361 = sphi 0, %s360
      %s375 = sphi 0, %s361
      %s379 = sphi 0, %s379
      %s381 = sphi 0, %s379
      %s382 = sphi 0, %s381
      %s396 = sphi 0, %s382
      %s400 = sphi 0, %s400
      %s402 = sphi 0, %s400
      %s403 = sphi 0, %s402
      %s417 = sphi 0, %s403
      %s423 = sphi 0, %s425
      %s426 = sphi 0, %s423
      %s427 = sphi 0, %s426
      %s443 = sphi 0, %s427
      %s449 = sphi 0, %s451
      %s452 = sphi 0, %s449
      %s453 = sphi 0, %s452
      %s469 = sphi 0, %s453
      %s475 = sphi 0, %s477
      %s478 = sphi 0, %s475
      %s479 = sphi 0, %s478
      %s495 = sphi 0, %s479
      %s501 = sphi 0, %s503
      %s504 = sphi 0, %s501
      %s505 = sphi 0, %s504
      %s521 = sphi 0, %s505
      %s527 = sphi 0, %s529
      %s530 = sphi 0, %s527
      %s531 = sphi 0, %s530
      %s547 = sphi 0, %s531
      %s553 = sphi 0, %s555
      %s556 = sphi 0, %s553
      %s557 = sphi 0, %s556
      %s573 = sphi 0, %s557
      %s579 = sphi 0, %s581
      %s582 = sphi 0, %s579
      %s583 = sphi 0, %s582
      %s599 = sphi 0, %s583
      %s605 = sphi 0, %s607
      %s608 = sphi 0, %s605
      %s609 = sphi 0, %s608
      %s625 = sphi 0, %s609
      %s631 = sphi 0, %s633
      %s634 = sphi 0, %s631
      %s635 = sphi 0, %s634
      %s651 = sphi 0, %s635
      %s657 = sphi 0, %s659
      %s660 = sphi 0, %s657
      %s661 = sphi 0, %s660
      %s677 = sphi 0, %s661
      %s683 = sphi 0, %s685
      %s686 = sphi 0, %s683
      %s687 = sphi 0, %s686
      %s703 = sphi 0, %s687
      %s709 = sphi 0, %s711
      %s712 = sphi 0, %s709
      %s713 = sphi 0, %s712
      %s729 = sphi 0, %s713
      %s735 = sphi 0, %s737
      %s738 = sphi 0, %s735
      %s739 = sphi 0, %s738
      %s755 = sphi 0, %s739
      %s761 = sphi 0, %s763
      %s764 = sphi 0, %s761
      %s765 = sphi 0, %s764
      %s781 = sphi 0, %s765
      %s787 = sphi 0, %s789
      %s790 = sphi 0, %s787
      %s791 = sphi 0, %s790
      %s807 = sphi 0, %s791
      %s813 = sphi 0, %s815
      %s816 = sphi 0, %s813
      %s817 = sphi 0, %s816
      %s833 = sphi 0, %s817
      %s839 = sphi 0, %s841
      %s842 = sphi 0, %s839
      %s843 = sphi 0, %s842
      %s859 = sphi 0, %s843
      %s863 = sphi 0, %s863
      %s865 = sphi 0, %s863
      %s866 = sphi 0, %s865
      %s880 = sphi 0, %s866
    $region4: #{context_decoder_forward.1} parent=1 // loop_header_branch
      %80 = sbr.rel (%p78) target = $region8
    $region5: #{context_decoder_forward.1} parent=1 // loop_body
      %s82 = ssub.s32 %s77, 1
      %s83 = ssub.s32 %s77, 2
      %s84 = sadd.s32 %s77, 1
      %s86 = sadd.s32 %s85, 1
      %p89 = scmp.eq.s32.totalorder %s77, 1
      %p90 = scmp.ne.s32.totalorder %s85, %s87
      %p91 = scmp.eq.s32.totalorder %s77, 0
      %p92 = por %p90, %p91
      %p93 = scmp.ne.s32.totalorder %s85, %s87
      %p94 = scmp.eq.s32.totalorder %s82, 1
      %p95 = por %p93, %p94
      %p96 = scmp.ne.s32.totalorder %s87, %s88
      %p97 = scmp.eq.s32.totalorder %s82, 0
      %p98 = por %p96, %p97
      %p99 = scmp.ne.s32.totalorder %s87, %s88
      %p100 = scmp.eq.s32.totalorder %s83, 1
      %p101 = por %p99, %p100
      %p103 = scmp.ne.s32.totalorder %s88, %s102
      %p104 = scmp.eq.s32.totalorder %s83, 0
      %p105 = por %p103, %p104
      %s107 = sadd.s32 %s106, 1
      %p110 = scmp.eq.s32.totalorder %s77, 1
      %p111 = scmp.ne.s32.totalorder %s106, %s108
      %p112 = scmp.eq.s32.totalorder %s77, 0
      %p113 = por %p111, %p112
      %p114 = scmp.ne.s32.totalorder %s106, %s108
      %p115 = scmp.eq.s32.totalorder %s82, 1
      %p116 = por %p114, %p115
      %p117 = scmp.ne.s32.totalorder %s108, %s109
      %p118 = scmp.eq.s32.totalorder %s82, 0
      %p119 = por %p117, %p118
      %p120 = scmp.ne.s32.totalorder %s108, %s109
      %p121 = scmp.eq.s32.totalorder %s83, 1
      %p122 = por %p120, %p121
      %p124 = scmp.ne.s32.totalorder %s109, %s123
      %p125 = scmp.eq.s32.totalorder %s83, 0
      %p126 = por %p124, %p125
      %s128 = sadd.s32 %s127, 1
      %p131 = scmp.eq.s32.totalorder %s77, 1
      %p132 = scmp.ne.s32.totalorder %s127, %s129
      %p133 = scmp.eq.s32.totalorder %s77, 0
      %p134 = por %p132, %p133
      %p135 = scmp.ne.s32.totalorder %s127, %s129
      %p136 = scmp.eq.s32.totalorder %s82, 1
      %p137 = por %p135, %p136
      %p138 = scmp.ne.s32.totalorder %s129, %s130
      %p139 = scmp.eq.s32.totalorder %s82, 0
      %p140 = por %p138, %p139
      %p141 = scmp.ne.s32.totalorder %s129, %s130
      %p142 = scmp.eq.s32.totalorder %s83, 1
      %p143 = por %p141, %p142
      %p145 = scmp.ne.s32.totalorder %s130, %s144
      %p146 = scmp.eq.s32.totalorder %s83, 0
      %p147 = por %p145, %p146
      %s149 = sadd.s32 %s148, 1
      %p152 = scmp.eq.s32.totalorder %s77, 1
      %p153 = scmp.ne.s32.totalorder %s148, %s150
      %p154 = scmp.eq.s32.totalorder %s77, 0
      %p155 = por %p153, %p154
      %p156 = scmp.ne.s32.totalorder %s148, %s150
      %p157 = scmp.eq.s32.totalorder %s82, 1
      %p158 = por %p156, %p157
      %p159 = scmp.ne.s32.totalorder %s150, %s151
      %p160 = scmp.eq.s32.totalorder %s82, 0
      %p161 = por %p159, %p160
      %p162 = scmp.ne.s32.totalorder %s150, %s151
      %p163 = scmp.eq.s32.totalorder %s83, 1
      %p164 = por %p162, %p163
      %p166 = scmp.ne.s32.totalorder %s151, %s165
      %p167 = scmp.eq.s32.totalorder %s83, 0
      %p168 = por %p166, %p167
      %s170 = sadd.s32 %s169, 1
      %p173 = scmp.eq.s32.totalorder %s77, 1
      %p174 = scmp.ne.s32.totalorder %s169, %s171
      %p175 = scmp.eq.s32.totalorder %s77, 0
      %p176 = por %p174, %p175
      %p177 = scmp.ne.s32.totalorder %s169, %s171
      %p178 = scmp.eq.s32.totalorder %s82, 1
      %p179 = por %p177, %p178
      %p180 = scmp.ne.s32.totalorder %s171, %s172
      %p181 = scmp.eq.s32.totalorder %s82, 0
      %p182 = por %p180, %p181
      %p183 = scmp.ne.s32.totalorder %s171, %s172
      %p184 = scmp.eq.s32.totalorder %s83, 1
      %p185 = por %p183, %p184
      %p187 = scmp.ne.s32.totalorder %s172, %s186
      %p188 = scmp.eq.s32.totalorder %s83, 0
      %p189 = por %p187, %p188
      %s191 = sadd.s32 %s190, 1
      %p194 = scmp.eq.s32.totalorder %s77, 1
      %p195 = scmp.ne.s32.totalorder %s190, %s192
      %p196 = scmp.eq.s32.totalorder %s77, 0
      %p197 = por %p195, %p196
      %p198 = scmp.ne.s32.totalorder %s190, %s192
      %p199 = scmp.eq.s32.totalorder %s82, 1
      %p200 = por %p198, %p199
      %p201 = scmp.ne.s32.totalorder %s192, %s193
      %p202 = scmp.eq.s32.totalorder %s82, 0
      %p203 = por %p201, %p202
      %p204 = scmp.ne.s32.totalorder %s192, %s193
      %p205 = scmp.eq.s32.totalorder %s83, 1
      %p206 = por %p204, %p205
      %p208 = scmp.ne.s32.totalorder %s193, %s207
      %p209 = scmp.eq.s32.totalorder %s83, 0
      %p210 = por %p208, %p209
      %s212 = sadd.s32 %s211, 1
      %p215 = scmp.eq.s32.totalorder %s77, 1
      %p216 = scmp.ne.s32.totalorder %s211, %s213
      %p217 = scmp.eq.s32.totalorder %s77, 0
      %p218 = por %p216, %p217
      %p219 = scmp.ne.s32.totalorder %s211, %s213
      %p220 = scmp.eq.s32.totalorder %s82, 1
      %p221 = por %p219, %p220
      %p222 = scmp.ne.s32.totalorder %s213, %s214
      %p223 = scmp.eq.s32.totalorder %s82, 0
      %p224 = por %p222, %p223
      %p225 = scmp.ne.s32.totalorder %s213, %s214
      %p226 = scmp.eq.s32.totalorder %s83, 1
      %p227 = por %p225, %p226
      %p229 = scmp.ne.s32.totalorder %s214, %s228
      %p230 = scmp.eq.s32.totalorder %s83, 0
      %p231 = por %p229, %p230
      %s233 = sadd.s32 %s232, 1
      %p236 = scmp.eq.s32.totalorder %s77, 1
      %p237 = scmp.ne.s32.totalorder %s232, %s234
      %p238 = scmp.eq.s32.totalorder %s77, 0
      %p239 = por %p237, %p238
      %p240 = scmp.ne.s32.totalorder %s232, %s234
      %p241 = scmp.eq.s32.totalorder %s82, 1
      %p242 = por %p240, %p241
      %p243 = scmp.ne.s32.totalorder %s234, %s235
      %p244 = scmp.eq.s32.totalorder %s82, 0
      %p245 = por %p243, %p244
      %p246 = scmp.ne.s32.totalorder %s234, %s235
      %p247 = scmp.eq.s32.totalorder %s83, 1
      %p248 = por %p246, %p247
      %p250 = scmp.ne.s32.totalorder %s235, %s249
      %p251 = scmp.eq.s32.totalorder %s83, 0
      %p252 = por %p250, %p251
      %s254 = sadd.s32 %s253, 1
      %p257 = scmp.eq.s32.totalorder %s77, 1
      %p258 = scmp.ne.s32.totalorder %s253, %s255
      %p259 = scmp.eq.s32.totalorder %s77, 0
      %p260 = por %p258, %p259
      %p261 = scmp.ne.s32.totalorder %s253, %s255
      %p262 = scmp.eq.s32.totalorder %s82, 1
      %p263 = por %p261, %p262
      %p264 = scmp.ne.s32.totalorder %s255, %s256
      %p265 = scmp.eq.s32.totalorder %s82, 0
      %p266 = por %p264, %p265
      %p267 = scmp.ne.s32.totalorder %s255, %s256
      %p268 = scmp.eq.s32.totalorder %s83, 1
      %p269 = por %p267, %p268
      %p271 = scmp.ne.s32.totalorder %s256, %s270
      %p272 = scmp.eq.s32.totalorder %s83, 0
      %p273 = por %p271, %p272
      %s275 = sadd.s32 %s274, 1
      %p278 = scmp.eq.s32.totalorder %s77, 1
      %p279 = scmp.ne.s32.totalorder %s274, %s276
      %p280 = scmp.eq.s32.totalorder %s77, 0
      %p281 = por %p279, %p280
      %p282 = scmp.ne.s32.totalorder %s274, %s276
      %p283 = scmp.eq.s32.totalorder %s82, 1
      %p284 = por %p282, %p283
      %p285 = scmp.ne.s32.totalorder %s276, %s277
      %p286 = scmp.eq.s32.totalorder %s82, 0
      %p287 = por %p285, %p286
      %p288 = scmp.ne.s32.totalorder %s276, %s277
      %p289 = scmp.eq.s32.totalorder %s83, 1
      %p290 = por %p288, %p289
      %p292 = scmp.ne.s32.totalorder %s277, %s291
      %p293 = scmp.eq.s32.totalorder %s83, 0
      %p294 = por %p292, %p293
      %s296 = sadd.s32 %s295, 1
      %p299 = scmp.eq.s32.totalorder %s77, 1
      %p300 = scmp.ne.s32.totalorder %s295, %s297
      %p301 = scmp.eq.s32.totalorder %s77, 0
      %p302 = por %p300, %p301
      %p303 = scmp.ne.s32.totalorder %s295, %s297
      %p304 = scmp.eq.s32.totalorder %s82, 1
      %p305 = por %p303, %p304
      %p306 = scmp.ne.s32.totalorder %s297, %s298
      %p307 = scmp.eq.s32.totalorder %s82, 0
      %p308 = por %p306, %p307
      %p309 = scmp.ne.s32.totalorder %s297, %s298
      %p310 = scmp.eq.s32.totalorder %s83, 1
      %p311 = por %p309, %p310
      %p313 = scmp.ne.s32.totalorder %s298, %s312
      %p314 = scmp.eq.s32.totalorder %s83, 0
      %p315 = por %p313, %p314
      %s317 = sadd.s32 %s316, 1
      %p320 = scmp.eq.s32.totalorder %s77, 1
      %p321 = scmp.ne.s32.totalorder %s316, %s318
      %p322 = scmp.eq.s32.totalorder %s77, 0
      %p323 = por %p321, %p322
      %p324 = scmp.ne.s32.totalorder %s316, %s318
      %p325 = scmp.eq.s32.totalorder %s82, 1
      %p326 = por %p324, %p325
      %p327 = scmp.ne.s32.totalorder %s318, %s319
      %p328 = scmp.eq.s32.totalorder %s82, 0
      %p329 = por %p327, %p328
      %p330 = scmp.ne.s32.totalorder %s318, %s319
      %p331 = scmp.eq.s32.totalorder %s83, 1
      %p332 = por %p330, %p331
      %p334 = scmp.ne.s32.totalorder %s319, %s333
      %p335 = scmp.eq.s32.totalorder %s83, 0
      %p336 = por %p334, %p335
      %s338 = sadd.s32 %s337, 1
      %p341 = scmp.eq.s32.totalorder %s77, 1
      %p342 = scmp.ne.s32.totalorder %s337, %s339
      %p343 = scmp.eq.s32.totalorder %s77, 0
      %p344 = por %p342, %p343
      %p345 = scmp.ne.s32.totalorder %s337, %s339
      %p346 = scmp.eq.s32.totalorder %s82, 1
      %p347 = por %p345, %p346
      %p348 = scmp.ne.s32.totalorder %s339, %s340
      %p349 = scmp.eq.s32.totalorder %s82, 0
      %p350 = por %p348, %p349
      %p351 = scmp.ne.s32.totalorder %s339, %s340
      %p352 = scmp.eq.s32.totalorder %s83, 1
      %p353 = por %p351, %p352
      %p355 = scmp.ne.s32.totalorder %s340, %s354
      %p356 = scmp.eq.s32.totalorder %s83, 0
      %p357 = por %p355, %p356
      %s359 = sadd.s32 %s358, 1
      %p362 = scmp.eq.s32.totalorder %s77, 1
      %p363 = scmp.ne.s32.totalorder %s358, %s360
      %p364 = scmp.eq.s32.totalorder %s77, 0
      %p365 = por %p363, %p364
      %p366 = scmp.ne.s32.totalorder %s358, %s360
      %p367 = scmp.eq.s32.totalorder %s82, 1
      %p368 = por %p366, %p367
      %p369 = scmp.ne.s32.totalorder %s360, %s361
      %p370 = scmp.eq.s32.totalorder %s82, 0
      %p371 = por %p369, %p370
      %p372 = scmp.ne.s32.totalorder %s360, %s361
      %p373 = scmp.eq.s32.totalorder %s83, 1
      %p374 = por %p372, %p373
      %p376 = scmp.ne.s32.totalorder %s361, %s375
      %p377 = scmp.eq.s32.totalorder %s83, 0
      %p378 = por %p376, %p377
      %s380 = sadd.s32 %s379, 1
      %p383 = scmp.eq.s32.totalorder %s77, 1
      %p384 = scmp.ne.s32.totalorder %s379, %s381
      %p385 = scmp.eq.s32.totalorder %s77, 0
      %p386 = por %p384, %p385
      %p387 = scmp.ne.s32.totalorder %s379, %s381
      %p388 = scmp.eq.s32.totalorder %s82, 1
      %p389 = por %p387, %p388
      %p390 = scmp.ne.s32.totalorder %s381, %s382
      %p391 = scmp.eq.s32.totalorder %s82, 0
      %p392 = por %p390, %p391
      %p393 = scmp.ne.s32.totalorder %s381, %s382
      %p394 = scmp.eq.s32.totalorder %s83, 1
      %p395 = por %p393, %p394
      %p397 = scmp.ne.s32.totalorder %s382, %s396
      %p398 = scmp.eq.s32.totalorder %s83, 0
      %p399 = por %p397, %p398
      %s401 = sadd.s32 %s400, 1
      %p404 = scmp.eq.s32.totalorder %s77, 1
      %p405 = scmp.ne.s32.totalorder %s400, %s402
      %p406 = scmp.eq.s32.totalorder %s77, 0
      %p407 = por %p405, %p406
      %p408 = scmp.ne.s32.totalorder %s400, %s402
      %p409 = scmp.eq.s32.totalorder %s82, 1
      %p410 = por %p408, %p409
      %p411 = scmp.ne.s32.totalorder %s402, %s403
      %p412 = scmp.eq.s32.totalorder %s82, 0
      %p413 = por %p411, %p412
      %p414 = scmp.ne.s32.totalorder %s402, %s403
      %p415 = scmp.eq.s32.totalorder %s83, 1
      %p416 = por %p414, %p415
      %p418 = scmp.ne.s32.totalorder %s403, %s417
      %p419 = scmp.eq.s32.totalorder %s83, 0
      %p420 = por %p418, %p419
      %s421 = ssub.s32 %s77, %s84
      %p422 = scmp.eq.s32.totalorder %s421, 0
      %s424 = sadd.s32 %s423, 1
      %s425 = scalar_select %p422, %s423, %s424
      %p428 = pneg %p422
      %p429 = scmp.eq.s32.totalorder %s77, 1
      %p430 = por %p428, %p429
      %p431 = scmp.ne.s32.totalorder %s423, %s426
      %p432 = scmp.eq.s32.totalorder %s77, 0
      %p433 = por %p431, %p432
      %p434 = scmp.ne.s32.totalorder %s423, %s426
      %p435 = scmp.eq.s32.totalorder %s82, 1
      %p436 = por %p434, %p435
      %p437 = scmp.ne.s32.totalorder %s426, %s427
      %p438 = scmp.eq.s32.totalorder %s82, 0
      %p439 = por %p437, %p438
      %p440 = scmp.ne.s32.totalorder %s426, %s427
      %p441 = scmp.eq.s32.totalorder %s83, 1
      %p442 = por %p440, %p441
      %p444 = scmp.ne.s32.totalorder %s427, %s443
      %p445 = scmp.eq.s32.totalorder %s83, 0
      %p446 = por %p444, %p445
      %s447 = ssub.s32 %s77, %s84
      %p448 = scmp.eq.s32.totalorder %s447, 0
      %s450 = sadd.s32 %s449, 1
      %s451 = scalar_select %p448, %s449, %s450
      %p454 = pneg %p448
      %p455 = scmp.eq.s32.totalorder %s77, 1
      %p456 = por %p454, %p455
      %p457 = scmp.ne.s32.totalorder %s449, %s452
      %p458 = scmp.eq.s32.totalorder %s77, 0
      %p459 = por %p457, %p458
      %p460 = scmp.ne.s32.totalorder %s449, %s452
      %p461 = scmp.eq.s32.totalorder %s82, 1
      %p462 = por %p460, %p461
      %p463 = scmp.ne.s32.totalorder %s452, %s453
      %p464 = scmp.eq.s32.totalorder %s82, 0
      %p465 = por %p463, %p464
      %p466 = scmp.ne.s32.totalorder %s452, %s453
      %p467 = scmp.eq.s32.totalorder %s83, 1
      %p468 = por %p466, %p467
      %p470 = scmp.ne.s32.totalorder %s453, %s469
      %p471 = scmp.eq.s32.totalorder %s83, 0
      %p472 = por %p470, %p471
      %s473 = ssub.s32 %s77, %s84
      %p474 = scmp.eq.s32.totalorder %s473, 0
      %s476 = sadd.s32 %s475, 1
      %s477 = scalar_select %p474, %s475, %s476
      %p480 = pneg %p474
      %p481 = scmp.eq.s32.totalorder %s77, 1
      %p482 = por %p480, %p481
      %p483 = scmp.ne.s32.totalorder %s475, %s478
      %p484 = scmp.eq.s32.totalorder %s77, 0
      %p485 = por %p483, %p484
      %p486 = scmp.ne.s32.totalorder %s475, %s478
      %p487 = scmp.eq.s32.totalorder %s82, 1
      %p488 = por %p486, %p487
      %p489 = scmp.ne.s32.totalorder %s478, %s479
      %p490 = scmp.eq.s32.totalorder %s82, 0
      %p491 = por %p489, %p490
      %p492 = scmp.ne.s32.totalorder %s478, %s479
      %p493 = scmp.eq.s32.totalorder %s83, 1
      %p494 = por %p492, %p493
      %p496 = scmp.ne.s32.totalorder %s479, %s495
      %p497 = scmp.eq.s32.totalorder %s83, 0
      %p498 = por %p496, %p497
      %s499 = ssub.s32 %s77, %s84
      %p500 = scmp.eq.s32.totalorder %s499, 0
      %s502 = sadd.s32 %s501, 1
      %s503 = scalar_select %p500, %s501, %s502
      %p506 = pneg %p500
      %p507 = scmp.eq.s32.totalorder %s77, 1
      %p508 = por %p506, %p507
      %p509 = scmp.ne.s32.totalorder %s501, %s504
      %p510 = scmp.eq.s32.totalorder %s77, 0
      %p511 = por %p509, %p510
      %p512 = scmp.ne.s32.totalorder %s501, %s504
      %p513 = scmp.eq.s32.totalorder %s82, 1
      %p514 = por %p512, %p513
      %p515 = scmp.ne.s32.totalorder %s504, %s505
      %p516 = scmp.eq.s32.totalorder %s82, 0
      %p517 = por %p515, %p516
      %p518 = scmp.ne.s32.totalorder %s504, %s505
      %p519 = scmp.eq.s32.totalorder %s83, 1
      %p520 = por %p518, %p519
      %p522 = scmp.ne.s32.totalorder %s505, %s521
      %p523 = scmp.eq.s32.totalorder %s83, 0
      %p524 = por %p522, %p523
      %s525 = ssub.s32 %s77, %s84
      %p526 = scmp.eq.s32.totalorder %s525, 0
      %s528 = sadd.s32 %s527, 1
      %s529 = scalar_select %p526, %s527, %s528
      %p532 = pneg %p526
      %p533 = scmp.eq.s32.totalorder %s77, 1
      %p534 = por %p532, %p533
      %p535 = scmp.ne.s32.totalorder %s527, %s530
      %p536 = scmp.eq.s32.totalorder %s77, 0
      %p537 = por %p535, %p536
      %p538 = scmp.ne.s32.totalorder %s527, %s530
      %p539 = scmp.eq.s32.totalorder %s82, 1
      %p540 = por %p538, %p539
      %p541 = scmp.ne.s32.totalorder %s530, %s531
      %p542 = scmp.eq.s32.totalorder %s82, 0
      %p543 = por %p541, %p542
      %p544 = scmp.ne.s32.totalorder %s530, %s531
      %p545 = scmp.eq.s32.totalorder %s83, 1
      %p546 = por %p544, %p545
      %p548 = scmp.ne.s32.totalorder %s531, %s547
      %p549 = scmp.eq.s32.totalorder %s83, 0
      %p550 = por %p548, %p549
      %s551 = ssub.s32 %s77, %s84
      %p552 = scmp.eq.s32.totalorder %s551, 0
      %s554 = sadd.s32 %s553, 1
      %s555 = scalar_select %p552, %s553, %s554
      %p558 = pneg %p552
      %p559 = scmp.eq.s32.totalorder %s77, 1
      %p560 = por %p558, %p559
      %p561 = scmp.ne.s32.totalorder %s553, %s556
      %p562 = scmp.eq.s32.totalorder %s77, 0
      %p563 = por %p561, %p562
      %p564 = scmp.ne.s32.totalorder %s553, %s556
      %p565 = scmp.eq.s32.totalorder %s82, 1
      %p566 = por %p564, %p565
      %p567 = scmp.ne.s32.totalorder %s556, %s557
      %p568 = scmp.eq.s32.totalorder %s82, 0
      %p569 = por %p567, %p568
      %p570 = scmp.ne.s32.totalorder %s556, %s557
      %p571 = scmp.eq.s32.totalorder %s83, 1
      %p572 = por %p570, %p571
      %p574 = scmp.ne.s32.totalorder %s557, %s573
      %p575 = scmp.eq.s32.totalorder %s83, 0
      %p576 = por %p574, %p575
      %s577 = ssub.s32 %s77, %s84
      %p578 = scmp.eq.s32.totalorder %s577, 0
      %s580 = sadd.s32 %s579, 1
      %s581 = scalar_select %p578, %s579, %s580
      %p584 = pneg %p578
      %p585 = scmp.eq.s32.totalorder %s77, 1
      %p586 = por %p584, %p585
      %p587 = scmp.ne.s32.totalorder %s579, %s582
      %p588 = scmp.eq.s32.totalorder %s77, 0
      %p589 = por %p587, %p588
      %p590 = scmp.ne.s32.totalorder %s579, %s582
      %p591 = scmp.eq.s32.totalorder %s82, 1
      %p592 = por %p590, %p591
      %p593 = scmp.ne.s32.totalorder %s582, %s583
      %p594 = scmp.eq.s32.totalorder %s82, 0
      %p595 = por %p593, %p594
      %p596 = scmp.ne.s32.totalorder %s582, %s583
      %p597 = scmp.eq.s32.totalorder %s83, 1
      %p598 = por %p596, %p597
      %p600 = scmp.ne.s32.totalorder %s583, %s599
      %p601 = scmp.eq.s32.totalorder %s83, 0
      %p602 = por %p600, %p601
      %s603 = ssub.s32 %s77, %s84
      %p604 = scmp.eq.s32.totalorder %s603, 0
      %s606 = sadd.s32 %s605, 1
      %s607 = scalar_select %p604, %s605, %s606
      %p610 = pneg %p604
      %p611 = scmp.eq.s32.totalorder %s77, 1
      %p612 = por %p610, %p611
      %p613 = scmp.ne.s32.totalorder %s605, %s608
      %p614 = scmp.eq.s32.totalorder %s77, 0
      %p615 = por %p613, %p614
      %p616 = scmp.ne.s32.totalorder %s605, %s608
      %p617 = scmp.eq.s32.totalorder %s82, 1
      %p618 = por %p616, %p617
      %p619 = scmp.ne.s32.totalorder %s608, %s609
      %p620 = scmp.eq.s32.totalorder %s82, 0
      %p621 = por %p619, %p620
      %p622 = scmp.ne.s32.totalorder %s608, %s609
      %p623 = scmp.eq.s32.totalorder %s83, 1
      %p624 = por %p622, %p623
      %p626 = scmp.ne.s32.totalorder %s609, %s625
      %p627 = scmp.eq.s32.totalorder %s83, 0
      %p628 = por %p626, %p627
      %s629 = ssub.s32 %s77, %s84
      %p630 = scmp.eq.s32.totalorder %s629, 0
      %s632 = sadd.s32 %s631, 1
      %s633 = scalar_select %p630, %s631, %s632
      %p636 = pneg %p630
      %p637 = scmp.eq.s32.totalorder %s77, 1
      %p638 = por %p636, %p637
      %p639 = scmp.ne.s32.totalorder %s631, %s634
      %p640 = scmp.eq.s32.totalorder %s77, 0
      %p641 = por %p639, %p640
      %p642 = scmp.ne.s32.totalorder %s631, %s634
      %p643 = scmp.eq.s32.totalorder %s82, 1
      %p644 = por %p642, %p643
      %p645 = scmp.ne.s32.totalorder %s634, %s635
      %p646 = scmp.eq.s32.totalorder %s82, 0
      %p647 = por %p645, %p646
      %p648 = scmp.ne.s32.totalorder %s634, %s635
      %p649 = scmp.eq.s32.totalorder %s83, 1
      %p650 = por %p648, %p649
      %p652 = scmp.ne.s32.totalorder %s635, %s651
      %p653 = scmp.eq.s32.totalorder %s83, 0
      %p654 = por %p652, %p653
      %s655 = ssub.s32 %s77, %s84
      %p656 = scmp.eq.s32.totalorder %s655, 0
      %s658 = sadd.s32 %s657, 1
      %s659 = scalar_select %p656, %s657, %s658
      %p662 = pneg %p656
      %p663 = scmp.eq.s32.totalorder %s77, 1
      %p664 = por %p662, %p663
      %p665 = scmp.ne.s32.totalorder %s657, %s660
      %p666 = scmp.eq.s32.totalorder %s77, 0
      %p667 = por %p665, %p666
      %p668 = scmp.ne.s32.totalorder %s657, %s660
      %p669 = scmp.eq.s32.totalorder %s82, 1
      %p670 = por %p668, %p669
      %p671 = scmp.ne.s32.totalorder %s660, %s661
      %p672 = scmp.eq.s32.totalorder %s82, 0
      %p673 = por %p671, %p672
      %p674 = scmp.ne.s32.totalorder %s660, %s661
      %p675 = scmp.eq.s32.totalorder %s83, 1
      %p676 = por %p674, %p675
      %p678 = scmp.ne.s32.totalorder %s661, %s677
      %p679 = scmp.eq.s32.totalorder %s83, 0
      %p680 = por %p678, %p679
      %s681 = ssub.s32 %s77, %s84
      %p682 = scmp.eq.s32.totalorder %s681, 0
      %s684 = sadd.s32 %s683, 1
      %s685 = scalar_select %p682, %s683, %s684
      %p688 = pneg %p682
      %p689 = scmp.eq.s32.totalorder %s77, 1
      %p690 = por %p688, %p689
      %p691 = scmp.ne.s32.totalorder %s683, %s686
      %p692 = scmp.eq.s32.totalorder %s77, 0
      %p693 = por %p691, %p692
      %p694 = scmp.ne.s32.totalorder %s683, %s686
      %p695 = scmp.eq.s32.totalorder %s82, 1
      %p696 = por %p694, %p695
      %p697 = scmp.ne.s32.totalorder %s686, %s687
      %p698 = scmp.eq.s32.totalorder %s82, 0
      %p699 = por %p697, %p698
      %p700 = scmp.ne.s32.totalorder %s686, %s687
      %p701 = scmp.eq.s32.totalorder %s83, 1
      %p702 = por %p700, %p701
      %p704 = scmp.ne.s32.totalorder %s687, %s703
      %p705 = scmp.eq.s32.totalorder %s83, 0
      %p706 = por %p704, %p705
      %s707 = ssub.s32 %s77, %s84
      %p708 = scmp.eq.s32.totalorder %s707, 0
      %s710 = sadd.s32 %s709, 1
      %s711 = scalar_select %p708, %s709, %s710
      %p714 = pneg %p708
      %p715 = scmp.eq.s32.totalorder %s77, 1
      %p716 = por %p714, %p715
      %p717 = scmp.ne.s32.totalorder %s709, %s712
      %p718 = scmp.eq.s32.totalorder %s77, 0
      %p719 = por %p717, %p718
      %p720 = scmp.ne.s32.totalorder %s709, %s712
      %p721 = scmp.eq.s32.totalorder %s82, 1
      %p722 = por %p720, %p721
      %p723 = scmp.ne.s32.totalorder %s712, %s713
      %p724 = scmp.eq.s32.totalorder %s82, 0
      %p725 = por %p723, %p724
      %p726 = scmp.ne.s32.totalorder %s712, %s713
      %p727 = scmp.eq.s32.totalorder %s83, 1
      %p728 = por %p726, %p727
      %p730 = scmp.ne.s32.totalorder %s713, %s729
      %p731 = scmp.eq.s32.totalorder %s83, 0
      %p732 = por %p730, %p731
      %s733 = ssub.s32 %s77, %s84
      %p734 = scmp.eq.s32.totalorder %s733, 0
      %s736 = sadd.s32 %s735, 1
      %s737 = scalar_select %p734, %s735, %s736
      %p740 = pneg %p734
      %p741 = scmp.eq.s32.totalorder %s77, 1
      %p742 = por %p740, %p741
      %p743 = scmp.ne.s32.totalorder %s735, %s738
      %p744 = scmp.eq.s32.totalorder %s77, 0
      %p745 = por %p743, %p744
      %p746 = scmp.ne.s32.totalorder %s735, %s738
      %p747 = scmp.eq.s32.totalorder %s82, 1
      %p748 = por %p746, %p747
      %p749 = scmp.ne.s32.totalorder %s738, %s739
      %p750 = scmp.eq.s32.totalorder %s82, 0
      %p751 = por %p749, %p750
      %p752 = scmp.ne.s32.totalorder %s738, %s739
      %p753 = scmp.eq.s32.totalorder %s83, 1
      %p754 = por %p752, %p753
      %p756 = scmp.ne.s32.totalorder %s739, %s755
      %p757 = scmp.eq.s32.totalorder %s83, 0
      %p758 = por %p756, %p757
      %s759 = ssub.s32 %s77, %s84
      %p760 = scmp.eq.s32.totalorder %s759, 0
      %s762 = sadd.s32 %s761, 1
      %s763 = scalar_select %p760, %s761, %s762
      %p766 = pneg %p760
      %p767 = scmp.eq.s32.totalorder %s77, 1
      %p768 = por %p766, %p767
      %p769 = scmp.ne.s32.totalorder %s761, %s764
      %p770 = scmp.eq.s32.totalorder %s77, 0
      %p771 = por %p769, %p770
      %p772 = scmp.ne.s32.totalorder %s761, %s764
      %p773 = scmp.eq.s32.totalorder %s82, 1
      %p774 = por %p772, %p773
      %p775 = scmp.ne.s32.totalorder %s764, %s765
      %p776 = scmp.eq.s32.totalorder %s82, 0
      %p777 = por %p775, %p776
      %p778 = scmp.ne.s32.totalorder %s764, %s765
      %p779 = scmp.eq.s32.totalorder %s83, 1
      %p780 = por %p778, %p779
      %p782 = scmp.ne.s32.totalorder %s765, %s781
      %p783 = scmp.eq.s32.totalorder %s83, 0
      %p784 = por %p782, %p783
      %s785 = ssub.s32 %s77, %s84
      %p786 = scmp.eq.s32.totalorder %s785, 0
      %s788 = sadd.s32 %s787, 1
      %s789 = scalar_select %p786, %s787, %s788
      %p792 = pneg %p786
      %p793 = scmp.eq.s32.totalorder %s77, 1
      %p794 = por %p792, %p793
      %p795 = scmp.ne.s32.totalorder %s787, %s790
      %p796 = scmp.eq.s32.totalorder %s77, 0
      %p797 = por %p795, %p796
      %p798 = scmp.ne.s32.totalorder %s787, %s790
      %p799 = scmp.eq.s32.totalorder %s82, 1
      %p800 = por %p798, %p799
      %p801 = scmp.ne.s32.totalorder %s790, %s791
      %p802 = scmp.eq.s32.totalorder %s82, 0
      %p803 = por %p801, %p802
      %p804 = scmp.ne.s32.totalorder %s790, %s791
      %p805 = scmp.eq.s32.totalorder %s83, 1
      %p806 = por %p804, %p805
      %p808 = scmp.ne.s32.totalorder %s791, %s807
      %p809 = scmp.eq.s32.totalorder %s83, 0
      %p810 = por %p808, %p809
      %s811 = ssub.s32 %s77, %s84
      %p812 = scmp.eq.s32.totalorder %s811, 0
      %s814 = sadd.s32 %s813, 1
      %s815 = scalar_select %p812, %s813, %s814
      %p818 = pneg %p812
      %p819 = scmp.eq.s32.totalorder %s77, 1
      %p820 = por %p818, %p819
      %p821 = scmp.ne.s32.totalorder %s813, %s816
      %p822 = scmp.eq.s32.totalorder %s77, 0
      %p823 = por %p821, %p822
      %p824 = scmp.ne.s32.totalorder %s813, %s816
      %p825 = scmp.eq.s32.totalorder %s82, 1
      %p826 = por %p824, %p825
      %p827 = scmp.ne.s32.totalorder %s816, %s817
      %p828 = scmp.eq.s32.totalorder %s82, 0
      %p829 = por %p827, %p828
      %p830 = scmp.ne.s32.totalorder %s816, %s817
      %p831 = scmp.eq.s32.totalorder %s83, 1
      %p832 = por %p830, %p831
      %p834 = scmp.ne.s32.totalorder %s817, %s833
      %p835 = scmp.eq.s32.totalorder %s83, 0
      %p836 = por %p834, %p835
      %s837 = ssub.s32 %s77, %s84
      %p838 = scmp.eq.s32.totalorder %s837, 0
      %s840 = sadd.s32 %s839, 1
      %s841 = scalar_select %p838, %s839, %s840
      %p844 = pneg %p838
      %p845 = scmp.eq.s32.totalorder %s77, 1
      %p846 = por %p844, %p845
      %p847 = scmp.ne.s32.totalorder %s839, %s842
      %p848 = scmp.eq.s32.totalorder %s77, 0
      %p849 = por %p847, %p848
      %p850 = scmp.ne.s32.totalorder %s839, %s842
      %p851 = scmp.eq.s32.totalorder %s82, 1
      %p852 = por %p850, %p851
      %p853 = scmp.ne.s32.totalorder %s842, %s843
      %p854 = scmp.eq.s32.totalorder %s82, 0
      %p855 = por %p853, %p854
      %p856 = scmp.ne.s32.totalorder %s842, %s843
      %p857 = scmp.eq.s32.totalorder %s83, 1
      %p858 = por %p856, %p857
      %p860 = scmp.ne.s32.totalorder %s843, %s859
      %p861 = scmp.eq.s32.totalorder %s83, 0
      %p862 = por %p860, %p861
      %s864 = sadd.s32 %s863, 1
      %p867 = scmp.eq.s32.totalorder %s77, 1
      %p868 = scmp.ne.s32.totalorder %s863, %s865
      %p869 = scmp.eq.s32.totalorder %s77, 0
      %p870 = por %p868, %p869
      %p871 = scmp.ne.s32.totalorder %s863, %s865
      %p872 = scmp.eq.s32.totalorder %s82, 1
      %p873 = por %p871, %p872
      %p874 = scmp.ne.s32.totalorder %s865, %s866
      %p875 = scmp.eq.s32.totalorder %s82, 0
      %p876 = por %p874, %p875
      %p877 = scmp.ne.s32.totalorder %s865, %s866
      %p878 = scmp.eq.s32.totalorder %s83, 1
      %p879 = por %p877, %p878
      %p881 = scmp.ne.s32.totalorder %s866, %s880
      %p882 = scmp.eq.s32.totalorder %s83, 0
      %p883 = por %p881, %p882
      %p884 = scmp.le.s32.totalorder 1, %s77
      %p885 = scmp.lt.s32.totalorder %s77, 3
      %p886 = pnand %p884, %p885
      %p887 = pneg %p886
      // Predicated region
      $region9: #{context_decoder_forward.1} parent=5 // pred_check
        _
      $region10: #{context_decoder_forward.1} parent=5 // pred_check_branch
        %889 = sbr.rel (%p886) target = $region12
      $region11: #{context_decoder_forward.1} parent=5 // pred_region
        %s890 = ssub.s32 %s77, 1
        // Predicated region
        $region13: #{context_decoder_forward.1} parent=11 // pred_check
          %p891 = pneg %p98
        $region14: #{context_decoder_forward.1} parent=11 // pred_check_branch
          %893 = sbr.rel (%p891) target = $region16
        $region15: #{context_decoder_forward.1} parent=11 // pred_region
          %s895 = ssub.s32 256, 256
          %896 = vsyncadd [#allocation5], %s895
          %s897 = sshll.u32 [#allocation4], 4
          %s898 = int_to_ptr.vmem [resolvable:$true] %s897
          %903 = dma.hbm_to_vmem [thread:$0]  %s1, 256, %s898, [#allocation5], 128, 128, 8
        $region16: #{context_decoder_forward.1} parent=11 // pred_fallthru
          _
        // Predicated region
        $region17: #{context_decoder_forward.1} parent=11 // pred_check
          %p904 = pneg %p119
        $region18: #{context_decoder_forward.1} parent=11 // pred_check_branch
          %906 = sbr.rel (%p904) target = $region20
        $region19: #{context_decoder_forward.1} parent=11 // pred_region
          _
        $region20: #{context_decoder_forward.1} parent=11 // pred_fallthru
          _
        // Predicated region
        $region21: #{context_decoder_forward.1} parent=11 // pred_check
          %p907 = pneg %p140
        $region22: #{context_decoder_forward.1} parent=11 // pred_check_branch
          %909 = sbr.rel (%p907) target = $region24
        $region23: #{context_decoder_forward.1} parent=11 // pred_region
          _
        $region24: #{context_decoder_forward.1} parent=11 // pred_fallthru
          _
        // Predicated region
        $region25: #{context_decoder_forward.1} parent=11 // pred_check
          %p910 = pneg %p161
        $region26: #{context_decoder_forward.1} parent=11 // pred_check_branch
          %912 = sbr.rel (%p910) target = $region28
        $region27: #{context_decoder_forward.1} parent=11 // pred_region
          _
        $region28: #{context_decoder_forward.1} parent=11 // pred_fallthru
          _
        // Predicated region
        $region29: #{context_decoder_forward.1} parent=11 // pred_check
          %p913 = pneg %p182
        $region30: #{context_decoder_forward.1} parent=11 // pred_check_branch
          %915 = sbr.rel (%p913) target = $region32
        $region31: #{context_decoder_forward.1} parent=11 // pred_region
          %s917 = ssub.s32 2048, 2048
          %918 = vsyncadd [#allocation8], %s917
          %s919 = sshll.u32 [#allocation7], 4
          %s920 = int_to_ptr.vmem [resolvable:$true] %s919
          %925 = dma.hbm_to_vmem [thread:$0]  %s9, 2048, %s920, [#allocation8], 64, 64, 4
        $region32: #{context_decoder_forward.1} parent=11 // pred_fallthru
          _
        // Predicated region
        $region33: #{context_decoder_forward.1} parent=11 // pred_check
          %p926 = pneg %p203
        $region34: #{context_decoder_forward.1} parent=11 // pred_check_branch
          %928 = sbr.rel (%p926) target = $region36
        $region35: #{context_decoder_forward.1} parent=11 // pred_region
          _
        $region36: #{context_decoder_forward.1} parent=11 // pred_fallthru
          _
        // Predicated region
        $region37: #{context_decoder_forward.1} parent=11 // pred_check
          %p929 = pneg %p224
        $region38: #{context_decoder_forward.1} parent=11 // pred_check_branch
          %931 = sbr.rel (%p929) target = $region40
        $region39: #{context_decoder_forward.1} parent=11 // pred_region
          _
        $region40: #{context_decoder_forward.1} parent=11 // pred_fallthru
          _
        // Predicated region
        $region41: #{context_decoder_forward.1} parent=11 // pred_check
          %p932 = pneg %p245
        $region42: #{context_decoder_forward.1} parent=11 // pred_check_branch
          %934 = sbr.rel (%p932) target = $region44
        $region43: #{context_decoder_forward.1} parent=11 // pred_region
          _
        $region44: #{context_decoder_forward.1} parent=11 // pred_fallthru
          _
        // Predicated region
        $region45: #{context_decoder_forward.1} parent=11 // pred_check
          %p935 = pneg %p266
        $region46: #{context_decoder_forward.1} parent=11 // pred_check_branch
          %937 = sbr.rel (%p935) target = $region48
        $region47: #{context_decoder_forward.1} parent=11 // pred_region
          _
        $region48: #{context_decoder_forward.1} parent=11 // pred_fallthru
          _
        // Predicated region
        $region49: #{context_decoder_forward.1} parent=11 // pred_check
          %p938 = pneg %p287
        $region50: #{context_decoder_forward.1} parent=11 // pred_check_branch
          %940 = sbr.rel (%p938) target = $region52
        $region51: #{context_decoder_forward.1} parent=11 // pred_region
          _
        $region52: #{context_decoder_forward.1} parent=11 // pred_fallthru
          _
        // Predicated region
        $region53: #{context_decoder_forward.1} parent=11 // pred_check
          %p941 = pneg %p308
        $region54: #{context_decoder_forward.1} parent=11 // pred_check_branch
          %943 = sbr.rel (%p941) target = $region56
        $region55: #{context_decoder_forward.1} parent=11 // pred_region
          %s945 = ssub.s32 2048, 2048
          %946 = vsyncadd [#allocation8], %s945
          %s947 = sshll.u32 [#allocation9], 4
          %s948 = int_to_ptr.vmem [resolvable:$true] %s947
          %953 = dma.hbm_to_vmem [thread:$0]  %s21, 2048, %s948, [#allocation8], 64, 64, 4
        $region56: #{context_decoder_forward.1} parent=11 // pred_fallthru
          _
        // Predicated region
        $region57: #{context_decoder_forward.1} parent=11 // pred_check
          %p954 = pneg %p329
        $region58: #{context_decoder_forward.1} parent=11 // pred_check_branch
          %956 = sbr.rel (%p954) target = $region60
        $region59: #{context_decoder_forward.1} parent=11 // pred_region
          _
        $region60: #{context_decoder_forward.1} parent=11 // pred_fallthru
          _
        // Predicated region
        $region61: #{context_decoder_forward.1} parent=11 // pred_check
          %p957 = pneg %p350
        $region62: #{context_decoder_forward.1} parent=11 // pred_check_branch
          %959 = sbr.rel (%p957) target = $region64
        $region63: #{context_decoder_forward.1} parent=11 // pred_region
          _
        $region64: #{context_decoder_forward.1} parent=11 // pred_fallthru
          _
        // Predicated region
        $region65: #{context_decoder_forward.1} parent=11 // pred_check
          %p960 = pneg %p371
        $region66: #{context_decoder_forward.1} parent=11 // pred_check_branch
          %962 = sbr.rel (%p960) target = $region68
        $region67: #{context_decoder_forward.1} parent=11 // pred_region
          _
        $region68: #{context_decoder_forward.1} parent=11 // pred_fallthru
          _
        // Predicated region
        $region69: #{context_decoder_forward.1} parent=11 // pred_check
          %p963 = pneg %p392
        $region70: #{context_decoder_forward.1} parent=11 // pred_check_branch
          %965 = sbr.rel (%p963) target = $region72
        $region71: #{context_decoder_forward.1} parent=11 // pred_region
          %s967 = ssub.s32 2048, 2048
          %968 = vsyncadd [#allocation11], %s967
          %s969 = sshll.u32 [#allocation10], 4
          %s970 = int_to_ptr.vmem [resolvable:$true] %s969
          %975 = dma.hbm_to_vmem [thread:$0]  %s29, 2048, %s970, [#allocation11], 128, 128, 8
        $region72: #{context_decoder_forward.1} parent=11 // pred_fallthru
          _
        // Predicated region
        $region73: #{context_decoder_forward.1} parent=11 // pred_check
          %p976 = pneg %p413
        $region74: #{context_decoder_forward.1} parent=11 // pred_check_branch
          %978 = sbr.rel (%p976) target = $region76
        $region75: #{context_decoder_forward.1} parent=11 // pred_region
          _
        $region76: #{context_decoder_forward.1} parent=11 // pred_fallthru
          _
      $region12: #{context_decoder_forward.1} parent=5 // pred_fallthru
        _
      %p979 = scmp.lt.s32.totalorder %s77, 2
      // Predicated region
      $region77: #{context_decoder_forward.1} parent=5 // pred_check
        %p980 = pneg %p979
      $region78: #{context_decoder_forward.1} parent=5 // pred_check_branch
        %982 = sbr.rel (%p980) target = $region80
      $region79: #{context_decoder_forward.1} parent=5 // pred_region
        // Predicated region
        $region81: #{context_decoder_forward.1} parent=79 // pred_check
          %p983 = pneg %p433
        $region82: #{context_decoder_forward.1} parent=79 // pred_check_branch
          %985 = sbr.rel (%p983) target = $region84
        $region83: #{context_decoder_forward.1} parent=79 // pred_region
          %p986 = scmp.lt.s32.totalorder %s77, 1
          %s987 = scalar_select %p986, %s77, 1
          %s988 = scalar_lea.vmem %s33, %s987
        $region84: #{context_decoder_forward.1} parent=79 // pred_fallthru
          _
        // Predicated region
        $region85: #{context_decoder_forward.1} parent=79 // pred_check
          %p989 = pneg %p459
        $region86: #{context_decoder_forward.1} parent=79 // pred_check_branch
          %991 = sbr.rel (%p989) target = $region88
        $region87: #{context_decoder_forward.1} parent=79 // pred_region
          %p992 = scmp.lt.s32.totalorder %s77, 1
          %s993 = scalar_select %p992, %s77, 1
          %s994 = scalar_lea.vmem %s35, %s993
        $region88: #{context_decoder_forward.1} parent=79 // pred_fallthru
          _
        // Predicated region
        $region89: #{context_decoder_forward.1} parent=79 // pred_check
          %p995 = pneg %p485
        $region90: #{context_decoder_forward.1} parent=79 // pred_check_branch
          %997 = sbr.rel (%p995) target = $region92
        $region91: #{context_decoder_forward.1} parent=79 // pred_region
          %s998 = sand.u32 %s77, 1
          %s999 = scalar_lea.sflag [#allocation5], %s998
          %s1000 = sand.u32 %s475, 1
          %s1001 = smul.addr %s1000, 192
          %s1002 = scalar_lea.vmem [#allocation12], %s1001
          %s1004 = ssub.s32 3072, 3072
          %1005 = vsyncadd %s999, %s1004
          %s1006 = smul.addr %s77, 48
          %s1007 = smul.addr %s1006, 64
          %s1008 = scalar_lea.hbm %s37, %s1007
          %s1009 = sshll.u32 %s1002, 4
          %s1010 = int_to_ptr.vmem [resolvable:$true] %s1009
          %1015 = dma.hbm_to_vmem [thread:$0]  %s1008, 3072, %s1010, %s999, 192, 192, 12
        $region92: #{context_decoder_forward.1} parent=79 // pred_fallthru
          _
        // Predicated region
        $region93: #{context_decoder_forward.1} parent=79 // pred_check
          %p1016 = pneg %p511
        $region94: #{context_decoder_forward.1} parent=79 // pred_check_branch
          %1018 = sbr.rel (%p1016) target = $region96
        $region95: #{context_decoder_forward.1} parent=79 // pred_region
          %s1019 = sand.u32 %s77, 1
          %s1020 = scalar_lea.sflag [#allocation5], %s1019
          %s1021 = sand.u32 %s501, 1
          %s1022 = smul.addr %s1021, 64
          %s1023 = scalar_lea.vmem [#allocation13], %s1022
          %s1025 = ssub.s32 1024, 1024
          %1026 = vsyncadd %s1020, %s1025
          %s1027 = smul.addr %s77, 16
          %s1028 = smul.addr %s1027, 64
          %s1029 = scalar_lea.hbm %s39, %s1028
          %s1030 = sshll.u32 %s1023, 4
          %s1031 = int_to_ptr.vmem [resolvable:$true] %s1030
          %1036 = dma.hbm_to_vmem [thread:$0]  %s1029, 1024, %s1031, %s1020, 64, 64, 4
        $region96: #{context_decoder_forward.1} parent=79 // pred_fallthru
          _
        // Predicated region
        $region97: #{context_decoder_forward.1} parent=79 // pred_check
          %p1037 = pneg %p537
        $region98: #{context_decoder_forward.1} parent=79 // pred_check_branch
          %1039 = sbr.rel (%p1037) target = $region100
        $region99: #{context_decoder_forward.1} parent=79 // pred_region
          %p1040 = scmp.lt.s32.totalorder %s77, 1
          %s1041 = scalar_select %p1040, %s77, 1
          %s1042 = scalar_lea.vmem %s41, %s1041
        $region100: #{context_decoder_forward.1} parent=79 // pred_fallthru
          _
        // Predicated region
        $region101: #{context_decoder_forward.1} parent=79 // pred_check
          %p1043 = pneg %p563
        $region102: #{context_decoder_forward.1} parent=79 // pred_check_branch
          %1045 = sbr.rel (%p1043) target = $region104
        $region103: #{context_decoder_forward.1} parent=79 // pred_region
          %p1046 = scmp.lt.s32.totalorder %s77, 1
          %s1047 = scalar_select %p1046, %s77, 1
          %s1048 = scalar_lea.vmem %s43, %s1047
        $region104: #{context_decoder_forward.1} parent=79 // pred_fallthru
          _
        // Predicated region
        $region105: #{context_decoder_forward.1} parent=79 // pred_check
          %p1049 = pneg %p589
        $region106: #{context_decoder_forward.1} parent=79 // pred_check_branch
          %1051 = sbr.rel (%p1049) target = $region108
        $region107: #{context_decoder_forward.1} parent=79 // pred_region
          %p1052 = scmp.lt.s32.totalorder %s77, 1
          %s1053 = scalar_select %p1052, %s77, 1
          %s1054 = scalar_lea.vmem %s45, %s1053
        $region108: #{context_decoder_forward.1} parent=79 // pred_fallthru
          _
        // Predicated region
        $region109: #{context_decoder_forward.1} parent=79 // pred_check
          %p1055 = pneg %p615
        $region110: #{context_decoder_forward.1} parent=79 // pred_check_branch
          %1057 = sbr.rel (%p1055) target = $region112
        $region111: #{context_decoder_forward.1} parent=79 // pred_region
          %s1058 = sand.u32 %s77, 1
          %s1059 = scalar_lea.sflag [#allocation5], %s1058
          %s1060 = sand.u32 %s605, 1
          %s1061 = smul.addr %s1060, 64
          %s1062 = scalar_lea.vmem [#allocation14], %s1061
          %s1064 = ssub.s32 1024, 1024
          %1065 = vsyncadd %s1059, %s1064
          %s1066 = smul.addr %s77, 16
          %s1067 = smul.addr %s1066, 64
          %s1068 = scalar_lea.hbm %s47, %s1067
          %s1069 = sshll.u32 %s1062, 4
          %s1070 = int_to_ptr.vmem [resolvable:$true] %s1069
          %1075 = dma.hbm_to_vmem [thread:$0]  %s1068, 1024, %s1070, %s1059, 64, 64, 4
        $region112: #{context_decoder_forward.1} parent=79 // pred_fallthru
          _
        // Predicated region
        $region113: #{context_decoder_forward.1} parent=79 // pred_check
          %p1076 = pneg %p641
        $region114: #{context_decoder_forward.1} parent=79 // pred_check_branch
          %1078 = sbr.rel (%p1076) target = $region116
        $region115: #{context_decoder_forward.1} parent=79 // pred_region
          %s1079 = sand.u32 %s77, 1
          %s1080 = scalar_lea.sflag [#allocation5], %s1079
          %s1081 = sand.u32 %s631, 1
          %s1082 = smul.addr %s1081, 128
          %s1083 = scalar_lea.vmem [#allocation15], %s1082
          %s1085 = ssub.s32 2048, 2048
          %1086 = vsyncadd %s1080, %s1085
          %s1087 = smul.addr %s77, 32
          %s1088 = smul.addr %s1087, 64
          %s1089 = scalar_lea.hbm %s49, %s1088
          %s1090 = sshll.u32 %s1083, 4
          %s1091 = int_to_ptr.vmem [resolvable:$true] %s1090
          %1096 = dma.hbm_to_vmem [thread:$0]  %s1089, 2048, %s1091, %s1080, 128, 128, 8
        $region116: #{context_decoder_forward.1} parent=79 // pred_fallthru
          _
        // Predicated region
        $region117: #{context_decoder_forward.1} parent=79 // pred_check
          %p1097 = pneg %p667
        $region118: #{context_decoder_forward.1} parent=79 // pred_check_branch
          %1099 = sbr.rel (%p1097) target = $region120
        $region119: #{context_decoder_forward.1} parent=79 // pred_region
          %s1100 = sand.u32 %s77, 1
          %s1101 = scalar_lea.sflag [#allocation5], %s1100
          %s1102 = sand.u32 %s657, 1
          %s1103 = smul.addr %s1102, 64
          %s1104 = scalar_lea.vmem [#allocation16], %s1103
          %s1106 = ssub.s32 1024, 1024
          %1107 = vsyncadd %s1101, %s1106
          %s1108 = smul.addr %s77, 16
          %s1109 = smul.addr %s1108, 64
          %s1110 = scalar_lea.hbm %s51, %s1109
          %s1111 = sshll.u32 %s1104, 4
          %s1112 = int_to_ptr.vmem [resolvable:$true] %s1111
          %1117 = dma.hbm_to_vmem [thread:$0]  %s1110, 1024, %s1112, %s1101, 64, 64, 4
        $region120: #{context_decoder_forward.1} parent=79 // pred_fallthru
          _
        // Predicated region
        $region121: #{context_decoder_forward.1} parent=79 // pred_check
          %p1118 = pneg %p693
        $region122: #{context_decoder_forward.1} parent=79 // pred_check_branch
          %1120 = sbr.rel (%p1118) target = $region124
        $region123: #{context_decoder_forward.1} parent=79 // pred_region
          %p1121 = scmp.lt.s32.totalorder %s77, 1
          %s1122 = scalar_select %p1121, %s77, 1
          %s1123 = scalar_lea.vmem %s53, %s1122
        $region124: #{context_decoder_forward.1} parent=79 // pred_fallthru
          _
        // Predicated region
        $region125: #{context_decoder_forward.1} parent=79 // pred_check
          %p1124 = pneg %p719
        $region126: #{context_decoder_forward.1} parent=79 // pred_check_branch
          %1126 = sbr.rel (%p1124) target = $region128
        $region127: #{context_decoder_forward.1} parent=79 // pred_region
          %p1127 = scmp.lt.s32.totalorder %s77, 1
          %s1128 = scalar_select %p1127, %s77, 1
          %s1129 = scalar_lea.vmem %s55, %s1128
        $region128: #{context_decoder_forward.1} parent=79 // pred_fallthru
          _
        // Predicated region
        $region129: #{context_decoder_forward.1} parent=79 // pred_check
          %p1130 = pneg %p745
        $region130: #{context_decoder_forward.1} parent=79 // pred_check_branch
          %1132 = sbr.rel (%p1130) target = $region132
        $region131: #{context_decoder_forward.1} parent=79 // pred_region
          %p1133 = scmp.lt.s32.totalorder %s77, 1
          %s1134 = scalar_select %p1133, %s77, 1
          %s1135 = scalar_lea.vmem %s57, %s1134
        $region132: #{context_decoder_forward.1} parent=79 // pred_fallthru
          _
        // Predicated region
        $region133: #{context_decoder_forward.1} parent=79 // pred_check
          %p1136 = pneg %p771
        $region134: #{context_decoder_forward.1} parent=79 // pred_check_branch
          %1138 = sbr.rel (%p1136) target = $region136
        $region135: #{context_decoder_forward.1} parent=79 // pred_region
          %s1139 = sand.u32 %s77, 1
          %s1140 = scalar_lea.sflag [#allocation5], %s1139
          %s1141 = sand.u32 %s761, 1
          %s1142 = smul.addr %s1141, 256
          %s1143 = scalar_lea.vmem [#allocation17], %s1142
          %s1145 = ssub.s32 4096, 4096
          %1146 = vsyncadd %s1140, %s1145
          %s1147 = smul.addr %s77, 64
          %s1148 = smul.addr %s1147, 64
          %s1149 = scalar_lea.hbm %s59, %s1148
          %s1150 = sshll.u32 %s1143, 4
          %s1151 = int_to_ptr.vmem [resolvable:$true] %s1150
          %1156 = dma.hbm_to_vmem [thread:$0]  %s1149, 4096, %s1151, %s1140, 256, 256, 16
        $region136: #{context_decoder_forward.1} parent=79 // pred_fallthru
          _
        // Predicated region
        $region137: #{context_decoder_forward.1} parent=79 // pred_check
          %p1157 = pneg %p797
        $region138: #{context_decoder_forward.1} parent=79 // pred_check_branch
          %1159 = sbr.rel (%p1157) target = $region140
        $region139: #{context_decoder_forward.1} parent=79 // pred_region
          %p1160 = scmp.lt.s32.totalorder %s77, 1
          %s1161 = scalar_select %p1160, %s77, 1
          %s1162 = smul.addr %s1161, 4
          %s1163 = scalar_lea.vmem %s61, %s1162
        $region140: #{context_decoder_forward.1} parent=79 // pred_fallthru
          _
        // Predicated region
        $region141: #{context_decoder_forward.1} parent=79 // pred_check
          %p1164 = pneg %p823
        $region142: #{context_decoder_forward.1} parent=79 // pred_check_branch
          %1166 = sbr.rel (%p1164) target = $region144
        $region143: #{context_decoder_forward.1} parent=79 // pred_region
          %s1167 = sand.u32 %s77, 1
          %s1168 = scalar_lea.sflag [#allocation5], %s1167
          %s1169 = sand.u32 %s813, 1
          %s1170 = smul.addr %s1169, 256
          %s1171 = scalar_lea.vmem [#allocation18], %s1170
          %s1173 = ssub.s32 4096, 4096
          %1174 = vsyncadd %s1168, %s1173
          %s1175 = smul.addr %s77, 64
          %s1176 = smul.addr %s1175, 64
          %s1177 = scalar_lea.hbm %s63, %s1176
          %s1178 = sshll.u32 %s1171, 4
          %s1179 = int_to_ptr.vmem [resolvable:$true] %s1178
          %1184 = dma.hbm_to_vmem [thread:$0]  %s1177, 4096, %s1179, %s1168, 64, 64, 4
        $region144: #{context_decoder_forward.1} parent=79 // pred_fallthru
          _
        // Predicated region
        $region145: #{context_decoder_forward.1} parent=79 // pred_check
          %p1185 = pneg %p849
        $region146: #{context_decoder_forward.1} parent=79 // pred_check_branch
          %1187 = sbr.rel (%p1185) target = $region148
        $region147: #{context_decoder_forward.1} parent=79 // pred_region
          %p1188 = scmp.lt.s32.totalorder %s77, 1
          %s1189 = scalar_select %p1188, %s77, 1
          %s1190 = scalar_lea.vmem %s65, %s1189
        $region148: #{context_decoder_forward.1} parent=79 // pred_fallthru
          _
      $region80: #{context_decoder_forward.1} parent=5 // pred_fallthru
        _
      %p1191 = scmp.le.s32.totalorder 1, %s77
      %p1192 = scmp.lt.s32.totalorder %s77, 3
      %p1193 = pnand %p1191, %p1192
      %p1194 = pneg %p1193
      // Predicated region
      $region149: #{context_decoder_forward.1} parent=5 // pred_check
        _
      $region150: #{context_decoder_forward.1} parent=5 // pred_check_branch
        %1196 = sbr.rel (%p1193) target = $region152
      $region151: #{context_decoder_forward.1} parent=5 // pred_region
        %s1197 = ssub.s32 %s77, 1
        // Predicated region
        $region153: #{context_decoder_forward.1} parent=151 // pred_check
          %p1198 = pneg %p98
        $region154: #{context_decoder_forward.1} parent=151 // pred_check_branch
          %1200 = sbr.rel (%p1198) target = $region156
        $region155: #{context_decoder_forward.1} parent=151 // pred_region
          %1201 = dma.done [#allocation5], 256
        $region156: #{context_decoder_forward.1} parent=151 // pred_fallthru
          _
        // Predicated region
        $region157: #{context_decoder_forward.1} parent=151 // pred_check
          %p1202 = pneg %p182
        $region158: #{context_decoder_forward.1} parent=151 // pred_check_branch
          %1204 = sbr.rel (%p1202) target = $region160
        $region159: #{context_decoder_forward.1} parent=151 // pred_region
          %1205 = dma.done [#allocation8], 2048
        $region160: #{context_decoder_forward.1} parent=151 // pred_fallthru
          _
        // Predicated region
        $region161: #{context_decoder_forward.1} parent=151 // pred_check
          %p1206 = pneg %p308
        $region162: #{context_decoder_forward.1} parent=151 // pred_check_branch
          %1208 = sbr.rel (%p1206) target = $region164
        $region163: #{context_decoder_forward.1} parent=151 // pred_region
          %1209 = dma.done [#allocation8], 2048
        $region164: #{context_decoder_forward.1} parent=151 // pred_fallthru
          _
        // Predicated region
        $region165: #{context_decoder_forward.1} parent=151 // pred_check
          %p1210 = pneg %p392
        $region166: #{context_decoder_forward.1} parent=151 // pred_check_branch
          %1212 = sbr.rel (%p1210) target = $region168
        $region167: #{context_decoder_forward.1} parent=151 // pred_region
          %1213 = dma.done [#allocation11], 2048
        $region168: #{context_decoder_forward.1} parent=151 // pred_fallthru
          _
        %s1214 = sand.u32 %s82, 1
        %s1215 = scalar_lea.sflag [#allocation5], %s1214
        %s1216 = sand.u32 %s478, 1
        %s1217 = smul.addr %s1216, 192
        %s1218 = scalar_lea.vmem [#allocation12], %s1217
        // Predicated region
        $region169: #{context_decoder_forward.1} parent=151 // pred_check
          %p1219 = pneg %p491
        $region170: #{context_decoder_forward.1} parent=151 // pred_check_branch
          %1221 = sbr.rel (%p1219) target = $region172
        $region171: #{context_decoder_forward.1} parent=151 // pred_region
          %1222 = dma.done %s1215, 3072
        $region172: #{context_decoder_forward.1} parent=151 // pred_fallthru
          _
        %s1223 = sand.u32 %s82, 1
        %s1224 = scalar_lea.sflag [#allocation5], %s1223
        %s1225 = sand.u32 %s504, 1
        %s1226 = smul.addr %s1225, 64
        %s1227 = scalar_lea.vmem [#allocation13], %s1226
        // Predicated region
        $region173: #{context_decoder_forward.1} parent=151 // pred_check
          %p1228 = pneg %p517
        $region174: #{context_decoder_forward.1} parent=151 // pred_check_branch
          %1230 = sbr.rel (%p1228) target = $region176
        $region175: #{context_decoder_forward.1} parent=151 // pred_region
          %1231 = dma.done %s1224, 1024
        $region176: #{context_decoder_forward.1} parent=151 // pred_fallthru
          _
        %s1232 = sand.u32 %s82, 1
        %s1233 = scalar_lea.sflag [#allocation5], %s1232
        %s1234 = sand.u32 %s608, 1
        %s1235 = smul.addr %s1234, 64
        %s1236 = scalar_lea.vmem [#allocation14], %s1235
        // Predicated region
        $region177: #{context_decoder_forward.1} parent=151 // pred_check
          %p1237 = pneg %p621
        $region178: #{context_decoder_forward.1} parent=151 // pred_check_branch
          %1239 = sbr.rel (%p1237) target = $region180
        $region179: #{context_decoder_forward.1} parent=151 // pred_region
          %1240 = dma.done %s1233, 1024
        $region180: #{context_decoder_forward.1} parent=151 // pred_fallthru
          _
        %s1241 = sand.u32 %s82, 1
        %s1242 = scalar_lea.sflag [#allocation5], %s1241
        %s1243 = sand.u32 %s634, 1
        %s1244 = smul.addr %s1243, 128
        %s1245 = scalar_lea.vmem [#allocation15], %s1244
        // Predicated region
        $region181: #{context_decoder_forward.1} parent=151 // pred_check
          %p1246 = pneg %p647
        $region182: #{context_decoder_forward.1} parent=151 // pred_check_branch
          %1248 = sbr.rel (%p1246) target = $region184
        $region183: #{context_decoder_forward.1} parent=151 // pred_region
          %1249 = dma.done %s1242, 2048
        $region184: #{context_decoder_forward.1} parent=151 // pred_fallthru
          _
        %s1250 = sand.u32 %s82, 1
        %s1251 = scalar_lea.sflag [#allocation5], %s1250
        %s1252 = sand.u32 %s660, 1
        %s1253 = smul.addr %s1252, 64
        %s1254 = scalar_lea.vmem [#allocation16], %s1253
        // Predicated region
        $region185: #{context_decoder_forward.1} parent=151 // pred_check
          %p1255 = pneg %p673
        $region186: #{context_decoder_forward.1} parent=151 // pred_check_branch
          %1257 = sbr.rel (%p1255) target = $region188
        $region187: #{context_decoder_forward.1} parent=151 // pred_region
          %1258 = dma.done %s1251, 1024
        $region188: #{context_decoder_forward.1} parent=151 // pred_fallthru
          _
        %s1259 = sand.u32 %s82, 1
        %s1260 = scalar_lea.sflag [#allocation5], %s1259
        %s1261 = sand.u32 %s764, 1
        %s1262 = smul.addr %s1261, 256
        %s1263 = scalar_lea.vmem [#allocation17], %s1262
        // Predicated region
        $region189: #{context_decoder_forward.1} parent=151 // pred_check
          %p1264 = pneg %p777
        $region190: #{context_decoder_forward.1} parent=151 // pred_check_branch
          %1266 = sbr.rel (%p1264) target = $region192
        $region191: #{context_decoder_forward.1} parent=151 // pred_region
          %1267 = dma.done %s1260, 4096
        $region192: #{context_decoder_forward.1} parent=151 // pred_fallthru
          _
        %s1268 = sand.u32 %s82, 1
        %s1269 = scalar_lea.sflag [#allocation5], %s1268
        %s1270 = sand.u32 %s816, 1
        %s1271 = smul.addr %s1270, 256
        %s1272 = scalar_lea.vmem [#allocation18], %s1271
        // Predicated region
        $region193: #{context_decoder_forward.1} parent=151 // pred_check
          %p1273 = pneg %p829
        $region194: #{context_decoder_forward.1} parent=151 // pred_check_branch
          %1275 = sbr.rel (%p1273) target = $region196
        $region195: #{context_decoder_forward.1} parent=151 // pred_region
          %1276 = dma.done %s1269, 4096
        $region196: #{context_decoder_forward.1} parent=151 // pred_fallthru
          _
        %p1277 = pneg %p98
        %p1278 = pneg %p95
        %p1279 = pneg %p119
        %p1280 = pneg %p116
        %p1281 = pneg %p140
        %p1282 = pneg %p137
        %p1283 = pneg %p161
        %p1284 = pneg %p158
        %p1285 = pneg %p182
        %p1286 = pneg %p179
        %p1287 = pneg %p203
        %p1288 = pneg %p200
        %p1289 = pneg %p224
        %p1290 = pneg %p221
        %p1291 = pneg %p245
        %p1292 = pneg %p242
        %p1293 = pneg %p266
        %p1294 = pneg %p263
        %p1295 = pneg %p287
        %p1296 = pneg %p284
        %p1297 = pneg %p308
        %p1298 = pneg %p305
        %p1299 = pneg %p329
        %p1300 = pneg %p326
        %p1301 = pneg %p350
        %p1302 = pneg %p347
        %p1303 = pneg %p371
        %p1304 = pneg %p368
        %p1305 = pneg %p392
        %p1306 = pneg %p389
        %p1307 = pneg %p413
        %p1308 = pneg %p410
        %p1309 = scmp.lt.s32.totalorder %s82, 1
        %s1310 = scalar_select %p1309, %s82, 1
        %s1311 = scalar_lea.vmem %s33, %s1310
        %p1312 = pneg %p439
        %p1313 = pneg %p436
        %p1314 = scmp.lt.s32.totalorder %s82, 1
        %s1315 = scalar_select %p1314, %s82, 1
        %s1316 = scalar_lea.vmem %s35, %s1315
        %p1317 = pneg %p465
        %p1318 = pneg %p462
        %s1319 = sand.u32 %s82, 1
        %s1320 = scalar_lea.sflag [#allocation5], %s1319
        %s1321 = sand.u32 %s478, 1
        %s1322 = smul.addr %s1321, 192
        %s1323 = scalar_lea.vmem [#allocation12], %s1322
        %p1324 = pneg %p491
        %p1325 = pneg %p488
        %s1326 = sand.u32 %s82, 1
        %s1327 = scalar_lea.sflag [#allocation5], %s1326
        %s1328 = sand.u32 %s504, 1
        %s1329 = smul.addr %s1328, 64
        %s1330 = scalar_lea.vmem [#allocation13], %s1329
        %p1331 = pneg %p517
        %p1332 = pneg %p514
        %p1333 = scmp.lt.s32.totalorder %s82, 1
        %s1334 = scalar_select %p1333, %s82, 1
        %s1335 = scalar_lea.vmem %s41, %s1334
        %p1336 = pneg %p543
        %p1337 = pneg %p540
        %p1338 = scmp.lt.s32.totalorder %s82, 1
        %s1339 = scalar_select %p1338, %s82, 1
        %s1340 = scalar_lea.vmem %s43, %s1339
        %p1341 = pneg %p569
        %p1342 = pneg %p566
        %p1343 = scmp.lt.s32.totalorder %s82, 1
        %s1344 = scalar_select %p1343, %s82, 1
        %s1345 = scalar_lea.vmem %s45, %s1344
        %p1346 = pneg %p595
        %p1347 = pneg %p592
        %s1348 = sand.u32 %s82, 1
        %s1349 = scalar_lea.sflag [#allocation5], %s1348
        %s1350 = sand.u32 %s608, 1
        %s1351 = smul.addr %s1350, 64
        %s1352 = scalar_lea.vmem [#allocation14], %s1351
        %p1353 = pneg %p621
        %p1354 = pneg %p618
        %s1355 = sand.u32 %s82, 1
        %s1356 = scalar_lea.sflag [#allocation5], %s1355
        %s1357 = sand.u32 %s634, 1
        %s1358 = smul.addr %s1357, 128
        %s1359 = scalar_lea.vmem [#allocation15], %s1358
        %p1360 = pneg %p647
        %p1361 = pneg %p644
        %s1362 = sand.u32 %s82, 1
        %s1363 = scalar_lea.sflag [#allocation5], %s1362
        %s1364 = sand.u32 %s660, 1
        %s1365 = smul.addr %s1364, 64
        %s1366 = scalar_lea.vmem [#allocation16], %s1365
        %p1367 = pneg %p673
        %p1368 = pneg %p670
        %p1369 = scmp.lt.s32.totalorder %s82, 1
        %s1370 = scalar_select %p1369, %s82, 1
        %s1371 = scalar_lea.vmem %s53, %s1370
        %p1372 = pneg %p699
        %p1373 = pneg %p696
        %p1374 = scmp.lt.s32.totalorder %s82, 1
        %s1375 = scalar_select %p1374, %s82, 1
        %s1376 = scalar_lea.vmem %s55, %s1375
        %p1377 = pneg %p725
        %p1378 = pneg %p722
        %p1379 = scmp.lt.s32.totalorder %s82, 1
        %s1380 = scalar_select %p1379, %s82, 1
        %s1381 = scalar_lea.vmem %s57, %s1380
        %p1382 = pneg %p751
        %p1383 = pneg %p748
        %s1384 = sand.u32 %s82, 1
        %s1385 = scalar_lea.sflag [#allocation5], %s1384
        %s1386 = sand.u32 %s764, 1
        %s1387 = smul.addr %s1386, 256
        %s1388 = scalar_lea.vmem [#allocation17], %s1387
        %p1389 = pneg %p777
        %p1390 = pneg %p774
        %p1391 = scmp.lt.s32.totalorder %s82, 1
        %s1392 = scalar_select %p1391, %s82, 1
        %s1393 = smul.addr %s1392, 4
        %s1394 = scalar_lea.vmem %s61, %s1393
        %p1395 = pneg %p803
        %p1396 = pneg %p800
        %s1397 = sand.u32 %s82, 1
        %s1398 = scalar_lea.sflag [#allocation5], %s1397
        %s1399 = sand.u32 %s816, 1
        %s1400 = smul.addr %s1399, 256
        %s1401 = scalar_lea.vmem [#allocation18], %s1400
        %p1402 = pneg %p829
        %p1403 = pneg %p826
        %p1404 = scmp.lt.s32.totalorder %s82, 1
        %s1405 = scalar_select %p1404, %s82, 1
        %s1406 = scalar_lea.vmem %s65, %s1405
        %p1407 = pneg %p855
        %p1408 = pneg %p852
        %p1409 = pneg %p876
        %p1410 = pneg %p873
        %p1411 = scmp.lt.s32.totalorder %s82, 1
        %s1412 = scalar_select %p1411, %s82, 1
        %s1413 = scalar_lea.vmem %s33, %s1412
        %p1414 = scmp.lt.s32.totalorder %s82, 1
        %s1415 = scalar_select %p1414, %s82, 1
        %s1416 = scalar_lea.vmem %s35, %s1415
        %p1417 = scmp.lt.s32.totalorder %s82, 1
        %s1418 = scalar_select %p1417, %s82, 1
        %s1419 = scalar_lea.vmem %s41, %s1418
        %p1420 = scmp.lt.s32.totalorder %s82, 1
        %s1421 = scalar_select %p1420, %s82, 1
        %s1422 = scalar_lea.vmem %s43, %s1421
        %p1423 = scmp.lt.s32.totalorder %s82, 1
        %s1424 = scalar_select %p1423, %s82, 1
        %s1425 = scalar_lea.vmem %s45, %s1424
        %p1426 = scmp.lt.s32.totalorder %s82, 1
        %s1427 = scalar_select %p1426, %s82, 1
        %s1428 = scalar_lea.vmem %s53, %s1427
        %p1429 = scmp.lt.s32.totalorder %s82, 1
        %s1430 = scalar_select %p1429, %s82, 1
        %s1431 = scalar_lea.vmem %s55, %s1430
        %p1432 = scmp.lt.s32.totalorder %s82, 1
        %s1433 = scalar_select %p1432, %s82, 1
        %s1434 = scalar_lea.vmem %s57, %s1433
        %p1435 = scmp.lt.s32.totalorder %s82, 1
        %s1436 = scalar_select %p1435, %s82, 1
        %s1437 = smul.addr %s1436, 4
        %s1438 = scalar_lea.vmem %s61, %s1437
        %p1439 = scmp.lt.s32.totalorder %s82, 1
        %s1440 = scalar_select %p1439, %s82, 1
        %s1441 = scalar_lea.vmem %s65, %s1440
        %p1443 = scmp.eq.s32.totalorder %s82, 0
        // Predicated region
        $region197: #{context_decoder_forward.1} parent=151 // pred_check
          %p1444 = pneg %p1443
        $region198: #{context_decoder_forward.1} parent=151 // pred_check_branch
          %1446 = sbr.rel (%p1444) target = $region200
        $region199: #{context_decoder_forward.1} parent=151 // pred_region
          %v1447 = vld [vmem:[%s3] sm:$0xff]
          %v1448 = vld [vmem:[%s3 + $0x8] sm:$0xff]
          %v1449 = vld [vmem:[%s3 + $0x10] sm:$0xff]
          %v1450 = vld [vmem:[%s3 + $0x18] sm:$0xff]
          %v1451 = vunpack.c.l.bf16 %v1447
          %v1452 = vunpack.c.h.bf16 %v1447
          %v1453 = vunpack.c.l.bf16 %v1448
          %v1454 = vunpack.c.h.bf16 %v1448
          %v1455 = vunpack.c.l.bf16 %v1449
          %v1456 = vunpack.c.h.bf16 %v1449
          %v1457 = vunpack.c.l.bf16 %v1450
          %v1458 = vunpack.c.h.bf16 %v1450
          %v1459 = vld [vmem:[%s5] sm:$0x3]
          %v1460 = vunpack.c.l.bf16 %v1459
          %v1461 = vld [vmem:[%s7] sm:$0x3]
          %v1462 = vunpack.c.l.bf16 %v1461
          %v1463 = vadd.f32 %v1451, %v1452
          %1464 = vadd.xlane.f32.xlu0 %v1463
          %v1465 = vpop.xlane.xlu0 %1464
          %v1466 = vadd.f32 %v1453, %v1454
          %1467 = vadd.xlane.f32.xlu0 %v1466
          %v1468 = vpop.xlane.xlu0 %1467
          %v1469 = vadd.f32 %v1455, %v1456
          %1470 = vadd.xlane.f32.xlu0 %v1469
          %v1471 = vpop.xlane.xlu0 %1470
          %v1472 = vadd.f32 %v1457, %v1458
          %1473 = vadd.xlane.f32.xlu0 %v1472
          %v1474 = vpop.xlane.xlu0 %1473
          %v1475 = vrcp.pop 256.0
          %v1476 = vmul.f32 %v1465, %v1475
          %v1477 = vmul.f32 %v1468, %v1475
          %v1478 = vmul.f32 %v1471, %v1475
          %v1479 = vmul.f32 %v1474, %v1475
          %v1480 = vsub.f32 %v1451, %v1476
          %v1481 = vsub.f32 %v1452, %v1476
          %v1482 = vsub.f32 %v1453, %v1477
          %v1483 = vsub.f32 %v1454, %v1477
          %v1484 = vsub.f32 %v1455, %v1478
          %v1485 = vsub.f32 %v1456, %v1478
          %v1486 = vsub.f32 %v1457, %v1479
          %v1487 = vsub.f32 %v1458, %v1479
          %v1488 = vmul.f32 %v1480, %v1480
          %v1489 = vmul.f32 %v1481, %v1481
          %v1490 = vmul.f32 %v1482, %v1482
          %v1491 = vmul.f32 %v1483, %v1483
          %v1492 = vmul.f32 %v1484, %v1484
          %v1493 = vmul.f32 %v1485, %v1485
          %v1494 = vmul.f32 %v1486, %v1486
          %v1495 = vmul.f32 %v1487, %v1487
          %v1496 = vadd.f32 %v1488, %v1489
          %1497 = vadd.xlane.f32.xlu0 %v1496
          %v1498 = vpop.xlane.xlu0 %1497
          %v1499 = vadd.f32 %v1490, %v1491
          %1500 = vadd.xlane.f32.xlu0 %v1499
          %v1501 = vpop.xlane.xlu0 %1500
          %v1502 = vadd.f32 %v1492, %v1493
          %1503 = vadd.xlane.f32.xlu0 %v1502
          %v1504 = vpop.xlane.xlu0 %1503
          %v1505 = vadd.f32 %v1494, %v1495
          %1506 = vadd.xlane.f32.xlu0 %v1505
          %v1507 = vpop.xlane.xlu0 %1506
          %v1508 = vmul.f32 %v1498, %v1475
          %v1509 = vmul.f32 %v1501, %v1475
          %v1510 = vmul.f32 %v1504, %v1475
          %v1511 = vmul.f32 %v1507, %v1475
          %v1512 = vadd.f32 %v1508, 1e-05
          %v1513 = vadd.f32 %v1509, 1e-05
          %v1514 = vadd.f32 %v1510, 1e-05
          %v1515 = vadd.f32 %v1511, 1e-05
          %v1516 = vrsqrt.pop %v1512
          %v1517 = vrsqrt.pop %v1513
          %v1518 = vrsqrt.pop %v1514
          %v1519 = vrsqrt.pop %v1515
          %v1520 = vmul.f32 %v1480, %v1516
          %v1521 = vmul.f32 %v1481, %v1516
          %v1522 = vmul.f32 %v1482, %v1517
          %v1523 = vmul.f32 %v1483, %v1517
          %v1524 = vmul.f32 %v1484, %v1518
          %v1525 = vmul.f32 %v1485, %v1518
          %v1526 = vmul.f32 %v1486, %v1519
          %v1527 = vmul.f32 %v1487, %v1519
          %v1529 = vlaneseq
          %v1530 = vshrl.u32 %v1529, 7
          %v1531 = vsub.s32 0, %v1530
          %v1532 = vrot.slane %v1460, %v1531
          %v1533 = vlaneseq
          %v1534 = vshrl.u32 %v1533, 7
          %v1535 = vsub.s32 2, %v1534
          %v1536 = vrot.slane %v1460, %v1535
          %v1539 = vlaneseq
          %v1540 = vshrl.u32 %v1539, 7
          %v1541 = vsub.s32 0, %v1540
          %v1542 = vrot.slane %v1532, %v1541
          %v1543 = vlaneseq
          %v1544 = vshrl.u32 %v1543, 7
          %v1545 = vsub.s32 0, %v1544
          %v1546 = vrot.slane %v1536, %v1545
          %v1547 = vmul.f32 %v1520, %v1542
          %v1548 = vmul.f32 %v1521, %v1546
          %v1549 = vmul.f32 %v1522, %v1542
          %v1550 = vmul.f32 %v1523, %v1546
          %v1551 = vmul.f32 %v1524, %v1542
          %v1552 = vmul.f32 %v1525, %v1546
          %v1553 = vmul.f32 %v1526, %v1542
          %v1554 = vmul.f32 %v1527, %v1546
          %v1556 = vlaneseq
          %v1557 = vshrl.u32 %v1556, 7
          %v1558 = vsub.s32 0, %v1557
          %v1559 = vrot.slane %v1462, %v1558
          %v1560 = vlaneseq
          %v1561 = vshrl.u32 %v1560, 7
          %v1562 = vsub.s32 2, %v1561
          %v1563 = vrot.slane %v1462, %v1562
          %v1566 = vlaneseq
          %v1567 = vshrl.u32 %v1566, 7
          %v1568 = vsub.s32 0, %v1567
          %v1569 = vrot.slane %v1559, %v1568
          %v1570 = vlaneseq
          %v1571 = vshrl.u32 %v1570, 7
          %v1572 = vsub.s32 0, %v1571
          %v1573 = vrot.slane %v1563, %v1572
          %v1574 = vadd.f32 %v1547, %v1569
          %v1575 = vadd.f32 %v1548, %v1573
          %v1576 = vadd.f32 %v1549, %v1569
          %v1577 = vadd.f32 %v1550, %v1573
          %v1578 = vadd.f32 %v1551, %v1569
          %v1579 = vadd.f32 %v1552, %v1573
          %v1580 = vadd.f32 %v1553, %v1569
          %v1581 = vadd.f32 %v1554, %v1573
          %v1582 = vld [vmem:[#allocation7] sm:$0xf]
          %v1583 = vld [vmem:[#allocation7 + $0x4] sm:$0xf]
          %v1584 = vld [vmem:[#allocation7 + $0x8] sm:$0xf]
          %v1585 = vld [vmem:[#allocation7 + $0xc] sm:$0xf]
          %v1586 = vld [vmem:[#allocation7 + $0x10] sm:$0xf]
          %v1587 = vld [vmem:[#allocation7 + $0x14] sm:$0xf]
          %v1588 = vld [vmem:[#allocation7 + $0x18] sm:$0xf]
          %v1589 = vld [vmem:[#allocation7 + $0x1c] sm:$0xf]
          %v1590 = vld [vmem:[#allocation7 + $0x20] sm:$0xf]
          %v1591 = vld [vmem:[#allocation7 + $0x24] sm:$0xf]
          %v1592 = vld [vmem:[#allocation7 + $0x28] sm:$0xf]
          %v1593 = vld [vmem:[#allocation7 + $0x2c] sm:$0xf]
          %v1594 = vld [vmem:[#allocation7 + $0x30] sm:$0xf]
          %v1595 = vld [vmem:[#allocation7 + $0x34] sm:$0xf]
          %v1596 = vld [vmem:[#allocation7 + $0x38] sm:$0xf]
          %v1597 = vld [vmem:[#allocation7 + $0x3c] sm:$0xf]
          %v1598 = vld [vmem:[#allocation7 + $0x40] sm:$0xf]
          %v1599 = vld [vmem:[#allocation7 + $0x44] sm:$0xf]
          %v1600 = vld [vmem:[#allocation7 + $0x48] sm:$0xf]
          %v1601 = vld [vmem:[#allocation7 + $0x4c] sm:$0xf]
          %v1602 = vld [vmem:[#allocation7 + $0x50] sm:$0xf]
          %v1603 = vld [vmem:[#allocation7 + $0x54] sm:$0xf]
          %v1604 = vld [vmem:[#allocation7 + $0x58] sm:$0xf]
          %v1605 = vld [vmem:[#allocation7 + $0x5c] sm:$0xf]
          %v1606 = vld [vmem:[#allocation7 + $0x60] sm:$0xf]
          %v1607 = vld [vmem:[#allocation7 + $0x64] sm:$0xf]
          %v1608 = vld [vmem:[#allocation7 + $0x68] sm:$0xf]
          %v1609 = vld [vmem:[#allocation7 + $0x6c] sm:$0xf]
          %v1610 = vld [vmem:[#allocation7 + $0x70] sm:$0xf]
          %v1611 = vld [vmem:[#allocation7 + $0x74] sm:$0xf]
          %v1612 = vld [vmem:[#allocation7 + $0x78] sm:$0xf]
          %v1613 = vld [vmem:[#allocation7 + $0x7c] sm:$0xf]
          %v1614 = vpack.c.bf16 %v1576, %v1574
          %v1615 = vpack.c.bf16 %v1577, %v1575
          %v1616 = vpack.c.bf16 %v1580, %v1578
          %v1617 = vpack.c.bf16 %v1581, %v1579
          %v1618 = vld [vmem:[%s11] sm:$0x1]
          %v1619 = vunpack.c.l.bf16 %v1618
          %v1620 = vlaneseq
          %v1621 = vshrl.u32 %v1620, 7
          %v1622 = vsub.s32 0, %v1621
          %v1623 = vrot.slane %v1619, %v1622
          %v1656 = vunpack.c.l.b16 %v1582
          %v1657 = vunpack.c.l.b16 %v1583
          %v1658 = vunpack.c.l.b16 %v1584
          %v1659 = vunpack.c.l.b16 %v1585
          %v1660 = vunpack.c.l.b16 %v1586
          %v1661 = vunpack.c.l.b16 %v1587
          %v1662 = vunpack.c.l.b16 %v1588
          %v1663 = vunpack.c.l.b16 %v1589
          %v1664 = vunpack.c.l.b16 %v1590
          %v1665 = vunpack.c.l.b16 %v1591
          %v1666 = vunpack.c.l.b16 %v1592
          %v1667 = vunpack.c.l.b16 %v1593
          %v1668 = vunpack.c.l.b16 %v1594
          %v1669 = vunpack.c.l.b16 %v1595
          %v1670 = vunpack.c.l.b16 %v1596
          %v1671 = vunpack.c.l.b16 %v1597
          %v1672 = vunpack.c.l.b16 %v1598
          %v1673 = vunpack.c.l.b16 %v1599
          %v1674 = vunpack.c.l.b16 %v1600
          %v1675 = vunpack.c.l.b16 %v1601
          %v1676 = vunpack.c.l.b16 %v1602
          %v1677 = vunpack.c.l.b16 %v1603
          %v1678 = vunpack.c.l.b16 %v1604
          %v1679 = vunpack.c.l.b16 %v1605
          %v1680 = vunpack.c.l.b16 %v1606
          %v1681 = vunpack.c.l.b16 %v1607
          %v1682 = vunpack.c.l.b16 %v1608
          %v1683 = vunpack.c.l.b16 %v1609
          %v1684 = vunpack.c.l.b16 %v1610
          %v1685 = vunpack.c.l.b16 %v1611
          %v1686 = vunpack.c.l.b16 %v1612
          %v1687 = vunpack.c.l.b16 %v1613
          %v1688 = vpack.c.b16 %v1657, %v1656
          %v1689 = vpack.c.b16 %v1659, %v1658
          %v1690 = vpack.c.b16 %v1661, %v1660
          %v1691 = vpack.c.b16 %v1663, %v1662
          %v1692 = vpack.c.b16 %v1665, %v1664
          %v1693 = vpack.c.b16 %v1667, %v1666
          %v1694 = vpack.c.b16 %v1669, %v1668
          %v1695 = vpack.c.b16 %v1671, %v1670
          %v1696 = vpack.c.b16 %v1673, %v1672
          %v1697 = vpack.c.b16 %v1675, %v1674
          %v1698 = vpack.c.b16 %v1677, %v1676
          %v1699 = vpack.c.b16 %v1679, %v1678
          %v1700 = vpack.c.b16 %v1681, %v1680
          %v1701 = vpack.c.b16 %v1683, %v1682
          %v1702 = vpack.c.b16 %v1685, %v1684
          %v1703 = vpack.c.b16 %v1687, %v1686
          %1720 = vmatprep.subr.bf16.mxu0 0
          %1721 = vmatpush1.bf16.msra.mxu0 %v1695
          %1722 = vmatprep.subr.bf16.mxu0 0
          %1723 = vmatpush1.bf16.msra.mxu0 %v1694
          %1724 = vmatprep.subr.bf16.mxu0 0
          %1725 = vmatpush1.bf16.msra.mxu0 %v1693
          %1726 = vmatprep.subr.bf16.mxu0 0
          %1727 = vmatpush1.bf16.msra.mxu0 %v1692
          %1728 = vmatprep.subr.bf16.mxu0 0
          %1729 = vmatpush1.bf16.msra.mxu0 %v1691
          %1730 = vmatprep.subr.bf16.mxu0 0
          %1731 = vmatpush1.bf16.msra.mxu0 %v1690
          %1732 = vmatprep.subr.bf16.mxu0 0
          %1733 = vmatpush1.bf16.msra.mxu0 %v1689
          %1734 = vmatprep.subr.bf16.mxu0 0
          %1735 = vmatpush1.bf16.msra.mxu0 %v1688
          %1736 = vmatprep.subr.bf16.mxu0 0
          %1737 = vmatpush2.bf16.msra.mxu0 %v1703
          %1738 = vmatprep.subr.bf16.mxu0 0
          %1739 = vmatpush2.bf16.msra.mxu0 %v1702
          %1740 = vmatprep.subr.bf16.mxu0 0
          %1741 = vmatpush2.bf16.msra.mxu0 %v1701
          %1742 = vmatprep.subr.bf16.mxu0 0
          %1743 = vmatpush2.bf16.msra.mxu0 %v1700
          %1744 = vmatprep.subr.bf16.mxu0 0
          %1745 = vmatpush2.bf16.msra.mxu0 %v1699
          %1746 = vmatprep.subr.bf16.mxu0 0
          %1747 = vmatpush2.bf16.msra.mxu0 %v1698
          %1748 = vmatprep.subr.bf16.mxu0 0
          %1749 = vmatpush2.bf16.msra.mxu0 %v1697
          %1750 = vmatprep.subr.bf16.mxu0 0
          %1751 = vmatpush2.bf16.msra.mxu0 %v1696
          %1752 = vmatprep.mubr.bf16.mxu0 %v1615
          %1753 = vmatmul.mubr.bf16.gmra.mxu0 %v1614
          %v1754 = vpop.f32.mrf.mxu0
          %v1755 = vadd.f32 %v1623, %v1754
          %v1756 = vpop.f32.mrf.mxu0
          %v1757 = vpop.f32.mrf.mxu0
          %v1758 = vadd.f32 %v1623, %v1757
          %v1759 = vpop.f32.mrf.mxu0
          %1760 = vmatprep.mubr.bf16.mxu0 %v1617
          %1761 = vmatmul.mubr.bf16.gmra.mxu0 %v1616
          %v1762 = vpop.f32.mrf.mxu0
          %v1763 = vadd.f32 %v1623, %v1762
          %v1764 = vpop.f32.mrf.mxu0
          %v1765 = vpop.f32.mrf.mxu0
          %v1766 = vadd.f32 %v1623, %v1765
          %v1767 = vpop.f32.mrf.mxu0
          %1768 = vdwg.mxu0
          %v1769 = vld [vmem:[%s13] sm:$0x1]
          %v1770 = vunpack.c.l.bf16 %v1769
          %v1771 = vld [vmem:[%s15] sm:$0x1]
          %v1772 = vunpack.c.l.bf16 %v1771
          %1773 = vadd.xlane.f32.xlu0 %v1755
          %v1774 = vpop.xlane.xlu0 %1773
          %1775 = vadd.xlane.f32.xlu0 %v1758
          %v1776 = vpop.xlane.xlu0 %1775
          %1777 = vadd.xlane.f32.xlu0 %v1763
          %v1778 = vpop.xlane.xlu0 %1777
          %1779 = vadd.xlane.f32.xlu0 %v1766
          %v1780 = vpop.xlane.xlu0 %1779
          %v1781 = vrcp.pop 128.0
          %v1782 = vmul.f32 %v1774, %v1781
          %v1783 = vmul.f32 %v1776, %v1781
          %v1784 = vmul.f32 %v1778, %v1781
          %v1785 = vmul.f32 %v1780, %v1781
          %v1786 = vsub.f32 %v1755, %v1782
          %v1787 = vsub.f32 %v1758, %v1783
          %v1788 = vsub.f32 %v1763, %v1784
          %v1789 = vsub.f32 %v1766, %v1785
          %v1790 = vmul.f32 %v1786, %v1786
          %v1791 = vmul.f32 %v1787, %v1787
          %v1792 = vmul.f32 %v1788, %v1788
          %v1793 = vmul.f32 %v1789, %v1789
          %1794 = vadd.xlane.f32.xlu0 %v1790
          %v1795 = vpop.xlane.xlu0 %1794
          %1796 = vadd.xlane.f32.xlu0 %v1791
          %v1797 = vpop.xlane.xlu0 %1796
          %1798 = vadd.xlane.f32.xlu0 %v1792
          %v1799 = vpop.xlane.xlu0 %1798
          %1800 = vadd.xlane.f32.xlu0 %v1793
          %v1801 = vpop.xlane.xlu0 %1800
          %v1802 = vmul.f32 %v1795, %v1781
          %v1803 = vmul.f32 %v1797, %v1781
          %v1804 = vmul.f32 %v1799, %v1781
          %v1805 = vmul.f32 %v1801, %v1781
          %v1806 = vadd.f32 %v1802, 1e-05
          %v1807 = vadd.f32 %v1803, 1e-05
          %v1808 = vadd.f32 %v1804, 1e-05
          %v1809 = vadd.f32 %v1805, 1e-05
          %v1810 = vrsqrt.pop %v1806
          %v1811 = vrsqrt.pop %v1807
          %v1812 = vrsqrt.pop %v1808
          %v1813 = vrsqrt.pop %v1809
          %v1814 = vmul.f32 %v1786, %v1810
          %v1815 = vmul.f32 %v1787, %v1811
          %v1816 = vmul.f32 %v1788, %v1812
          %v1817 = vmul.f32 %v1789, %v1813
          %v1818 = vlaneseq
          %v1819 = vshrl.u32 %v1818, 7
          %v1820 = vsub.s32 0, %v1819
          %v1821 = vrot.slane %v1770, %v1820
          %v1822 = vmul.f32 %v1814, %v1821
          %v1823 = vmul.f32 %v1815, %v1821
          %v1824 = vmul.f32 %v1816, %v1821
          %v1825 = vmul.f32 %v1817, %v1821
          %v1826 = vlaneseq
          %v1827 = vshrl.u32 %v1826, 7
          %v1828 = vsub.s32 0, %v1827
          %v1829 = vrot.slane %v1772, %v1828
          %v1830 = vadd.f32 %v1822, %v1829
          %v1831 = vadd.f32 %v1823, %v1829
          %v1832 = vadd.f32 %v1824, %v1829
          %v1833 = vadd.f32 %v1825, %v1829
          %1834 = vst [vmem:[#allocation3] sm:$0xff] %v1830
          %1835 = vst [vmem:[#allocation3 + $0x8] sm:$0xff] %v1831
          %1836 = vst [vmem:[#allocation3 + $0x10] sm:$0xff] %v1832
          %1837 = vst [vmem:[#allocation3 + $0x18] sm:$0xff] %v1833
          %v1838 = vld [vmem:[#allocation4] sm:$0xff]
          %v1839 = vld [vmem:[#allocation4 + $0x8] sm:$0xff]
          %v1840 = vunpack.c.l.bf16 %v1838
          %v1841 = vunpack.c.h.bf16 %v1838
          %v1842 = vunpack.c.l.bf16 %v1839
          %v1843 = vunpack.c.h.bf16 %v1839
          %v1844 = vld [vmem:[%s17] sm:$0x3]
          %v1845 = vunpack.c.l.bf16 %v1844
          %v1846 = vld [vmem:[%s19] sm:$0x3]
          %v1847 = vunpack.c.l.bf16 %v1846
          %v1848 = vadd.f32 %v1840, %v1841
          %1849 = vadd.xlane.f32.xlu0 %v1848
          %v1850 = vpop.xlane.xlu0 %1849
          %v1851 = vadd.f32 %v1842, %v1843
          %1852 = vadd.xlane.f32.xlu0 %v1851
          %v1853 = vpop.xlane.xlu0 %1852
          %v1854 = vmul.f32 %v1850, %v1475
          %v1855 = vmul.f32 %v1853, %v1475
          %v1856 = vsub.f32 %v1840, %v1854
          %v1857 = vsub.f32 %v1841, %v1854
          %v1858 = vsub.f32 %v1842, %v1855
          %v1859 = vsub.f32 %v1843, %v1855
          %v1860 = vmul.f32 %v1856, %v1856
          %v1861 = vmul.f32 %v1857, %v1857
          %v1862 = vmul.f32 %v1858, %v1858
          %v1863 = vmul.f32 %v1859, %v1859
          %v1864 = vadd.f32 %v1860, %v1861
          %1865 = vadd.xlane.f32.xlu0 %v1864
          %v1866 = vpop.xlane.xlu0 %1865
          %v1867 = vadd.f32 %v1862, %v1863
          %1868 = vadd.xlane.f32.xlu0 %v1867
          %v1869 = vpop.xlane.xlu0 %1868
          %v1870 = vmul.f32 %v1866, %v1475
          %v1871 = vmul.f32 %v1869, %v1475
          %v1872 = vadd.f32 %v1870, 1e-05
          %v1873 = vadd.f32 %v1871, 1e-05
          %v1874 = vrsqrt.pop %v1872
          %v1875 = vrsqrt.pop %v1873
          %v1876 = vmul.f32 %v1856, %v1874
          %v1877 = vmul.f32 %v1857, %v1874
          %v1878 = vmul.f32 %v1858, %v1875
          %v1879 = vmul.f32 %v1859, %v1875
          %v1881 = vlaneseq
          %v1882 = vshrl.u32 %v1881, 7
          %v1883 = vsub.s32 0, %v1882
          %v1884 = vrot.slane %v1845, %v1883
          %v1885 = vlaneseq
          %v1886 = vshrl.u32 %v1885, 7
          %v1887 = vsub.s32 2, %v1886
          %v1888 = vrot.slane %v1845, %v1887
          %v1891 = vlaneseq
          %v1892 = vshrl.u32 %v1891, 7
          %v1893 = vsub.s32 0, %v1892
          %v1894 = vrot.slane %v1884, %v1893
          %v1895 = vlaneseq
          %v1896 = vshrl.u32 %v1895, 7
          %v1897 = vsub.s32 0, %v1896
          %v1898 = vrot.slane %v1888, %v1897
          %v1899 = vmul.f32 %v1876, %v1894
          %v1900 = vmul.f32 %v1877, %v1898
          %v1901 = vmul.f32 %v1878, %v1894
          %v1902 = vmul.f32 %v1879, %v1898
          %v1904 = vlaneseq
          %v1905 = vshrl.u32 %v1904, 7
          %v1906 = vsub.s32 0, %v1905
          %v1907 = vrot.slane %v1847, %v1906
          %v1908 = vlaneseq
          %v1909 = vshrl.u32 %v1908, 7
          %v1910 = vsub.s32 2, %v1909
          %v1911 = vrot.slane %v1847, %v1910
          %v1914 = vlaneseq
          %v1915 = vshrl.u32 %v1914, 7
          %v1916 = vsub.s32 0, %v1915
          %v1917 = vrot.slane %v1907, %v1916
          %v1918 = vlaneseq
          %v1919 = vshrl.u32 %v1918, 7
          %v1920 = vsub.s32 0, %v1919
          %v1921 = vrot.slane %v1911, %v1920
          %v1922 = vadd.f32 %v1899, %v1917
          %v1923 = vadd.f32 %v1900, %v1921
          %v1924 = vadd.f32 %v1901, %v1917
          %v1925 = vadd.f32 %v1902, %v1921
          %v1926 = vld [vmem:[#allocation9] sm:$0xf]
          %v1927 = vld [vmem:[#allocation9 + $0x4] sm:$0xf]
          %v1928 = vld [vmem:[#allocation9 + $0x8] sm:$0xf]
          %v1929 = vld [vmem:[#allocation9 + $0xc] sm:$0xf]
          %v1930 = vld [vmem:[#allocation9 + $0x10] sm:$0xf]
          %v1931 = vld [vmem:[#allocation9 + $0x14] sm:$0xf]
          %v1932 = vld [vmem:[#allocation9 + $0x18] sm:$0xf]
          %v1933 = vld [vmem:[#allocation9 + $0x1c] sm:$0xf]
          %v1934 = vld [vmem:[#allocation9 + $0x20] sm:$0xf]
          %v1935 = vld [vmem:[#allocation9 + $0x24] sm:$0xf]
          %v1936 = vld [vmem:[#allocation9 + $0x28] sm:$0xf]
          %v1937 = vld [vmem:[#allocation9 + $0x2c] sm:$0xf]
          %v1938 = vld [vmem:[#allocation9 + $0x30] sm:$0xf]
          %v1939 = vld [vmem:[#allocation9 + $0x34] sm:$0xf]
          %v1940 = vld [vmem:[#allocation9 + $0x38] sm:$0xf]
          %v1941 = vld [vmem:[#allocation9 + $0x3c] sm:$0xf]
          %v1942 = vld [vmem:[#allocation9 + $0x40] sm:$0xf]
          %v1943 = vld [vmem:[#allocation9 + $0x44] sm:$0xf]
          %v1944 = vld [vmem:[#allocation9 + $0x48] sm:$0xf]
          %v1945 = vld [vmem:[#allocation9 + $0x4c] sm:$0xf]
          %v1946 = vld [vmem:[#allocation9 + $0x50] sm:$0xf]
          %v1947 = vld [vmem:[#allocation9 + $0x54] sm:$0xf]
          %v1948 = vld [vmem:[#allocation9 + $0x58] sm:$0xf]
          %v1949 = vld [vmem:[#allocation9 + $0x5c] sm:$0xf]
          %v1950 = vld [vmem:[#allocation9 + $0x60] sm:$0xf]
          %v1951 = vld [vmem:[#allocation9 + $0x64] sm:$0xf]
          %v1952 = vld [vmem:[#allocation9 + $0x68] sm:$0xf]
          %v1953 = vld [vmem:[#allocation9 + $0x6c] sm:$0xf]
          %v1954 = vld [vmem:[#allocation9 + $0x70] sm:$0xf]
          %v1955 = vld [vmem:[#allocation9 + $0x74] sm:$0xf]
          %v1956 = vld [vmem:[#allocation9 + $0x78] sm:$0xf]
          %v1957 = vld [vmem:[#allocation9 + $0x7c] sm:$0xf]
          %v1958 = vpack.c.bf16 %v1924, %v1922
          %v1959 = vpack.c.bf16 %v1925, %v1923
          %v1960 = vld [vmem:[%s23] sm:$0x1]
          %v1961 = vunpack.c.l.bf16 %v1960
          %v1962 = vlaneseq
          %v1963 = vshrl.u32 %v1962, 7
          %v1964 = vsub.s32 0, %v1963
          %v1965 = vrot.slane %v1961, %v1964
          %v1998 = vunpack.c.l.b16 %v1926
          %v1999 = vunpack.c.l.b16 %v1927
          %v2000 = vunpack.c.l.b16 %v1928
          %v2001 = vunpack.c.l.b16 %v1929
          %v2002 = vunpack.c.l.b16 %v1930
          %v2003 = vunpack.c.l.b16 %v1931
          %v2004 = vunpack.c.l.b16 %v1932
          %v2005 = vunpack.c.l.b16 %v1933
          %v2006 = vunpack.c.l.b16 %v1934
          %v2007 = vunpack.c.l.b16 %v1935
          %v2008 = vunpack.c.l.b16 %v1936
          %v2009 = vunpack.c.l.b16 %v1937
          %v2010 = vunpack.c.l.b16 %v1938
          %v2011 = vunpack.c.l.b16 %v1939
          %v2012 = vunpack.c.l.b16 %v1940
          %v2013 = vunpack.c.l.b16 %v1941
          %v2014 = vunpack.c.l.b16 %v1942
          %v2015 = vunpack.c.l.b16 %v1943
          %v2016 = vunpack.c.l.b16 %v1944
          %v2017 = vunpack.c.l.b16 %v1945
          %v2018 = vunpack.c.l.b16 %v1946
          %v2019 = vunpack.c.l.b16 %v1947
          %v2020 = vunpack.c.l.b16 %v1948
          %v2021 = vunpack.c.l.b16 %v1949
          %v2022 = vunpack.c.l.b16 %v1950
          %v2023 = vunpack.c.l.b16 %v1951
          %v2024 = vunpack.c.l.b16 %v1952
          %v2025 = vunpack.c.l.b16 %v1953
          %v2026 = vunpack.c.l.b16 %v1954
          %v2027 = vunpack.c.l.b16 %v1955
          %v2028 = vunpack.c.l.b16 %v1956
          %v2029 = vunpack.c.l.b16 %v1957
          %v2030 = vpack.c.b16 %v1999, %v1998
          %v2031 = vpack.c.b16 %v2001, %v2000
          %v2032 = vpack.c.b16 %v2003, %v2002
          %v2033 = vpack.c.b16 %v2005, %v2004
          %v2034 = vpack.c.b16 %v2007, %v2006
          %v2035 = vpack.c.b16 %v2009, %v2008
          %v2036 = vpack.c.b16 %v2011, %v2010
          %v2037 = vpack.c.b16 %v2013, %v2012
          %v2038 = vpack.c.b16 %v2015, %v2014
          %v2039 = vpack.c.b16 %v2017, %v2016
          %v2040 = vpack.c.b16 %v2019, %v2018
          %v2041 = vpack.c.b16 %v2021, %v2020
          %v2042 = vpack.c.b16 %v2023, %v2022
          %v2043 = vpack.c.b16 %v2025, %v2024
          %v2044 = vpack.c.b16 %v2027, %v2026
          %v2045 = vpack.c.b16 %v2029, %v2028
          %2062 = vmatprep.subr.bf16.mxu0 0
          %2063 = vmatpush1.bf16.msra.mxu0 %v2037
          %2064 = vmatprep.subr.bf16.mxu0 0
          %2065 = vmatpush1.bf16.msra.mxu0 %v2036
          %2066 = vmatprep.subr.bf16.mxu0 0
          %2067 = vmatpush1.bf16.msra.mxu0 %v2035
          %2068 = vmatprep.subr.bf16.mxu0 0
          %2069 = vmatpush1.bf16.msra.mxu0 %v2034
          %2070 = vmatprep.subr.bf16.mxu0 0
          %2071 = vmatpush1.bf16.msra.mxu0 %v2033
          %2072 = vmatprep.subr.bf16.mxu0 0
          %2073 = vmatpush1.bf16.msra.mxu0 %v2032
          %2074 = vmatprep.subr.bf16.mxu0 0
          %2075 = vmatpush1.bf16.msra.mxu0 %v2031
          %2076 = vmatprep.subr.bf16.mxu0 0
          %2077 = vmatpush1.bf16.msra.mxu0 %v2030
          %2078 = vmatprep.subr.bf16.mxu0 0
          %2079 = vmatpush2.bf16.msra.mxu0 %v2045
          %2080 = vmatprep.subr.bf16.mxu0 0
          %2081 = vmatpush2.bf16.msra.mxu0 %v2044
          %2082 = vmatprep.subr.bf16.mxu0 0
          %2083 = vmatpush2.bf16.msra.mxu0 %v2043
          %2084 = vmatprep.subr.bf16.mxu0 0
          %2085 = vmatpush2.bf16.msra.mxu0 %v2042
          %2086 = vmatprep.subr.bf16.mxu0 0
          %2087 = vmatpush2.bf16.msra.mxu0 %v2041
          %2088 = vmatprep.subr.bf16.mxu0 0
          %2089 = vmatpush2.bf16.msra.mxu0 %v2040
          %2090 = vmatprep.subr.bf16.mxu0 0
          %2091 = vmatpush2.bf16.msra.mxu0 %v2039
          %2092 = vmatprep.subr.bf16.mxu0 0
          %2093 = vmatpush2.bf16.msra.mxu0 %v2038
          %2094 = vmatprep.mubr.bf16.mxu0 %v1959
          %2095 = vmatmul.mubr.bf16.gmra.mxu0 %v1958
          %v2096 = vpop.f32.mrf.mxu0
          %v2097 = vadd.f32 %v1965, %v2096
          %v2098 = vpop.f32.mrf.mxu0
          %v2099 = vpop.f32.mrf.mxu0
          %v2100 = vadd.f32 %v1965, %v2099
          %v2101 = vpop.f32.mrf.mxu0
          %2102 = vdwg.mxu0
          %2103 = vst [vmem:[#allocation2] sm:$0xff] %v2097
          %2104 = vst [vmem:[#allocation2 + $0x8] sm:$0xff] %v2100
        $region200: #{context_decoder_forward.1} parent=151 // pred_fallthru
          _
        %v2105 = vld [vmem:[#allocation2] sm:$0xff]
        %v2106 = vld [vmem:[#allocation2 + $0x8] sm:$0xff]
        %v2107 = vld [vmem:[#allocation3] sm:$0xff]
        %v2108 = vld [vmem:[#allocation3 + $0x8] sm:$0xff]
        %v2109 = vld [vmem:[#allocation3 + $0x10] sm:$0xff]
        %v2110 = vld [vmem:[#allocation3 + $0x18] sm:$0xff]
        %v2111 = vld [vmem:[%s1413] sm:$0x1]
        %v2112 = vunpack.c.l.bf16 %v2111
        %v2113 = vld [vmem:[%s1416] sm:$0x1]
        %v2114 = vunpack.c.l.bf16 %v2113
        %2115 = vadd.xlane.f32.xlu0 %v2105
        %v2116 = vpop.xlane.xlu0 %2115
        %2117 = vadd.xlane.f32.xlu0 %v2106
        %v2118 = vpop.xlane.xlu0 %2117
        %v2119 = vrcp.pop 128.0
        %v2120 = vmul.f32 %v2116, %v2119
        %v2121 = vmul.f32 %v2118, %v2119
        %v2122 = vsub.f32 %v2105, %v2120
        %v2123 = vsub.f32 %v2106, %v2121
        %v2124 = vmul.f32 %v2122, %v2122
        %v2125 = vmul.f32 %v2123, %v2123
        %2126 = vadd.xlane.f32.xlu0 %v2124
        %v2127 = vpop.xlane.xlu0 %2126
        %2128 = vadd.xlane.f32.xlu0 %v2125
        %v2129 = vpop.xlane.xlu0 %2128
        %v2130 = vmul.f32 %v2127, %v2119
        %v2131 = vmul.f32 %v2129, %v2119
        %v2132 = vadd.f32 %v2130, 1e-05
        %v2133 = vadd.f32 %v2131, 1e-05
        %v2134 = vrsqrt.pop %v2132
        %v2135 = vrsqrt.pop %v2133
        %v2136 = vmul.f32 %v2122, %v2134
        %v2137 = vmul.f32 %v2123, %v2135
        %v2138 = vlaneseq
        %v2139 = vshrl.u32 %v2138, 7
        %v2140 = vsub.s32 0, %v2139
        %v2141 = vrot.slane %v2112, %v2140
        %v2142 = vmul.f32 %v2136, %v2141
        %v2143 = vmul.f32 %v2137, %v2141
        %v2144 = vlaneseq
        %v2145 = vshrl.u32 %v2144, 7
        %v2146 = vsub.s32 0, %v2145
        %v2147 = vrot.slane %v2114, %v2146
        %v2148 = vadd.f32 %v2142, %v2147
        %v2149 = vadd.f32 %v2143, %v2147
        %v2150 = vld [vmem:[%s1218] sm:$0xff]
        %v2151 = vld [vmem:[%s1218 + $0x8] sm:$0xf]
        %v2152 = vld [vmem:[%s1218 + $0xc] sm:$0xff]
        %v2153 = vld [vmem:[%s1218 + $0x14] sm:$0xf]
        %v2154 = vld [vmem:[%s1218 + $0x18] sm:$0xff]
        %v2155 = vld [vmem:[%s1218 + $0x20] sm:$0xf]
        %v2156 = vld [vmem:[%s1218 + $0x24] sm:$0xff]
        %v2157 = vld [vmem:[%s1218 + $0x2c] sm:$0xf]
        %v2158 = vld [vmem:[%s1218 + $0x30] sm:$0xff]
        %v2159 = vld [vmem:[%s1218 + $0x38] sm:$0xf]
        %v2160 = vld [vmem:[%s1218 + $0x3c] sm:$0xff]
        %v2161 = vld [vmem:[%s1218 + $0x44] sm:$0xf]
        %v2162 = vld [vmem:[%s1218 + $0x48] sm:$0xff]
        %v2163 = vld [vmem:[%s1218 + $0x50] sm:$0xf]
        %v2164 = vld [vmem:[%s1218 + $0x54] sm:$0xff]
        %v2165 = vld [vmem:[%s1218 + $0x5c] sm:$0xf]
        %v2166 = vld [vmem:[%s1218 + $0x60] sm:$0xff]
        %v2167 = vld [vmem:[%s1218 + $0x68] sm:$0xf]
        %v2168 = vld [vmem:[%s1218 + $0x6c] sm:$0xff]
        %v2169 = vld [vmem:[%s1218 + $0x74] sm:$0xf]
        %v2170 = vld [vmem:[%s1218 + $0x78] sm:$0xff]
        %v2171 = vld [vmem:[%s1218 + $0x80] sm:$0xf]
        %v2172 = vld [vmem:[%s1218 + $0x84] sm:$0xff]
        %v2173 = vld [vmem:[%s1218 + $0x8c] sm:$0xf]
        %v2174 = vld [vmem:[%s1218 + $0x90] sm:$0xff]
        %v2175 = vld [vmem:[%s1218 + $0x98] sm:$0xf]
        %v2176 = vld [vmem:[%s1218 + $0x9c] sm:$0xff]
        %v2177 = vld [vmem:[%s1218 + $0xa4] sm:$0xf]
        %v2178 = vld [vmem:[%s1218 + $0xa8] sm:$0xff]
        %v2179 = vld [vmem:[%s1218 + $0xb0] sm:$0xf]
        %v2180 = vld [vmem:[%s1218 + $0xb4] sm:$0xff]
        %v2181 = vld [vmem:[%s1218 + $0xbc] sm:$0xf]
        %v2182 = vpack.c.bf16 %v2149, %v2148
        %v2215 = vunpack.c.l.b16 %v2150
        %v2216 = vunpack.c.h.b16 %v2150
        %v2217 = vunpack.c.l.b16 %v2151
        %v2218 = vunpack.c.l.b16 %v2152
        %v2219 = vunpack.c.h.b16 %v2152
        %v2220 = vunpack.c.l.b16 %v2153
        %v2221 = vunpack.c.l.b16 %v2154
        %v2222 = vunpack.c.h.b16 %v2154
        %v2223 = vunpack.c.l.b16 %v2155
        %v2224 = vunpack.c.l.b16 %v2156
        %v2225 = vunpack.c.h.b16 %v2156
        %v2226 = vunpack.c.l.b16 %v2157
        %v2227 = vunpack.c.l.b16 %v2158
        %v2228 = vunpack.c.h.b16 %v2158
        %v2229 = vunpack.c.l.b16 %v2159
        %v2230 = vunpack.c.l.b16 %v2160
        %v2231 = vunpack.c.h.b16 %v2160
        %v2232 = vunpack.c.l.b16 %v2161
        %v2233 = vunpack.c.l.b16 %v2162
        %v2234 = vunpack.c.h.b16 %v2162
        %v2235 = vunpack.c.l.b16 %v2163
        %v2236 = vunpack.c.l.b16 %v2164
        %v2237 = vunpack.c.h.b16 %v2164
        %v2238 = vunpack.c.l.b16 %v2165
        %v2239 = vunpack.c.l.b16 %v2166
        %v2240 = vunpack.c.h.b16 %v2166
        %v2241 = vunpack.c.l.b16 %v2167
        %v2242 = vunpack.c.l.b16 %v2168
        %v2243 = vunpack.c.h.b16 %v2168
        %v2244 = vunpack.c.l.b16 %v2169
        %v2245 = vunpack.c.l.b16 %v2170
        %v2246 = vunpack.c.h.b16 %v2170
        %v2247 = vunpack.c.l.b16 %v2171
        %v2248 = vunpack.c.l.b16 %v2172
        %v2249 = vunpack.c.h.b16 %v2172
        %v2250 = vunpack.c.l.b16 %v2173
        %v2251 = vunpack.c.l.b16 %v2174
        %v2252 = vunpack.c.h.b16 %v2174
        %v2253 = vunpack.c.l.b16 %v2175
        %v2254 = vunpack.c.l.b16 %v2176
        %v2255 = vunpack.c.h.b16 %v2176
        %v2256 = vunpack.c.l.b16 %v2177
        %v2257 = vunpack.c.l.b16 %v2178
        %v2258 = vunpack.c.h.b16 %v2178
        %v2259 = vunpack.c.l.b16 %v2179
        %v2260 = vunpack.c.l.b16 %v2180
        %v2261 = vunpack.c.h.b16 %v2180
        %v2262 = vunpack.c.l.b16 %v2181
        %v2263 = vpack.c.b16 %v2218, %v2215
        %v2264 = vpack.c.b16 %v2219, %v2216
        %v2265 = vpack.c.b16 %v2220, %v2217
        %v2266 = vpack.c.b16 %v2224, %v2221
        %v2267 = vpack.c.b16 %v2225, %v2222
        %v2268 = vpack.c.b16 %v2226, %v2223
        %v2269 = vpack.c.b16 %v2230, %v2227
        %v2270 = vpack.c.b16 %v2231, %v2228
        %v2271 = vpack.c.b16 %v2232, %v2229
        %v2272 = vpack.c.b16 %v2236, %v2233
        %v2273 = vpack.c.b16 %v2237, %v2234
        %v2274 = vpack.c.b16 %v2238, %v2235
        %v2275 = vpack.c.b16 %v2242, %v2239
        %v2276 = vpack.c.b16 %v2243, %v2240
        %v2277 = vpack.c.b16 %v2244, %v2241
        %v2278 = vpack.c.b16 %v2248, %v2245
        %v2279 = vpack.c.b16 %v2249, %v2246
        %v2280 = vpack.c.b16 %v2250, %v2247
        %v2281 = vpack.c.b16 %v2254, %v2251
        %v2282 = vpack.c.b16 %v2255, %v2252
        %v2283 = vpack.c.b16 %v2256, %v2253
        %v2284 = vpack.c.b16 %v2260, %v2257
        %v2285 = vpack.c.b16 %v2261, %v2258
        %v2286 = vpack.c.b16 %v2262, %v2259
        %2311 = vmatprep.subr.bf16.mxu0 %v2285
        %2312 = vmatpush1.bf16.msra.mxu0 %v2284
        %2313 = vmatprep.subr.bf16.mxu0 %v2282
        %2314 = vmatpush1.bf16.msra.mxu0 %v2281
        %2315 = vmatprep.subr.bf16.mxu0 %v2279
        %2316 = vmatpush1.bf16.msra.mxu0 %v2278
        %2317 = vmatprep.subr.bf16.mxu0 %v2276
        %2318 = vmatpush1.bf16.msra.mxu0 %v2275
        %2319 = vmatprep.subr.bf16.mxu0 %v2273
        %2320 = vmatpush1.bf16.msra.mxu0 %v2272
        %2321 = vmatprep.subr.bf16.mxu0 %v2270
        %2322 = vmatpush1.bf16.msra.mxu0 %v2269
        %2323 = vmatprep.subr.bf16.mxu0 %v2267
        %2324 = vmatpush1.bf16.msra.mxu0 %v2266
        %2325 = vmatprep.subr.bf16.mxu0 %v2264
        %2326 = vmatpush1.bf16.msra.mxu0 %v2263
        %2327 = vmatprep.subr.bf16.mxu0 0
        %2328 = vmatpush2.bf16.msra.mxu0 0
        %2329 = vmatprep.subr.bf16.mxu0 0
        %2330 = vmatpush2.bf16.msra.mxu0 0
        %2331 = vmatprep.subr.bf16.mxu0 0
        %2332 = vmatpush2.bf16.msra.mxu0 0
        %2333 = vmatprep.subr.bf16.mxu0 0
        %2334 = vmatpush2.bf16.msra.mxu0 0
        %2335 = vmatprep.subr.bf16.mxu0 0
        %2336 = vmatpush2.bf16.msra.mxu0 0
        %2337 = vmatprep.subr.bf16.mxu0 0
        %2338 = vmatpush2.bf16.msra.mxu0 0
        %2339 = vmatprep.subr.bf16.mxu0 0
        %2340 = vmatpush2.bf16.msra.mxu0 0
        %2341 = vmatprep.subr.bf16.mxu0 0
        %2342 = vmatpush2.bf16.msra.mxu0 0
        %2343 = vmatprep.mubr.bf16.mxu0 0
        %2344 = vmatmul.mubr.bf16.gmra.mxu0 %v2182
        %v2345 = vpop.f32.mrf.mxu0
        %v2346 = vadd.f32 0.0, %v2345
        %v2347 = vpop.f32.mrf.mxu0
        %v2348 = vadd.f32 0.0, %v2347
        %v2349 = vpop.f32.mrf.mxu0
        %v2350 = vadd.f32 0.0, %v2349
        %v2351 = vpop.f32.mrf.mxu0
        %v2352 = vadd.f32 0.0, %v2351
        %2353 = vdwg.mxu0
        %2354 = vmatprep.subr.bf16.mxu0 0
        %2355 = vmatpush1.bf16.msra.mxu0 %v2286
        %2356 = vmatprep.subr.bf16.mxu0 0
        %2357 = vmatpush1.bf16.msra.mxu0 %v2283
        %2358 = vmatprep.subr.bf16.mxu0 0
        %2359 = vmatpush1.bf16.msra.mxu0 %v2280
        %2360 = vmatprep.subr.bf16.mxu0 0
        %2361 = vmatpush1.bf16.msra.mxu0 %v2277
        %2362 = vmatprep.subr.bf16.mxu0 0
        %2363 = vmatpush1.bf16.msra.mxu0 %v2274
        %2364 = vmatprep.subr.bf16.mxu0 0
        %2365 = vmatpush1.bf16.msra.mxu0 %v2271
        %2366 = vmatprep.subr.bf16.mxu0 0
        %2367 = vmatpush1.bf16.msra.mxu0 %v2268
        %2368 = vmatprep.subr.bf16.mxu0 0
        %2369 = vmatpush1.bf16.msra.mxu0 %v2265
        %2370 = vmatprep.subr.bf16.mxu0 0
        %2371 = vmatpush2.bf16.msra.mxu0 0
        %2372 = vmatprep.subr.bf16.mxu0 0
        %2373 = vmatpush2.bf16.msra.mxu0 0
        %2374 = vmatprep.subr.bf16.mxu0 0
        %2375 = vmatpush2.bf16.msra.mxu0 0
        %2376 = vmatprep.subr.bf16.mxu0 0
        %2377 = vmatpush2.bf16.msra.mxu0 0
        %2378 = vmatprep.subr.bf16.mxu0 0
        %2379 = vmatpush2.bf16.msra.mxu0 0
        %2380 = vmatprep.subr.bf16.mxu0 0
        %2381 = vmatpush2.bf16.msra.mxu0 0
        %2382 = vmatprep.subr.bf16.mxu0 0
        %2383 = vmatpush2.bf16.msra.mxu0 0
        %2384 = vmatprep.subr.bf16.mxu0 0
        %2385 = vmatpush2.bf16.msra.mxu0 0
        %2386 = vmatprep.mubr.bf16.mxu0 0
        %2387 = vmatmul.mubr.bf16.gmra.mxu0 %v2182
        %v2388 = vpop.f32.mrf.mxu0
        %v2389 = vadd.f32 0.0, %v2388
        %v2390 = vpop.f32.mrf.mxu0
        %v2391 = vpop.f32.mrf.mxu0
        %v2392 = vadd.f32 0.0, %v2391
        %v2393 = vpop.f32.mrf.mxu0
        %2394 = vdwg.mxu0
        %v2395 = vld [vmem:[%s1227] sm:$0xf]
        %v2396 = vld [vmem:[%s1227 + $0x4] sm:$0xf]
        %v2397 = vld [vmem:[%s1227 + $0x8] sm:$0xf]
        %v2398 = vld [vmem:[%s1227 + $0xc] sm:$0xf]
        %v2399 = vld [vmem:[%s1227 + $0x10] sm:$0xf]
        %v2400 = vld [vmem:[%s1227 + $0x14] sm:$0xf]
        %v2401 = vld [vmem:[%s1227 + $0x18] sm:$0xf]
        %v2402 = vld [vmem:[%s1227 + $0x1c] sm:$0xf]
        %v2403 = vld [vmem:[%s1227 + $0x20] sm:$0xf]
        %v2404 = vld [vmem:[%s1227 + $0x24] sm:$0xf]
        %v2405 = vld [vmem:[%s1227 + $0x28] sm:$0xf]
        %v2406 = vld [vmem:[%s1227 + $0x2c] sm:$0xf]
        %v2407 = vld [vmem:[%s1227 + $0x30] sm:$0xf]
        %v2408 = vld [vmem:[%s1227 + $0x34] sm:$0xf]
        %v2409 = vld [vmem:[%s1227 + $0x38] sm:$0xf]
        %v2410 = vld [vmem:[%s1227 + $0x3c] sm:$0xf]
        %v2411 = vpack.c.bf16 %v2346, %v2346
        %v2412 = vpack.c.bf16 %v2348, %v2348
        %v2413 = vpack.c.bf16 %v2389, %v2389
        %vm2414 = vcmask 261120
        %v2416 = vsel %vm2414, %v2411, 0
        %v2419 = vsel %vm2414, %v2412, 0
        %2421 = vmatprep.subr.bf16.mxu0 0
        %2422 = vmatpush1.bf16.xpose.msra.mxu0 0
        %2423 = vmatprep.subr.bf16.mxu0 0
        %2424 = vmatpush1.bf16.xpose.msra.mxu0 0
        %2425 = vmatprep.subr.bf16.mxu0 0
        %2426 = vmatpush1.bf16.xpose.msra.mxu0 0
        %2427 = vmatprep.subr.bf16.mxu0 0
        %2428 = vmatpush1.bf16.xpose.msra.mxu0 0
        %2429 = vmatprep.subr.bf16.mxu0 0
        %2430 = vmatpush1.bf16.xpose.msra.mxu0 0
        %2431 = vmatprep.subr.bf16.mxu0 0
        %2432 = vmatpush1.bf16.xpose.msra.mxu0 0
        %2433 = vmatprep.subr.bf16.mxu0 0
        %2434 = vmatpush1.bf16.xpose.msra.mxu0 0
        %2435 = vmatprep.subr.bf16.mxu0 0
        %2436 = vmatpush1.bf16.xpose.msra.mxu0 %v2419
        %2437 = vmatprep.subr.bf16.mxu0 0
        %2438 = vmatpush2.bf16.xpose.msra.mxu0 0
        %2439 = vmatprep.subr.bf16.mxu0 0
        %2440 = vmatpush2.bf16.xpose.msra.mxu0 0
        %2441 = vmatprep.subr.bf16.mxu0 0
        %2442 = vmatpush2.bf16.xpose.msra.mxu0 0
        %2443 = vmatprep.subr.bf16.mxu0 0
        %2444 = vmatpush2.bf16.xpose.msra.mxu0 0
        %2445 = vmatprep.subr.bf16.mxu0 0
        %2446 = vmatpush2.bf16.xpose.msra.mxu0 0
        %2447 = vmatprep.subr.bf16.mxu0 0
        %2448 = vmatpush2.bf16.xpose.msra.mxu0 0
        %2449 = vmatprep.subr.bf16.mxu0 0
        %2450 = vmatpush2.bf16.xpose.msra.mxu0 0
        %2451 = vmatprep.subr.bf16.mxu0 0
        %2452 = vmatpush2.bf16.xpose.msra.mxu0 0
        %2453 = vmatprep.mubr.bf16.mxu0 0
        %2454 = vmatmul.mubr.bf16.gmra.mxu0 %v2416
        %v2455 = vpop.f32.mrf.mxu0
        %v2456 = vadd.f32 0.0, %v2455
        %v2457 = vpop.f32.mrf.mxu0
        %v2458 = vpop.f32.mrf.mxu0
        %v2459 = vpop.f32.mrf.mxu0
        %2460 = vdwg.mxu0
        %v2461 = vmul.f32 %v2456, 0.17677669
        %vm2462 = vcmask 64512
        %v2463 = vsel %vm2462, %v2461, -inf
        %2464 = vmax.xlane.f32.xlu0 %v2463
        %v2465 = vpop.xlane.xlu0 %2464
        %v2466 = vsub.f32 %v2461, %v2465
        %v2467 = vmul.f32 %v2466, 1.442695
        %v2468 = vpow.pop %v2467
        %v2469 = vsel %vm2462, %v2468, 0.0
        %2470 = vadd.xlane.f32.xlu0 %v2469
        %v2471 = vpop.xlane.xlu0 %2470
        %v2472 = vrcp.pop %v2471
        %v2473 = vmul.f32 %v2468, %v2472
        %v2474 = vpack.c.bf16 %v2473, %v2473
        %v2476 = vsel %vm2462, %v2474, 0
        %vm2478 = vcmask 1043456
        %v2480 = vsel %vm2478, %v2413, 0
        %2482 = vmatprep.subr.bf16.mxu0 0
        %2483 = vmatpush1.bf16.msra.mxu0 0
        %2484 = vmatprep.subr.bf16.mxu0 0
        %2485 = vmatpush1.bf16.msra.mxu0 0
        %2486 = vmatprep.subr.bf16.mxu0 0
        %2487 = vmatpush1.bf16.msra.mxu0 0
        %2488 = vmatprep.subr.bf16.mxu0 0
        %2489 = vmatpush1.bf16.msra.mxu0 0
        %2490 = vmatprep.subr.bf16.mxu0 0
        %2491 = vmatpush1.bf16.msra.mxu0 0
        %2492 = vmatprep.subr.bf16.mxu0 0
        %2493 = vmatpush1.bf16.msra.mxu0 0
        %2494 = vmatprep.subr.bf16.mxu0 0
        %2495 = vmatpush1.bf16.msra.mxu0 0
        %2496 = vmatprep.subr.bf16.mxu0 0
        %2497 = vmatpush1.bf16.msra.mxu0 %v2480
        %2498 = vmatprep.subr.bf16.mxu0 0
        %2499 = vmatpush2.bf16.msra.mxu0 0
        %2500 = vmatprep.subr.bf16.mxu0 0
        %2501 = vmatpush2.bf16.msra.mxu0 0
        %2502 = vmatprep.subr.bf16.mxu0 0
        %2503 = vmatpush2.bf16.msra.mxu0 0
        %2504 = vmatprep.subr.bf16.mxu0 0
        %2505 = vmatpush2.bf16.msra.mxu0 0
        %2506 = vmatprep.subr.bf16.mxu0 0
        %2507 = vmatpush2.bf16.msra.mxu0 0
        %2508 = vmatprep.subr.bf16.mxu0 0
        %2509 = vmatpush2.bf16.msra.mxu0 0
        %2510 = vmatprep.subr.bf16.mxu0 0
        %2511 = vmatpush2.bf16.msra.mxu0 0
        %2512 = vmatprep.subr.bf16.mxu0 0
        %2513 = vmatpush2.bf16.msra.mxu0 0
        %2514 = vmatprep.mubr.bf16.mxu0 0
        %2515 = vmatmul.mubr.bf16.gmra.mxu0 %v2476
        %v2516 = vpop.f32.mrf.mxu0
        %v2517 = vadd.f32 0.0, %v2516
        %v2518 = vpop.f32.mrf.mxu0
        %v2519 = vpop.f32.mrf.mxu0
        %v2520 = vpop.f32.mrf.mxu0
        %2521 = vdwg.mxu0
        %v2522 = vpack.c.bf16 %v2517, %v2517
        %2524 = vrot.lane.b32.xlu0 %v2411, 96
        %v2525 = vpop.permute.xlu0 %2524
        %2527 = vrot.lane.b32.xlu0 %v2412, 96
        %v2528 = vpop.permute.xlu0 %2527
        %v2530 = vsel %vm2414, %v2525, 0
        %v2533 = vsel %vm2414, %v2528, 0
        %2535 = vmatprep.subr.bf16.mxu0 0
        %2536 = vmatpush1.bf16.xpose.msra.mxu0 0
        %2537 = vmatprep.subr.bf16.mxu0 0
        %2538 = vmatpush1.bf16.xpose.msra.mxu0 0
        %2539 = vmatprep.subr.bf16.mxu0 0
        %2540 = vmatpush1.bf16.xpose.msra.mxu0 0
        %2541 = vmatprep.subr.bf16.mxu0 0
        %2542 = vmatpush1.bf16.xpose.msra.mxu0 0
        %2543 = vmatprep.subr.bf16.mxu0 0
        %2544 = vmatpush1.bf16.xpose.msra.mxu0 0
        %2545 = vmatprep.subr.bf16.mxu0 0
        %2546 = vmatpush1.bf16.xpose.msra.mxu0 0
        %2547 = vmatprep.subr.bf16.mxu0 0
        %2548 = vmatpush1.bf16.xpose.msra.mxu0 0
        %2549 = vmatprep.subr.bf16.mxu0 0
        %2550 = vmatpush1.bf16.xpose.msra.mxu0 %v2533
        %2551 = vmatprep.subr.bf16.mxu0 0
        %2552 = vmatpush2.bf16.xpose.msra.mxu0 0
        %2553 = vmatprep.subr.bf16.mxu0 0
        %2554 = vmatpush2.bf16.xpose.msra.mxu0 0
        %2555 = vmatprep.subr.bf16.mxu0 0
        %2556 = vmatpush2.bf16.xpose.msra.mxu0 0
        %2557 = vmatprep.subr.bf16.mxu0 0
        %2558 = vmatpush2.bf16.xpose.msra.mxu0 0
        %2559 = vmatprep.subr.bf16.mxu0 0
        %2560 = vmatpush2.bf16.xpose.msra.mxu0 0
        %2561 = vmatprep.subr.bf16.mxu0 0
        %2562 = vmatpush2.bf16.xpose.msra.mxu0 0
        %2563 = vmatprep.subr.bf16.mxu0 0
        %2564 = vmatpush2.bf16.xpose.msra.mxu0 0
        %2565 = vmatprep.subr.bf16.mxu0 0
        %2566 = vmatpush2.bf16.xpose.msra.mxu0 0
        %2567 = vmatprep.mubr.bf16.mxu0 0
        %2568 = vmatmul.mubr.bf16.gmra.mxu0 %v2530
        %v2569 = vpop.f32.mrf.mxu0
        %v2570 = vadd.f32 0.0, %v2569
        %v2571 = vpop.f32.mrf.mxu0
        %v2572 = vpop.f32.mrf.mxu0
        %v2573 = vpop.f32.mrf.mxu0
        %2574 = vdwg.mxu0
        %v2575 = vmul.f32 %v2570, 0.17677669
        %v2576 = vsel %vm2462, %v2575, -inf
        %2577 = vmax.xlane.f32.xlu0 %v2576
        %v2578 = vpop.xlane.xlu0 %2577
        %v2579 = vsub.f32 %v2575, %v2578
        %v2580 = vmul.f32 %v2579, 1.442695
        %v2581 = vpow.pop %v2580
        %v2582 = vsel %vm2462, %v2581, 0.0
        %2583 = vadd.xlane.f32.xlu0 %v2582
        %v2584 = vpop.xlane.xlu0 %2583
        %v2585 = vrcp.pop %v2584
        %v2586 = vmul.f32 %v2581, %v2585
        %v2587 = vpack.c.bf16 %v2586, %v2586
        %2589 = vrot.lane.b32.xlu0 %v2413, 96
        %v2590 = vpop.permute.xlu0 %2589
        %v2592 = vsel %vm2462, %v2587, 0
        %v2595 = vsel %vm2478, %v2590, 0
        %2597 = vmatprep.subr.bf16.mxu0 0
        %2598 = vmatpush1.bf16.msra.mxu0 0
        %2599 = vmatprep.subr.bf16.mxu0 0
        %2600 = vmatpush1.bf16.msra.mxu0 0
        %2601 = vmatprep.subr.bf16.mxu0 0
        %2602 = vmatpush1.bf16.msra.mxu0 0
        %2603 = vmatprep.subr.bf16.mxu0 0
        %2604 = vmatpush1.bf16.msra.mxu0 0
        %2605 = vmatprep.subr.bf16.mxu0 0
        %2606 = vmatpush1.bf16.msra.mxu0 0
        %2607 = vmatprep.subr.bf16.mxu0 0
        %2608 = vmatpush1.bf16.msra.mxu0 0
        %2609 = vmatprep.subr.bf16.mxu0 0
        %2610 = vmatpush1.bf16.msra.mxu0 0
        %2611 = vmatprep.subr.bf16.mxu0 0
        %2612 = vmatpush1.bf16.msra.mxu0 %v2595
        %2613 = vmatprep.subr.bf16.mxu0 0
        %2614 = vmatpush2.bf16.msra.mxu0 0
        %2615 = vmatprep.subr.bf16.mxu0 0
        %2616 = vmatpush2.bf16.msra.mxu0 0
        %2617 = vmatprep.subr.bf16.mxu0 0
        %2618 = vmatpush2.bf16.msra.mxu0 0
        %2619 = vmatprep.subr.bf16.mxu0 0
        %2620 = vmatpush2.bf16.msra.mxu0 0
        %2621 = vmatprep.subr.bf16.mxu0 0
        %2622 = vmatpush2.bf16.msra.mxu0 0
        %2623 = vmatprep.subr.bf16.mxu0 0
        %2624 = vmatpush2.bf16.msra.mxu0 0
        %2625 = vmatprep.subr.bf16.mxu0 0
        %2626 = vmatpush2.bf16.msra.mxu0 0
        %2627 = vmatprep.subr.bf16.mxu0 0
        %2628 = vmatpush2.bf16.msra.mxu0 0
        %2629 = vmatprep.mubr.bf16.mxu0 0
        %2630 = vmatmul.mubr.bf16.gmra.mxu0 %v2592
        %v2631 = vpop.f32.mrf.mxu0
        %v2632 = vadd.f32 0.0, %v2631
        %v2633 = vpop.f32.mrf.mxu0
        %v2634 = vpop.f32.mrf.mxu0
        %v2635 = vpop.f32.mrf.mxu0
        %2636 = vdwg.mxu0
        %v2637 = vpack.c.bf16 %v2632, %v2632
        %v2642 = vunpack.c.l.b16 %v2399
        %v2643 = vunpack.c.l.b16 %v2400
        %v2644 = vunpack.c.l.b16 %v2401
        %v2645 = vunpack.c.l.b16 %v2402
        %v2646 = vpack.c.b16 %v2643, %v2642
        %v2647 = vpack.c.b16 %v2645, %v2644
        %v2651 = vsel %vm2414, %v2637, 0
        %2653 = vmatprep.subr.bf16.mxu0 0
        %2654 = vmatpush1.bf16.msra.mxu0 0
        %2655 = vmatprep.subr.bf16.mxu0 0
        %2656 = vmatpush1.bf16.msra.mxu0 0
        %2657 = vmatprep.subr.bf16.mxu0 0
        %2658 = vmatpush1.bf16.msra.mxu0 0
        %2659 = vmatprep.subr.bf16.mxu0 0
        %2660 = vmatpush1.bf16.msra.mxu0 0
        %2661 = vmatprep.subr.bf16.mxu0 0
        %2662 = vmatpush1.bf16.msra.mxu0 0
        %2663 = vmatprep.subr.bf16.mxu0 0
        %2664 = vmatpush1.bf16.msra.mxu0 0
        %2665 = vmatprep.subr.bf16.mxu0 0
        %2666 = vmatpush1.bf16.msra.mxu0 %v2647
        %2667 = vmatprep.subr.bf16.mxu0 0
        %2668 = vmatpush1.bf16.msra.mxu0 %v2646
        %2669 = vmatprep.subr.bf16.mxu0 0
        %2670 = vmatpush2.bf16.msra.mxu0 0
        %2671 = vmatprep.subr.bf16.mxu0 0
        %2672 = vmatpush2.bf16.msra.mxu0 0
        %2673 = vmatprep.subr.bf16.mxu0 0
        %2674 = vmatpush2.bf16.msra.mxu0 0
        %2675 = vmatprep.subr.bf16.mxu0 0
        %2676 = vmatpush2.bf16.msra.mxu0 0
        %2677 = vmatprep.subr.bf16.mxu0 0
        %2678 = vmatpush2.bf16.msra.mxu0 0
        %2679 = vmatprep.subr.bf16.mxu0 0
        %2680 = vmatpush2.bf16.msra.mxu0 0
        %2681 = vmatprep.subr.bf16.mxu0 0
        %2682 = vmatpush2.bf16.msra.mxu0 0
        %2683 = vmatprep.subr.bf16.mxu0 0
        %2684 = vmatpush2.bf16.msra.mxu0 0
        %2685 = vmatprep.mubr.bf16.mxu0 0
        %2686 = vmatmul.mubr.bf16.gmra.mxu0 %v2651
        %v2687 = vpop.f32.mrf.mxu0
        %v2688 = vadd.f32 0.0, %v2687
        %v2689 = vpop.f32.mrf.mxu0
        %v2690 = vpop.f32.mrf.mxu0
        %v2691 = vpop.f32.mrf.mxu0
        %2692 = vdwg.mxu0
        %v2697 = vunpack.c.l.b16 %v2395
        %v2698 = vunpack.c.l.b16 %v2396
        %v2699 = vunpack.c.l.b16 %v2397
        %v2700 = vunpack.c.l.b16 %v2398
        %v2701 = vpack.c.b16 %v2698, %v2697
        %v2702 = vpack.c.b16 %v2700, %v2699
        %v2706 = vsel %vm2414, %v2522, 0
        %2708 = vmatprep.subr.bf16.mxu0 0
        %2709 = vmatpush1.bf16.msra.mxu0 0
        %2710 = vmatprep.subr.bf16.mxu0 0
        %2711 = vmatpush1.bf16.msra.mxu0 0
        %2712 = vmatprep.subr.bf16.mxu0 0
        %2713 = vmatpush1.bf16.msra.mxu0 0
        %2714 = vmatprep.subr.bf16.mxu0 0
        %2715 = vmatpush1.bf16.msra.mxu0 0
        %2716 = vmatprep.subr.bf16.mxu0 0
        %2717 = vmatpush1.bf16.msra.mxu0 0
        %2718 = vmatprep.subr.bf16.mxu0 0
        %2719 = vmatpush1.bf16.msra.mxu0 0
        %2720 = vmatprep.subr.bf16.mxu0 0
        %2721 = vmatpush1.bf16.msra.mxu0 %v2702
        %2722 = vmatprep.subr.bf16.mxu0 0
        %2723 = vmatpush1.bf16.msra.mxu0 %v2701
        %2724 = vmatprep.subr.bf16.mxu0 0
        %2725 = vmatpush2.bf16.msra.mxu0 0
        %2726 = vmatprep.subr.bf16.mxu0 0
        %2727 = vmatpush2.bf16.msra.mxu0 0
        %2728 = vmatprep.subr.bf16.mxu0 0
        %2729 = vmatpush2.bf16.msra.mxu0 0
        %2730 = vmatprep.subr.bf16.mxu0 0
        %2731 = vmatpush2.bf16.msra.mxu0 0
        %2732 = vmatprep.subr.bf16.mxu0 0
        %2733 = vmatpush2.bf16.msra.mxu0 0
        %2734 = vmatprep.subr.bf16.mxu0 0
        %2735 = vmatpush2.bf16.msra.mxu0 0
        %2736 = vmatprep.subr.bf16.mxu0 0
        %2737 = vmatpush2.bf16.msra.mxu0 0
        %2738 = vmatprep.subr.bf16.mxu0 0
        %2739 = vmatpush2.bf16.msra.mxu0 0
        %2740 = vmatprep.mubr.bf16.mxu0 0
        %2741 = vmatmul.mubr.bf16.gmra.mxu0 %v2706
        %v2742 = vpop.f32.mrf.mxu0
        %v2743 = vadd.f32 %v2688, %v2742
        %v2744 = vpop.f32.mrf.mxu0
        %v2745 = vpop.f32.mrf.mxu0
        %v2746 = vpop.f32.mrf.mxu0
        %2747 = vdwg.mxu0
        %2748 = vrot.lane.b32.xlu0 %v2411, 64
        %v2749 = vpop.permute.xlu0 %2748
        %2750 = vrot.lane.b32.xlu0 %v2412, 64
        %v2751 = vpop.permute.xlu0 %2750
        %v2753 = vsel %vm2414, %v2749, 0
        %v2756 = vsel %vm2414, %v2751, 0
        %2758 = vmatprep.subr.bf16.mxu0 0
        %2759 = vmatpush1.bf16.xpose.msra.mxu0 0
        %2760 = vmatprep.subr.bf16.mxu0 0
        %2761 = vmatpush1.bf16.xpose.msra.mxu0 0
        %2762 = vmatprep.subr.bf16.mxu0 0
        %2763 = vmatpush1.bf16.xpose.msra.mxu0 0
        %2764 = vmatprep.subr.bf16.mxu0 0
        %2765 = vmatpush1.bf16.xpose.msra.mxu0 0
        %2766 = vmatprep.subr.bf16.mxu0 0
        %2767 = vmatpush1.bf16.xpose.msra.mxu0 0
        %2768 = vmatprep.subr.bf16.mxu0 0
        %2769 = vmatpush1.bf16.xpose.msra.mxu0 0
        %2770 = vmatprep.subr.bf16.mxu0 0
        %2771 = vmatpush1.bf16.xpose.msra.mxu0 0
        %2772 = vmatprep.subr.bf16.mxu0 0
        %2773 = vmatpush1.bf16.xpose.msra.mxu0 %v2756
        %2774 = vmatprep.subr.bf16.mxu0 0
        %2775 = vmatpush2.bf16.xpose.msra.mxu0 0
        %2776 = vmatprep.subr.bf16.mxu0 0
        %2777 = vmatpush2.bf16.xpose.msra.mxu0 0
        %2778 = vmatprep.subr.bf16.mxu0 0
        %2779 = vmatpush2.bf16.xpose.msra.mxu0 0
        %2780 = vmatprep.subr.bf16.mxu0 0
        %2781 = vmatpush2.bf16.xpose.msra.mxu0 0
        %2782 = vmatprep.subr.bf16.mxu0 0
        %2783 = vmatpush2.bf16.xpose.msra.mxu0 0
        %2784 = vmatprep.subr.bf16.mxu0 0
        %2785 = vmatpush2.bf16.xpose.msra.mxu0 0
        %2786 = vmatprep.subr.bf16.mxu0 0
        %2787 = vmatpush2.bf16.xpose.msra.mxu0 0
        %2788 = vmatprep.subr.bf16.mxu0 0
        %2789 = vmatpush2.bf16.xpose.msra.mxu0 0
        %2790 = vmatprep.mubr.bf16.mxu0 0
        %2791 = vmatmul.mubr.bf16.gmra.mxu0 %v2753
        %v2792 = vpop.f32.mrf.mxu0
        %v2793 = vadd.f32 0.0, %v2792
        %v2794 = vpop.f32.mrf.mxu0
        %v2795 = vpop.f32.mrf.mxu0
        %v2796 = vpop.f32.mrf.mxu0
        %2797 = vdwg.mxu0
        %v2798 = vmul.f32 %v2793, 0.17677669
        %v2799 = vsel %vm2462, %v2798, -inf
        %2800 = vmax.xlane.f32.xlu0 %v2799
        %v2801 = vpop.xlane.xlu0 %2800
        %v2802 = vsub.f32 %v2798, %v2801
        %v2803 = vmul.f32 %v2802, 1.442695
        %v2804 = vpow.pop %v2803
        %v2805 = vsel %vm2462, %v2804, 0.0
        %2806 = vadd.xlane.f32.xlu0 %v2805
        %v2807 = vpop.xlane.xlu0 %2806
        %v2808 = vrcp.pop %v2807
        %v2809 = vmul.f32 %v2804, %v2808
        %v2810 = vpack.c.bf16 %v2809, %v2809
        %2811 = vrot.lane.b32.xlu0 %v2413, 64
        %v2812 = vpop.permute.xlu0 %2811
        %v2814 = vsel %vm2462, %v2810, 0
        %v2817 = vsel %vm2478, %v2812, 0
        %2819 = vmatprep.subr.bf16.mxu0 0
        %2820 = vmatpush1.bf16.msra.mxu0 0
        %2821 = vmatprep.subr.bf16.mxu0 0
        %2822 = vmatpush1.bf16.msra.mxu0 0
        %2823 = vmatprep.subr.bf16.mxu0 0
        %2824 = vmatpush1.bf16.msra.mxu0 0
        %2825 = vmatprep.subr.bf16.mxu0 0
        %2826 = vmatpush1.bf16.msra.mxu0 0
        %2827 = vmatprep.subr.bf16.mxu0 0
        %2828 = vmatpush1.bf16.msra.mxu0 0
        %2829 = vmatprep.subr.bf16.mxu0 0
        %2830 = vmatpush1.bf16.msra.mxu0 0
        %2831 = vmatprep.subr.bf16.mxu0 0
        %2832 = vmatpush1.bf16.msra.mxu0 0
        %2833 = vmatprep.subr.bf16.mxu0 0
        %2834 = vmatpush1.bf16.msra.mxu0 %v2817
        %2835 = vmatprep.subr.bf16.mxu0 0
        %2836 = vmatpush2.bf16.msra.mxu0 0
        %2837 = vmatprep.subr.bf16.mxu0 0
        %2838 = vmatpush2.bf16.msra.mxu0 0
        %2839 = vmatprep.subr.bf16.mxu0 0
        %2840 = vmatpush2.bf16.msra.mxu0 0
        %2841 = vmatprep.subr.bf16.mxu0 0
        %2842 = vmatpush2.bf16.msra.mxu0 0
        %2843 = vmatprep.subr.bf16.mxu0 0
        %2844 = vmatpush2.bf16.msra.mxu0 0
        %2845 = vmatprep.subr.bf16.mxu0 0
        %2846 = vmatpush2.bf16.msra.mxu0 0
        %2847 = vmatprep.subr.bf16.mxu0 0
        %2848 = vmatpush2.bf16.msra.mxu0 0
        %2849 = vmatprep.subr.bf16.mxu0 0
        %2850 = vmatpush2.bf16.msra.mxu0 0
        %2851 = vmatprep.mubr.bf16.mxu0 0
        %2852 = vmatmul.mubr.bf16.gmra.mxu0 %v2814
        %v2853 = vpop.f32.mrf.mxu0
        %v2854 = vadd.f32 0.0, %v2853
        %v2855 = vpop.f32.mrf.mxu0
        %v2856 = vpop.f32.mrf.mxu0
        %v2857 = vpop.f32.mrf.mxu0
        %2858 = vdwg.mxu0
        %v2859 = vpack.c.bf16 %v2854, %v2854
        %v2864 = vunpack.c.l.b16 %v2403
        %v2865 = vunpack.c.l.b16 %v2404
        %v2866 = vunpack.c.l.b16 %v2405
        %v2867 = vunpack.c.l.b16 %v2406
        %v2868 = vpack.c.b16 %v2865, %v2864
        %v2869 = vpack.c.b16 %v2867, %v2866
        %v2873 = vsel %vm2414, %v2859, 0
        %2875 = vmatprep.subr.bf16.mxu0 0
        %2876 = vmatpush1.bf16.msra.mxu0 0
        %2877 = vmatprep.subr.bf16.mxu0 0
        %2878 = vmatpush1.bf16.msra.mxu0 0
        %2879 = vmatprep.subr.bf16.mxu0 0
        %2880 = vmatpush1.bf16.msra.mxu0 0
        %2881 = vmatprep.subr.bf16.mxu0 0
        %2882 = vmatpush1.bf16.msra.mxu0 0
        %2883 = vmatprep.subr.bf16.mxu0 0
        %2884 = vmatpush1.bf16.msra.mxu0 0
        %2885 = vmatprep.subr.bf16.mxu0 0
        %2886 = vmatpush1.bf16.msra.mxu0 0
        %2887 = vmatprep.subr.bf16.mxu0 0
        %2888 = vmatpush1.bf16.msra.mxu0 %v2869
        %2889 = vmatprep.subr.bf16.mxu0 0
        %2890 = vmatpush1.bf16.msra.mxu0 %v2868
        %2891 = vmatprep.subr.bf16.mxu0 0
        %2892 = vmatpush2.bf16.msra.mxu0 0
        %2893 = vmatprep.subr.bf16.mxu0 0
        %2894 = vmatpush2.bf16.msra.mxu0 0
        %2895 = vmatprep.subr.bf16.mxu0 0
        %2896 = vmatpush2.bf16.msra.mxu0 0
        %2897 = vmatprep.subr.bf16.mxu0 0
        %2898 = vmatpush2.bf16.msra.mxu0 0
        %2899 = vmatprep.subr.bf16.mxu0 0
        %2900 = vmatpush2.bf16.msra.mxu0 0
        %2901 = vmatprep.subr.bf16.mxu0 0
        %2902 = vmatpush2.bf16.msra.mxu0 0
        %2903 = vmatprep.subr.bf16.mxu0 0
        %2904 = vmatpush2.bf16.msra.mxu0 0
        %2905 = vmatprep.subr.bf16.mxu0 0
        %2906 = vmatpush2.bf16.msra.mxu0 0
        %2907 = vmatprep.mubr.bf16.mxu0 0
        %2908 = vmatmul.mubr.bf16.gmra.mxu0 %v2873
        %v2909 = vpop.f32.mrf.mxu0
        %v2910 = vadd.f32 0.0, %v2909
        %v2911 = vpop.f32.mrf.mxu0
        %v2912 = vpop.f32.mrf.mxu0
        %v2913 = vpop.f32.mrf.mxu0
        %2914 = vdwg.mxu0
        %v2915 = vadd.f32 %v2743, %v2910
        %2916 = vrot.lane.b32.xlu0 %v2411, 32
        %v2917 = vpop.permute.xlu0 %2916
        %2918 = vrot.lane.b32.xlu0 %v2412, 32
        %v2919 = vpop.permute.xlu0 %2918
        %v2921 = vsel %vm2414, %v2917, 0
        %v2924 = vsel %vm2414, %v2919, 0
        %2926 = vmatprep.subr.bf16.mxu0 0
        %2927 = vmatpush1.bf16.xpose.msra.mxu0 0
        %2928 = vmatprep.subr.bf16.mxu0 0
        %2929 = vmatpush1.bf16.xpose.msra.mxu0 0
        %2930 = vmatprep.subr.bf16.mxu0 0
        %2931 = vmatpush1.bf16.xpose.msra.mxu0 0
        %2932 = vmatprep.subr.bf16.mxu0 0
        %2933 = vmatpush1.bf16.xpose.msra.mxu0 0
        %2934 = vmatprep.subr.bf16.mxu0 0
        %2935 = vmatpush1.bf16.xpose.msra.mxu0 0
        %2936 = vmatprep.subr.bf16.mxu0 0
        %2937 = vmatpush1.bf16.xpose.msra.mxu0 0
        %2938 = vmatprep.subr.bf16.mxu0 0
        %2939 = vmatpush1.bf16.xpose.msra.mxu0 0
        %2940 = vmatprep.subr.bf16.mxu0 0
        %2941 = vmatpush1.bf16.xpose.msra.mxu0 %v2924
        %2942 = vmatprep.subr.bf16.mxu0 0
        %2943 = vmatpush2.bf16.xpose.msra.mxu0 0
        %2944 = vmatprep.subr.bf16.mxu0 0
        %2945 = vmatpush2.bf16.xpose.msra.mxu0 0
        %2946 = vmatprep.subr.bf16.mxu0 0
        %2947 = vmatpush2.bf16.xpose.msra.mxu0 0
        %2948 = vmatprep.subr.bf16.mxu0 0
        %2949 = vmatpush2.bf16.xpose.msra.mxu0 0
        %2950 = vmatprep.subr.bf16.mxu0 0
        %2951 = vmatpush2.bf16.xpose.msra.mxu0 0
        %2952 = vmatprep.subr.bf16.mxu0 0
        %2953 = vmatpush2.bf16.xpose.msra.mxu0 0
        %2954 = vmatprep.subr.bf16.mxu0 0
        %2955 = vmatpush2.bf16.xpose.msra.mxu0 0
        %2956 = vmatprep.subr.bf16.mxu0 0
        %2957 = vmatpush2.bf16.xpose.msra.mxu0 0
        %2958 = vmatprep.mubr.bf16.mxu0 0
        %2959 = vmatmul.mubr.bf16.gmra.mxu0 %v2921
        %v2960 = vpop.f32.mrf.mxu0
        %v2961 = vadd.f32 0.0, %v2960
        %v2962 = vpop.f32.mrf.mxu0
        %v2963 = vpop.f32.mrf.mxu0
        %v2964 = vpop.f32.mrf.mxu0
        %2965 = vdwg.mxu0
        %v2966 = vmul.f32 %v2961, 0.17677669
        %v2967 = vsel %vm2462, %v2966, -inf
        %2968 = vmax.xlane.f32.xlu0 %v2967
        %v2969 = vpop.xlane.xlu0 %2968
        %v2970 = vsub.f32 %v2966, %v2969
        %v2971 = vmul.f32 %v2970, 1.442695
        %v2972 = vpow.pop %v2971
        %v2973 = vsel %vm2462, %v2972, 0.0
        %2974 = vadd.xlane.f32.xlu0 %v2973
        %v2975 = vpop.xlane.xlu0 %2974
        %v2976 = vrcp.pop %v2975
        %v2977 = vmul.f32 %v2972, %v2976
        %v2978 = vpack.c.bf16 %v2977, %v2977
        %2979 = vrot.lane.b32.xlu0 %v2413, 32
        %v2980 = vpop.permute.xlu0 %2979
        %v2982 = vsel %vm2462, %v2978, 0
        %v2985 = vsel %vm2478, %v2980, 0
        %2987 = vmatprep.subr.bf16.mxu0 0
        %2988 = vmatpush1.bf16.msra.mxu0 0
        %2989 = vmatprep.subr.bf16.mxu0 0
        %2990 = vmatpush1.bf16.msra.mxu0 0
        %2991 = vmatprep.subr.bf16.mxu0 0
        %2992 = vmatpush1.bf16.msra.mxu0 0
        %2993 = vmatprep.subr.bf16.mxu0 0
        %2994 = vmatpush1.bf16.msra.mxu0 0
        %2995 = vmatprep.subr.bf16.mxu0 0
        %2996 = vmatpush1.bf16.msra.mxu0 0
        %2997 = vmatprep.subr.bf16.mxu0 0
        %2998 = vmatpush1.bf16.msra.mxu0 0
        %2999 = vmatprep.subr.bf16.mxu0 0
        %3000 = vmatpush1.bf16.msra.mxu0 0
        %3001 = vmatprep.subr.bf16.mxu0 0
        %3002 = vmatpush1.bf16.msra.mxu0 %v2985
        %3003 = vmatprep.subr.bf16.mxu0 0
        %3004 = vmatpush2.bf16.msra.mxu0 0
        %3005 = vmatprep.subr.bf16.mxu0 0
        %3006 = vmatpush2.bf16.msra.mxu0 0
        %3007 = vmatprep.subr.bf16.mxu0 0
        %3008 = vmatpush2.bf16.msra.mxu0 0
        %3009 = vmatprep.subr.bf16.mxu0 0
        %3010 = vmatpush2.bf16.msra.mxu0 0
        %3011 = vmatprep.subr.bf16.mxu0 0
        %3012 = vmatpush2.bf16.msra.mxu0 0
        %3013 = vmatprep.subr.bf16.mxu0 0
        %3014 = vmatpush2.bf16.msra.mxu0 0
        %3015 = vmatprep.subr.bf16.mxu0 0
        %3016 = vmatpush2.bf16.msra.mxu0 0
        %3017 = vmatprep.subr.bf16.mxu0 0
        %3018 = vmatpush2.bf16.msra.mxu0 0
        %3019 = vmatprep.mubr.bf16.mxu0 0
        %3020 = vmatmul.mubr.bf16.gmra.mxu0 %v2982
        %v3021 = vpop.f32.mrf.mxu0
        %v3022 = vadd.f32 0.0, %v3021
        %v3023 = vpop.f32.mrf.mxu0
        %v3024 = vpop.f32.mrf.mxu0
        %v3025 = vpop.f32.mrf.mxu0
        %3026 = vdwg.mxu0
        %v3027 = vpack.c.bf16 %v3022, %v3022
        %v3032 = vunpack.c.l.b16 %v2407
        %v3033 = vunpack.c.l.b16 %v2408
        %v3034 = vunpack.c.l.b16 %v2409
        %v3035 = vunpack.c.l.b16 %v2410
        %v3036 = vpack.c.b16 %v3033, %v3032
        %v3037 = vpack.c.b16 %v3035, %v3034
        %v3041 = vsel %vm2414, %v3027, 0
        %3043 = vmatprep.subr.bf16.mxu0 0
        %3044 = vmatpush1.bf16.msra.mxu0 0
        %3045 = vmatprep.subr.bf16.mxu0 0
        %3046 = vmatpush1.bf16.msra.mxu0 0
        %3047 = vmatprep.subr.bf16.mxu0 0
        %3048 = vmatpush1.bf16.msra.mxu0 0
        %3049 = vmatprep.subr.bf16.mxu0 0
        %3050 = vmatpush1.bf16.msra.mxu0 0
        %3051 = vmatprep.subr.bf16.mxu0 0
        %3052 = vmatpush1.bf16.msra.mxu0 0
        %3053 = vmatprep.subr.bf16.mxu0 0
        %3054 = vmatpush1.bf16.msra.mxu0 0
        %3055 = vmatprep.subr.bf16.mxu0 0
        %3056 = vmatpush1.bf16.msra.mxu0 %v3037
        %3057 = vmatprep.subr.bf16.mxu0 0
        %3058 = vmatpush1.bf16.msra.mxu0 %v3036
        %3059 = vmatprep.subr.bf16.mxu0 0
        %3060 = vmatpush2.bf16.msra.mxu0 0
        %3061 = vmatprep.subr.bf16.mxu0 0
        %3062 = vmatpush2.bf16.msra.mxu0 0
        %3063 = vmatprep.subr.bf16.mxu0 0
        %3064 = vmatpush2.bf16.msra.mxu0 0
        %3065 = vmatprep.subr.bf16.mxu0 0
        %3066 = vmatpush2.bf16.msra.mxu0 0
        %3067 = vmatprep.subr.bf16.mxu0 0
        %3068 = vmatpush2.bf16.msra.mxu0 0
        %3069 = vmatprep.subr.bf16.mxu0 0
        %3070 = vmatpush2.bf16.msra.mxu0 0
        %3071 = vmatprep.subr.bf16.mxu0 0
        %3072 = vmatpush2.bf16.msra.mxu0 0
        %3073 = vmatprep.subr.bf16.mxu0 0
        %3074 = vmatpush2.bf16.msra.mxu0 0
        %3075 = vmatprep.mubr.bf16.mxu0 0
        %3076 = vmatmul.mubr.bf16.gmra.mxu0 %v3041
        %v3077 = vpop.f32.mrf.mxu0
        %v3078 = vadd.f32 0.0, %v3077
        %v3079 = vpop.f32.mrf.mxu0
        %v3080 = vpop.f32.mrf.mxu0
        %v3081 = vpop.f32.mrf.mxu0
        %3082 = vdwg.mxu0
        %v3083 = vadd.f32 %v2915, %v3078
        %v3084 = vpack.c.bf16 %v2350, %v2350
        %v3085 = vpack.c.bf16 %v2352, %v2352
        %v3086 = vpack.c.bf16 %v2392, %v2392
        %v3088 = vsel %vm2414, %v3084, 0
        %v3091 = vsel %vm2414, %v3085, 0
        %3093 = vmatprep.subr.bf16.mxu0 0
        %3094 = vmatpush1.bf16.xpose.msra.mxu0 0
        %3095 = vmatprep.subr.bf16.mxu0 0
        %3096 = vmatpush1.bf16.xpose.msra.mxu0 0
        %3097 = vmatprep.subr.bf16.mxu0 0
        %3098 = vmatpush1.bf16.xpose.msra.mxu0 0
        %3099 = vmatprep.subr.bf16.mxu0 0
        %3100 = vmatpush1.bf16.xpose.msra.mxu0 0
        %3101 = vmatprep.subr.bf16.mxu0 0
        %3102 = vmatpush1.bf16.xpose.msra.mxu0 0
        %3103 = vmatprep.subr.bf16.mxu0 0
        %3104 = vmatpush1.bf16.xpose.msra.mxu0 0
        %3105 = vmatprep.subr.bf16.mxu0 0
        %3106 = vmatpush1.bf16.xpose.msra.mxu0 0
        %3107 = vmatprep.subr.bf16.mxu0 0
        %3108 = vmatpush1.bf16.xpose.msra.mxu0 %v3091
        %3109 = vmatprep.subr.bf16.mxu0 0
        %3110 = vmatpush2.bf16.xpose.msra.mxu0 0
        %3111 = vmatprep.subr.bf16.mxu0 0
        %3112 = vmatpush2.bf16.xpose.msra.mxu0 0
        %3113 = vmatprep.subr.bf16.mxu0 0
        %3114 = vmatpush2.bf16.xpose.msra.mxu0 0
        %3115 = vmatprep.subr.bf16.mxu0 0
        %3116 = vmatpush2.bf16.xpose.msra.mxu0 0
        %3117 = vmatprep.subr.bf16.mxu0 0
        %3118 = vmatpush2.bf16.xpose.msra.mxu0 0
        %3119 = vmatprep.subr.bf16.mxu0 0
        %3120 = vmatpush2.bf16.xpose.msra.mxu0 0
        %3121 = vmatprep.subr.bf16.mxu0 0
        %3122 = vmatpush2.bf16.xpose.msra.mxu0 0
        %3123 = vmatprep.subr.bf16.mxu0 0
        %3124 = vmatpush2.bf16.xpose.msra.mxu0 0
        %3125 = vmatprep.mubr.bf16.mxu0 0
        %3126 = vmatmul.mubr.bf16.gmra.mxu0 %v3088
        %v3127 = vpop.f32.mrf.mxu0
        %v3128 = vadd.f32 0.0, %v3127
        %v3129 = vpop.f32.mrf.mxu0
        %v3130 = vpop.f32.mrf.mxu0
        %v3131 = vpop.f32.mrf.mxu0
        %3132 = vdwg.mxu0
        %v3133 = vmul.f32 %v3128, 0.17677669
        %v3134 = vsel %vm2462, %v3133, -inf
        %3135 = vmax.xlane.f32.xlu0 %v3134
        %v3136 = vpop.xlane.xlu0 %3135
        %v3137 = vsub.f32 %v3133, %v3136
        %v3138 = vmul.f32 %v3137, 1.442695
        %v3139 = vpow.pop %v3138
        %v3140 = vsel %vm2462, %v3139, 0.0
        %3141 = vadd.xlane.f32.xlu0 %v3140
        %v3142 = vpop.xlane.xlu0 %3141
        %v3143 = vrcp.pop %v3142
        %v3144 = vmul.f32 %v3139, %v3143
        %v3145 = vpack.c.bf16 %v3144, %v3144
        %v3147 = vsel %vm2462, %v3145, 0
        %v3150 = vsel %vm2478, %v3086, 0
        %3152 = vmatprep.subr.bf16.mxu0 0
        %3153 = vmatpush1.bf16.msra.mxu0 0
        %3154 = vmatprep.subr.bf16.mxu0 0
        %3155 = vmatpush1.bf16.msra.mxu0 0
        %3156 = vmatprep.subr.bf16.mxu0 0
        %3157 = vmatpush1.bf16.msra.mxu0 0
        %3158 = vmatprep.subr.bf16.mxu0 0
        %3159 = vmatpush1.bf16.msra.mxu0 0
        %3160 = vmatprep.subr.bf16.mxu0 0
        %3161 = vmatpush1.bf16.msra.mxu0 0
        %3162 = vmatprep.subr.bf16.mxu0 0
        %3163 = vmatpush1.bf16.msra.mxu0 0
        %3164 = vmatprep.subr.bf16.mxu0 0
        %3165 = vmatpush1.bf16.msra.mxu0 0
        %3166 = vmatprep.subr.bf16.mxu0 0
        %3167 = vmatpush1.bf16.msra.mxu0 %v3150
        %3168 = vmatprep.subr.bf16.mxu0 0
        %3169 = vmatpush2.bf16.msra.mxu0 0
        %3170 = vmatprep.subr.bf16.mxu0 0
        %3171 = vmatpush2.bf16.msra.mxu0 0
        %3172 = vmatprep.subr.bf16.mxu0 0
        %3173 = vmatpush2.bf16.msra.mxu0 0
        %3174 = vmatprep.subr.bf16.mxu0 0
        %3175 = vmatpush2.bf16.msra.mxu0 0
        %3176 = vmatprep.subr.bf16.mxu0 0
        %3177 = vmatpush2.bf16.msra.mxu0 0
        %3178 = vmatprep.subr.bf16.mxu0 0
        %3179 = vmatpush2.bf16.msra.mxu0 0
        %3180 = vmatprep.subr.bf16.mxu0 0
        %3181 = vmatpush2.bf16.msra.mxu0 0
        %3182 = vmatprep.subr.bf16.mxu0 0
        %3183 = vmatpush2.bf16.msra.mxu0 0
        %3184 = vmatprep.mubr.bf16.mxu0 0
        %3185 = vmatmul.mubr.bf16.gmra.mxu0 %v3147
        %v3186 = vpop.f32.mrf.mxu0
        %v3187 = vadd.f32 0.0, %v3186
        %v3188 = vpop.f32.mrf.mxu0
        %v3189 = vpop.f32.mrf.mxu0
        %v3190 = vpop.f32.mrf.mxu0
        %3191 = vdwg.mxu0
        %v3192 = vpack.c.bf16 %v3187, %v3187
        %3194 = vrot.lane.b32.xlu0 %v3084, 96
        %v3195 = vpop.permute.xlu0 %3194
        %3197 = vrot.lane.b32.xlu0 %v3085, 96
        %v3198 = vpop.permute.xlu0 %3197
        %v3200 = vsel %vm2414, %v3195, 0
        %v3203 = vsel %vm2414, %v3198, 0
        %3205 = vmatprep.subr.bf16.mxu0 0
        %3206 = vmatpush1.bf16.xpose.msra.mxu0 0
        %3207 = vmatprep.subr.bf16.mxu0 0
        %3208 = vmatpush1.bf16.xpose.msra.mxu0 0
        %3209 = vmatprep.subr.bf16.mxu0 0
        %3210 = vmatpush1.bf16.xpose.msra.mxu0 0
        %3211 = vmatprep.subr.bf16.mxu0 0
        %3212 = vmatpush1.bf16.xpose.msra.mxu0 0
        %3213 = vmatprep.subr.bf16.mxu0 0
        %3214 = vmatpush1.bf16.xpose.msra.mxu0 0
        %3215 = vmatprep.subr.bf16.mxu0 0
        %3216 = vmatpush1.bf16.xpose.msra.mxu0 0
        %3217 = vmatprep.subr.bf16.mxu0 0
        %3218 = vmatpush1.bf16.xpose.msra.mxu0 0
        %3219 = vmatprep.subr.bf16.mxu0 0
        %3220 = vmatpush1.bf16.xpose.msra.mxu0 %v3203
        %3221 = vmatprep.subr.bf16.mxu0 0
        %3222 = vmatpush2.bf16.xpose.msra.mxu0 0
        %3223 = vmatprep.subr.bf16.mxu0 0
        %3224 = vmatpush2.bf16.xpose.msra.mxu0 0
        %3225 = vmatprep.subr.bf16.mxu0 0
        %3226 = vmatpush2.bf16.xpose.msra.mxu0 0
        %3227 = vmatprep.subr.bf16.mxu0 0
        %3228 = vmatpush2.bf16.xpose.msra.mxu0 0
        %3229 = vmatprep.subr.bf16.mxu0 0
        %3230 = vmatpush2.bf16.xpose.msra.mxu0 0
        %3231 = vmatprep.subr.bf16.mxu0 0
        %3232 = vmatpush2.bf16.xpose.msra.mxu0 0
        %3233 = vmatprep.subr.bf16.mxu0 0
        %3234 = vmatpush2.bf16.xpose.msra.mxu0 0
        %3235 = vmatprep.subr.bf16.mxu0 0
        %3236 = vmatpush2.bf16.xpose.msra.mxu0 0
        %3237 = vmatprep.mubr.bf16.mxu0 0
        %3238 = vmatmul.mubr.bf16.gmra.mxu0 %v3200
        %v3239 = vpop.f32.mrf.mxu0
        %v3240 = vadd.f32 0.0, %v3239
        %v3241 = vpop.f32.mrf.mxu0
        %v3242 = vpop.f32.mrf.mxu0
        %v3243 = vpop.f32.mrf.mxu0
        %3244 = vdwg.mxu0
        %v3245 = vmul.f32 %v3240, 0.17677669
        %v3246 = vsel %vm2462, %v3245, -inf
        %3247 = vmax.xlane.f32.xlu0 %v3246
        %v3248 = vpop.xlane.xlu0 %3247
        %v3249 = vsub.f32 %v3245, %v3248
        %v3250 = vmul.f32 %v3249, 1.442695
        %v3251 = vpow.pop %v3250
        %v3252 = vsel %vm2462, %v3251, 0.0
        %3253 = vadd.xlane.f32.xlu0 %v3252
        %v3254 = vpop.xlane.xlu0 %3253
        %v3255 = vrcp.pop %v3254
        %v3256 = vmul.f32 %v3251, %v3255
        %v3257 = vpack.c.bf16 %v3256, %v3256
        %3259 = vrot.lane.b32.xlu0 %v3086, 96
        %v3260 = vpop.permute.xlu0 %3259
        %v3262 = vsel %vm2462, %v3257, 0
        %v3265 = vsel %vm2478, %v3260, 0
        %3267 = vmatprep.subr.bf16.mxu0 0
        %3268 = vmatpush1.bf16.msra.mxu0 0
        %3269 = vmatprep.subr.bf16.mxu0 0
        %3270 = vmatpush1.bf16.msra.mxu0 0
        %3271 = vmatprep.subr.bf16.mxu0 0
        %3272 = vmatpush1.bf16.msra.mxu0 0
        %3273 = vmatprep.subr.bf16.mxu0 0
        %3274 = vmatpush1.bf16.msra.mxu0 0
        %3275 = vmatprep.subr.bf16.mxu0 0
        %3276 = vmatpush1.bf16.msra.mxu0 0
        %3277 = vmatprep.subr.bf16.mxu0 0
        %3278 = vmatpush1.bf16.msra.mxu0 0
        %3279 = vmatprep.subr.bf16.mxu0 0
        %3280 = vmatpush1.bf16.msra.mxu0 0
        %3281 = vmatprep.subr.bf16.mxu0 0
        %3282 = vmatpush1.bf16.msra.mxu0 %v3265
        %3283 = vmatprep.subr.bf16.mxu0 0
        %3284 = vmatpush2.bf16.msra.mxu0 0
        %3285 = vmatprep.subr.bf16.mxu0 0
        %3286 = vmatpush2.bf16.msra.mxu0 0
        %3287 = vmatprep.subr.bf16.mxu0 0
        %3288 = vmatpush2.bf16.msra.mxu0 0
        %3289 = vmatprep.subr.bf16.mxu0 0
        %3290 = vmatpush2.bf16.msra.mxu0 0
        %3291 = vmatprep.subr.bf16.mxu0 0
        %3292 = vmatpush2.bf16.msra.mxu0 0
        %3293 = vmatprep.subr.bf16.mxu0 0
        %3294 = vmatpush2.bf16.msra.mxu0 0
        %3295 = vmatprep.subr.bf16.mxu0 0
        %3296 = vmatpush2.bf16.msra.mxu0 0
        %3297 = vmatprep.subr.bf16.mxu0 0
        %3298 = vmatpush2.bf16.msra.mxu0 0
        %3299 = vmatprep.mubr.bf16.mxu0 0
        %3300 = vmatmul.mubr.bf16.gmra.mxu0 %v3262
        %v3301 = vpop.f32.mrf.mxu0
        %v3302 = vadd.f32 0.0, %v3301
        %v3303 = vpop.f32.mrf.mxu0
        %v3304 = vpop.f32.mrf.mxu0
        %v3305 = vpop.f32.mrf.mxu0
        %3306 = vdwg.mxu0
        %v3307 = vpack.c.bf16 %v3302, %v3302
        %v3309 = vsel %vm2414, %v3307, 0
        %3311 = vmatprep.subr.bf16.mxu0 0
        %3312 = vmatpush1.bf16.msra.mxu0 0
        %3313 = vmatprep.subr.bf16.mxu0 0
        %3314 = vmatpush1.bf16.msra.mxu0 0
        %3315 = vmatprep.subr.bf16.mxu0 0
        %3316 = vmatpush1.bf16.msra.mxu0 0
        %3317 = vmatprep.subr.bf16.mxu0 0
        %3318 = vmatpush1.bf16.msra.mxu0 0
        %3319 = vmatprep.subr.bf16.mxu0 0
        %3320 = vmatpush1.bf16.msra.mxu0 0
        %3321 = vmatprep.subr.bf16.mxu0 0
        %3322 = vmatpush1.bf16.msra.mxu0 0
        %3323 = vmatprep.subr.bf16.mxu0 0
        %3324 = vmatpush1.bf16.msra.mxu0 %v2647
        %3325 = vmatprep.subr.bf16.mxu0 0
        %3326 = vmatpush1.bf16.msra.mxu0 %v2646
        %3327 = vmatprep.subr.bf16.mxu0 0
        %3328 = vmatpush2.bf16.msra.mxu0 0
        %3329 = vmatprep.subr.bf16.mxu0 0
        %3330 = vmatpush2.bf16.msra.mxu0 0
        %3331 = vmatprep.subr.bf16.mxu0 0
        %3332 = vmatpush2.bf16.msra.mxu0 0
        %3333 = vmatprep.subr.bf16.mxu0 0
        %3334 = vmatpush2.bf16.msra.mxu0 0
        %3335 = vmatprep.subr.bf16.mxu0 0
        %3336 = vmatpush2.bf16.msra.mxu0 0
        %3337 = vmatprep.subr.bf16.mxu0 0
        %3338 = vmatpush2.bf16.msra.mxu0 0
        %3339 = vmatprep.subr.bf16.mxu0 0
        %3340 = vmatpush2.bf16.msra.mxu0 0
        %3341 = vmatprep.subr.bf16.mxu0 0
        %3342 = vmatpush2.bf16.msra.mxu0 0
        %3343 = vmatprep.mubr.bf16.mxu0 0
        %3344 = vmatmul.mubr.bf16.gmra.mxu0 %v3309
        %v3345 = vpop.f32.mrf.mxu0
        %v3346 = vadd.f32 0.0, %v3345
        %v3347 = vpop.f32.mrf.mxu0
        %v3348 = vpop.f32.mrf.mxu0
        %v3349 = vpop.f32.mrf.mxu0
        %3350 = vdwg.mxu0
        %v3352 = vsel %vm2414, %v3192, 0
        %3354 = vmatprep.subr.bf16.mxu0 0
        %3355 = vmatpush1.bf16.msra.mxu0 0
        %3356 = vmatprep.subr.bf16.mxu0 0
        %3357 = vmatpush1.bf16.msra.mxu0 0
        %3358 = vmatprep.subr.bf16.mxu0 0
        %3359 = vmatpush1.bf16.msra.mxu0 0
        %3360 = vmatprep.subr.bf16.mxu0 0
        %3361 = vmatpush1.bf16.msra.mxu0 0
        %3362 = vmatprep.subr.bf16.mxu0 0
        %3363 = vmatpush1.bf16.msra.mxu0 0
        %3364 = vmatprep.subr.bf16.mxu0 0
        %3365 = vmatpush1.bf16.msra.mxu0 0
        %3366 = vmatprep.subr.bf16.mxu0 0
        %3367 = vmatpush1.bf16.msra.mxu0 %v2702
        %3368 = vmatprep.subr.bf16.mxu0 0
        %3369 = vmatpush1.bf16.msra.mxu0 %v2701
        %3370 = vmatprep.subr.bf16.mxu0 0
        %3371 = vmatpush2.bf16.msra.mxu0 0
        %3372 = vmatprep.subr.bf16.mxu0 0
        %3373 = vmatpush2.bf16.msra.mxu0 0
        %3374 = vmatprep.subr.bf16.mxu0 0
        %3375 = vmatpush2.bf16.msra.mxu0 0
        %3376 = vmatprep.subr.bf16.mxu0 0
        %3377 = vmatpush2.bf16.msra.mxu0 0
        %3378 = vmatprep.subr.bf16.mxu0 0
        %3379 = vmatpush2.bf16.msra.mxu0 0
        %3380 = vmatprep.subr.bf16.mxu0 0
        %3381 = vmatpush2.bf16.msra.mxu0 0
        %3382 = vmatprep.subr.bf16.mxu0 0
        %3383 = vmatpush2.bf16.msra.mxu0 0
        %3384 = vmatprep.subr.bf16.mxu0 0
        %3385 = vmatpush2.bf16.msra.mxu0 0
        %3386 = vmatprep.mubr.bf16.mxu0 0
        %3387 = vmatmul.mubr.bf16.gmra.mxu0 %v3352
        %v3388 = vpop.f32.mrf.mxu0
        %v3389 = vadd.f32 %v3346, %v3388
        %v3390 = vpop.f32.mrf.mxu0
        %v3391 = vpop.f32.mrf.mxu0
        %v3392 = vpop.f32.mrf.mxu0
        %3393 = vdwg.mxu0
        %3394 = vrot.lane.b32.xlu0 %v3084, 64
        %v3395 = vpop.permute.xlu0 %3394
        %3396 = vrot.lane.b32.xlu0 %v3085, 64
        %v3397 = vpop.permute.xlu0 %3396
        %v3399 = vsel %vm2414, %v3395, 0
        %v3402 = vsel %vm2414, %v3397, 0
        %3404 = vmatprep.subr.bf16.mxu0 0
        %3405 = vmatpush1.bf16.xpose.msra.mxu0 0
        %3406 = vmatprep.subr.bf16.mxu0 0
        %3407 = vmatpush1.bf16.xpose.msra.mxu0 0
        %3408 = vmatprep.subr.bf16.mxu0 0
        %3409 = vmatpush1.bf16.xpose.msra.mxu0 0
        %3410 = vmatprep.subr.bf16.mxu0 0
        %3411 = vmatpush1.bf16.xpose.msra.mxu0 0
        %3412 = vmatprep.subr.bf16.mxu0 0
        %3413 = vmatpush1.bf16.xpose.msra.mxu0 0
        %3414 = vmatprep.subr.bf16.mxu0 0
        %3415 = vmatpush1.bf16.xpose.msra.mxu0 0
        %3416 = vmatprep.subr.bf16.mxu0 0
        %3417 = vmatpush1.bf16.xpose.msra.mxu0 0
        %3418 = vmatprep.subr.bf16.mxu0 0
        %3419 = vmatpush1.bf16.xpose.msra.mxu0 %v3402
        %3420 = vmatprep.subr.bf16.mxu0 0
        %3421 = vmatpush2.bf16.xpose.msra.mxu0 0
        %3422 = vmatprep.subr.bf16.mxu0 0
        %3423 = vmatpush2.bf16.xpose.msra.mxu0 0
        %3424 = vmatprep.subr.bf16.mxu0 0
        %3425 = vmatpush2.bf16.xpose.msra.mxu0 0
        %3426 = vmatprep.subr.bf16.mxu0 0
        %3427 = vmatpush2.bf16.xpose.msra.mxu0 0
        %3428 = vmatprep.subr.bf16.mxu0 0
        %3429 = vmatpush2.bf16.xpose.msra.mxu0 0
        %3430 = vmatprep.subr.bf16.mxu0 0
        %3431 = vmatpush2.bf16.xpose.msra.mxu0 0
        %3432 = vmatprep.subr.bf16.mxu0 0
        %3433 = vmatpush2.bf16.xpose.msra.mxu0 0
        %3434 = vmatprep.subr.bf16.mxu0 0
        %3435 = vmatpush2.bf16.xpose.msra.mxu0 0
        %3436 = vmatprep.mubr.bf16.mxu0 0
        %3437 = vmatmul.mubr.bf16.gmra.mxu0 %v3399
        %v3438 = vpop.f32.mrf.mxu0
        %v3439 = vadd.f32 0.0, %v3438
        %v3440 = vpop.f32.mrf.mxu0
        %v3441 = vpop.f32.mrf.mxu0
        %v3442 = vpop.f32.mrf.mxu0
        %3443 = vdwg.mxu0
        %v3444 = vmul.f32 %v3439, 0.17677669
        %v3445 = vsel %vm2462, %v3444, -inf
        %3446 = vmax.xlane.f32.xlu0 %v3445
        %v3447 = vpop.xlane.xlu0 %3446
        %v3448 = vsub.f32 %v3444, %v3447
        %v3449 = vmul.f32 %v3448, 1.442695
        %v3450 = vpow.pop %v3449
        %v3451 = vsel %vm2462, %v3450, 0.0
        %3452 = vadd.xlane.f32.xlu0 %v3451
        %v3453 = vpop.xlane.xlu0 %3452
        %v3454 = vrcp.pop %v3453
        %v3455 = vmul.f32 %v3450, %v3454
        %v3456 = vpack.c.bf16 %v3455, %v3455
        %3457 = vrot.lane.b32.xlu0 %v3086, 64
        %v3458 = vpop.permute.xlu0 %3457
        %v3460 = vsel %vm2462, %v3456, 0
        %v3463 = vsel %vm2478, %v3458, 0
        %3465 = vmatprep.subr.bf16.mxu0 0
        %3466 = vmatpush1.bf16.msra.mxu0 0
        %3467 = vmatprep.subr.bf16.mxu0 0
        %3468 = vmatpush1.bf16.msra.mxu0 0
        %3469 = vmatprep.subr.bf16.mxu0 0
        %3470 = vmatpush1.bf16.msra.mxu0 0
        %3471 = vmatprep.subr.bf16.mxu0 0
        %3472 = vmatpush1.bf16.msra.mxu0 0
        %3473 = vmatprep.subr.bf16.mxu0 0
        %3474 = vmatpush1.bf16.msra.mxu0 0
        %3475 = vmatprep.subr.bf16.mxu0 0
        %3476 = vmatpush1.bf16.msra.mxu0 0
        %3477 = vmatprep.subr.bf16.mxu0 0
        %3478 = vmatpush1.bf16.msra.mxu0 0
        %3479 = vmatprep.subr.bf16.mxu0 0
        %3480 = vmatpush1.bf16.msra.mxu0 %v3463
        %3481 = vmatprep.subr.bf16.mxu0 0
        %3482 = vmatpush2.bf16.msra.mxu0 0
        %3483 = vmatprep.subr.bf16.mxu0 0
        %3484 = vmatpush2.bf16.msra.mxu0 0
        %3485 = vmatprep.subr.bf16.mxu0 0
        %3486 = vmatpush2.bf16.msra.mxu0 0
        %3487 = vmatprep.subr.bf16.mxu0 0
        %3488 = vmatpush2.bf16.msra.mxu0 0
        %3489 = vmatprep.subr.bf16.mxu0 0
        %3490 = vmatpush2.bf16.msra.mxu0 0
        %3491 = vmatprep.subr.bf16.mxu0 0
        %3492 = vmatpush2.bf16.msra.mxu0 0
        %3493 = vmatprep.subr.bf16.mxu0 0
        %3494 = vmatpush2.bf16.msra.mxu0 0
        %3495 = vmatprep.subr.bf16.mxu0 0
        %3496 = vmatpush2.bf16.msra.mxu0 0
        %3497 = vmatprep.mubr.bf16.mxu0 0
        %3498 = vmatmul.mubr.bf16.gmra.mxu0 %v3460
        %v3499 = vpop.f32.mrf.mxu0
        %v3500 = vadd.f32 0.0, %v3499
        %v3501 = vpop.f32.mrf.mxu0
        %v3502 = vpop.f32.mrf.mxu0
        %v3503 = vpop.f32.mrf.mxu0
        %3504 = vdwg.mxu0
        %v3505 = vpack.c.bf16 %v3500, %v3500
        %v3507 = vsel %vm2414, %v3505, 0
        %3509 = vmatprep.subr.bf16.mxu0 0
        %3510 = vmatpush1.bf16.msra.mxu0 0
        %3511 = vmatprep.subr.bf16.mxu0 0
        %3512 = vmatpush1.bf16.msra.mxu0 0
        %3513 = vmatprep.subr.bf16.mxu0 0
        %3514 = vmatpush1.bf16.msra.mxu0 0
        %3515 = vmatprep.subr.bf16.mxu0 0
        %3516 = vmatpush1.bf16.msra.mxu0 0
        %3517 = vmatprep.subr.bf16.mxu0 0
        %3518 = vmatpush1.bf16.msra.mxu0 0
        %3519 = vmatprep.subr.bf16.mxu0 0
        %3520 = vmatpush1.bf16.msra.mxu0 0
        %3521 = vmatprep.subr.bf16.mxu0 0
        %3522 = vmatpush1.bf16.msra.mxu0 %v2869
        %3523 = vmatprep.subr.bf16.mxu0 0
        %3524 = vmatpush1.bf16.msra.mxu0 %v2868
        %3525 = vmatprep.subr.bf16.mxu0 0
        %3526 = vmatpush2.bf16.msra.mxu0 0
        %3527 = vmatprep.subr.bf16.mxu0 0
        %3528 = vmatpush2.bf16.msra.mxu0 0
        %3529 = vmatprep.subr.bf16.mxu0 0
        %3530 = vmatpush2.bf16.msra.mxu0 0
        %3531 = vmatprep.subr.bf16.mxu0 0
        %3532 = vmatpush2.bf16.msra.mxu0 0
        %3533 = vmatprep.subr.bf16.mxu0 0
        %3534 = vmatpush2.bf16.msra.mxu0 0
        %3535 = vmatprep.subr.bf16.mxu0 0
        %3536 = vmatpush2.bf16.msra.mxu0 0
        %3537 = vmatprep.subr.bf16.mxu0 0
        %3538 = vmatpush2.bf16.msra.mxu0 0
        %3539 = vmatprep.subr.bf16.mxu0 0
        %3540 = vmatpush2.bf16.msra.mxu0 0
        %3541 = vmatprep.mubr.bf16.mxu0 0
        %3542 = vmatmul.mubr.bf16.gmra.mxu0 %v3507
        %v3543 = vpop.f32.mrf.mxu0
        %v3544 = vadd.f32 0.0, %v3543
        %v3545 = vpop.f32.mrf.mxu0
        %v3546 = vpop.f32.mrf.mxu0
        %v3547 = vpop.f32.mrf.mxu0
        %3548 = vdwg.mxu0
        %v3549 = vadd.f32 %v3389, %v3544
        %3550 = vrot.lane.b32.xlu0 %v3084, 32
        %v3551 = vpop.permute.xlu0 %3550
        %3552 = vrot.lane.b32.xlu0 %v3085, 32
        %v3553 = vpop.permute.xlu0 %3552
        %v3555 = vsel %vm2414, %v3551, 0
        %v3558 = vsel %vm2414, %v3553, 0
        %3560 = vmatprep.subr.bf16.mxu0 0
        %3561 = vmatpush1.bf16.xpose.msra.mxu0 0
        %3562 = vmatprep.subr.bf16.mxu0 0
        %3563 = vmatpush1.bf16.xpose.msra.mxu0 0
        %3564 = vmatprep.subr.bf16.mxu0 0
        %3565 = vmatpush1.bf16.xpose.msra.mxu0 0
        %3566 = vmatprep.subr.bf16.mxu0 0
        %3567 = vmatpush1.bf16.xpose.msra.mxu0 0
        %3568 = vmatprep.subr.bf16.mxu0 0
        %3569 = vmatpush1.bf16.xpose.msra.mxu0 0
        %3570 = vmatprep.subr.bf16.mxu0 0
        %3571 = vmatpush1.bf16.xpose.msra.mxu0 0
        %3572 = vmatprep.subr.bf16.mxu0 0
        %3573 = vmatpush1.bf16.xpose.msra.mxu0 0
        %3574 = vmatprep.subr.bf16.mxu0 0
        %3575 = vmatpush1.bf16.xpose.msra.mxu0 %v3558
        %3576 = vmatprep.subr.bf16.mxu0 0
        %3577 = vmatpush2.bf16.xpose.msra.mxu0 0
        %3578 = vmatprep.subr.bf16.mxu0 0
        %3579 = vmatpush2.bf16.xpose.msra.mxu0 0
        %3580 = vmatprep.subr.bf16.mxu0 0
        %3581 = vmatpush2.bf16.xpose.msra.mxu0 0
        %3582 = vmatprep.subr.bf16.mxu0 0
        %3583 = vmatpush2.bf16.xpose.msra.mxu0 0
        %3584 = vmatprep.subr.bf16.mxu0 0
        %3585 = vmatpush2.bf16.xpose.msra.mxu0 0
        %3586 = vmatprep.subr.bf16.mxu0 0
        %3587 = vmatpush2.bf16.xpose.msra.mxu0 0
        %3588 = vmatprep.subr.bf16.mxu0 0
        %3589 = vmatpush2.bf16.xpose.msra.mxu0 0
        %3590 = vmatprep.subr.bf16.mxu0 0
        %3591 = vmatpush2.bf16.xpose.msra.mxu0 0
        %3592 = vmatprep.mubr.bf16.mxu0 0
        %3593 = vmatmul.mubr.bf16.gmra.mxu0 %v3555
        %v3594 = vpop.f32.mrf.mxu0
        %v3595 = vadd.f32 0.0, %v3594
        %v3596 = vpop.f32.mrf.mxu0
        %v3597 = vpop.f32.mrf.mxu0
        %v3598 = vpop.f32.mrf.mxu0
        %3599 = vdwg.mxu0
        %v3600 = vmul.f32 %v3595, 0.17677669
        %v3601 = vsel %vm2462, %v3600, -inf
        %3602 = vmax.xlane.f32.xlu0 %v3601
        %v3603 = vpop.xlane.xlu0 %3602
        %v3604 = vsub.f32 %v3600, %v3603
        %v3605 = vmul.f32 %v3604, 1.442695
        %v3606 = vpow.pop %v3605
        %v3607 = vsel %vm2462, %v3606, 0.0
        %3608 = vadd.xlane.f32.xlu0 %v3607
        %v3609 = vpop.xlane.xlu0 %3608
        %v3610 = vrcp.pop %v3609
        %v3611 = vmul.f32 %v3606, %v3610
        %v3612 = vpack.c.bf16 %v3611, %v3611
        %3613 = vrot.lane.b32.xlu0 %v3086, 32
        %v3614 = vpop.permute.xlu0 %3613
        %v3616 = vsel %vm2462, %v3612, 0
        %v3619 = vsel %vm2478, %v3614, 0
        %3621 = vmatprep.subr.bf16.mxu0 0
        %3622 = vmatpush1.bf16.msra.mxu0 0
        %3623 = vmatprep.subr.bf16.mxu0 0
        %3624 = vmatpush1.bf16.msra.mxu0 0
        %3625 = vmatprep.subr.bf16.mxu0 0
        %3626 = vmatpush1.bf16.msra.mxu0 0
        %3627 = vmatprep.subr.bf16.mxu0 0
        %3628 = vmatpush1.bf16.msra.mxu0 0
        %3629 = vmatprep.subr.bf16.mxu0 0
        %3630 = vmatpush1.bf16.msra.mxu0 0
        %3631 = vmatprep.subr.bf16.mxu0 0
        %3632 = vmatpush1.bf16.msra.mxu0 0
        %3633 = vmatprep.subr.bf16.mxu0 0
        %3634 = vmatpush1.bf16.msra.mxu0 0
        %3635 = vmatprep.subr.bf16.mxu0 0
        %3636 = vmatpush1.bf16.msra.mxu0 %v3619
        %3637 = vmatprep.subr.bf16.mxu0 0
        %3638 = vmatpush2.bf16.msra.mxu0 0
        %3639 = vmatprep.subr.bf16.mxu0 0
        %3640 = vmatpush2.bf16.msra.mxu0 0
        %3641 = vmatprep.subr.bf16.mxu0 0
        %3642 = vmatpush2.bf16.msra.mxu0 0
        %3643 = vmatprep.subr.bf16.mxu0 0
        %3644 = vmatpush2.bf16.msra.mxu0 0
        %3645 = vmatprep.subr.bf16.mxu0 0
        %3646 = vmatpush2.bf16.msra.mxu0 0
        %3647 = vmatprep.subr.bf16.mxu0 0
        %3648 = vmatpush2.bf16.msra.mxu0 0
        %3649 = vmatprep.subr.bf16.mxu0 0
        %3650 = vmatpush2.bf16.msra.mxu0 0
        %3651 = vmatprep.subr.bf16.mxu0 0
        %3652 = vmatpush2.bf16.msra.mxu0 0
        %3653 = vmatprep.mubr.bf16.mxu0 0
        %3654 = vmatmul.mubr.bf16.gmra.mxu0 %v3616
        %v3655 = vpop.f32.mrf.mxu0
        %v3656 = vadd.f32 0.0, %v3655
        %v3657 = vpop.f32.mrf.mxu0
        %v3658 = vpop.f32.mrf.mxu0
        %v3659 = vpop.f32.mrf.mxu0
        %3660 = vdwg.mxu0
        %v3661 = vpack.c.bf16 %v3656, %v3656
        %v3663 = vsel %vm2414, %v3661, 0
        %3665 = vmatprep.subr.bf16.mxu0 0
        %3666 = vmatpush1.bf16.msra.mxu0 0
        %3667 = vmatprep.subr.bf16.mxu0 0
        %3668 = vmatpush1.bf16.msra.mxu0 0
        %3669 = vmatprep.subr.bf16.mxu0 0
        %3670 = vmatpush1.bf16.msra.mxu0 0
        %3671 = vmatprep.subr.bf16.mxu0 0
        %3672 = vmatpush1.bf16.msra.mxu0 0
        %3673 = vmatprep.subr.bf16.mxu0 0
        %3674 = vmatpush1.bf16.msra.mxu0 0
        %3675 = vmatprep.subr.bf16.mxu0 0
        %3676 = vmatpush1.bf16.msra.mxu0 0
        %3677 = vmatprep.subr.bf16.mxu0 0
        %3678 = vmatpush1.bf16.msra.mxu0 %v3037
        %3679 = vmatprep.subr.bf16.mxu0 0
        %3680 = vmatpush1.bf16.msra.mxu0 %v3036
        %3681 = vmatprep.subr.bf16.mxu0 0
        %3682 = vmatpush2.bf16.msra.mxu0 0
        %3683 = vmatprep.subr.bf16.mxu0 0
        %3684 = vmatpush2.bf16.msra.mxu0 0
        %3685 = vmatprep.subr.bf16.mxu0 0
        %3686 = vmatpush2.bf16.msra.mxu0 0
        %3687 = vmatprep.subr.bf16.mxu0 0
        %3688 = vmatpush2.bf16.msra.mxu0 0
        %3689 = vmatprep.subr.bf16.mxu0 0
        %3690 = vmatpush2.bf16.msra.mxu0 0
        %3691 = vmatprep.subr.bf16.mxu0 0
        %3692 = vmatpush2.bf16.msra.mxu0 0
        %3693 = vmatprep.subr.bf16.mxu0 0
        %3694 = vmatpush2.bf16.msra.mxu0 0
        %3695 = vmatprep.subr.bf16.mxu0 0
        %3696 = vmatpush2.bf16.msra.mxu0 0
        %3697 = vmatprep.mubr.bf16.mxu0 0
        %3698 = vmatmul.mubr.bf16.gmra.mxu0 %v3663
        %v3699 = vpop.f32.mrf.mxu0
        %v3700 = vadd.f32 0.0, %v3699
        %v3701 = vpop.f32.mrf.mxu0
        %v3702 = vpop.f32.mrf.mxu0
        %v3703 = vpop.f32.mrf.mxu0
        %3704 = vdwg.mxu0
        %v3705 = vadd.f32 %v3549, %v3700
        %v3706 = vadd.f32 %v2105, %v3083
        %v3707 = vadd.f32 %v2106, %v3705
        %v3708 = vld [vmem:[%s1419] sm:$0x1]
        %v3709 = vunpack.c.l.bf16 %v3708
        %v3710 = vlaneseq
        %v3711 = vshrl.u32 %v3710, 7
        %v3712 = vsub.s32 0, %v3711
        %v3713 = vrot.slane %v3709, %v3712
        %v3714 = vadd.f32 %v3706, %v3713
        %v3715 = vadd.f32 %v3707, %v3713
        %v3716 = vld [vmem:[%s1422] sm:$0x1]
        %v3717 = vunpack.c.l.bf16 %v3716
        %v3718 = vld [vmem:[%s1425] sm:$0x1]
        %v3719 = vunpack.c.l.bf16 %v3718
        %3720 = vadd.xlane.f32.xlu0 %v3714
        %v3721 = vpop.xlane.xlu0 %3720
        %3722 = vadd.xlane.f32.xlu0 %v3715
        %v3723 = vpop.xlane.xlu0 %3722
        %v3724 = vmul.f32 %v3721, %v2119
        %v3725 = vmul.f32 %v3723, %v2119
        %v3726 = vsub.f32 %v3714, %v3724
        %v3727 = vsub.f32 %v3715, %v3725
        %v3728 = vmul.f32 %v3726, %v3726
        %v3729 = vmul.f32 %v3727, %v3727
        %3730 = vadd.xlane.f32.xlu0 %v3728
        %v3731 = vpop.xlane.xlu0 %3730
        %3732 = vadd.xlane.f32.xlu0 %v3729
        %v3733 = vpop.xlane.xlu0 %3732
        %v3734 = vmul.f32 %v3731, %v2119
        %v3735 = vmul.f32 %v3733, %v2119
        %v3736 = vadd.f32 %v3734, 1e-05
        %v3737 = vadd.f32 %v3735, 1e-05
        %v3738 = vrsqrt.pop %v3736
        %v3739 = vrsqrt.pop %v3737
        %v3740 = vmul.f32 %v3726, %v3738
        %v3741 = vmul.f32 %v3727, %v3739
        %v3742 = vlaneseq
        %v3743 = vshrl.u32 %v3742, 7
        %v3744 = vsub.s32 0, %v3743
        %v3745 = vrot.slane %v3717, %v3744
        %v3746 = vmul.f32 %v3740, %v3745
        %v3747 = vmul.f32 %v3741, %v3745
        %v3748 = vlaneseq
        %v3749 = vshrl.u32 %v3748, 7
        %v3750 = vsub.s32 0, %v3749
        %v3751 = vrot.slane %v3719, %v3750
        %v3752 = vadd.f32 %v3746, %v3751
        %v3753 = vadd.f32 %v3747, %v3751
        %v3754 = vld [vmem:[%s1236] sm:$0xf]
        %v3755 = vld [vmem:[%s1236 + $0x4] sm:$0xf]
        %v3756 = vld [vmem:[%s1236 + $0x8] sm:$0xf]
        %v3757 = vld [vmem:[%s1236 + $0xc] sm:$0xf]
        %v3758 = vld [vmem:[%s1236 + $0x10] sm:$0xf]
        %v3759 = vld [vmem:[%s1236 + $0x14] sm:$0xf]
        %v3760 = vld [vmem:[%s1236 + $0x18] sm:$0xf]
        %v3761 = vld [vmem:[%s1236 + $0x1c] sm:$0xf]
        %v3762 = vld [vmem:[%s1236 + $0x20] sm:$0xf]
        %v3763 = vld [vmem:[%s1236 + $0x24] sm:$0xf]
        %v3764 = vld [vmem:[%s1236 + $0x28] sm:$0xf]
        %v3765 = vld [vmem:[%s1236 + $0x2c] sm:$0xf]
        %v3766 = vld [vmem:[%s1236 + $0x30] sm:$0xf]
        %v3767 = vld [vmem:[%s1236 + $0x34] sm:$0xf]
        %v3768 = vld [vmem:[%s1236 + $0x38] sm:$0xf]
        %v3769 = vld [vmem:[%s1236 + $0x3c] sm:$0xf]
        %v3770 = vpack.c.bf16 %v3753, %v3752
        %v3787 = vunpack.c.l.b16 %v3754
        %v3788 = vunpack.c.l.b16 %v3755
        %v3789 = vunpack.c.l.b16 %v3756
        %v3790 = vunpack.c.l.b16 %v3757
        %v3791 = vunpack.c.l.b16 %v3758
        %v3792 = vunpack.c.l.b16 %v3759
        %v3793 = vunpack.c.l.b16 %v3760
        %v3794 = vunpack.c.l.b16 %v3761
        %v3795 = vunpack.c.l.b16 %v3762
        %v3796 = vunpack.c.l.b16 %v3763
        %v3797 = vunpack.c.l.b16 %v3764
        %v3798 = vunpack.c.l.b16 %v3765
        %v3799 = vunpack.c.l.b16 %v3766
        %v3800 = vunpack.c.l.b16 %v3767
        %v3801 = vunpack.c.l.b16 %v3768
        %v3802 = vunpack.c.l.b16 %v3769
        %v3803 = vpack.c.b16 %v3788, %v3787
        %v3804 = vpack.c.b16 %v3790, %v3789
        %v3805 = vpack.c.b16 %v3792, %v3791
        %v3806 = vpack.c.b16 %v3794, %v3793
        %v3807 = vpack.c.b16 %v3796, %v3795
        %v3808 = vpack.c.b16 %v3798, %v3797
        %v3809 = vpack.c.b16 %v3800, %v3799
        %v3810 = vpack.c.b16 %v3802, %v3801
        %3819 = vmatprep.subr.bf16.mxu0 0
        %3820 = vmatpush1.bf16.msra.mxu0 %v3810
        %3821 = vmatprep.subr.bf16.mxu0 0
        %3822 = vmatpush1.bf16.msra.mxu0 %v3809
        %3823 = vmatprep.subr.bf16.mxu0 0
        %3824 = vmatpush1.bf16.msra.mxu0 %v3808
        %3825 = vmatprep.subr.bf16.mxu0 0
        %3826 = vmatpush1.bf16.msra.mxu0 %v3807
        %3827 = vmatprep.subr.bf16.mxu0 0
        %3828 = vmatpush1.bf16.msra.mxu0 %v3806
        %3829 = vmatprep.subr.bf16.mxu0 0
        %3830 = vmatpush1.bf16.msra.mxu0 %v3805
        %3831 = vmatprep.subr.bf16.mxu0 0
        %3832 = vmatpush1.bf16.msra.mxu0 %v3804
        %3833 = vmatprep.subr.bf16.mxu0 0
        %3834 = vmatpush1.bf16.msra.mxu0 %v3803
        %3835 = vmatprep.subr.bf16.mxu0 0
        %3836 = vmatpush2.bf16.msra.mxu0 0
        %3837 = vmatprep.subr.bf16.mxu0 0
        %3838 = vmatpush2.bf16.msra.mxu0 0
        %3839 = vmatprep.subr.bf16.mxu0 0
        %3840 = vmatpush2.bf16.msra.mxu0 0
        %3841 = vmatprep.subr.bf16.mxu0 0
        %3842 = vmatpush2.bf16.msra.mxu0 0
        %3843 = vmatprep.subr.bf16.mxu0 0
        %3844 = vmatpush2.bf16.msra.mxu0 0
        %3845 = vmatprep.subr.bf16.mxu0 0
        %3846 = vmatpush2.bf16.msra.mxu0 0
        %3847 = vmatprep.subr.bf16.mxu0 0
        %3848 = vmatpush2.bf16.msra.mxu0 0
        %3849 = vmatprep.subr.bf16.mxu0 0
        %3850 = vmatpush2.bf16.msra.mxu0 0
        %3851 = vmatprep.mubr.bf16.mxu0 0
        %3852 = vmatmul.mubr.bf16.gmra.mxu0 %v3770
        %v3853 = vpop.f32.mrf.mxu0
        %v3854 = vadd.f32 0.0, %v3853
        %v3855 = vpop.f32.mrf.mxu0
        %v3856 = vpop.f32.mrf.mxu0
        %v3857 = vadd.f32 0.0, %v3856
        %v3858 = vpop.f32.mrf.mxu0
        %3859 = vdwg.mxu0
        %v3860 = vld [vmem:[%s1245] sm:$0xff]
        %v3861 = vld [vmem:[%s1245 + $0x8] sm:$0xff]
        %v3862 = vld [vmem:[%s1245 + $0x10] sm:$0xff]
        %v3863 = vld [vmem:[%s1245 + $0x18] sm:$0xff]
        %v3864 = vld [vmem:[%s1245 + $0x20] sm:$0xff]
        %v3865 = vld [vmem:[%s1245 + $0x28] sm:$0xff]
        %v3866 = vld [vmem:[%s1245 + $0x30] sm:$0xff]
        %v3867 = vld [vmem:[%s1245 + $0x38] sm:$0xff]
        %v3868 = vld [vmem:[%s1245 + $0x40] sm:$0xff]
        %v3869 = vld [vmem:[%s1245 + $0x48] sm:$0xff]
        %v3870 = vld [vmem:[%s1245 + $0x50] sm:$0xff]
        %v3871 = vld [vmem:[%s1245 + $0x58] sm:$0xff]
        %v3872 = vld [vmem:[%s1245 + $0x60] sm:$0xff]
        %v3873 = vld [vmem:[%s1245 + $0x68] sm:$0xff]
        %v3874 = vld [vmem:[%s1245 + $0x70] sm:$0xff]
        %v3875 = vld [vmem:[%s1245 + $0x78] sm:$0xff]
        %v3876 = vpack.c.bf16 %v2108, %v2107
        %v3877 = vpack.c.bf16 %v2110, %v2109
        %v3894 = vunpack.c.l.b16 %v3860
        %v3895 = vunpack.c.h.b16 %v3860
        %v3896 = vunpack.c.l.b16 %v3861
        %v3897 = vunpack.c.h.b16 %v3861
        %v3898 = vunpack.c.l.b16 %v3862
        %v3899 = vunpack.c.h.b16 %v3862
        %v3900 = vunpack.c.l.b16 %v3863
        %v3901 = vunpack.c.h.b16 %v3863
        %v3902 = vunpack.c.l.b16 %v3864
        %v3903 = vunpack.c.h.b16 %v3864
        %v3904 = vunpack.c.l.b16 %v3865
        %v3905 = vunpack.c.h.b16 %v3865
        %v3906 = vunpack.c.l.b16 %v3866
        %v3907 = vunpack.c.h.b16 %v3866
        %v3908 = vunpack.c.l.b16 %v3867
        %v3909 = vunpack.c.h.b16 %v3867
        %v3910 = vunpack.c.l.b16 %v3868
        %v3911 = vunpack.c.h.b16 %v3868
        %v3912 = vunpack.c.l.b16 %v3869
        %v3913 = vunpack.c.h.b16 %v3869
        %v3914 = vunpack.c.l.b16 %v3870
        %v3915 = vunpack.c.h.b16 %v3870
        %v3916 = vunpack.c.l.b16 %v3871
        %v3917 = vunpack.c.h.b16 %v3871
        %v3918 = vunpack.c.l.b16 %v3872
        %v3919 = vunpack.c.h.b16 %v3872
        %v3920 = vunpack.c.l.b16 %v3873
        %v3921 = vunpack.c.h.b16 %v3873
        %v3922 = vunpack.c.l.b16 %v3874
        %v3923 = vunpack.c.h.b16 %v3874
        %v3924 = vunpack.c.l.b16 %v3875
        %v3925 = vunpack.c.h.b16 %v3875
        %v3926 = vpack.c.b16 %v3896, %v3894
        %v3927 = vpack.c.b16 %v3897, %v3895
        %v3928 = vpack.c.b16 %v3900, %v3898
        %v3929 = vpack.c.b16 %v3901, %v3899
        %v3930 = vpack.c.b16 %v3904, %v3902
        %v3931 = vpack.c.b16 %v3905, %v3903
        %v3932 = vpack.c.b16 %v3908, %v3906
        %v3933 = vpack.c.b16 %v3909, %v3907
        %v3934 = vpack.c.b16 %v3912, %v3910
        %v3935 = vpack.c.b16 %v3913, %v3911
        %v3936 = vpack.c.b16 %v3916, %v3914
        %v3937 = vpack.c.b16 %v3917, %v3915
        %v3938 = vpack.c.b16 %v3920, %v3918
        %v3939 = vpack.c.b16 %v3921, %v3919
        %v3940 = vpack.c.b16 %v3924, %v3922
        %v3941 = vpack.c.b16 %v3925, %v3923
        %3958 = vmatprep.subr.bf16.mxu0 %v3941
        %3959 = vmatpush1.bf16.msra.mxu0 %v3940
        %3960 = vmatprep.subr.bf16.mxu0 %v3939
        %3961 = vmatpush1.bf16.msra.mxu0 %v3938
        %3962 = vmatprep.subr.bf16.mxu0 %v3937
        %3963 = vmatpush1.bf16.msra.mxu0 %v3936
        %3964 = vmatprep.subr.bf16.mxu0 %v3935
        %3965 = vmatpush1.bf16.msra.mxu0 %v3934
        %3966 = vmatprep.subr.bf16.mxu0 %v3933
        %3967 = vmatpush1.bf16.msra.mxu0 %v3932
        %3968 = vmatprep.subr.bf16.mxu0 %v3931
        %3969 = vmatpush1.bf16.msra.mxu0 %v3930
        %3970 = vmatprep.subr.bf16.mxu0 %v3929
        %3971 = vmatpush1.bf16.msra.mxu0 %v3928
        %3972 = vmatprep.subr.bf16.mxu0 %v3927
        %3973 = vmatpush1.bf16.msra.mxu0 %v3926
        %3974 = vmatprep.subr.bf16.mxu0 0
        %3975 = vmatpush2.bf16.msra.mxu0 0
        %3976 = vmatprep.subr.bf16.mxu0 0
        %3977 = vmatpush2.bf16.msra.mxu0 0
        %3978 = vmatprep.subr.bf16.mxu0 0
        %3979 = vmatpush2.bf16.msra.mxu0 0
        %3980 = vmatprep.subr.bf16.mxu0 0
        %3981 = vmatpush2.bf16.msra.mxu0 0
        %3982 = vmatprep.subr.bf16.mxu0 0
        %3983 = vmatpush2.bf16.msra.mxu0 0
        %3984 = vmatprep.subr.bf16.mxu0 0
        %3985 = vmatpush2.bf16.msra.mxu0 0
        %3986 = vmatprep.subr.bf16.mxu0 0
        %3987 = vmatpush2.bf16.msra.mxu0 0
        %3988 = vmatprep.subr.bf16.mxu0 0
        %3989 = vmatpush2.bf16.msra.mxu0 0
        %3990 = vmatprep.mubr.bf16.mxu0 0
        %3991 = vmatmul.mubr.bf16.gmra.mxu0 %v3876
        %v3992 = vpop.f32.mrf.mxu0
        %v3993 = vadd.f32 0.0, %v3992
        %v3994 = vpop.f32.mrf.mxu0
        %v3995 = vadd.f32 0.0, %v3994
        %v3996 = vpop.f32.mrf.mxu0
        %v3997 = vadd.f32 0.0, %v3996
        %v3998 = vpop.f32.mrf.mxu0
        %v3999 = vadd.f32 0.0, %v3998
        %4000 = vmatprep.mubr.bf16.mxu0 0
        %4001 = vmatmul.mubr.bf16.gmra.mxu0 %v3877
        %v4002 = vpop.f32.mrf.mxu0
        %v4003 = vadd.f32 0.0, %v4002
        %v4004 = vpop.f32.mrf.mxu0
        %v4005 = vadd.f32 0.0, %v4004
        %v4006 = vpop.f32.mrf.mxu0
        %v4007 = vadd.f32 0.0, %v4006
        %v4008 = vpop.f32.mrf.mxu0
        %v4009 = vadd.f32 0.0, %v4008
        %4010 = vdwg.mxu0
        %v4011 = vld [vmem:[%s1254] sm:$0xf]
        %v4012 = vld [vmem:[%s1254 + $0x4] sm:$0xf]
        %v4013 = vld [vmem:[%s1254 + $0x8] sm:$0xf]
        %v4014 = vld [vmem:[%s1254 + $0xc] sm:$0xf]
        %v4015 = vld [vmem:[%s1254 + $0x10] sm:$0xf]
        %v4016 = vld [vmem:[%s1254 + $0x14] sm:$0xf]
        %v4017 = vld [vmem:[%s1254 + $0x18] sm:$0xf]
        %v4018 = vld [vmem:[%s1254 + $0x1c] sm:$0xf]
        %v4019 = vld [vmem:[%s1254 + $0x20] sm:$0xf]
        %v4020 = vld [vmem:[%s1254 + $0x24] sm:$0xf]
        %v4021 = vld [vmem:[%s1254 + $0x28] sm:$0xf]
        %v4022 = vld [vmem:[%s1254 + $0x2c] sm:$0xf]
        %v4023 = vld [vmem:[%s1254 + $0x30] sm:$0xf]
        %v4024 = vld [vmem:[%s1254 + $0x34] sm:$0xf]
        %v4025 = vld [vmem:[%s1254 + $0x38] sm:$0xf]
        %v4026 = vld [vmem:[%s1254 + $0x3c] sm:$0xf]
        %v4027 = vpack.c.bf16 %v3854, %v3854
        %v4028 = vpack.c.bf16 %v3997, %v3993
        %v4029 = vpack.c.bf16 %v3999, %v3995
        %v4031 = vsel %vm2414, %v4027, 0
        %v4034 = vsel %vm2414, %v4028, 0
        %4036 = vmatprep.subr.bf16.mxu0 0
        %4037 = vmatpush1.bf16.xpose.msra.mxu0 0
        %4038 = vmatprep.subr.bf16.mxu0 0
        %4039 = vmatpush1.bf16.xpose.msra.mxu0 0
        %4040 = vmatprep.subr.bf16.mxu0 0
        %4041 = vmatpush1.bf16.xpose.msra.mxu0 0
        %4042 = vmatprep.subr.bf16.mxu0 0
        %4043 = vmatpush1.bf16.xpose.msra.mxu0 0
        %4044 = vmatprep.subr.bf16.mxu0 0
        %4045 = vmatpush1.bf16.xpose.msra.mxu0 0
        %4046 = vmatprep.subr.bf16.mxu0 0
        %4047 = vmatpush1.bf16.xpose.msra.mxu0 0
        %4048 = vmatprep.subr.bf16.mxu0 0
        %4049 = vmatpush1.bf16.xpose.msra.mxu0 0
        %4050 = vmatprep.subr.bf16.mxu0 0
        %4051 = vmatpush1.bf16.xpose.msra.mxu0 %v4034
        %4052 = vmatprep.subr.bf16.mxu0 0
        %4053 = vmatpush2.bf16.xpose.msra.mxu0 0
        %4054 = vmatprep.subr.bf16.mxu0 0
        %4055 = vmatpush2.bf16.xpose.msra.mxu0 0
        %4056 = vmatprep.subr.bf16.mxu0 0
        %4057 = vmatpush2.bf16.xpose.msra.mxu0 0
        %4058 = vmatprep.subr.bf16.mxu0 0
        %4059 = vmatpush2.bf16.xpose.msra.mxu0 0
        %4060 = vmatprep.subr.bf16.mxu0 0
        %4061 = vmatpush2.bf16.xpose.msra.mxu0 0
        %4062 = vmatprep.subr.bf16.mxu0 0
        %4063 = vmatpush2.bf16.xpose.msra.mxu0 0
        %4064 = vmatprep.subr.bf16.mxu0 0
        %4065 = vmatpush2.bf16.xpose.msra.mxu0 0
        %4066 = vmatprep.subr.bf16.mxu0 0
        %4067 = vmatpush2.bf16.xpose.msra.mxu0 0
        %4068 = vmatprep.mubr.bf16.mxu0 0
        %4069 = vmatmul.mubr.bf16.gmra.mxu0 %v4031
        %v4070 = vpop.f32.mrf.mxu0
        %v4071 = vadd.f32 0.0, %v4070
        %v4072 = vpop.f32.mrf.mxu0
        %v4073 = vpop.f32.mrf.mxu0
        %v4074 = vpop.f32.mrf.mxu0
        %4075 = vdwg.mxu0
        %v4076 = vmul.f32 %v4071, 0.17677669
        %vm4077 = vcmask 130048
        %v4078 = vsel %vm4077, %v4076, -inf
        %4079 = vmax.xlane.f32.xlu0 %v4078
        %v4080 = vpop.xlane.xlu0 %4079
        %v4081 = vsub.f32 %v4076, %v4080
        %v4082 = vmul.f32 %v4081, 1.442695
        %v4083 = vpow.pop %v4082
        %v4084 = vsel %vm4077, %v4083, 0.0
        %4085 = vadd.xlane.f32.xlu0 %v4084
        %v4086 = vpop.xlane.xlu0 %4085
        %v4087 = vrcp.pop %v4086
        %v4088 = vmul.f32 %v4083, %v4087
        %v4089 = vpack.c.bf16 %v4088, %v4088
        %v4091 = vsel %vm4077, %v4089, 0
        %4093 = vmatprep.subr.bf16.mxu0 0
        %4094 = vmatpush1.bf16.msra.mxu0 0
        %4095 = vmatprep.subr.bf16.mxu0 0
        %4096 = vmatpush1.bf16.msra.mxu0 0
        %4097 = vmatprep.subr.bf16.mxu0 0
        %4098 = vmatpush1.bf16.msra.mxu0 0
        %4099 = vmatprep.subr.bf16.mxu0 0
        %4100 = vmatpush1.bf16.msra.mxu0 0
        %4101 = vmatprep.subr.bf16.mxu0 0
        %4102 = vmatpush1.bf16.msra.mxu0 0
        %4103 = vmatprep.subr.bf16.mxu0 0
        %4104 = vmatpush1.bf16.msra.mxu0 0
        %4105 = vmatprep.subr.bf16.mxu0 0
        %4106 = vmatpush1.bf16.msra.mxu0 0
        %4107 = vmatprep.subr.bf16.mxu0 0
        %4108 = vmatpush1.bf16.msra.mxu0 %v4029
        %4109 = vmatprep.subr.bf16.mxu0 0
        %4110 = vmatpush2.bf16.msra.mxu0 0
        %4111 = vmatprep.subr.bf16.mxu0 0
        %4112 = vmatpush2.bf16.msra.mxu0 0
        %4113 = vmatprep.subr.bf16.mxu0 0
        %4114 = vmatpush2.bf16.msra.mxu0 0
        %4115 = vmatprep.subr.bf16.mxu0 0
        %4116 = vmatpush2.bf16.msra.mxu0 0
        %4117 = vmatprep.subr.bf16.mxu0 0
        %4118 = vmatpush2.bf16.msra.mxu0 0
        %4119 = vmatprep.subr.bf16.mxu0 0
        %4120 = vmatpush2.bf16.msra.mxu0 0
        %4121 = vmatprep.subr.bf16.mxu0 0
        %4122 = vmatpush2.bf16.msra.mxu0 0
        %4123 = vmatprep.subr.bf16.mxu0 0
        %4124 = vmatpush2.bf16.msra.mxu0 0
        %4125 = vmatprep.mubr.bf16.mxu0 0
        %4126 = vmatmul.mubr.bf16.gmra.mxu0 %v4091
        %v4127 = vpop.f32.mrf.mxu0
        %v4128 = vadd.f32 0.0, %v4127
        %v4129 = vpop.f32.mrf.mxu0
        %v4130 = vpop.f32.mrf.mxu0
        %v4131 = vpop.f32.mrf.mxu0
        %4132 = vdwg.mxu0
        %v4133 = vpack.c.bf16 %v4128, %v4128
        %4135 = vrot.lane.b32.xlu0 %v4027, 96
        %v4136 = vpop.permute.xlu0 %4135
        %4138 = vrot.lane.b32.xlu0 %v4028, 96
        %v4139 = vpop.permute.xlu0 %4138
        %v4141 = vsel %vm2414, %v4136, 0
        %v4144 = vsel %vm2414, %v4139, 0
        %4146 = vmatprep.subr.bf16.mxu0 0
        %4147 = vmatpush1.bf16.xpose.msra.mxu0 0
        %4148 = vmatprep.subr.bf16.mxu0 0
        %4149 = vmatpush1.bf16.xpose.msra.mxu0 0
        %4150 = vmatprep.subr.bf16.mxu0 0
        %4151 = vmatpush1.bf16.xpose.msra.mxu0 0
        %4152 = vmatprep.subr.bf16.mxu0 0
        %4153 = vmatpush1.bf16.xpose.msra.mxu0 0
        %4154 = vmatprep.subr.bf16.mxu0 0
        %4155 = vmatpush1.bf16.xpose.msra.mxu0 0
        %4156 = vmatprep.subr.bf16.mxu0 0
        %4157 = vmatpush1.bf16.xpose.msra.mxu0 0
        %4158 = vmatprep.subr.bf16.mxu0 0
        %4159 = vmatpush1.bf16.xpose.msra.mxu0 0
        %4160 = vmatprep.subr.bf16.mxu0 0
        %4161 = vmatpush1.bf16.xpose.msra.mxu0 %v4144
        %4162 = vmatprep.subr.bf16.mxu0 0
        %4163 = vmatpush2.bf16.xpose.msra.mxu0 0
        %4164 = vmatprep.subr.bf16.mxu0 0
        %4165 = vmatpush2.bf16.xpose.msra.mxu0 0
        %4166 = vmatprep.subr.bf16.mxu0 0
        %4167 = vmatpush2.bf16.xpose.msra.mxu0 0
        %4168 = vmatprep.subr.bf16.mxu0 0
        %4169 = vmatpush2.bf16.xpose.msra.mxu0 0
        %4170 = vmatprep.subr.bf16.mxu0 0
        %4171 = vmatpush2.bf16.xpose.msra.mxu0 0
        %4172 = vmatprep.subr.bf16.mxu0 0
        %4173 = vmatpush2.bf16.xpose.msra.mxu0 0
        %4174 = vmatprep.subr.bf16.mxu0 0
        %4175 = vmatpush2.bf16.xpose.msra.mxu0 0
        %4176 = vmatprep.subr.bf16.mxu0 0
        %4177 = vmatpush2.bf16.xpose.msra.mxu0 0
        %4178 = vmatprep.mubr.bf16.mxu0 0
        %4179 = vmatmul.mubr.bf16.gmra.mxu0 %v4141
        %v4180 = vpop.f32.mrf.mxu0
        %v4181 = vadd.f32 0.0, %v4180
        %v4182 = vpop.f32.mrf.mxu0
        %v4183 = vpop.f32.mrf.mxu0
        %v4184 = vpop.f32.mrf.mxu0
        %4185 = vdwg.mxu0
        %v4186 = vmul.f32 %v4181, 0.17677669
        %v4187 = vsel %vm4077, %v4186, -inf
        %4188 = vmax.xlane.f32.xlu0 %v4187
        %v4189 = vpop.xlane.xlu0 %4188
        %v4190 = vsub.f32 %v4186, %v4189
        %v4191 = vmul.f32 %v4190, 1.442695
        %v4192 = vpow.pop %v4191
        %v4193 = vsel %vm4077, %v4192, 0.0
        %4194 = vadd.xlane.f32.xlu0 %v4193
        %v4195 = vpop.xlane.xlu0 %4194
        %v4196 = vrcp.pop %v4195
        %v4197 = vmul.f32 %v4192, %v4196
        %v4198 = vpack.c.bf16 %v4197, %v4197
        %4200 = vrot.lane.b32.xlu0 %v4029, 96
        %v4201 = vpop.permute.xlu0 %4200
        %v4204 = vsel %vm4077, %v4198, 0
        %4206 = vmatprep.subr.bf16.mxu0 0
        %4207 = vmatpush1.bf16.msra.mxu0 0
        %4208 = vmatprep.subr.bf16.mxu0 0
        %4209 = vmatpush1.bf16.msra.mxu0 0
        %4210 = vmatprep.subr.bf16.mxu0 0
        %4211 = vmatpush1.bf16.msra.mxu0 0
        %4212 = vmatprep.subr.bf16.mxu0 0
        %4213 = vmatpush1.bf16.msra.mxu0 0
        %4214 = vmatprep.subr.bf16.mxu0 0
        %4215 = vmatpush1.bf16.msra.mxu0 0
        %4216 = vmatprep.subr.bf16.mxu0 0
        %4217 = vmatpush1.bf16.msra.mxu0 0
        %4218 = vmatprep.subr.bf16.mxu0 0
        %4219 = vmatpush1.bf16.msra.mxu0 0
        %4220 = vmatprep.subr.bf16.mxu0 0
        %4221 = vmatpush1.bf16.msra.mxu0 %v4201
        %4222 = vmatprep.subr.bf16.mxu0 0
        %4223 = vmatpush2.bf16.msra.mxu0 0
        %4224 = vmatprep.subr.bf16.mxu0 0
        %4225 = vmatpush2.bf16.msra.mxu0 0
        %4226 = vmatprep.subr.bf16.mxu0 0
        %4227 = vmatpush2.bf16.msra.mxu0 0
        %4228 = vmatprep.subr.bf16.mxu0 0
        %4229 = vmatpush2.bf16.msra.mxu0 0
        %4230 = vmatprep.subr.bf16.mxu0 0
        %4231 = vmatpush2.bf16.msra.mxu0 0
        %4232 = vmatprep.subr.bf16.mxu0 0
        %4233 = vmatpush2.bf16.msra.mxu0 0
        %4234 = vmatprep.subr.bf16.mxu0 0
        %4235 = vmatpush2.bf16.msra.mxu0 0
        %4236 = vmatprep.subr.bf16.mxu0 0
        %4237 = vmatpush2.bf16.msra.mxu0 0
        %4238 = vmatprep.mubr.bf16.mxu0 0
        %4239 = vmatmul.mubr.bf16.gmra.mxu0 %v4204
        %v4240 = vpop.f32.mrf.mxu0
        %v4241 = vadd.f32 0.0, %v4240
        %v4242 = vpop.f32.mrf.mxu0
        %v4243 = vpop.f32.mrf.mxu0
        %v4244 = vpop.f32.mrf.mxu0
        %4245 = vdwg.mxu0
        %v4246 = vpack.c.bf16 %v4241, %v4241
        %v4251 = vunpack.c.l.b16 %v4015
        %v4252 = vunpack.c.l.b16 %v4016
        %v4253 = vunpack.c.l.b16 %v4017
        %v4254 = vunpack.c.l.b16 %v4018
        %v4255 = vpack.c.b16 %v4252, %v4251
        %v4256 = vpack.c.b16 %v4254, %v4253
        %v4260 = vsel %vm2414, %v4246, 0
        %4262 = vmatprep.subr.bf16.mxu0 0
        %4263 = vmatpush1.bf16.msra.mxu0 0
        %4264 = vmatprep.subr.bf16.mxu0 0
        %4265 = vmatpush1.bf16.msra.mxu0 0
        %4266 = vmatprep.subr.bf16.mxu0 0
        %4267 = vmatpush1.bf16.msra.mxu0 0
        %4268 = vmatprep.subr.bf16.mxu0 0
        %4269 = vmatpush1.bf16.msra.mxu0 0
        %4270 = vmatprep.subr.bf16.mxu0 0
        %4271 = vmatpush1.bf16.msra.mxu0 0
        %4272 = vmatprep.subr.bf16.mxu0 0
        %4273 = vmatpush1.bf16.msra.mxu0 0
        %4274 = vmatprep.subr.bf16.mxu0 0
        %4275 = vmatpush1.bf16.msra.mxu0 %v4256
        %4276 = vmatprep.subr.bf16.mxu0 0
        %4277 = vmatpush1.bf16.msra.mxu0 %v4255
        %4278 = vmatprep.subr.bf16.mxu0 0
        %4279 = vmatpush2.bf16.msra.mxu0 0
        %4280 = vmatprep.subr.bf16.mxu0 0
        %4281 = vmatpush2.bf16.msra.mxu0 0
        %4282 = vmatprep.subr.bf16.mxu0 0
        %4283 = vmatpush2.bf16.msra.mxu0 0
        %4284 = vmatprep.subr.bf16.mxu0 0
        %4285 = vmatpush2.bf16.msra.mxu0 0
        %4286 = vmatprep.subr.bf16.mxu0 0
        %4287 = vmatpush2.bf16.msra.mxu0 0
        %4288 = vmatprep.subr.bf16.mxu0 0
        %4289 = vmatpush2.bf16.msra.mxu0 0
        %4290 = vmatprep.subr.bf16.mxu0 0
        %4291 = vmatpush2.bf16.msra.mxu0 0
        %4292 = vmatprep.subr.bf16.mxu0 0
        %4293 = vmatpush2.bf16.msra.mxu0 0
        %4294 = vmatprep.mubr.bf16.mxu0 0
        %4295 = vmatmul.mubr.bf16.gmra.mxu0 %v4260
        %v4296 = vpop.f32.mrf.mxu0
        %v4297 = vadd.f32 0.0, %v4296
        %v4298 = vpop.f32.mrf.mxu0
        %v4299 = vpop.f32.mrf.mxu0
        %v4300 = vpop.f32.mrf.mxu0
        %4301 = vdwg.mxu0
        %v4306 = vunpack.c.l.b16 %v4011
        %v4307 = vunpack.c.l.b16 %v4012
        %v4308 = vunpack.c.l.b16 %v4013
        %v4309 = vunpack.c.l.b16 %v4014
        %v4310 = vpack.c.b16 %v4307, %v4306
        %v4311 = vpack.c.b16 %v4309, %v4308
        %v4315 = vsel %vm2414, %v4133, 0
        %4317 = vmatprep.subr.bf16.mxu0 0
        %4318 = vmatpush1.bf16.msra.mxu0 0
        %4319 = vmatprep.subr.bf16.mxu0 0
        %4320 = vmatpush1.bf16.msra.mxu0 0
        %4321 = vmatprep.subr.bf16.mxu0 0
        %4322 = vmatpush1.bf16.msra.mxu0 0
        %4323 = vmatprep.subr.bf16.mxu0 0
        %4324 = vmatpush1.bf16.msra.mxu0 0
        %4325 = vmatprep.subr.bf16.mxu0 0
        %4326 = vmatpush1.bf16.msra.mxu0 0
        %4327 = vmatprep.subr.bf16.mxu0 0
        %4328 = vmatpush1.bf16.msra.mxu0 0
        %4329 = vmatprep.subr.bf16.mxu0 0
        %4330 = vmatpush1.bf16.msra.mxu0 %v4311
        %4331 = vmatprep.subr.bf16.mxu0 0
        %4332 = vmatpush1.bf16.msra.mxu0 %v4310
        %4333 = vmatprep.subr.bf16.mxu0 0
        %4334 = vmatpush2.bf16.msra.mxu0 0
        %4335 = vmatprep.subr.bf16.mxu0 0
        %4336 = vmatpush2.bf16.msra.mxu0 0
        %4337 = vmatprep.subr.bf16.mxu0 0
        %4338 = vmatpush2.bf16.msra.mxu0 0
        %4339 = vmatprep.subr.bf16.mxu0 0
        %4340 = vmatpush2.bf16.msra.mxu0 0
        %4341 = vmatprep.subr.bf16.mxu0 0
        %4342 = vmatpush2.bf16.msra.mxu0 0
        %4343 = vmatprep.subr.bf16.mxu0 0
        %4344 = vmatpush2.bf16.msra.mxu0 0
        %4345 = vmatprep.subr.bf16.mxu0 0
        %4346 = vmatpush2.bf16.msra.mxu0 0
        %4347 = vmatprep.subr.bf16.mxu0 0
        %4348 = vmatpush2.bf16.msra.mxu0 0
        %4349 = vmatprep.mubr.bf16.mxu0 0
        %4350 = vmatmul.mubr.bf16.gmra.mxu0 %v4315
        %v4351 = vpop.f32.mrf.mxu0
        %v4352 = vadd.f32 %v4297, %v4351
        %v4353 = vpop.f32.mrf.mxu0
        %v4354 = vpop.f32.mrf.mxu0
        %v4355 = vpop.f32.mrf.mxu0
        %4356 = vdwg.mxu0
        %4357 = vrot.lane.b32.xlu0 %v4027, 64
        %v4358 = vpop.permute.xlu0 %4357
        %4359 = vrot.lane.b32.xlu0 %v4028, 64
        %v4360 = vpop.permute.xlu0 %4359
        %v4362 = vsel %vm2414, %v4358, 0
        %v4365 = vsel %vm2414, %v4360, 0
        %4367 = vmatprep.subr.bf16.mxu0 0
        %4368 = vmatpush1.bf16.xpose.msra.mxu0 0
        %4369 = vmatprep.subr.bf16.mxu0 0
        %4370 = vmatpush1.bf16.xpose.msra.mxu0 0
        %4371 = vmatprep.subr.bf16.mxu0 0
        %4372 = vmatpush1.bf16.xpose.msra.mxu0 0
        %4373 = vmatprep.subr.bf16.mxu0 0
        %4374 = vmatpush1.bf16.xpose.msra.mxu0 0
        %4375 = vmatprep.subr.bf16.mxu0 0
        %4376 = vmatpush1.bf16.xpose.msra.mxu0 0
        %4377 = vmatprep.subr.bf16.mxu0 0
        %4378 = vmatpush1.bf16.xpose.msra.mxu0 0
        %4379 = vmatprep.subr.bf16.mxu0 0
        %4380 = vmatpush1.bf16.xpose.msra.mxu0 0
        %4381 = vmatprep.subr.bf16.mxu0 0
        %4382 = vmatpush1.bf16.xpose.msra.mxu0 %v4365
        %4383 = vmatprep.subr.bf16.mxu0 0
        %4384 = vmatpush2.bf16.xpose.msra.mxu0 0
        %4385 = vmatprep.subr.bf16.mxu0 0
        %4386 = vmatpush2.bf16.xpose.msra.mxu0 0
        %4387 = vmatprep.subr.bf16.mxu0 0
        %4388 = vmatpush2.bf16.xpose.msra.mxu0 0
        %4389 = vmatprep.subr.bf16.mxu0 0
        %4390 = vmatpush2.bf16.xpose.msra.mxu0 0
        %4391 = vmatprep.subr.bf16.mxu0 0
        %4392 = vmatpush2.bf16.xpose.msra.mxu0 0
        %4393 = vmatprep.subr.bf16.mxu0 0
        %4394 = vmatpush2.bf16.xpose.msra.mxu0 0
        %4395 = vmatprep.subr.bf16.mxu0 0
        %4396 = vmatpush2.bf16.xpose.msra.mxu0 0
        %4397 = vmatprep.subr.bf16.mxu0 0
        %4398 = vmatpush2.bf16.xpose.msra.mxu0 0
        %4399 = vmatprep.mubr.bf16.mxu0 0
        %4400 = vmatmul.mubr.bf16.gmra.mxu0 %v4362
        %v4401 = vpop.f32.mrf.mxu0
        %v4402 = vadd.f32 0.0, %v4401
        %v4403 = vpop.f32.mrf.mxu0
        %v4404 = vpop.f32.mrf.mxu0
        %v4405 = vpop.f32.mrf.mxu0
        %4406 = vdwg.mxu0
        %v4407 = vmul.f32 %v4402, 0.17677669
        %v4408 = vsel %vm4077, %v4407, -inf
        %4409 = vmax.xlane.f32.xlu0 %v4408
        %v4410 = vpop.xlane.xlu0 %4409
        %v4411 = vsub.f32 %v4407, %v4410
        %v4412 = vmul.f32 %v4411, 1.442695
        %v4413 = vpow.pop %v4412
        %v4414 = vsel %vm4077, %v4413, 0.0
        %4415 = vadd.xlane.f32.xlu0 %v4414
        %v4416 = vpop.xlane.xlu0 %4415
        %v4417 = vrcp.pop %v4416
        %v4418 = vmul.f32 %v4413, %v4417
        %v4419 = vpack.c.bf16 %v4418, %v4418
        %4420 = vrot.lane.b32.xlu0 %v4029, 64
        %v4421 = vpop.permute.xlu0 %4420
        %v4424 = vsel %vm4077, %v4419, 0
        %4426 = vmatprep.subr.bf16.mxu0 0
        %4427 = vmatpush1.bf16.msra.mxu0 0
        %4428 = vmatprep.subr.bf16.mxu0 0
        %4429 = vmatpush1.bf16.msra.mxu0 0
        %4430 = vmatprep.subr.bf16.mxu0 0
        %4431 = vmatpush1.bf16.msra.mxu0 0
        %4432 = vmatprep.subr.bf16.mxu0 0
        %4433 = vmatpush1.bf16.msra.mxu0 0
        %4434 = vmatprep.subr.bf16.mxu0 0
        %4435 = vmatpush1.bf16.msra.mxu0 0
        %4436 = vmatprep.subr.bf16.mxu0 0
        %4437 = vmatpush1.bf16.msra.mxu0 0
        %4438 = vmatprep.subr.bf16.mxu0 0
        %4439 = vmatpush1.bf16.msra.mxu0 0
        %4440 = vmatprep.subr.bf16.mxu0 0
        %4441 = vmatpush1.bf16.msra.mxu0 %v4421
        %4442 = vmatprep.subr.bf16.mxu0 0
        %4443 = vmatpush2.bf16.msra.mxu0 0
        %4444 = vmatprep.subr.bf16.mxu0 0
        %4445 = vmatpush2.bf16.msra.mxu0 0
        %4446 = vmatprep.subr.bf16.mxu0 0
        %4447 = vmatpush2.bf16.msra.mxu0 0
        %4448 = vmatprep.subr.bf16.mxu0 0
        %4449 = vmatpush2.bf16.msra.mxu0 0
        %4450 = vmatprep.subr.bf16.mxu0 0
        %4451 = vmatpush2.bf16.msra.mxu0 0
        %4452 = vmatprep.subr.bf16.mxu0 0
        %4453 = vmatpush2.bf16.msra.mxu0 0
        %4454 = vmatprep.subr.bf16.mxu0 0
        %4455 = vmatpush2.bf16.msra.mxu0 0
        %4456 = vmatprep.subr.bf16.mxu0 0
        %4457 = vmatpush2.bf16.msra.mxu0 0
        %4458 = vmatprep.mubr.bf16.mxu0 0
        %4459 = vmatmul.mubr.bf16.gmra.mxu0 %v4424
        %v4460 = vpop.f32.mrf.mxu0
        %v4461 = vadd.f32 0.0, %v4460
        %v4462 = vpop.f32.mrf.mxu0
        %v4463 = vpop.f32.mrf.mxu0
        %v4464 = vpop.f32.mrf.mxu0
        %4465 = vdwg.mxu0
        %v4466 = vpack.c.bf16 %v4461, %v4461
        %v4471 = vunpack.c.l.b16 %v4019
        %v4472 = vunpack.c.l.b16 %v4020
        %v4473 = vunpack.c.l.b16 %v4021
        %v4474 = vunpack.c.l.b16 %v4022
        %v4475 = vpack.c.b16 %v4472, %v4471
        %v4476 = vpack.c.b16 %v4474, %v4473
        %v4480 = vsel %vm2414, %v4466, 0
        %4482 = vmatprep.subr.bf16.mxu0 0
        %4483 = vmatpush1.bf16.msra.mxu0 0
        %4484 = vmatprep.subr.bf16.mxu0 0
        %4485 = vmatpush1.bf16.msra.mxu0 0
        %4486 = vmatprep.subr.bf16.mxu0 0
        %4487 = vmatpush1.bf16.msra.mxu0 0
        %4488 = vmatprep.subr.bf16.mxu0 0
        %4489 = vmatpush1.bf16.msra.mxu0 0
        %4490 = vmatprep.subr.bf16.mxu0 0
        %4491 = vmatpush1.bf16.msra.mxu0 0
        %4492 = vmatprep.subr.bf16.mxu0 0
        %4493 = vmatpush1.bf16.msra.mxu0 0
        %4494 = vmatprep.subr.bf16.mxu0 0
        %4495 = vmatpush1.bf16.msra.mxu0 %v4476
        %4496 = vmatprep.subr.bf16.mxu0 0
        %4497 = vmatpush1.bf16.msra.mxu0 %v4475
        %4498 = vmatprep.subr.bf16.mxu0 0
        %4499 = vmatpush2.bf16.msra.mxu0 0
        %4500 = vmatprep.subr.bf16.mxu0 0
        %4501 = vmatpush2.bf16.msra.mxu0 0
        %4502 = vmatprep.subr.bf16.mxu0 0
        %4503 = vmatpush2.bf16.msra.mxu0 0
        %4504 = vmatprep.subr.bf16.mxu0 0
        %4505 = vmatpush2.bf16.msra.mxu0 0
        %4506 = vmatprep.subr.bf16.mxu0 0
        %4507 = vmatpush2.bf16.msra.mxu0 0
        %4508 = vmatprep.subr.bf16.mxu0 0
        %4509 = vmatpush2.bf16.msra.mxu0 0
        %4510 = vmatprep.subr.bf16.mxu0 0
        %4511 = vmatpush2.bf16.msra.mxu0 0
        %4512 = vmatprep.subr.bf16.mxu0 0
        %4513 = vmatpush2.bf16.msra.mxu0 0
        %4514 = vmatprep.mubr.bf16.mxu0 0
        %4515 = vmatmul.mubr.bf16.gmra.mxu0 %v4480
        %v4516 = vpop.f32.mrf.mxu0
        %v4517 = vadd.f32 0.0, %v4516
        %v4518 = vpop.f32.mrf.mxu0
        %v4519 = vpop.f32.mrf.mxu0
        %v4520 = vpop.f32.mrf.mxu0
        %4521 = vdwg.mxu0
        %v4522 = vadd.f32 %v4352, %v4517
        %4523 = vrot.lane.b32.xlu0 %v4027, 32
        %v4524 = vpop.permute.xlu0 %4523
        %4525 = vrot.lane.b32.xlu0 %v4028, 32
        %v4526 = vpop.permute.xlu0 %4525
        %v4528 = vsel %vm2414, %v4524, 0
        %v4531 = vsel %vm2414, %v4526, 0
        %4533 = vmatprep.subr.bf16.mxu0 0
        %4534 = vmatpush1.bf16.xpose.msra.mxu0 0
        %4535 = vmatprep.subr.bf16.mxu0 0
        %4536 = vmatpush1.bf16.xpose.msra.mxu0 0
        %4537 = vmatprep.subr.bf16.mxu0 0
        %4538 = vmatpush1.bf16.xpose.msra.mxu0 0
        %4539 = vmatprep.subr.bf16.mxu0 0
        %4540 = vmatpush1.bf16.xpose.msra.mxu0 0
        %4541 = vmatprep.subr.bf16.mxu0 0
        %4542 = vmatpush1.bf16.xpose.msra.mxu0 0
        %4543 = vmatprep.subr.bf16.mxu0 0
        %4544 = vmatpush1.bf16.xpose.msra.mxu0 0
        %4545 = vmatprep.subr.bf16.mxu0 0
        %4546 = vmatpush1.bf16.xpose.msra.mxu0 0
        %4547 = vmatprep.subr.bf16.mxu0 0
        %4548 = vmatpush1.bf16.xpose.msra.mxu0 %v4531
        %4549 = vmatprep.subr.bf16.mxu0 0
        %4550 = vmatpush2.bf16.xpose.msra.mxu0 0
        %4551 = vmatprep.subr.bf16.mxu0 0
        %4552 = vmatpush2.bf16.xpose.msra.mxu0 0
        %4553 = vmatprep.subr.bf16.mxu0 0
        %4554 = vmatpush2.bf16.xpose.msra.mxu0 0
        %4555 = vmatprep.subr.bf16.mxu0 0
        %4556 = vmatpush2.bf16.xpose.msra.mxu0 0
        %4557 = vmatprep.subr.bf16.mxu0 0
        %4558 = vmatpush2.bf16.xpose.msra.mxu0 0
        %4559 = vmatprep.subr.bf16.mxu0 0
        %4560 = vmatpush2.bf16.xpose.msra.mxu0 0
        %4561 = vmatprep.subr.bf16.mxu0 0
        %4562 = vmatpush2.bf16.xpose.msra.mxu0 0
        %4563 = vmatprep.subr.bf16.mxu0 0
        %4564 = vmatpush2.bf16.xpose.msra.mxu0 0
        %4565 = vmatprep.mubr.bf16.mxu0 0
        %4566 = vmatmul.mubr.bf16.gmra.mxu0 %v4528
        %v4567 = vpop.f32.mrf.mxu0
        %v4568 = vadd.f32 0.0, %v4567
        %v4569 = vpop.f32.mrf.mxu0
        %v4570 = vpop.f32.mrf.mxu0
        %v4571 = vpop.f32.mrf.mxu0
        %4572 = vdwg.mxu0
        %v4573 = vmul.f32 %v4568, 0.17677669
        %v4574 = vsel %vm4077, %v4573, -inf
        %4575 = vmax.xlane.f32.xlu0 %v4574
        %v4576 = vpop.xlane.xlu0 %4575
        %v4577 = vsub.f32 %v4573, %v4576
        %v4578 = vmul.f32 %v4577, 1.442695
        %v4579 = vpow.pop %v4578
        %v4580 = vsel %vm4077, %v4579, 0.0
        %4581 = vadd.xlane.f32.xlu0 %v4580
        %v4582 = vpop.xlane.xlu0 %4581
        %v4583 = vrcp.pop %v4582
        %v4584 = vmul.f32 %v4579, %v4583
        %v4585 = vpack.c.bf16 %v4584, %v4584
        %4586 = vrot.lane.b32.xlu0 %v4029, 32
        %v4587 = vpop.permute.xlu0 %4586
        %v4590 = vsel %vm4077, %v4585, 0
        %4592 = vmatprep.subr.bf16.mxu0 0
        %4593 = vmatpush1.bf16.msra.mxu0 0
        %4594 = vmatprep.subr.bf16.mxu0 0
        %4595 = vmatpush1.bf16.msra.mxu0 0
        %4596 = vmatprep.subr.bf16.mxu0 0
        %4597 = vmatpush1.bf16.msra.mxu0 0
        %4598 = vmatprep.subr.bf16.mxu0 0
        %4599 = vmatpush1.bf16.msra.mxu0 0
        %4600 = vmatprep.subr.bf16.mxu0 0
        %4601 = vmatpush1.bf16.msra.mxu0 0
        %4602 = vmatprep.subr.bf16.mxu0 0
        %4603 = vmatpush1.bf16.msra.mxu0 0
        %4604 = vmatprep.subr.bf16.mxu0 0
        %4605 = vmatpush1.bf16.msra.mxu0 0
        %4606 = vmatprep.subr.bf16.mxu0 0
        %4607 = vmatpush1.bf16.msra.mxu0 %v4587
        %4608 = vmatprep.subr.bf16.mxu0 0
        %4609 = vmatpush2.bf16.msra.mxu0 0
        %4610 = vmatprep.subr.bf16.mxu0 0
        %4611 = vmatpush2.bf16.msra.mxu0 0
        %4612 = vmatprep.subr.bf16.mxu0 0
        %4613 = vmatpush2.bf16.msra.mxu0 0
        %4614 = vmatprep.subr.bf16.mxu0 0
        %4615 = vmatpush2.bf16.msra.mxu0 0
        %4616 = vmatprep.subr.bf16.mxu0 0
        %4617 = vmatpush2.bf16.msra.mxu0 0
        %4618 = vmatprep.subr.bf16.mxu0 0
        %4619 = vmatpush2.bf16.msra.mxu0 0
        %4620 = vmatprep.subr.bf16.mxu0 0
        %4621 = vmatpush2.bf16.msra.mxu0 0
        %4622 = vmatprep.subr.bf16.mxu0 0
        %4623 = vmatpush2.bf16.msra.mxu0 0
        %4624 = vmatprep.mubr.bf16.mxu0 0
        %4625 = vmatmul.mubr.bf16.gmra.mxu0 %v4590
        %v4626 = vpop.f32.mrf.mxu0
        %v4627 = vadd.f32 0.0, %v4626
        %v4628 = vpop.f32.mrf.mxu0
        %v4629 = vpop.f32.mrf.mxu0
        %v4630 = vpop.f32.mrf.mxu0
        %4631 = vdwg.mxu0
        %v4632 = vpack.c.bf16 %v4627, %v4627
        %v4637 = vunpack.c.l.b16 %v4023
        %v4638 = vunpack.c.l.b16 %v4024
        %v4639 = vunpack.c.l.b16 %v4025
        %v4640 = vunpack.c.l.b16 %v4026
        %v4641 = vpack.c.b16 %v4638, %v4637
        %v4642 = vpack.c.b16 %v4640, %v4639
        %v4646 = vsel %vm2414, %v4632, 0
        %4648 = vmatprep.subr.bf16.mxu0 0
        %4649 = vmatpush1.bf16.msra.mxu0 0
        %4650 = vmatprep.subr.bf16.mxu0 0
        %4651 = vmatpush1.bf16.msra.mxu0 0
        %4652 = vmatprep.subr.bf16.mxu0 0
        %4653 = vmatpush1.bf16.msra.mxu0 0
        %4654 = vmatprep.subr.bf16.mxu0 0
        %4655 = vmatpush1.bf16.msra.mxu0 0
        %4656 = vmatprep.subr.bf16.mxu0 0
        %4657 = vmatpush1.bf16.msra.mxu0 0
        %4658 = vmatprep.subr.bf16.mxu0 0
        %4659 = vmatpush1.bf16.msra.mxu0 0
        %4660 = vmatprep.subr.bf16.mxu0 0
        %4661 = vmatpush1.bf16.msra.mxu0 %v4642
        %4662 = vmatprep.subr.bf16.mxu0 0
        %4663 = vmatpush1.bf16.msra.mxu0 %v4641
        %4664 = vmatprep.subr.bf16.mxu0 0
        %4665 = vmatpush2.bf16.msra.mxu0 0
        %4666 = vmatprep.subr.bf16.mxu0 0
        %4667 = vmatpush2.bf16.msra.mxu0 0
        %4668 = vmatprep.subr.bf16.mxu0 0
        %4669 = vmatpush2.bf16.msra.mxu0 0
        %4670 = vmatprep.subr.bf16.mxu0 0
        %4671 = vmatpush2.bf16.msra.mxu0 0
        %4672 = vmatprep.subr.bf16.mxu0 0
        %4673 = vmatpush2.bf16.msra.mxu0 0
        %4674 = vmatprep.subr.bf16.mxu0 0
        %4675 = vmatpush2.bf16.msra.mxu0 0
        %4676 = vmatprep.subr.bf16.mxu0 0
        %4677 = vmatpush2.bf16.msra.mxu0 0
        %4678 = vmatprep.subr.bf16.mxu0 0
        %4679 = vmatpush2.bf16.msra.mxu0 0
        %4680 = vmatprep.mubr.bf16.mxu0 0
        %4681 = vmatmul.mubr.bf16.gmra.mxu0 %v4646
        %v4682 = vpop.f32.mrf.mxu0
        %v4683 = vadd.f32 0.0, %v4682
        %v4684 = vpop.f32.mrf.mxu0
        %v4685 = vpop.f32.mrf.mxu0
        %v4686 = vpop.f32.mrf.mxu0
        %4687 = vdwg.mxu0
        %v4688 = vadd.f32 %v4522, %v4683
        %v4689 = vpack.c.bf16 %v3857, %v3857
        %v4690 = vpack.c.bf16 %v4007, %v4003
        %v4691 = vpack.c.bf16 %v4009, %v4005
        %v4693 = vsel %vm2414, %v4689, 0
        %v4696 = vsel %vm2414, %v4690, 0
        %4698 = vmatprep.subr.bf16.mxu0 0
        %4699 = vmatpush1.bf16.xpose.msra.mxu0 0
        %4700 = vmatprep.subr.bf16.mxu0 0
        %4701 = vmatpush1.bf16.xpose.msra.mxu0 0
        %4702 = vmatprep.subr.bf16.mxu0 0
        %4703 = vmatpush1.bf16.xpose.msra.mxu0 0
        %4704 = vmatprep.subr.bf16.mxu0 0
        %4705 = vmatpush1.bf16.xpose.msra.mxu0 0
        %4706 = vmatprep.subr.bf16.mxu0 0
        %4707 = vmatpush1.bf16.xpose.msra.mxu0 0
        %4708 = vmatprep.subr.bf16.mxu0 0
        %4709 = vmatpush1.bf16.xpose.msra.mxu0 0
        %4710 = vmatprep.subr.bf16.mxu0 0
        %4711 = vmatpush1.bf16.xpose.msra.mxu0 0
        %4712 = vmatprep.subr.bf16.mxu0 0
        %4713 = vmatpush1.bf16.xpose.msra.mxu0 %v4696
        %4714 = vmatprep.subr.bf16.mxu0 0
        %4715 = vmatpush2.bf16.xpose.msra.mxu0 0
        %4716 = vmatprep.subr.bf16.mxu0 0
        %4717 = vmatpush2.bf16.xpose.msra.mxu0 0
        %4718 = vmatprep.subr.bf16.mxu0 0
        %4719 = vmatpush2.bf16.xpose.msra.mxu0 0
        %4720 = vmatprep.subr.bf16.mxu0 0
        %4721 = vmatpush2.bf16.xpose.msra.mxu0 0
        %4722 = vmatprep.subr.bf16.mxu0 0
        %4723 = vmatpush2.bf16.xpose.msra.mxu0 0
        %4724 = vmatprep.subr.bf16.mxu0 0
        %4725 = vmatpush2.bf16.xpose.msra.mxu0 0
        %4726 = vmatprep.subr.bf16.mxu0 0
        %4727 = vmatpush2.bf16.xpose.msra.mxu0 0
        %4728 = vmatprep.subr.bf16.mxu0 0
        %4729 = vmatpush2.bf16.xpose.msra.mxu0 0
        %4730 = vmatprep.mubr.bf16.mxu0 0
        %4731 = vmatmul.mubr.bf16.gmra.mxu0 %v4693
        %v4732 = vpop.f32.mrf.mxu0
        %v4733 = vadd.f32 0.0, %v4732
        %v4734 = vpop.f32.mrf.mxu0
        %v4735 = vpop.f32.mrf.mxu0
        %v4736 = vpop.f32.mrf.mxu0
        %4737 = vdwg.mxu0
        %v4738 = vmul.f32 %v4733, 0.17677669
        %v4739 = vsel %vm4077, %v4738, -inf
        %4740 = vmax.xlane.f32.xlu0 %v4739
        %v4741 = vpop.xlane.xlu0 %4740
        %v4742 = vsub.f32 %v4738, %v4741
        %v4743 = vmul.f32 %v4742, 1.442695
        %v4744 = vpow.pop %v4743
        %v4745 = vsel %vm4077, %v4744, 0.0
        %4746 = vadd.xlane.f32.xlu0 %v4745
        %v4747 = vpop.xlane.xlu0 %4746
        %v4748 = vrcp.pop %v4747
        %v4749 = vmul.f32 %v4744, %v4748
        %v4750 = vpack.c.bf16 %v4749, %v4749
        %v4752 = vsel %vm4077, %v4750, 0
        %4754 = vmatprep.subr.bf16.mxu0 0
        %4755 = vmatpush1.bf16.msra.mxu0 0
        %4756 = vmatprep.subr.bf16.mxu0 0
        %4757 = vmatpush1.bf16.msra.mxu0 0
        %4758 = vmatprep.subr.bf16.mxu0 0
        %4759 = vmatpush1.bf16.msra.mxu0 0
        %4760 = vmatprep.subr.bf16.mxu0 0
        %4761 = vmatpush1.bf16.msra.mxu0 0
        %4762 = vmatprep.subr.bf16.mxu0 0
        %4763 = vmatpush1.bf16.msra.mxu0 0
        %4764 = vmatprep.subr.bf16.mxu0 0
        %4765 = vmatpush1.bf16.msra.mxu0 0
        %4766 = vmatprep.subr.bf16.mxu0 0
        %4767 = vmatpush1.bf16.msra.mxu0 0
        %4768 = vmatprep.subr.bf16.mxu0 0
        %4769 = vmatpush1.bf16.msra.mxu0 %v4691
        %4770 = vmatprep.subr.bf16.mxu0 0
        %4771 = vmatpush2.bf16.msra.mxu0 0
        %4772 = vmatprep.subr.bf16.mxu0 0
        %4773 = vmatpush2.bf16.msra.mxu0 0
        %4774 = vmatprep.subr.bf16.mxu0 0
        %4775 = vmatpush2.bf16.msra.mxu0 0
        %4776 = vmatprep.subr.bf16.mxu0 0
        %4777 = vmatpush2.bf16.msra.mxu0 0
        %4778 = vmatprep.subr.bf16.mxu0 0
        %4779 = vmatpush2.bf16.msra.mxu0 0
        %4780 = vmatprep.subr.bf16.mxu0 0
        %4781 = vmatpush2.bf16.msra.mxu0 0
        %4782 = vmatprep.subr.bf16.mxu0 0
        %4783 = vmatpush2.bf16.msra.mxu0 0
        %4784 = vmatprep.subr.bf16.mxu0 0
        %4785 = vmatpush2.bf16.msra.mxu0 0
        %4786 = vmatprep.mubr.bf16.mxu0 0
        %4787 = vmatmul.mubr.bf16.gmra.mxu0 %v4752
        %v4788 = vpop.f32.mrf.mxu0
        %v4789 = vadd.f32 0.0, %v4788
        %v4790 = vpop.f32.mrf.mxu0
        %v4791 = vpop.f32.mrf.mxu0
        %v4792 = vpop.f32.mrf.mxu0
        %4793 = vdwg.mxu0
        %v4794 = vpack.c.bf16 %v4789, %v4789
        %4796 = vrot.lane.b32.xlu0 %v4689, 96
        %v4797 = vpop.permute.xlu0 %4796
        %4799 = vrot.lane.b32.xlu0 %v4690, 96
        %v4800 = vpop.permute.xlu0 %4799
        %v4802 = vsel %vm2414, %v4797, 0
        %v4805 = vsel %vm2414, %v4800, 0
        %4807 = vmatprep.subr.bf16.mxu0 0
        %4808 = vmatpush1.bf16.xpose.msra.mxu0 0
        %4809 = vmatprep.subr.bf16.mxu0 0
        %4810 = vmatpush1.bf16.xpose.msra.mxu0 0
        %4811 = vmatprep.subr.bf16.mxu0 0
        %4812 = vmatpush1.bf16.xpose.msra.mxu0 0
        %4813 = vmatprep.subr.bf16.mxu0 0
        %4814 = vmatpush1.bf16.xpose.msra.mxu0 0
        %4815 = vmatprep.subr.bf16.mxu0 0
        %4816 = vmatpush1.bf16.xpose.msra.mxu0 0
        %4817 = vmatprep.subr.bf16.mxu0 0
        %4818 = vmatpush1.bf16.xpose.msra.mxu0 0
        %4819 = vmatprep.subr.bf16.mxu0 0
        %4820 = vmatpush1.bf16.xpose.msra.mxu0 0
        %4821 = vmatprep.subr.bf16.mxu0 0
        %4822 = vmatpush1.bf16.xpose.msra.mxu0 %v4805
        %4823 = vmatprep.subr.bf16.mxu0 0
        %4824 = vmatpush2.bf16.xpose.msra.mxu0 0
        %4825 = vmatprep.subr.bf16.mxu0 0
        %4826 = vmatpush2.bf16.xpose.msra.mxu0 0
        %4827 = vmatprep.subr.bf16.mxu0 0
        %4828 = vmatpush2.bf16.xpose.msra.mxu0 0
        %4829 = vmatprep.subr.bf16.mxu0 0
        %4830 = vmatpush2.bf16.xpose.msra.mxu0 0
        %4831 = vmatprep.subr.bf16.mxu0 0
        %4832 = vmatpush2.bf16.xpose.msra.mxu0 0
        %4833 = vmatprep.subr.bf16.mxu0 0
        %4834 = vmatpush2.bf16.xpose.msra.mxu0 0
        %4835 = vmatprep.subr.bf16.mxu0 0
        %4836 = vmatpush2.bf16.xpose.msra.mxu0 0
        %4837 = vmatprep.subr.bf16.mxu0 0
        %4838 = vmatpush2.bf16.xpose.msra.mxu0 0
        %4839 = vmatprep.mubr.bf16.mxu0 0
        %4840 = vmatmul.mubr.bf16.gmra.mxu0 %v4802
        %v4841 = vpop.f32.mrf.mxu0
        %v4842 = vadd.f32 0.0, %v4841
        %v4843 = vpop.f32.mrf.mxu0
        %v4844 = vpop.f32.mrf.mxu0
        %v4845 = vpop.f32.mrf.mxu0
        %4846 = vdwg.mxu0
        %v4847 = vmul.f32 %v4842, 0.17677669
        %v4848 = vsel %vm4077, %v4847, -inf
        %4849 = vmax.xlane.f32.xlu0 %v4848
        %v4850 = vpop.xlane.xlu0 %4849
        %v4851 = vsub.f32 %v4847, %v4850
        %v4852 = vmul.f32 %v4851, 1.442695
        %v4853 = vpow.pop %v4852
        %v4854 = vsel %vm4077, %v4853, 0.0
        %4855 = vadd.xlane.f32.xlu0 %v4854
        %v4856 = vpop.xlane.xlu0 %4855
        %v4857 = vrcp.pop %v4856
        %v4858 = vmul.f32 %v4853, %v4857
        %v4859 = vpack.c.bf16 %v4858, %v4858
        %4861 = vrot.lane.b32.xlu0 %v4691, 96
        %v4862 = vpop.permute.xlu0 %4861
        %v4865 = vsel %vm4077, %v4859, 0
        %4867 = vmatprep.subr.bf16.mxu0 0
        %4868 = vmatpush1.bf16.msra.mxu0 0
        %4869 = vmatprep.subr.bf16.mxu0 0
        %4870 = vmatpush1.bf16.msra.mxu0 0
        %4871 = vmatprep.subr.bf16.mxu0 0
        %4872 = vmatpush1.bf16.msra.mxu0 0
        %4873 = vmatprep.subr.bf16.mxu0 0
        %4874 = vmatpush1.bf16.msra.mxu0 0
        %4875 = vmatprep.subr.bf16.mxu0 0
        %4876 = vmatpush1.bf16.msra.mxu0 0
        %4877 = vmatprep.subr.bf16.mxu0 0
        %4878 = vmatpush1.bf16.msra.mxu0 0
        %4879 = vmatprep.subr.bf16.mxu0 0
        %4880 = vmatpush1.bf16.msra.mxu0 0
        %4881 = vmatprep.subr.bf16.mxu0 0
        %4882 = vmatpush1.bf16.msra.mxu0 %v4862
        %4883 = vmatprep.subr.bf16.mxu0 0
        %4884 = vmatpush2.bf16.msra.mxu0 0
        %4885 = vmatprep.subr.bf16.mxu0 0
        %4886 = vmatpush2.bf16.msra.mxu0 0
        %4887 = vmatprep.subr.bf16.mxu0 0
        %4888 = vmatpush2.bf16.msra.mxu0 0
        %4889 = vmatprep.subr.bf16.mxu0 0
        %4890 = vmatpush2.bf16.msra.mxu0 0
        %4891 = vmatprep.subr.bf16.mxu0 0
        %4892 = vmatpush2.bf16.msra.mxu0 0
        %4893 = vmatprep.subr.bf16.mxu0 0
        %4894 = vmatpush2.bf16.msra.mxu0 0
        %4895 = vmatprep.subr.bf16.mxu0 0
        %4896 = vmatpush2.bf16.msra.mxu0 0
        %4897 = vmatprep.subr.bf16.mxu0 0
        %4898 = vmatpush2.bf16.msra.mxu0 0
        %4899 = vmatprep.mubr.bf16.mxu0 0
        %4900 = vmatmul.mubr.bf16.gmra.mxu0 %v4865
        %v4901 = vpop.f32.mrf.mxu0
        %v4902 = vadd.f32 0.0, %v4901
        %v4903 = vpop.f32.mrf.mxu0
        %v4904 = vpop.f32.mrf.mxu0
        %v4905 = vpop.f32.mrf.mxu0
        %4906 = vdwg.mxu0
        %v4907 = vpack.c.bf16 %v4902, %v4902
        %v4909 = vsel %vm2414, %v4907, 0
        %4911 = vmatprep.subr.bf16.mxu0 0
        %4912 = vmatpush1.bf16.msra.mxu0 0
        %4913 = vmatprep.subr.bf16.mxu0 0
        %4914 = vmatpush1.bf16.msra.mxu0 0
        %4915 = vmatprep.subr.bf16.mxu0 0
        %4916 = vmatpush1.bf16.msra.mxu0 0
        %4917 = vmatprep.subr.bf16.mxu0 0
        %4918 = vmatpush1.bf16.msra.mxu0 0
        %4919 = vmatprep.subr.bf16.mxu0 0
        %4920 = vmatpush1.bf16.msra.mxu0 0
        %4921 = vmatprep.subr.bf16.mxu0 0
        %4922 = vmatpush1.bf16.msra.mxu0 0
        %4923 = vmatprep.subr.bf16.mxu0 0
        %4924 = vmatpush1.bf16.msra.mxu0 %v4256
        %4925 = vmatprep.subr.bf16.mxu0 0
        %4926 = vmatpush1.bf16.msra.mxu0 %v4255
        %4927 = vmatprep.subr.bf16.mxu0 0
        %4928 = vmatpush2.bf16.msra.mxu0 0
        %4929 = vmatprep.subr.bf16.mxu0 0
        %4930 = vmatpush2.bf16.msra.mxu0 0
        %4931 = vmatprep.subr.bf16.mxu0 0
        %4932 = vmatpush2.bf16.msra.mxu0 0
        %4933 = vmatprep.subr.bf16.mxu0 0
        %4934 = vmatpush2.bf16.msra.mxu0 0
        %4935 = vmatprep.subr.bf16.mxu0 0
        %4936 = vmatpush2.bf16.msra.mxu0 0
        %4937 = vmatprep.subr.bf16.mxu0 0
        %4938 = vmatpush2.bf16.msra.mxu0 0
        %4939 = vmatprep.subr.bf16.mxu0 0
        %4940 = vmatpush2.bf16.msra.mxu0 0
        %4941 = vmatprep.subr.bf16.mxu0 0
        %4942 = vmatpush2.bf16.msra.mxu0 0
        %4943 = vmatprep.mubr.bf16.mxu0 0
        %4944 = vmatmul.mubr.bf16.gmra.mxu0 %v4909
        %v4945 = vpop.f32.mrf.mxu0
        %v4946 = vadd.f32 0.0, %v4945
        %v4947 = vpop.f32.mrf.mxu0
        %v4948 = vpop.f32.mrf.mxu0
        %v4949 = vpop.f32.mrf.mxu0
        %4950 = vdwg.mxu0
        %v4952 = vsel %vm2414, %v4794, 0
        %4954 = vmatprep.subr.bf16.mxu0 0
        %4955 = vmatpush1.bf16.msra.mxu0 0
        %4956 = vmatprep.subr.bf16.mxu0 0
        %4957 = vmatpush1.bf16.msra.mxu0 0
        %4958 = vmatprep.subr.bf16.mxu0 0
        %4959 = vmatpush1.bf16.msra.mxu0 0
        %4960 = vmatprep.subr.bf16.mxu0 0
        %4961 = vmatpush1.bf16.msra.mxu0 0
        %4962 = vmatprep.subr.bf16.mxu0 0
        %4963 = vmatpush1.bf16.msra.mxu0 0
        %4964 = vmatprep.subr.bf16.mxu0 0
        %4965 = vmatpush1.bf16.msra.mxu0 0
        %4966 = vmatprep.subr.bf16.mxu0 0
        %4967 = vmatpush1.bf16.msra.mxu0 %v4311
        %4968 = vmatprep.subr.bf16.mxu0 0
        %4969 = vmatpush1.bf16.msra.mxu0 %v4310
        %4970 = vmatprep.subr.bf16.mxu0 0
        %4971 = vmatpush2.bf16.msra.mxu0 0
        %4972 = vmatprep.subr.bf16.mxu0 0
        %4973 = vmatpush2.bf16.msra.mxu0 0
        %4974 = vmatprep.subr.bf16.mxu0 0
        %4975 = vmatpush2.bf16.msra.mxu0 0
        %4976 = vmatprep.subr.bf16.mxu0 0
        %4977 = vmatpush2.bf16.msra.mxu0 0
        %4978 = vmatprep.subr.bf16.mxu0 0
        %4979 = vmatpush2.bf16.msra.mxu0 0
        %4980 = vmatprep.subr.bf16.mxu0 0
        %4981 = vmatpush2.bf16.msra.mxu0 0
        %4982 = vmatprep.subr.bf16.mxu0 0
        %4983 = vmatpush2.bf16.msra.mxu0 0
        %4984 = vmatprep.subr.bf16.mxu0 0
        %4985 = vmatpush2.bf16.msra.mxu0 0
        %4986 = vmatprep.mubr.bf16.mxu0 0
        %4987 = vmatmul.mubr.bf16.gmra.mxu0 %v4952
        %v4988 = vpop.f32.mrf.mxu0
        %v4989 = vadd.f32 %v4946, %v4988
        %v4990 = vpop.f32.mrf.mxu0
        %v4991 = vpop.f32.mrf.mxu0
        %v4992 = vpop.f32.mrf.mxu0
        %4993 = vdwg.mxu0
        %4994 = vrot.lane.b32.xlu0 %v4689, 64
        %v4995 = vpop.permute.xlu0 %4994
        %4996 = vrot.lane.b32.xlu0 %v4690, 64
        %v4997 = vpop.permute.xlu0 %4996
        %v4999 = vsel %vm2414, %v4995, 0
        %v5002 = vsel %vm2414, %v4997, 0
        %5004 = vmatprep.subr.bf16.mxu0 0
        %5005 = vmatpush1.bf16.xpose.msra.mxu0 0
        %5006 = vmatprep.subr.bf16.mxu0 0
        %5007 = vmatpush1.bf16.xpose.msra.mxu0 0
        %5008 = vmatprep.subr.bf16.mxu0 0
        %5009 = vmatpush1.bf16.xpose.msra.mxu0 0
        %5010 = vmatprep.subr.bf16.mxu0 0
        %5011 = vmatpush1.bf16.xpose.msra.mxu0 0
        %5012 = vmatprep.subr.bf16.mxu0 0
        %5013 = vmatpush1.bf16.xpose.msra.mxu0 0
        %5014 = vmatprep.subr.bf16.mxu0 0
        %5015 = vmatpush1.bf16.xpose.msra.mxu0 0
        %5016 = vmatprep.subr.bf16.mxu0 0
        %5017 = vmatpush1.bf16.xpose.msra.mxu0 0
        %5018 = vmatprep.subr.bf16.mxu0 0
        %5019 = vmatpush1.bf16.xpose.msra.mxu0 %v5002
        %5020 = vmatprep.subr.bf16.mxu0 0
        %5021 = vmatpush2.bf16.xpose.msra.mxu0 0
        %5022 = vmatprep.subr.bf16.mxu0 0
        %5023 = vmatpush2.bf16.xpose.msra.mxu0 0
        %5024 = vmatprep.subr.bf16.mxu0 0
        %5025 = vmatpush2.bf16.xpose.msra.mxu0 0
        %5026 = vmatprep.subr.bf16.mxu0 0
        %5027 = vmatpush2.bf16.xpose.msra.mxu0 0
        %5028 = vmatprep.subr.bf16.mxu0 0
        %5029 = vmatpush2.bf16.xpose.msra.mxu0 0
        %5030 = vmatprep.subr.bf16.mxu0 0
        %5031 = vmatpush2.bf16.xpose.msra.mxu0 0
        %5032 = vmatprep.subr.bf16.mxu0 0
        %5033 = vmatpush2.bf16.xpose.msra.mxu0 0
        %5034 = vmatprep.subr.bf16.mxu0 0
        %5035 = vmatpush2.bf16.xpose.msra.mxu0 0
        %5036 = vmatprep.mubr.bf16.mxu0 0
        %5037 = vmatmul.mubr.bf16.gmra.mxu0 %v4999
        %v5038 = vpop.f32.mrf.mxu0
        %v5039 = vadd.f32 0.0, %v5038
        %v5040 = vpop.f32.mrf.mxu0
        %v5041 = vpop.f32.mrf.mxu0
        %v5042 = vpop.f32.mrf.mxu0
        %5043 = vdwg.mxu0
        %v5044 = vmul.f32 %v5039, 0.17677669
        %v5045 = vsel %vm4077, %v5044, -inf
        %5046 = vmax.xlane.f32.xlu0 %v5045
        %v5047 = vpop.xlane.xlu0 %5046
        %v5048 = vsub.f32 %v5044, %v5047
        %v5049 = vmul.f32 %v5048, 1.442695
        %v5050 = vpow.pop %v5049
        %v5051 = vsel %vm4077, %v5050, 0.0
        %5052 = vadd.xlane.f32.xlu0 %v5051
        %v5053 = vpop.xlane.xlu0 %5052
        %v5054 = vrcp.pop %v5053
        %v5055 = vmul.f32 %v5050, %v5054
        %v5056 = vpack.c.bf16 %v5055, %v5055
        %5057 = vrot.lane.b32.xlu0 %v4691, 64
        %v5058 = vpop.permute.xlu0 %5057
        %v5061 = vsel %vm4077, %v5056, 0
        %5063 = vmatprep.subr.bf16.mxu0 0
        %5064 = vmatpush1.bf16.msra.mxu0 0
        %5065 = vmatprep.subr.bf16.mxu0 0
        %5066 = vmatpush1.bf16.msra.mxu0 0
        %5067 = vmatprep.subr.bf16.mxu0 0
        %5068 = vmatpush1.bf16.msra.mxu0 0
        %5069 = vmatprep.subr.bf16.mxu0 0
        %5070 = vmatpush1.bf16.msra.mxu0 0
        %5071 = vmatprep.subr.bf16.mxu0 0
        %5072 = vmatpush1.bf16.msra.mxu0 0
        %5073 = vmatprep.subr.bf16.mxu0 0
        %5074 = vmatpush1.bf16.msra.mxu0 0
        %5075 = vmatprep.subr.bf16.mxu0 0
        %5076 = vmatpush1.bf16.msra.mxu0 0
        %5077 = vmatprep.subr.bf16.mxu0 0
        %5078 = vmatpush1.bf16.msra.mxu0 %v5058
        %5079 = vmatprep.subr.bf16.mxu0 0
        %5080 = vmatpush2.bf16.msra.mxu0 0
        %5081 = vmatprep.subr.bf16.mxu0 0
        %5082 = vmatpush2.bf16.msra.mxu0 0
        %5083 = vmatprep.subr.bf16.mxu0 0
        %5084 = vmatpush2.bf16.msra.mxu0 0
        %5085 = vmatprep.subr.bf16.mxu0 0
        %5086 = vmatpush2.bf16.msra.mxu0 0
        %5087 = vmatprep.subr.bf16.mxu0 0
        %5088 = vmatpush2.bf16.msra.mxu0 0
        %5089 = vmatprep.subr.bf16.mxu0 0
        %5090 = vmatpush2.bf16.msra.mxu0 0
        %5091 = vmatprep.subr.bf16.mxu0 0
        %5092 = vmatpush2.bf16.msra.mxu0 0
        %5093 = vmatprep.subr.bf16.mxu0 0
        %5094 = vmatpush2.bf16.msra.mxu0 0
        %5095 = vmatprep.mubr.bf16.mxu0 0
        %5096 = vmatmul.mubr.bf16.gmra.mxu0 %v5061
        %v5097 = vpop.f32.mrf.mxu0
        %v5098 = vadd.f32 0.0, %v5097
        %v5099 = vpop.f32.mrf.mxu0
        %v5100 = vpop.f32.mrf.mxu0
        %v5101 = vpop.f32.mrf.mxu0
        %5102 = vdwg.mxu0
        %v5103 = vpack.c.bf16 %v5098, %v5098
        %v5105 = vsel %vm2414, %v5103, 0
        %5107 = vmatprep.subr.bf16.mxu0 0
        %5108 = vmatpush1.bf16.msra.mxu0 0
        %5109 = vmatprep.subr.bf16.mxu0 0
        %5110 = vmatpush1.bf16.msra.mxu0 0
        %5111 = vmatprep.subr.bf16.mxu0 0
        %5112 = vmatpush1.bf16.msra.mxu0 0
        %5113 = vmatprep.subr.bf16.mxu0 0
        %5114 = vmatpush1.bf16.msra.mxu0 0
        %5115 = vmatprep.subr.bf16.mxu0 0
        %5116 = vmatpush1.bf16.msra.mxu0 0
        %5117 = vmatprep.subr.bf16.mxu0 0
        %5118 = vmatpush1.bf16.msra.mxu0 0
        %5119 = vmatprep.subr.bf16.mxu0 0
        %5120 = vmatpush1.bf16.msra.mxu0 %v4476
        %5121 = vmatprep.subr.bf16.mxu0 0
        %5122 = vmatpush1.bf16.msra.mxu0 %v4475
        %5123 = vmatprep.subr.bf16.mxu0 0
        %5124 = vmatpush2.bf16.msra.mxu0 0
        %5125 = vmatprep.subr.bf16.mxu0 0
        %5126 = vmatpush2.bf16.msra.mxu0 0
        %5127 = vmatprep.subr.bf16.mxu0 0
        %5128 = vmatpush2.bf16.msra.mxu0 0
        %5129 = vmatprep.subr.bf16.mxu0 0
        %5130 = vmatpush2.bf16.msra.mxu0 0
        %5131 = vmatprep.subr.bf16.mxu0 0
        %5132 = vmatpush2.bf16.msra.mxu0 0
        %5133 = vmatprep.subr.bf16.mxu0 0
        %5134 = vmatpush2.bf16.msra.mxu0 0
        %5135 = vmatprep.subr.bf16.mxu0 0
        %5136 = vmatpush2.bf16.msra.mxu0 0
        %5137 = vmatprep.subr.bf16.mxu0 0
        %5138 = vmatpush2.bf16.msra.mxu0 0
        %5139 = vmatprep.mubr.bf16.mxu0 0
        %5140 = vmatmul.mubr.bf16.gmra.mxu0 %v5105
        %v5141 = vpop.f32.mrf.mxu0
        %v5142 = vadd.f32 0.0, %v5141
        %v5143 = vpop.f32.mrf.mxu0
        %v5144 = vpop.f32.mrf.mxu0
        %v5145 = vpop.f32.mrf.mxu0
        %5146 = vdwg.mxu0
        %v5147 = vadd.f32 %v4989, %v5142
        %5148 = vrot.lane.b32.xlu0 %v4689, 32
        %v5149 = vpop.permute.xlu0 %5148
        %5150 = vrot.lane.b32.xlu0 %v4690, 32
        %v5151 = vpop.permute.xlu0 %5150
        %v5153 = vsel %vm2414, %v5149, 0
        %v5156 = vsel %vm2414, %v5151, 0
        %5158 = vmatprep.subr.bf16.mxu0 0
        %5159 = vmatpush1.bf16.xpose.msra.mxu0 0
        %5160 = vmatprep.subr.bf16.mxu0 0
        %5161 = vmatpush1.bf16.xpose.msra.mxu0 0
        %5162 = vmatprep.subr.bf16.mxu0 0
        %5163 = vmatpush1.bf16.xpose.msra.mxu0 0
        %5164 = vmatprep.subr.bf16.mxu0 0
        %5165 = vmatpush1.bf16.xpose.msra.mxu0 0
        %5166 = vmatprep.subr.bf16.mxu0 0
        %5167 = vmatpush1.bf16.xpose.msra.mxu0 0
        %5168 = vmatprep.subr.bf16.mxu0 0
        %5169 = vmatpush1.bf16.xpose.msra.mxu0 0
        %5170 = vmatprep.subr.bf16.mxu0 0
        %5171 = vmatpush1.bf16.xpose.msra.mxu0 0
        %5172 = vmatprep.subr.bf16.mxu0 0
        %5173 = vmatpush1.bf16.xpose.msra.mxu0 %v5156
        %5174 = vmatprep.subr.bf16.mxu0 0
        %5175 = vmatpush2.bf16.xpose.msra.mxu0 0
        %5176 = vmatprep.subr.bf16.mxu0 0
        %5177 = vmatpush2.bf16.xpose.msra.mxu0 0
        %5178 = vmatprep.subr.bf16.mxu0 0
        %5179 = vmatpush2.bf16.xpose.msra.mxu0 0
        %5180 = vmatprep.subr.bf16.mxu0 0
        %5181 = vmatpush2.bf16.xpose.msra.mxu0 0
        %5182 = vmatprep.subr.bf16.mxu0 0
        %5183 = vmatpush2.bf16.xpose.msra.mxu0 0
        %5184 = vmatprep.subr.bf16.mxu0 0
        %5185 = vmatpush2.bf16.xpose.msra.mxu0 0
        %5186 = vmatprep.subr.bf16.mxu0 0
        %5187 = vmatpush2.bf16.xpose.msra.mxu0 0
        %5188 = vmatprep.subr.bf16.mxu0 0
        %5189 = vmatpush2.bf16.xpose.msra.mxu0 0
        %5190 = vmatprep.mubr.bf16.mxu0 0
        %5191 = vmatmul.mubr.bf16.gmra.mxu0 %v5153
        %v5192 = vpop.f32.mrf.mxu0
        %v5193 = vadd.f32 0.0, %v5192
        %v5194 = vpop.f32.mrf.mxu0
        %v5195 = vpop.f32.mrf.mxu0
        %v5196 = vpop.f32.mrf.mxu0
        %5197 = vdwg.mxu0
        %v5198 = vmul.f32 %v5193, 0.17677669
        %v5199 = vsel %vm4077, %v5198, -inf
        %5200 = vmax.xlane.f32.xlu0 %v5199
        %v5201 = vpop.xlane.xlu0 %5200
        %v5202 = vsub.f32 %v5198, %v5201
        %v5203 = vmul.f32 %v5202, 1.442695
        %v5204 = vpow.pop %v5203
        %v5205 = vsel %vm4077, %v5204, 0.0
        %5206 = vadd.xlane.f32.xlu0 %v5205
        %v5207 = vpop.xlane.xlu0 %5206
        %v5208 = vrcp.pop %v5207
        %v5209 = vmul.f32 %v5204, %v5208
        %v5210 = vpack.c.bf16 %v5209, %v5209
        %5211 = vrot.lane.b32.xlu0 %v4691, 32
        %v5212 = vpop.permute.xlu0 %5211
        %v5215 = vsel %vm4077, %v5210, 0
        %5217 = vmatprep.subr.bf16.mxu0 0
        %5218 = vmatpush1.bf16.msra.mxu0 0
        %5219 = vmatprep.subr.bf16.mxu0 0
        %5220 = vmatpush1.bf16.msra.mxu0 0
        %5221 = vmatprep.subr.bf16.mxu0 0
        %5222 = vmatpush1.bf16.msra.mxu0 0
        %5223 = vmatprep.subr.bf16.mxu0 0
        %5224 = vmatpush1.bf16.msra.mxu0 0
        %5225 = vmatprep.subr.bf16.mxu0 0
        %5226 = vmatpush1.bf16.msra.mxu0 0
        %5227 = vmatprep.subr.bf16.mxu0 0
        %5228 = vmatpush1.bf16.msra.mxu0 0
        %5229 = vmatprep.subr.bf16.mxu0 0
        %5230 = vmatpush1.bf16.msra.mxu0 0
        %5231 = vmatprep.subr.bf16.mxu0 0
        %5232 = vmatpush1.bf16.msra.mxu0 %v5212
        %5233 = vmatprep.subr.bf16.mxu0 0
        %5234 = vmatpush2.bf16.msra.mxu0 0
        %5235 = vmatprep.subr.bf16.mxu0 0
        %5236 = vmatpush2.bf16.msra.mxu0 0
        %5237 = vmatprep.subr.bf16.mxu0 0
        %5238 = vmatpush2.bf16.msra.mxu0 0
        %5239 = vmatprep.subr.bf16.mxu0 0
        %5240 = vmatpush2.bf16.msra.mxu0 0
        %5241 = vmatprep.subr.bf16.mxu0 0
        %5242 = vmatpush2.bf16.msra.mxu0 0
        %5243 = vmatprep.subr.bf16.mxu0 0
        %5244 = vmatpush2.bf16.msra.mxu0 0
        %5245 = vmatprep.subr.bf16.mxu0 0
        %5246 = vmatpush2.bf16.msra.mxu0 0
        %5247 = vmatprep.subr.bf16.mxu0 0
        %5248 = vmatpush2.bf16.msra.mxu0 0
        %5249 = vmatprep.mubr.bf16.mxu0 0
        %5250 = vmatmul.mubr.bf16.gmra.mxu0 %v5215
        %v5251 = vpop.f32.mrf.mxu0
        %v5252 = vadd.f32 0.0, %v5251
        %v5253 = vpop.f32.mrf.mxu0
        %v5254 = vpop.f32.mrf.mxu0
        %v5255 = vpop.f32.mrf.mxu0
        %5256 = vdwg.mxu0
        %v5257 = vpack.c.bf16 %v5252, %v5252
        %v5259 = vsel %vm2414, %v5257, 0
        %5261 = vmatprep.subr.bf16.mxu0 0
        %5262 = vmatpush1.bf16.msra.mxu0 0
        %5263 = vmatprep.subr.bf16.mxu0 0
        %5264 = vmatpush1.bf16.msra.mxu0 0
        %5265 = vmatprep.subr.bf16.mxu0 0
        %5266 = vmatpush1.bf16.msra.mxu0 0
        %5267 = vmatprep.subr.bf16.mxu0 0
        %5268 = vmatpush1.bf16.msra.mxu0 0
        %5269 = vmatprep.subr.bf16.mxu0 0
        %5270 = vmatpush1.bf16.msra.mxu0 0
        %5271 = vmatprep.subr.bf16.mxu0 0
        %5272 = vmatpush1.bf16.msra.mxu0 0
        %5273 = vmatprep.subr.bf16.mxu0 0
        %5274 = vmatpush1.bf16.msra.mxu0 %v4642
        %5275 = vmatprep.subr.bf16.mxu0 0
        %5276 = vmatpush1.bf16.msra.mxu0 %v4641
        %5277 = vmatprep.subr.bf16.mxu0 0
        %5278 = vmatpush2.bf16.msra.mxu0 0
        %5279 = vmatprep.subr.bf16.mxu0 0
        %5280 = vmatpush2.bf16.msra.mxu0 0
        %5281 = vmatprep.subr.bf16.mxu0 0
        %5282 = vmatpush2.bf16.msra.mxu0 0
        %5283 = vmatprep.subr.bf16.mxu0 0
        %5284 = vmatpush2.bf16.msra.mxu0 0
        %5285 = vmatprep.subr.bf16.mxu0 0
        %5286 = vmatpush2.bf16.msra.mxu0 0
        %5287 = vmatprep.subr.bf16.mxu0 0
        %5288 = vmatpush2.bf16.msra.mxu0 0
        %5289 = vmatprep.subr.bf16.mxu0 0
        %5290 = vmatpush2.bf16.msra.mxu0 0
        %5291 = vmatprep.subr.bf16.mxu0 0
        %5292 = vmatpush2.bf16.msra.mxu0 0
        %5293 = vmatprep.mubr.bf16.mxu0 0
        %5294 = vmatmul.mubr.bf16.gmra.mxu0 %v5259
        %v5295 = vpop.f32.mrf.mxu0
        %v5296 = vadd.f32 0.0, %v5295
        %v5297 = vpop.f32.mrf.mxu0
        %v5298 = vpop.f32.mrf.mxu0
        %v5299 = vpop.f32.mrf.mxu0
        %5300 = vdwg.mxu0
        %v5301 = vadd.f32 %v5147, %v5296
        %v5302 = vadd.f32 %v3714, %v4688
        %v5303 = vadd.f32 %v3715, %v5301
        %v5304 = vld [vmem:[%s1428] sm:$0x1]
        %v5305 = vunpack.c.l.bf16 %v5304
        %v5306 = vlaneseq
        %v5307 = vshrl.u32 %v5306, 7
        %v5308 = vsub.s32 0, %v5307
        %v5309 = vrot.slane %v5305, %v5308
        %v5310 = vadd.f32 %v5302, %v5309
        %v5311 = vadd.f32 %v5303, %v5309
        %v5312 = vld [vmem:[%s1431] sm:$0x1]
        %v5313 = vunpack.c.l.bf16 %v5312
        %v5314 = vld [vmem:[%s1434] sm:$0x1]
        %v5315 = vunpack.c.l.bf16 %v5314
        %5316 = vadd.xlane.f32.xlu0 %v5310
        %v5317 = vpop.xlane.xlu0 %5316
        %5318 = vadd.xlane.f32.xlu0 %v5311
        %v5319 = vpop.xlane.xlu0 %5318
        %v5320 = vmul.f32 %v5317, %v2119
        %v5321 = vmul.f32 %v5319, %v2119
        %v5322 = vsub.f32 %v5310, %v5320
        %v5323 = vsub.f32 %v5311, %v5321
        %v5324 = vmul.f32 %v5322, %v5322
        %v5325 = vmul.f32 %v5323, %v5323
        %5326 = vadd.xlane.f32.xlu0 %v5324
        %v5327 = vpop.xlane.xlu0 %5326
        %5328 = vadd.xlane.f32.xlu0 %v5325
        %v5329 = vpop.xlane.xlu0 %5328
        %v5330 = vmul.f32 %v5327, %v2119
        %v5331 = vmul.f32 %v5329, %v2119
        %v5332 = vadd.f32 %v5330, 1e-05
        %v5333 = vadd.f32 %v5331, 1e-05
        %v5334 = vrsqrt.pop %v5332
        %v5335 = vrsqrt.pop %v5333
        %v5336 = vmul.f32 %v5322, %v5334
        %v5337 = vmul.f32 %v5323, %v5335
        %v5338 = vlaneseq
        %v5339 = vshrl.u32 %v5338, 7
        %v5340 = vsub.s32 0, %v5339
        %v5341 = vrot.slane %v5313, %v5340
        %v5342 = vmul.f32 %v5336, %v5341
        %v5343 = vmul.f32 %v5337, %v5341
        %v5344 = vlaneseq
        %v5345 = vshrl.u32 %v5344, 7
        %v5346 = vsub.s32 0, %v5345
        %v5347 = vrot.slane %v5315, %v5346
        %v5348 = vadd.f32 %v5342, %v5347
        %v5349 = vadd.f32 %v5343, %v5347
        %v5350 = vpack.c.bf16 %v5349, %v5348
        %v5351 = vld [vmem:[%s1263] sm:$0xff]
        %v5352 = vld [vmem:[%s1263 + $0x8] sm:$0xff]
        %v5353 = vld [vmem:[%s1263 + $0x10] sm:$0xff]
        %v5354 = vld [vmem:[%s1263 + $0x18] sm:$0xff]
        %v5355 = vld [vmem:[%s1263 + $0x20] sm:$0xff]
        %v5356 = vld [vmem:[%s1263 + $0x28] sm:$0xff]
        %v5357 = vld [vmem:[%s1263 + $0x30] sm:$0xff]
        %v5358 = vld [vmem:[%s1263 + $0x38] sm:$0xff]
        %v5359 = vld [vmem:[%s1263 + $0x40] sm:$0xff]
        %v5360 = vld [vmem:[%s1263 + $0x48] sm:$0xff]
        %v5361 = vld [vmem:[%s1263 + $0x50] sm:$0xff]
        %v5362 = vld [vmem:[%s1263 + $0x58] sm:$0xff]
        %v5363 = vld [vmem:[%s1263 + $0x60] sm:$0xff]
        %v5364 = vld [vmem:[%s1263 + $0x68] sm:$0xff]
        %v5365 = vld [vmem:[%s1263 + $0x70] sm:$0xff]
        %v5366 = vld [vmem:[%s1263 + $0x78] sm:$0xff]
        %v5367 = vld [vmem:[%s1263 + $0x80] sm:$0xff]
        %v5368 = vld [vmem:[%s1263 + $0x88] sm:$0xff]
        %v5369 = vld [vmem:[%s1263 + $0x90] sm:$0xff]
        %v5370 = vld [vmem:[%s1263 + $0x98] sm:$0xff]
        %v5371 = vld [vmem:[%s1263 + $0xa0] sm:$0xff]
        %v5372 = vld [vmem:[%s1263 + $0xa8] sm:$0xff]
        %v5373 = vld [vmem:[%s1263 + $0xb0] sm:$0xff]
        %v5374 = vld [vmem:[%s1263 + $0xb8] sm:$0xff]
        %v5375 = vld [vmem:[%s1263 + $0xc0] sm:$0xff]
        %v5376 = vld [vmem:[%s1263 + $0xc8] sm:$0xff]
        %v5377 = vld [vmem:[%s1263 + $0xd0] sm:$0xff]
        %v5378 = vld [vmem:[%s1263 + $0xd8] sm:$0xff]
        %v5379 = vld [vmem:[%s1263 + $0xe0] sm:$0xff]
        %v5380 = vld [vmem:[%s1263 + $0xe8] sm:$0xff]
        %v5381 = vld [vmem:[%s1263 + $0xf0] sm:$0xff]
        %v5382 = vld [vmem:[%s1263 + $0xf8] sm:$0xff]
        %v5383 = vld [vmem:[%s1438] sm:$0xf]
        %v5384 = vunpack.c.l.bf16 %v5383
        %v5386 = vlaneseq
        %v5387 = vshrl.u32 %v5386, 7
        %v5388 = vsub.s32 0, %v5387
        %v5389 = vrot.slane %v5384, %v5388
        %v5390 = vlaneseq
        %v5391 = vshrl.u32 %v5390, 7
        %v5392 = vsub.s32 2, %v5391
        %v5393 = vrot.slane %v5384, %v5392
        %v5394 = vlaneseq
        %v5395 = vshrl.u32 %v5394, 7
        %v5396 = vsub.s32 4, %v5395
        %v5397 = vrot.slane %v5384, %v5396
        %v5398 = vlaneseq
        %v5399 = vshrl.u32 %v5398, 7
        %v5400 = vsub.s32 6, %v5399
        %v5401 = vrot.slane %v5384, %v5400
        %v5406 = vlaneseq
        %v5407 = vshrl.u32 %v5406, 7
        %v5408 = vsub.s32 0, %v5407
        %v5409 = vrot.slane %v5389, %v5408
        %v5410 = vlaneseq
        %v5411 = vshrl.u32 %v5410, 7
        %v5412 = vsub.s32 0, %v5411
        %v5413 = vrot.slane %v5393, %v5412
        %v5414 = vlaneseq
        %v5415 = vshrl.u32 %v5414, 7
        %v5416 = vsub.s32 0, %v5415
        %v5417 = vrot.slane %v5397, %v5416
        %v5418 = vlaneseq
        %v5419 = vshrl.u32 %v5418, 7
        %v5420 = vsub.s32 0, %v5419
        %v5421 = vrot.slane %v5401, %v5420
        %v5454 = vunpack.c.l.b16 %v5351
        %v5455 = vunpack.c.h.b16 %v5351
        %v5456 = vunpack.c.l.b16 %v5352
        %v5457 = vunpack.c.h.b16 %v5352
        %v5458 = vunpack.c.l.b16 %v5353
        %v5459 = vunpack.c.h.b16 %v5353
        %v5460 = vunpack.c.l.b16 %v5354
        %v5461 = vunpack.c.h.b16 %v5354
        %v5462 = vunpack.c.l.b16 %v5355
        %v5463 = vunpack.c.h.b16 %v5355
        %v5464 = vunpack.c.l.b16 %v5356
        %v5465 = vunpack.c.h.b16 %v5356
        %v5466 = vunpack.c.l.b16 %v5357
        %v5467 = vunpack.c.h.b16 %v5357
        %v5468 = vunpack.c.l.b16 %v5358
        %v5469 = vunpack.c.h.b16 %v5358
        %v5470 = vunpack.c.l.b16 %v5359
        %v5471 = vunpack.c.h.b16 %v5359
        %v5472 = vunpack.c.l.b16 %v5360
        %v5473 = vunpack.c.h.b16 %v5360
        %v5474 = vunpack.c.l.b16 %v5361
        %v5475 = vunpack.c.h.b16 %v5361
        %v5476 = vunpack.c.l.b16 %v5362
        %v5477 = vunpack.c.h.b16 %v5362
        %v5478 = vunpack.c.l.b16 %v5363
        %v5479 = vunpack.c.h.b16 %v5363
        %v5480 = vunpack.c.l.b16 %v5364
        %v5481 = vunpack.c.h.b16 %v5364
        %v5482 = vunpack.c.l.b16 %v5365
        %v5483 = vunpack.c.h.b16 %v5365
        %v5484 = vunpack.c.l.b16 %v5366
        %v5485 = vunpack.c.h.b16 %v5366
        %v5486 = vunpack.c.l.b16 %v5367
        %v5487 = vunpack.c.h.b16 %v5367
        %v5488 = vunpack.c.l.b16 %v5368
        %v5489 = vunpack.c.h.b16 %v5368
        %v5490 = vunpack.c.l.b16 %v5369
        %v5491 = vunpack.c.h.b16 %v5369
        %v5492 = vunpack.c.l.b16 %v5370
        %v5493 = vunpack.c.h.b16 %v5370
        %v5494 = vunpack.c.l.b16 %v5371
        %v5495 = vunpack.c.h.b16 %v5371
        %v5496 = vunpack.c.l.b16 %v5372
        %v5497 = vunpack.c.h.b16 %v5372
        %v5498 = vunpack.c.l.b16 %v5373
        %v5499 = vunpack.c.h.b16 %v5373
        %v5500 = vunpack.c.l.b16 %v5374
        %v5501 = vunpack.c.h.b16 %v5374
        %v5502 = vunpack.c.l.b16 %v5375
        %v5503 = vunpack.c.h.b16 %v5375
        %v5504 = vunpack.c.l.b16 %v5376
        %v5505 = vunpack.c.h.b16 %v5376
        %v5506 = vunpack.c.l.b16 %v5377
        %v5507 = vunpack.c.h.b16 %v5377
        %v5508 = vunpack.c.l.b16 %v5378
        %v5509 = vunpack.c.h.b16 %v5378
        %v5510 = vunpack.c.l.b16 %v5379
        %v5511 = vunpack.c.h.b16 %v5379
        %v5512 = vunpack.c.l.b16 %v5380
        %v5513 = vunpack.c.h.b16 %v5380
        %v5514 = vunpack.c.l.b16 %v5381
        %v5515 = vunpack.c.h.b16 %v5381
        %v5516 = vunpack.c.l.b16 %v5382
        %v5517 = vunpack.c.h.b16 %v5382
        %v5518 = vpack.c.b16 %v5458, %v5454
        %v5519 = vpack.c.b16 %v5459, %v5455
        %v5520 = vpack.c.b16 %v5460, %v5456
        %v5521 = vpack.c.b16 %v5461, %v5457
        %v5522 = vpack.c.b16 %v5466, %v5462
        %v5523 = vpack.c.b16 %v5467, %v5463
        %v5524 = vpack.c.b16 %v5468, %v5464
        %v5525 = vpack.c.b16 %v5469, %v5465
        %v5526 = vpack.c.b16 %v5474, %v5470
        %v5527 = vpack.c.b16 %v5475, %v5471
        %v5528 = vpack.c.b16 %v5476, %v5472
        %v5529 = vpack.c.b16 %v5477, %v5473
        %v5530 = vpack.c.b16 %v5482, %v5478
        %v5531 = vpack.c.b16 %v5483, %v5479
        %v5532 = vpack.c.b16 %v5484, %v5480
        %v5533 = vpack.c.b16 %v5485, %v5481
        %v5534 = vpack.c.b16 %v5490, %v5486
        %v5535 = vpack.c.b16 %v5491, %v5487
        %v5536 = vpack.c.b16 %v5492, %v5488
        %v5537 = vpack.c.b16 %v5493, %v5489
        %v5538 = vpack.c.b16 %v5498, %v5494
        %v5539 = vpack.c.b16 %v5499, %v5495
        %v5540 = vpack.c.b16 %v5500, %v5496
        %v5541 = vpack.c.b16 %v5501, %v5497
        %v5542 = vpack.c.b16 %v5506, %v5502
        %v5543 = vpack.c.b16 %v5507, %v5503
        %v5544 = vpack.c.b16 %v5508, %v5504
        %v5545 = vpack.c.b16 %v5509, %v5505
        %v5546 = vpack.c.b16 %v5514, %v5510
        %v5547 = vpack.c.b16 %v5515, %v5511
        %v5548 = vpack.c.b16 %v5516, %v5512
        %v5549 = vpack.c.b16 %v5517, %v5513
        %5582 = vmatprep.subr.bf16.mxu0 %v5547
        %5583 = vmatpush1.bf16.msra.mxu0 %v5546
        %5584 = vmatprep.subr.bf16.mxu0 %v5543
        %5585 = vmatpush1.bf16.msra.mxu0 %v5542
        %5586 = vmatprep.subr.bf16.mxu0 %v5539
        %5587 = vmatpush1.bf16.msra.mxu0 %v5538
        %5588 = vmatprep.subr.bf16.mxu0 %v5535
        %5589 = vmatpush1.bf16.msra.mxu0 %v5534
        %5590 = vmatprep.subr.bf16.mxu0 %v5531
        %5591 = vmatpush1.bf16.msra.mxu0 %v5530
        %5592 = vmatprep.subr.bf16.mxu0 %v5527
        %5593 = vmatpush1.bf16.msra.mxu0 %v5526
        %5594 = vmatprep.subr.bf16.mxu0 %v5523
        %5595 = vmatpush1.bf16.msra.mxu0 %v5522
        %5596 = vmatprep.subr.bf16.mxu0 %v5519
        %5597 = vmatpush1.bf16.msra.mxu0 %v5518
        %5598 = vmatprep.subr.bf16.mxu0 0
        %5599 = vmatpush2.bf16.msra.mxu0 0
        %5600 = vmatprep.subr.bf16.mxu0 0
        %5601 = vmatpush2.bf16.msra.mxu0 0
        %5602 = vmatprep.subr.bf16.mxu0 0
        %5603 = vmatpush2.bf16.msra.mxu0 0
        %5604 = vmatprep.subr.bf16.mxu0 0
        %5605 = vmatpush2.bf16.msra.mxu0 0
        %5606 = vmatprep.subr.bf16.mxu0 0
        %5607 = vmatpush2.bf16.msra.mxu0 0
        %5608 = vmatprep.subr.bf16.mxu0 0
        %5609 = vmatpush2.bf16.msra.mxu0 0
        %5610 = vmatprep.subr.bf16.mxu0 0
        %5611 = vmatpush2.bf16.msra.mxu0 0
        %5612 = vmatprep.subr.bf16.mxu0 0
        %5613 = vmatpush2.bf16.msra.mxu0 0
        %5614 = vmatprep.mubr.bf16.mxu0 0
        %5615 = vmatmul.mubr.bf16.gmra.mxu0 %v5350
        %v5616 = vpop.f32.mrf.mxu0
        %v5617 = vadd.f32 %v5409, %v5616
        %v5618 = vpop.f32.mrf.mxu0
        %v5619 = vadd.f32 %v5413, %v5618
        %v5620 = vpop.f32.mrf.mxu0
        %v5621 = vadd.f32 %v5409, %v5620
        %v5622 = vpop.f32.mrf.mxu0
        %v5623 = vadd.f32 %v5413, %v5622
        %5624 = vdwg.mxu0
        %5625 = vmatprep.subr.bf16.mxu0 %v5549
        %5626 = vmatpush1.bf16.msra.mxu0 %v5548
        %5627 = vmatprep.subr.bf16.mxu0 %v5545
        %5628 = vmatpush1.bf16.msra.mxu0 %v5544
        %5629 = vmatprep.subr.bf16.mxu0 %v5541
        %5630 = vmatpush1.bf16.msra.mxu0 %v5540
        %5631 = vmatprep.subr.bf16.mxu0 %v5537
        %5632 = vmatpush1.bf16.msra.mxu0 %v5536
        %5633 = vmatprep.subr.bf16.mxu0 %v5533
        %5634 = vmatpush1.bf16.msra.mxu0 %v5532
        %5635 = vmatprep.subr.bf16.mxu0 %v5529
        %5636 = vmatpush1.bf16.msra.mxu0 %v5528
        %5637 = vmatprep.subr.bf16.mxu0 %v5525
        %5638 = vmatpush1.bf16.msra.mxu0 %v5524
        %5639 = vmatprep.subr.bf16.mxu0 %v5521
        %5640 = vmatpush1.bf16.msra.mxu0 %v5520
        %5641 = vmatprep.subr.bf16.mxu0 0
        %5642 = vmatpush2.bf16.msra.mxu0 0
        %5643 = vmatprep.subr.bf16.mxu0 0
        %5644 = vmatpush2.bf16.msra.mxu0 0
        %5645 = vmatprep.subr.bf16.mxu0 0
        %5646 = vmatpush2.bf16.msra.mxu0 0
        %5647 = vmatprep.subr.bf16.mxu0 0
        %5648 = vmatpush2.bf16.msra.mxu0 0
        %5649 = vmatprep.subr.bf16.mxu0 0
        %5650 = vmatpush2.bf16.msra.mxu0 0
        %5651 = vmatprep.subr.bf16.mxu0 0
        %5652 = vmatpush2.bf16.msra.mxu0 0
        %5653 = vmatprep.subr.bf16.mxu0 0
        %5654 = vmatpush2.bf16.msra.mxu0 0
        %5655 = vmatprep.subr.bf16.mxu0 0
        %5656 = vmatpush2.bf16.msra.mxu0 0
        %5657 = vmatprep.mubr.bf16.mxu0 0
        %5658 = vmatmul.mubr.bf16.gmra.mxu0 %v5350
        %v5659 = vpop.f32.mrf.mxu0
        %v5660 = vadd.f32 %v5417, %v5659
        %v5661 = vpop.f32.mrf.mxu0
        %v5662 = vadd.f32 %v5421, %v5661
        %v5663 = vpop.f32.mrf.mxu0
        %v5664 = vadd.f32 %v5417, %v5663
        %v5665 = vpop.f32.mrf.mxu0
        %v5666 = vadd.f32 %v5421, %v5665
        %5667 = vdwg.mxu0
        %v5668 = vmul.f32 %v5617, 0.5
        %v5669 = vmul.f32 %v5619, 0.5
        %v5670 = vmul.f32 %v5660, 0.5
        %v5671 = vmul.f32 %v5662, 0.5
        %v5672 = vmul.f32 %v5621, 0.5
        %v5673 = vmul.f32 %v5623, 0.5
        %v5674 = vmul.f32 %v5664, 0.5
        %v5675 = vmul.f32 %v5666, 0.5
        %v5676 = vmul.f32 %v5617, 0.70710677
        %v5677 = vmul.f32 %v5619, 0.70710677
        %v5678 = vmul.f32 %v5660, 0.70710677
        %v5679 = vmul.f32 %v5662, 0.70710677
        %v5680 = vmul.f32 %v5621, 0.70710677
        %v5681 = vmul.f32 %v5623, 0.70710677
        %v5682 = vmul.f32 %v5664, 0.70710677
        %v5683 = vmul.f32 %v5666, 0.70710677
        %vm5684 = vcmp.ge.f32.partialorder %v5676, 0.0
        %vm5685 = vcmp.ge.f32.partialorder %v5677, 0.0
        %vm5686 = vcmp.ge.f32.partialorder %v5678, 0.0
        %vm5687 = vcmp.ge.f32.partialorder %v5679, 0.0
        %vm5688 = vcmp.ge.f32.partialorder %v5680, 0.0
        %vm5689 = vcmp.ge.f32.partialorder %v5681, 0.0
        %vm5690 = vcmp.ge.f32.partialorder %v5682, 0.0
        %vm5691 = vcmp.ge.f32.partialorder %v5683, 0.0
        %v5692 = vsel %vm5684, 1.0, -1.0
        %v5693 = vsel %vm5685, 1.0, -1.0
        %v5694 = vsel %vm5686, 1.0, -1.0
        %v5695 = vsel %vm5687, 1.0, -1.0
        %v5696 = vsel %vm5688, 1.0, -1.0
        %v5697 = vsel %vm5689, 1.0, -1.0
        %v5698 = vsel %vm5690, 1.0, -1.0
        %v5699 = vsel %vm5691, 1.0, -1.0
        %v5700 = vand.u32 2147483647, %v5676
        %v5701 = vand.u32 2147483647, %v5677
        %v5702 = vand.u32 2147483647, %v5678
        %v5703 = vand.u32 2147483647, %v5679
        %v5704 = vand.u32 2147483647, %v5680
        %v5705 = vand.u32 2147483647, %v5681
        %v5706 = vand.u32 2147483647, %v5682
        %v5707 = vand.u32 2147483647, %v5683
        %v5708 = vmul.f32 %v5700, 0.3275911
        %v5709 = vmul.f32 %v5701, 0.3275911
        %v5710 = vmul.f32 %v5702, 0.3275911
        %v5711 = vmul.f32 %v5703, 0.3275911
        %v5712 = vmul.f32 %v5704, 0.3275911
        %v5713 = vmul.f32 %v5705, 0.3275911
        %v5714 = vmul.f32 %v5706, 0.3275911
        %v5715 = vmul.f32 %v5707, 0.3275911
        %v5716 = vadd.f32 %v5708, 1.0
        %v5717 = vadd.f32 %v5709, 1.0
        %v5718 = vadd.f32 %v5710, 1.0
        %v5719 = vadd.f32 %v5711, 1.0
        %v5720 = vadd.f32 %v5712, 1.0
        %v5721 = vadd.f32 %v5713, 1.0
        %v5722 = vadd.f32 %v5714, 1.0
        %v5723 = vadd.f32 %v5715, 1.0
        %v5724 = vrcp.pop %v5716
        %v5725 = vmul.f32 1.0, %v5724
        %v5726 = vrcp.pop %v5717
        %v5727 = vmul.f32 1.0, %v5726
        %v5728 = vrcp.pop %v5718
        %v5729 = vmul.f32 1.0, %v5728
        %v5730 = vrcp.pop %v5719
        %v5731 = vmul.f32 1.0, %v5730
        %v5732 = vrcp.pop %v5720
        %v5733 = vmul.f32 1.0, %v5732
        %v5734 = vrcp.pop %v5721
        %v5735 = vmul.f32 1.0, %v5734
        %v5736 = vrcp.pop %v5722
        %v5737 = vmul.f32 1.0, %v5736
        %v5738 = vrcp.pop %v5723
        %v5739 = vmul.f32 1.0, %v5738
        %v5740 = vmul.f32 %v5725, 1.0614054
        %v5741 = vmul.f32 %v5727, 1.0614054
        %v5742 = vmul.f32 %v5729, 1.0614054
        %v5743 = vmul.f32 %v5731, 1.0614054
        %v5744 = vmul.f32 %v5733, 1.0614054
        %v5745 = vmul.f32 %v5735, 1.0614054
        %v5746 = vmul.f32 %v5737, 1.0614054
        %v5747 = vmul.f32 %v5739, 1.0614054
        %v5748 = vsub.f32 %v5740, 1.4531521
        %v5749 = vsub.f32 %v5741, 1.4531521
        %v5750 = vsub.f32 %v5742, 1.4531521
        %v5751 = vsub.f32 %v5743, 1.4531521
        %v5752 = vsub.f32 %v5744, 1.4531521
        %v5753 = vsub.f32 %v5745, 1.4531521
        %v5754 = vsub.f32 %v5746, 1.4531521
        %v5755 = vsub.f32 %v5747, 1.4531521
        %v5756 = vmul.f32 %v5748, %v5725
        %v5757 = vmul.f32 %v5749, %v5727
        %v5758 = vmul.f32 %v5750, %v5729
        %v5759 = vmul.f32 %v5751, %v5731
        %v5760 = vmul.f32 %v5752, %v5733
        %v5761 = vmul.f32 %v5753, %v5735
        %v5762 = vmul.f32 %v5754, %v5737
        %v5763 = vmul.f32 %v5755, %v5739
        %v5764 = vadd.f32 %v5756, 1.4214138
        %v5765 = vadd.f32 %v5757, 1.4214138
        %v5766 = vadd.f32 %v5758, 1.4214138
        %v5767 = vadd.f32 %v5759, 1.4214138
        %v5768 = vadd.f32 %v5760, 1.4214138
        %v5769 = vadd.f32 %v5761, 1.4214138
        %v5770 = vadd.f32 %v5762, 1.4214138
        %v5771 = vadd.f32 %v5763, 1.4214138
        %v5772 = vmul.f32 %v5764, %v5725
        %v5773 = vmul.f32 %v5765, %v5727
        %v5774 = vmul.f32 %v5766, %v5729
        %v5775 = vmul.f32 %v5767, %v5731
        %v5776 = vmul.f32 %v5768, %v5733
        %v5777 = vmul.f32 %v5769, %v5735
        %v5778 = vmul.f32 %v5770, %v5737
        %v5779 = vmul.f32 %v5771, %v5739
        %v5780 = vsub.f32 %v5772, 0.28449672
        %v5781 = vsub.f32 %v5773, 0.28449672
        %v5782 = vsub.f32 %v5774, 0.28449672
        %v5783 = vsub.f32 %v5775, 0.28449672
        %v5784 = vsub.f32 %v5776, 0.28449672
        %v5785 = vsub.f32 %v5777, 0.28449672
        %v5786 = vsub.f32 %v5778, 0.28449672
        %v5787 = vsub.f32 %v5779, 0.28449672
        %v5788 = vmul.f32 %v5780, %v5725
        %v5789 = vmul.f32 %v5781, %v5727
        %v5790 = vmul.f32 %v5782, %v5729
        %v5791 = vmul.f32 %v5783, %v5731
        %v5792 = vmul.f32 %v5784, %v5733
        %v5793 = vmul.f32 %v5785, %v5735
        %v5794 = vmul.f32 %v5786, %v5737
        %v5795 = vmul.f32 %v5787, %v5739
        %v5796 = vadd.f32 %v5788, 0.2548296
        %v5797 = vadd.f32 %v5789, 0.2548296
        %v5798 = vadd.f32 %v5790, 0.2548296
        %v5799 = vadd.f32 %v5791, 0.2548296
        %v5800 = vadd.f32 %v5792, 0.2548296
        %v5801 = vadd.f32 %v5793, 0.2548296
        %v5802 = vadd.f32 %v5794, 0.2548296
        %v5803 = vadd.f32 %v5795, 0.2548296
        %v5804 = vmul.f32 %v5796, %v5725
        %v5805 = vmul.f32 %v5797, %v5727
        %v5806 = vmul.f32 %v5798, %v5729
        %v5807 = vmul.f32 %v5799, %v5731
        %v5808 = vmul.f32 %v5800, %v5733
        %v5809 = vmul.f32 %v5801, %v5735
        %v5810 = vmul.f32 %v5802, %v5737
        %v5811 = vmul.f32 %v5803, %v5739
        %v5812 = vsub.f32 0.0, %v5700
        %v5813 = vsub.f32 0.0, %v5701
        %v5814 = vsub.f32 0.0, %v5702
        %v5815 = vsub.f32 0.0, %v5703
        %v5816 = vsub.f32 0.0, %v5704
        %v5817 = vsub.f32 0.0, %v5705
        %v5818 = vsub.f32 0.0, %v5706
        %v5819 = vsub.f32 0.0, %v5707
        %v5820 = vmul.f32 %v5812, %v5700
        %v5821 = vmul.f32 %v5813, %v5701
        %v5822 = vmul.f32 %v5814, %v5702
        %v5823 = vmul.f32 %v5815, %v5703
        %v5824 = vmul.f32 %v5816, %v5704
        %v5825 = vmul.f32 %v5817, %v5705
        %v5826 = vmul.f32 %v5818, %v5706
        %v5827 = vmul.f32 %v5819, %v5707
        %v5828 = vmul.f32 %v5820, 1.442695
        %v5829 = vpow.pop %v5828
        %v5830 = vmul.f32 %v5821, 1.442695
        %v5831 = vpow.pop %v5830
        %v5832 = vmul.f32 %v5822, 1.442695
        %v5833 = vpow.pop %v5832
        %v5834 = vmul.f32 %v5823, 1.442695
        %v5835 = vpow.pop %v5834
        %v5836 = vmul.f32 %v5824, 1.442695
        %v5837 = vpow.pop %v5836
        %v5838 = vmul.f32 %v5825, 1.442695
        %v5839 = vpow.pop %v5838
        %v5840 = vmul.f32 %v5826, 1.442695
        %v5841 = vpow.pop %v5840
        %v5842 = vmul.f32 %v5827, 1.442695
        %v5843 = vpow.pop %v5842
        %v5844 = vmul.f32 %v5804, %v5829
        %v5845 = vmul.f32 %v5805, %v5831
        %v5846 = vmul.f32 %v5806, %v5833
        %v5847 = vmul.f32 %v5807, %v5835
        %v5848 = vmul.f32 %v5808, %v5837
        %v5849 = vmul.f32 %v5809, %v5839
        %v5850 = vmul.f32 %v5810, %v5841
        %v5851 = vmul.f32 %v5811, %v5843
        %v5852 = vsub.f32 1.0, %v5844
        %v5853 = vsub.f32 1.0, %v5845
        %v5854 = vsub.f32 1.0, %v5846
        %v5855 = vsub.f32 1.0, %v5847
        %v5856 = vsub.f32 1.0, %v5848
        %v5857 = vsub.f32 1.0, %v5849
        %v5858 = vsub.f32 1.0, %v5850
        %v5859 = vsub.f32 1.0, %v5851
        %v5860 = vmul.f32 %v5692, %v5852
        %v5861 = vmul.f32 %v5693, %v5853
        %v5862 = vmul.f32 %v5694, %v5854
        %v5863 = vmul.f32 %v5695, %v5855
        %v5864 = vmul.f32 %v5696, %v5856
        %v5865 = vmul.f32 %v5697, %v5857
        %v5866 = vmul.f32 %v5698, %v5858
        %v5867 = vmul.f32 %v5699, %v5859
        %v5868 = vadd.f32 %v5860, 1.0
        %v5869 = vadd.f32 %v5861, 1.0
        %v5870 = vadd.f32 %v5862, 1.0
        %v5871 = vadd.f32 %v5863, 1.0
        %v5872 = vadd.f32 %v5864, 1.0
        %v5873 = vadd.f32 %v5865, 1.0
        %v5874 = vadd.f32 %v5866, 1.0
        %v5875 = vadd.f32 %v5867, 1.0
        %v5876 = vmul.f32 %v5668, %v5868
        %v5877 = vmul.f32 %v5669, %v5869
        %v5878 = vmul.f32 %v5670, %v5870
        %v5879 = vmul.f32 %v5671, %v5871
        %v5880 = vmul.f32 %v5672, %v5872
        %v5881 = vmul.f32 %v5673, %v5873
        %v5882 = vmul.f32 %v5674, %v5874
        %v5883 = vmul.f32 %v5675, %v5875
        %v5884 = vpack.c.bf16 %v5880, %v5876
        %v5885 = vpack.c.bf16 %v5881, %v5877
        %v5886 = vpack.c.bf16 %v5882, %v5878
        %v5887 = vpack.c.bf16 %v5883, %v5879
        %v5888 = vld [vmem:[%s1272] sm:$0xf]
        %v5889 = vld [vmem:[%s1272 + $0x4] sm:$0xf]
        %v5890 = vld [vmem:[%s1272 + $0x8] sm:$0xf]
        %v5891 = vld [vmem:[%s1272 + $0xc] sm:$0xf]
        %v5892 = vld [vmem:[%s1272 + $0x10] sm:$0xf]
        %v5893 = vld [vmem:[%s1272 + $0x14] sm:$0xf]
        %v5894 = vld [vmem:[%s1272 + $0x18] sm:$0xf]
        %v5895 = vld [vmem:[%s1272 + $0x1c] sm:$0xf]
        %v5896 = vld [vmem:[%s1272 + $0x20] sm:$0xf]
        %v5897 = vld [vmem:[%s1272 + $0x24] sm:$0xf]
        %v5898 = vld [vmem:[%s1272 + $0x28] sm:$0xf]
        %v5899 = vld [vmem:[%s1272 + $0x2c] sm:$0xf]
        %v5900 = vld [vmem:[%s1272 + $0x30] sm:$0xf]
        %v5901 = vld [vmem:[%s1272 + $0x34] sm:$0xf]
        %v5902 = vld [vmem:[%s1272 + $0x38] sm:$0xf]
        %v5903 = vld [vmem:[%s1272 + $0x3c] sm:$0xf]
        %v5904 = vld [vmem:[%s1272 + $0x40] sm:$0xf]
        %v5905 = vld [vmem:[%s1272 + $0x44] sm:$0xf]
        %v5906 = vld [vmem:[%s1272 + $0x48] sm:$0xf]
        %v5907 = vld [vmem:[%s1272 + $0x4c] sm:$0xf]
        %v5908 = vld [vmem:[%s1272 + $0x50] sm:$0xf]
        %v5909 = vld [vmem:[%s1272 + $0x54] sm:$0xf]
        %v5910 = vld [vmem:[%s1272 + $0x58] sm:$0xf]
        %v5911 = vld [vmem:[%s1272 + $0x5c] sm:$0xf]
        %v5912 = vld [vmem:[%s1272 + $0x60] sm:$0xf]
        %v5913 = vld [vmem:[%s1272 + $0x64] sm:$0xf]
        %v5914 = vld [vmem:[%s1272 + $0x68] sm:$0xf]
        %v5915 = vld [vmem:[%s1272 + $0x6c] sm:$0xf]
        %v5916 = vld [vmem:[%s1272 + $0x70] sm:$0xf]
        %v5917 = vld [vmem:[%s1272 + $0x74] sm:$0xf]
        %v5918 = vld [vmem:[%s1272 + $0x78] sm:$0xf]
        %v5919 = vld [vmem:[%s1272 + $0x7c] sm:$0xf]
        %v5920 = vld [vmem:[%s1272 + $0x80] sm:$0xf]
        %v5921 = vld [vmem:[%s1272 + $0x84] sm:$0xf]
        %v5922 = vld [vmem:[%s1272 + $0x88] sm:$0xf]
        %v5923 = vld [vmem:[%s1272 + $0x8c] sm:$0xf]
        %v5924 = vld [vmem:[%s1272 + $0x90] sm:$0xf]
        %v5925 = vld [vmem:[%s1272 + $0x94] sm:$0xf]
        %v5926 = vld [vmem:[%s1272 + $0x98] sm:$0xf]
        %v5927 = vld [vmem:[%s1272 + $0x9c] sm:$0xf]
        %v5928 = vld [vmem:[%s1272 + $0xa0] sm:$0xf]
        %v5929 = vld [vmem:[%s1272 + $0xa4] sm:$0xf]
        %v5930 = vld [vmem:[%s1272 + $0xa8] sm:$0xf]
        %v5931 = vld [vmem:[%s1272 + $0xac] sm:$0xf]
        %v5932 = vld [vmem:[%s1272 + $0xb0] sm:$0xf]
        %v5933 = vld [vmem:[%s1272 + $0xb4] sm:$0xf]
        %v5934 = vld [vmem:[%s1272 + $0xb8] sm:$0xf]
        %v5935 = vld [vmem:[%s1272 + $0xbc] sm:$0xf]
        %v5936 = vld [vmem:[%s1272 + $0xc0] sm:$0xf]
        %v5937 = vld [vmem:[%s1272 + $0xc4] sm:$0xf]
        %v5938 = vld [vmem:[%s1272 + $0xc8] sm:$0xf]
        %v5939 = vld [vmem:[%s1272 + $0xcc] sm:$0xf]
        %v5940 = vld [vmem:[%s1272 + $0xd0] sm:$0xf]
        %v5941 = vld [vmem:[%s1272 + $0xd4] sm:$0xf]
        %v5942 = vld [vmem:[%s1272 + $0xd8] sm:$0xf]
        %v5943 = vld [vmem:[%s1272 + $0xdc] sm:$0xf]
        %v5944 = vld [vmem:[%s1272 + $0xe0] sm:$0xf]
        %v5945 = vld [vmem:[%s1272 + $0xe4] sm:$0xf]
        %v5946 = vld [vmem:[%s1272 + $0xe8] sm:$0xf]
        %v5947 = vld [vmem:[%s1272 + $0xec] sm:$0xf]
        %v5948 = vld [vmem:[%s1272 + $0xf0] sm:$0xf]
        %v5949 = vld [vmem:[%s1272 + $0xf4] sm:$0xf]
        %v5950 = vld [vmem:[%s1272 + $0xf8] sm:$0xf]
        %v5951 = vld [vmem:[%s1272 + $0xfc] sm:$0xf]
        %v6016 = vunpack.c.l.b16 %v5888
        %v6017 = vunpack.c.l.b16 %v5889
        %v6018 = vunpack.c.l.b16 %v5890
        %v6019 = vunpack.c.l.b16 %v5891
        %v6020 = vunpack.c.l.b16 %v5892
        %v6021 = vunpack.c.l.b16 %v5893
        %v6022 = vunpack.c.l.b16 %v5894
        %v6023 = vunpack.c.l.b16 %v5895
        %v6024 = vunpack.c.l.b16 %v5896
        %v6025 = vunpack.c.l.b16 %v5897
        %v6026 = vunpack.c.l.b16 %v5898
        %v6027 = vunpack.c.l.b16 %v5899
        %v6028 = vunpack.c.l.b16 %v5900
        %v6029 = vunpack.c.l.b16 %v5901
        %v6030 = vunpack.c.l.b16 %v5902
        %v6031 = vunpack.c.l.b16 %v5903
        %v6032 = vunpack.c.l.b16 %v5904
        %v6033 = vunpack.c.l.b16 %v5905
        %v6034 = vunpack.c.l.b16 %v5906
        %v6035 = vunpack.c.l.b16 %v5907
        %v6036 = vunpack.c.l.b16 %v5908
        %v6037 = vunpack.c.l.b16 %v5909
        %v6038 = vunpack.c.l.b16 %v5910
        %v6039 = vunpack.c.l.b16 %v5911
        %v6040 = vunpack.c.l.b16 %v5912
        %v6041 = vunpack.c.l.b16 %v5913
        %v6042 = vunpack.c.l.b16 %v5914
        %v6043 = vunpack.c.l.b16 %v5915
        %v6044 = vunpack.c.l.b16 %v5916
        %v6045 = vunpack.c.l.b16 %v5917
        %v6046 = vunpack.c.l.b16 %v5918
        %v6047 = vunpack.c.l.b16 %v5919
        %v6048 = vunpack.c.l.b16 %v5920
        %v6049 = vunpack.c.l.b16 %v5921
        %v6050 = vunpack.c.l.b16 %v5922
        %v6051 = vunpack.c.l.b16 %v5923
        %v6052 = vunpack.c.l.b16 %v5924
        %v6053 = vunpack.c.l.b16 %v5925
        %v6054 = vunpack.c.l.b16 %v5926
        %v6055 = vunpack.c.l.b16 %v5927
        %v6056 = vunpack.c.l.b16 %v5928
        %v6057 = vunpack.c.l.b16 %v5929
        %v6058 = vunpack.c.l.b16 %v5930
        %v6059 = vunpack.c.l.b16 %v5931
        %v6060 = vunpack.c.l.b16 %v5932
        %v6061 = vunpack.c.l.b16 %v5933
        %v6062 = vunpack.c.l.b16 %v5934
        %v6063 = vunpack.c.l.b16 %v5935
        %v6064 = vunpack.c.l.b16 %v5936
        %v6065 = vunpack.c.l.b16 %v5937
        %v6066 = vunpack.c.l.b16 %v5938
        %v6067 = vunpack.c.l.b16 %v5939
        %v6068 = vunpack.c.l.b16 %v5940
        %v6069 = vunpack.c.l.b16 %v5941
        %v6070 = vunpack.c.l.b16 %v5942
        %v6071 = vunpack.c.l.b16 %v5943
        %v6072 = vunpack.c.l.b16 %v5944
        %v6073 = vunpack.c.l.b16 %v5945
        %v6074 = vunpack.c.l.b16 %v5946
        %v6075 = vunpack.c.l.b16 %v5947
        %v6076 = vunpack.c.l.b16 %v5948
        %v6077 = vunpack.c.l.b16 %v5949
        %v6078 = vunpack.c.l.b16 %v5950
        %v6079 = vunpack.c.l.b16 %v5951
        %v6080 = vpack.c.b16 %v6017, %v6016
        %v6081 = vpack.c.b16 %v6019, %v6018
        %v6082 = vpack.c.b16 %v6021, %v6020
        %v6083 = vpack.c.b16 %v6023, %v6022
        %v6084 = vpack.c.b16 %v6025, %v6024
        %v6085 = vpack.c.b16 %v6027, %v6026
        %v6086 = vpack.c.b16 %v6029, %v6028
        %v6087 = vpack.c.b16 %v6031, %v6030
        %v6088 = vpack.c.b16 %v6033, %v6032
        %v6089 = vpack.c.b16 %v6035, %v6034
        %v6090 = vpack.c.b16 %v6037, %v6036
        %v6091 = vpack.c.b16 %v6039, %v6038
        %v6092 = vpack.c.b16 %v6041, %v6040
        %v6093 = vpack.c.b16 %v6043, %v6042
        %v6094 = vpack.c.b16 %v6045, %v6044
        %v6095 = vpack.c.b16 %v6047, %v6046
        %v6096 = vpack.c.b16 %v6049, %v6048
        %v6097 = vpack.c.b16 %v6051, %v6050
        %v6098 = vpack.c.b16 %v6053, %v6052
        %v6099 = vpack.c.b16 %v6055, %v6054
        %v6100 = vpack.c.b16 %v6057, %v6056
        %v6101 = vpack.c.b16 %v6059, %v6058
        %v6102 = vpack.c.b16 %v6061, %v6060
        %v6103 = vpack.c.b16 %v6063, %v6062
        %v6104 = vpack.c.b16 %v6065, %v6064
        %v6105 = vpack.c.b16 %v6067, %v6066
        %v6106 = vpack.c.b16 %v6069, %v6068
        %v6107 = vpack.c.b16 %v6071, %v6070
        %v6108 = vpack.c.b16 %v6073, %v6072
        %v6109 = vpack.c.b16 %v6075, %v6074
        %v6110 = vpack.c.b16 %v6077, %v6076
        %v6111 = vpack.c.b16 %v6079, %v6078
        %6144 = vmatprep.subr.bf16.mxu0 0
        %6145 = vmatpush1.bf16.msra.mxu0 %v6087
        %6146 = vmatprep.subr.bf16.mxu0 0
        %6147 = vmatpush1.bf16.msra.mxu0 %v6086
        %6148 = vmatprep.subr.bf16.mxu0 0
        %6149 = vmatpush1.bf16.msra.mxu0 %v6085
        %6150 = vmatprep.subr.bf16.mxu0 0
        %6151 = vmatpush1.bf16.msra.mxu0 %v6084
        %6152 = vmatprep.subr.bf16.mxu0 0
        %6153 = vmatpush1.bf16.msra.mxu0 %v6083
        %6154 = vmatprep.subr.bf16.mxu0 0
        %6155 = vmatpush1.bf16.msra.mxu0 %v6082
        %6156 = vmatprep.subr.bf16.mxu0 0
        %6157 = vmatpush1.bf16.msra.mxu0 %v6081
        %6158 = vmatprep.subr.bf16.mxu0 0
        %6159 = vmatpush1.bf16.msra.mxu0 %v6080
        %6160 = vmatprep.subr.bf16.mxu0 0
        %6161 = vmatpush2.bf16.msra.mxu0 %v6095
        %6162 = vmatprep.subr.bf16.mxu0 0
        %6163 = vmatpush2.bf16.msra.mxu0 %v6094
        %6164 = vmatprep.subr.bf16.mxu0 0
        %6165 = vmatpush2.bf16.msra.mxu0 %v6093
        %6166 = vmatprep.subr.bf16.mxu0 0
        %6167 = vmatpush2.bf16.msra.mxu0 %v6092
        %6168 = vmatprep.subr.bf16.mxu0 0
        %6169 = vmatpush2.bf16.msra.mxu0 %v6091
        %6170 = vmatprep.subr.bf16.mxu0 0
        %6171 = vmatpush2.bf16.msra.mxu0 %v6090
        %6172 = vmatprep.subr.bf16.mxu0 0
        %6173 = vmatpush2.bf16.msra.mxu0 %v6089
        %6174 = vmatprep.subr.bf16.mxu0 0
        %6175 = vmatpush2.bf16.msra.mxu0 %v6088
        %6176 = vmatprep.mubr.bf16.mxu0 %v5885
        %6177 = vmatmul.mubr.bf16.gmra.mxu0 %v5884
        %v6178 = vpop.f32.mrf.mxu0
        %v6179 = vadd.f32 0.0, %v6178
        %v6180 = vpop.f32.mrf.mxu0
        %v6181 = vpop.f32.mrf.mxu0
        %v6182 = vadd.f32 0.0, %v6181
        %v6183 = vpop.f32.mrf.mxu0
        %6184 = vdwg.mxu0
        %6185 = vmatprep.subr.bf16.mxu0 0
        %6186 = vmatpush1.bf16.msra.mxu0 %v6103
        %6187 = vmatprep.subr.bf16.mxu0 0
        %6188 = vmatpush1.bf16.msra.mxu0 %v6102
        %6189 = vmatprep.subr.bf16.mxu0 0
        %6190 = vmatpush1.bf16.msra.mxu0 %v6101
        %6191 = vmatprep.subr.bf16.mxu0 0
        %6192 = vmatpush1.bf16.msra.mxu0 %v6100
        %6193 = vmatprep.subr.bf16.mxu0 0
        %6194 = vmatpush1.bf16.msra.mxu0 %v6099
        %6195 = vmatprep.subr.bf16.mxu0 0
        %6196 = vmatpush1.bf16.msra.mxu0 %v6098
        %6197 = vmatprep.subr.bf16.mxu0 0
        %6198 = vmatpush1.bf16.msra.mxu0 %v6097
        %6199 = vmatprep.subr.bf16.mxu0 0
        %6200 = vmatpush1.bf16.msra.mxu0 %v6096
        %6201 = vmatprep.subr.bf16.mxu0 0
        %6202 = vmatpush2.bf16.msra.mxu0 %v6111
        %6203 = vmatprep.subr.bf16.mxu0 0
        %6204 = vmatpush2.bf16.msra.mxu0 %v6110
        %6205 = vmatprep.subr.bf16.mxu0 0
        %6206 = vmatpush2.bf16.msra.mxu0 %v6109
        %6207 = vmatprep.subr.bf16.mxu0 0
        %6208 = vmatpush2.bf16.msra.mxu0 %v6108
        %6209 = vmatprep.subr.bf16.mxu0 0
        %6210 = vmatpush2.bf16.msra.mxu0 %v6107
        %6211 = vmatprep.subr.bf16.mxu0 0
        %6212 = vmatpush2.bf16.msra.mxu0 %v6106
        %6213 = vmatprep.subr.bf16.mxu0 0
        %6214 = vmatpush2.bf16.msra.mxu0 %v6105
        %6215 = vmatprep.subr.bf16.mxu0 0
        %6216 = vmatpush2.bf16.msra.mxu0 %v6104
        %6217 = vmatprep.mubr.bf16.mxu0 %v5887
        %6218 = vmatmul.mubr.bf16.gmra.mxu0 %v5886
        %v6219 = vpop.f32.mrf.mxu0
        %v6220 = vadd.f32 %v6179, %v6219
        %v6221 = vpop.f32.mrf.mxu0
        %v6222 = vpop.f32.mrf.mxu0
        %v6223 = vadd.f32 %v6182, %v6222
        %v6224 = vpop.f32.mrf.mxu0
        %6225 = vdwg.mxu0
        %v6226 = vadd.f32 %v5310, %v6220
        %v6227 = vadd.f32 %v5311, %v6223
        %v6228 = vld [vmem:[%s1441] sm:$0x1]
        %v6229 = vunpack.c.l.bf16 %v6228
        %v6230 = vlaneseq
        %v6231 = vshrl.u32 %v6230, 7
        %v6232 = vsub.s32 0, %v6231
        %v6233 = vrot.slane %v6229, %v6232
        %v6234 = vadd.f32 %v6226, %v6233
        %v6235 = vadd.f32 %v6227, %v6233
        %6236 = vst [vmem:[#allocation2] sm:$0xff] %v6234
        %6237 = vst [vmem:[#allocation2 + $0x8] sm:$0xff] %v6235
        %p6238 = scmp.eq.s32.totalorder %s82, 1
        // Predicated region
        $region201: #{context_decoder_forward.1} parent=151 // pred_check
          %p6239 = pneg %p6238
        $region202: #{context_decoder_forward.1} parent=151 // pred_check_branch
          %6241 = sbr.rel (%p6239) target = $region204
        $region203: #{context_decoder_forward.1} parent=151 // pred_region
          %v6242 = vld [vmem:[%s25] sm:$0x1]
          %v6243 = vunpack.c.l.bf16 %v6242
          %v6244 = vld [vmem:[%s27] sm:$0x1]
          %v6245 = vunpack.c.l.bf16 %v6244
          %6246 = vadd.xlane.f32.xlu0 %v6234
          %v6247 = vpop.xlane.xlu0 %6246
          %6248 = vadd.xlane.f32.xlu0 %v6235
          %v6249 = vpop.xlane.xlu0 %6248
          %v6250 = vmul.f32 %v6247, %v2119
          %v6251 = vmul.f32 %v6249, %v2119
          %v6252 = vsub.f32 %v6234, %v6250
          %v6253 = vsub.f32 %v6235, %v6251
          %v6254 = vmul.f32 %v6252, %v6252
          %v6255 = vmul.f32 %v6253, %v6253
          %6256 = vadd.xlane.f32.xlu0 %v6254
          %v6257 = vpop.xlane.xlu0 %6256
          %6258 = vadd.xlane.f32.xlu0 %v6255
          %v6259 = vpop.xlane.xlu0 %6258
          %v6260 = vmul.f32 %v6257, %v2119
          %v6261 = vmul.f32 %v6259, %v2119
          %v6262 = vadd.f32 %v6260, 1e-05
          %v6263 = vadd.f32 %v6261, 1e-05
          %v6264 = vrsqrt.pop %v6262
          %v6265 = vrsqrt.pop %v6263
          %v6266 = vmul.f32 %v6252, %v6264
          %v6267 = vmul.f32 %v6253, %v6265
          %v6268 = vlaneseq
          %v6269 = vshrl.u32 %v6268, 7
          %v6270 = vsub.s32 0, %v6269
          %v6271 = vrot.slane %v6243, %v6270
          %v6272 = vmul.f32 %v6266, %v6271
          %v6273 = vmul.f32 %v6267, %v6271
          %v6274 = vlaneseq
          %v6275 = vshrl.u32 %v6274, 7
          %v6276 = vsub.s32 0, %v6275
          %v6277 = vrot.slane %v6245, %v6276
          %v6278 = vadd.f32 %v6272, %v6277
          %v6279 = vadd.f32 %v6273, %v6277
          %v6280 = vld [vmem:[#allocation10] sm:$0xff]
          %v6281 = vld [vmem:[#allocation10 + $0x8] sm:$0xff]
          %v6282 = vld [vmem:[#allocation10 + $0x10] sm:$0xff]
          %v6283 = vld [vmem:[#allocation10 + $0x18] sm:$0xff]
          %v6284 = vld [vmem:[#allocation10 + $0x20] sm:$0xff]
          %v6285 = vld [vmem:[#allocation10 + $0x28] sm:$0xff]
          %v6286 = vld [vmem:[#allocation10 + $0x30] sm:$0xff]
          %v6287 = vld [vmem:[#allocation10 + $0x38] sm:$0xff]
          %v6288 = vld [vmem:[#allocation10 + $0x40] sm:$0xff]
          %v6289 = vld [vmem:[#allocation10 + $0x48] sm:$0xff]
          %v6290 = vld [vmem:[#allocation10 + $0x50] sm:$0xff]
          %v6291 = vld [vmem:[#allocation10 + $0x58] sm:$0xff]
          %v6292 = vld [vmem:[#allocation10 + $0x60] sm:$0xff]
          %v6293 = vld [vmem:[#allocation10 + $0x68] sm:$0xff]
          %v6294 = vld [vmem:[#allocation10 + $0x70] sm:$0xff]
          %v6295 = vld [vmem:[#allocation10 + $0x78] sm:$0xff]
          %v6296 = vpack.c.bf16 %v6279, %v6278
          %v6297 = vld [vmem:[%s31] sm:$0x3]
          %v6298 = vunpack.c.l.bf16 %v6297
          %v6300 = vlaneseq
          %v6301 = vshrl.u32 %v6300, 7
          %v6302 = vsub.s32 0, %v6301
          %v6303 = vrot.slane %v6298, %v6302
          %v6304 = vlaneseq
          %v6305 = vshrl.u32 %v6304, 7
          %v6306 = vsub.s32 2, %v6305
          %v6307 = vrot.slane %v6298, %v6306
          %v6310 = vlaneseq
          %v6311 = vshrl.u32 %v6310, 7
          %v6312 = vsub.s32 0, %v6311
          %v6313 = vrot.slane %v6303, %v6312
          %v6314 = vlaneseq
          %v6315 = vshrl.u32 %v6314, 7
          %v6316 = vsub.s32 0, %v6315
          %v6317 = vrot.slane %v6307, %v6316
          %v6334 = vunpack.c.l.b16 %v6280
          %v6335 = vunpack.c.h.b16 %v6280
          %v6336 = vunpack.c.l.b16 %v6281
          %v6337 = vunpack.c.h.b16 %v6281
          %v6338 = vunpack.c.l.b16 %v6282
          %v6339 = vunpack.c.h.b16 %v6282
          %v6340 = vunpack.c.l.b16 %v6283
          %v6341 = vunpack.c.h.b16 %v6283
          %v6342 = vunpack.c.l.b16 %v6284
          %v6343 = vunpack.c.h.b16 %v6284
          %v6344 = vunpack.c.l.b16 %v6285
          %v6345 = vunpack.c.h.b16 %v6285
          %v6346 = vunpack.c.l.b16 %v6286
          %v6347 = vunpack.c.h.b16 %v6286
          %v6348 = vunpack.c.l.b16 %v6287
          %v6349 = vunpack.c.h.b16 %v6287
          %v6350 = vunpack.c.l.b16 %v6288
          %v6351 = vunpack.c.h.b16 %v6288
          %v6352 = vunpack.c.l.b16 %v6289
          %v6353 = vunpack.c.h.b16 %v6289
          %v6354 = vunpack.c.l.b16 %v6290
          %v6355 = vunpack.c.h.b16 %v6290
          %v6356 = vunpack.c.l.b16 %v6291
          %v6357 = vunpack.c.h.b16 %v6291
          %v6358 = vunpack.c.l.b16 %v6292
          %v6359 = vunpack.c.h.b16 %v6292
          %v6360 = vunpack.c.l.b16 %v6293
          %v6361 = vunpack.c.h.b16 %v6293
          %v6362 = vunpack.c.l.b16 %v6294
          %v6363 = vunpack.c.h.b16 %v6294
          %v6364 = vunpack.c.l.b16 %v6295
          %v6365 = vunpack.c.h.b16 %v6295
          %v6366 = vpack.c.b16 %v6336, %v6334
          %v6367 = vpack.c.b16 %v6337, %v6335
          %v6368 = vpack.c.b16 %v6340, %v6338
          %v6369 = vpack.c.b16 %v6341, %v6339
          %v6370 = vpack.c.b16 %v6344, %v6342
          %v6371 = vpack.c.b16 %v6345, %v6343
          %v6372 = vpack.c.b16 %v6348, %v6346
          %v6373 = vpack.c.b16 %v6349, %v6347
          %v6374 = vpack.c.b16 %v6352, %v6350
          %v6375 = vpack.c.b16 %v6353, %v6351
          %v6376 = vpack.c.b16 %v6356, %v6354
          %v6377 = vpack.c.b16 %v6357, %v6355
          %v6378 = vpack.c.b16 %v6360, %v6358
          %v6379 = vpack.c.b16 %v6361, %v6359
          %v6380 = vpack.c.b16 %v6364, %v6362
          %v6381 = vpack.c.b16 %v6365, %v6363
          %6398 = vmatprep.subr.bf16.mxu0 %v6381
          %6399 = vmatpush1.bf16.msra.mxu0 %v6380
          %6400 = vmatprep.subr.bf16.mxu0 %v6379
          %6401 = vmatpush1.bf16.msra.mxu0 %v6378
          %6402 = vmatprep.subr.bf16.mxu0 %v6377
          %6403 = vmatpush1.bf16.msra.mxu0 %v6376
          %6404 = vmatprep.subr.bf16.mxu0 %v6375
          %6405 = vmatpush1.bf16.msra.mxu0 %v6374
          %6406 = vmatprep.subr.bf16.mxu0 %v6373
          %6407 = vmatpush1.bf16.msra.mxu0 %v6372
          %6408 = vmatprep.subr.bf16.mxu0 %v6371
          %6409 = vmatpush1.bf16.msra.mxu0 %v6370
          %6410 = vmatprep.subr.bf16.mxu0 %v6369
          %6411 = vmatpush1.bf16.msra.mxu0 %v6368
          %6412 = vmatprep.subr.bf16.mxu0 %v6367
          %6413 = vmatpush1.bf16.msra.mxu0 %v6366
          %6414 = vmatprep.subr.bf16.mxu0 0
          %6415 = vmatpush2.bf16.msra.mxu0 0
          %6416 = vmatprep.subr.bf16.mxu0 0
          %6417 = vmatpush2.bf16.msra.mxu0 0
          %6418 = vmatprep.subr.bf16.mxu0 0
          %6419 = vmatpush2.bf16.msra.mxu0 0
          %6420 = vmatprep.subr.bf16.mxu0 0
          %6421 = vmatpush2.bf16.msra.mxu0 0
          %6422 = vmatprep.subr.bf16.mxu0 0
          %6423 = vmatpush2.bf16.msra.mxu0 0
          %6424 = vmatprep.subr.bf16.mxu0 0
          %6425 = vmatpush2.bf16.msra.mxu0 0
          %6426 = vmatprep.subr.bf16.mxu0 0
          %6427 = vmatpush2.bf16.msra.mxu0 0
          %6428 = vmatprep.subr.bf16.mxu0 0
          %6429 = vmatpush2.bf16.msra.mxu0 0
          %6430 = vmatprep.mubr.bf16.mxu0 0
          %6431 = vmatmul.mubr.bf16.gmra.mxu0 %v6296
          %v6432 = vpop.f32.mrf.mxu0
          %v6433 = vadd.f32 %v6313, %v6432
          %v6434 = vpop.f32.mrf.mxu0
          %v6435 = vadd.f32 %v6317, %v6434
          %v6436 = vpop.f32.mrf.mxu0
          %v6437 = vadd.f32 %v6313, %v6436
          %v6438 = vpop.f32.mrf.mxu0
          %v6439 = vadd.f32 %v6317, %v6438
          %6440 = vdwg.mxu0
          %v6441 = vpack.c.bf16 %v6437, %v6433
          %v6442 = vpack.c.bf16 %v6439, %v6435
          %v6445 = vunpack.c.l.b16 %v6441
          %v6446 = vunpack.c.l.b16 %v6442
          %v6447 = vunpack.c.h.b16 %v6441
          %v6448 = vunpack.c.h.b16 %v6442
          %v6449 = vpack.c.b16 %v6446, %v6445
          %v6450 = vpack.c.b16 %v6448, %v6447
          %6453 = vst [vmem:[#allocation19] sm:$0xff] %v6449
          %6454 = vst [vmem:[#allocation19 + $0x8] sm:$0xff] %v6450
        $region204: #{context_decoder_forward.1} parent=151 // pred_fallthru
          _
        // Predicated region
        $region205: #{context_decoder_forward.1} parent=151 // pred_check
          %p6455 = pneg %p873
        $region206: #{context_decoder_forward.1} parent=151 // pred_check_branch
          %6457 = sbr.rel (%p6455) target = $region208
        $region207: #{context_decoder_forward.1} parent=151 // pred_region
          %s6459 = ssub.s32 256, 256
          %6460 = vsyncadd [#allocation6], %s6459
          %s6461 = sshll.u32 [#allocation19], 4
          %s6462 = int_to_ptr.vmem [resolvable:$true] %s6461
          %6467 = dma.vmem_to_hbm [thread:$0]  %s6462, 256, %s67, [#allocation6], 128, 128, 8
        $region208: #{context_decoder_forward.1} parent=151 // pred_fallthru
          _
        // Predicated region
        $region209: #{context_decoder_forward.1} parent=151 // pred_check
          %p6468 = pneg %p873
        $region210: #{context_decoder_forward.1} parent=151 // pred_check_branch
          %6470 = sbr.rel (%p6468) target = $region212
        $region211: #{context_decoder_forward.1} parent=151 // pred_region
          %6471 = dma.done [#allocation6], 256
        $region212: #{context_decoder_forward.1} parent=151 // pred_fallthru
          _
      $region152: #{context_decoder_forward.1} parent=5 // pred_fallthru
        _
      %p6472 = scmp.le.s32.totalorder 2, %s77
      // Predicated region
      $region213: #{context_decoder_forward.1} parent=5 // pred_check
        %p6473 = pneg %p6472
      $region214: #{context_decoder_forward.1} parent=5 // pred_check_branch
        %6475 = sbr.rel (%p6473) target = $region216
      $region215: #{context_decoder_forward.1} parent=5 // pred_region
        %s6476 = ssub.s32 %s77, 2
      $region216: #{context_decoder_forward.1} parent=5 // pred_fallthru
        _
    $region6: #{context_decoder_forward.1} parent=1 // loop_footer
      %s81 = sadd.s32 1, %s77
    $region7: #{context_decoder_forward.1} parent=1 // loop_footer_branch
      %76 = sbr.rel target = $region3
    $region8: #{context_decoder_forward.1} parent=1 // loop_exit
      _
    %6477 = vsyncpa [#allocation5], 1
    %s6478 = scalar_lea.sflag [#allocation5], 1
    %6479 = vsyncpa %s6478, 1
    %6480 = vsyncpa [#allocation8], 1
    %6481 = vsyncpa [#allocation11], 1
    %6482 = vsyncpa [#allocation6], 1
    %s6483 = scalar_lea.sflag [#allocation6], 1
    %6484 = vsyncpa %s6483, 1

</llo_original>
